<compile_context>
chip_gen: v7x
topology: tpu7x:2x2x1
jax: 0.10.0
libtpu: 0.0.40
codegen_flags: <defaults>
</compile_context>

<pallas_src>
import numpy as np

import jax
import jax.numpy as jnp
from jax.experimental import pallas as pl
from jax.experimental.pallas import tpu as pltpu

# ----------------------------------------------------------------------------
# Model geometry (fixed by the PyTorch spec)
# ----------------------------------------------------------------------------
H0, W0 = 32, 32          # input spatial
C0, C1, C2 = 3, 6, 16    # channels: input, conv1 out, conv2 out
K = 5                    # conv kernel size
OH1, OW1 = 28, 28        # conv1 output
PH1, PW1 = 14, 14        # pool1 output
OH2, OW2 = 10, 10        # conv2 output
PH2, PW2 = 5, 5          # pool2 output
NF1, NF2, NF3 = 120, 84, 2
LANES = 128              # lane padding for FC layers / output
TB = 8                   # samples per grid step (multiple of 8)
assert TB % 8 == 0


# ----------------------------------------------------------------------------
# Fused forward kernel (one grid step == TB samples)
# ----------------------------------------------------------------------------
def _lenet_kernel(x_ref, m1_ref, bias1_ref, s1e_ref, s1o_ref, r1e_ref, r1o_ref,
                  m2_ref, bias2_ref, s2e_ref, s2o_ref, r2e_ref, r2o_ref,
                  w1f_ref, b1f_ref, w2f_ref, b2f_ref, w3f_ref, b3f_ref,
                  out_ref, acc1_ref, acc2_ref):
    f32, bf16 = jnp.float32, jnp.bfloat16
    xb = x_ref[...]                                       # (TB*32, 96) bf16
    n1 = TB * H0                                          # 256 stacked rows
    n2 = TB * PH1                                         # 112 stacked rows

    # ---- conv1 (banded matmuls, batched over the whole sample block) ------
    # acc1[s*32 + oh] = sum_kh (x @ m1[kh])[s*32 + oh + kh]; rows 28..31 of
    # each 32-row sample block are junk and are never selected downstream.
    acc1_ref[...] = jnp.dot(xb, m1_ref[0], preferred_element_type=f32)
    for kh in range(1, K):
        y = jnp.dot(xb, m1_ref[kh], preferred_element_type=f32)
        acc1_ref[0:n1 - kh, :] = acc1_ref[0:n1 - kh, :] + y[kh:, :]
    a1 = jnp.maximum(acc1_ref[...] + bias1_ref[...], 0.0)        # (256, 168)

    # ---- pool1 (2x2): lane-pair then row-pair 0/1 selection matmuls -------
    a1b = a1.astype(bf16)
    v1 = jnp.maximum(
        jnp.dot(a1b, s1e_ref[...], preferred_element_type=f32),
        jnp.dot(a1b, s1o_ref[...], preferred_element_type=f32))  # (256, 84)
    v1b = v1.astype(bf16)
    p1 = jnp.maximum(
        jnp.dot(r1e_ref[...], v1b, preferred_element_type=f32),
        jnp.dot(r1o_ref[...], v1b, preferred_element_type=f32))  # (112, 84)
    p1b = p1.astype(bf16)

    # ---- conv2 -------------------------------------------------------------
    acc2_ref[...] = jnp.dot(p1b, m2_ref[0], preferred_element_type=f32)
    for kh in range(1, K):
        z = jnp.dot(p1b, m2_ref[kh], preferred_element_type=f32)
        acc2_ref[0:n2 - kh, :] = acc2_ref[0:n2 - kh, :] + z[kh:, :]
    a2 = jnp.maximum(acc2_ref[...] + bias2_ref[...], 0.0)        # (112, 160)

    # ---- pool2 (row selector emits h-major rows: output row = h*TB + s) ---
    a2b = a2.astype(bf16)
    v2 = jnp.maximum(
        jnp.dot(a2b, s2e_ref[...], preferred_element_type=f32),
        jnp.dot(a2b, s2o_ref[...], preferred_element_type=f32))  # (112, 80)
    v2b = v2.astype(bf16)
    p2 = jnp.maximum(
        jnp.dot(r2e_ref[...], v2b, preferred_element_type=f32),
        jnp.dot(r2o_ref[...], v2b, preferred_element_type=f32))  # (5*TB, 80)

    # ---- fc1 + relu: 5 contiguous (TB, 80) slabs, batched over samples ----
    accf = jnp.dot(p2[0:TB, :].astype(bf16), w1f_ref[0],
                   preferred_element_type=f32)
    for h in range(1, PH2):
        accf = accf + jnp.dot(p2[h * TB:(h + 1) * TB, :].astype(bf16),
                              w1f_ref[h], preferred_element_type=f32)
    f1 = jnp.maximum(accf + b1f_ref[...], 0.0).astype(bf16)      # (TB, 128)

    # ---- fc2 + relu, fc3; lane-dense (TB, 128) store, wrapper slices [:2] -
    f2 = jnp.maximum(
        jnp.dot(f1, w2f_ref[...], preferred_element_type=f32) + b2f_ref[...],
        0.0).astype(bf16)
    f3 = jnp.dot(f2, w3f_ref[...], preferred_element_type=f32) + b3f_ref[...]
    out_ref[...] = f3


def _full_spec(a):
    n = a.ndim
    return pl.BlockSpec(a.shape, lambda b, n=n: (0,) * n)


def lenet_forward(packed, x):
    """x: (B, 3, 32, 32) f32 -> logits (B, 2) f32."""
    B = x.shape[0]
    assert x.shape[1:] == (C0, H0, W0), x.shape
    nblk = -(-B // TB)
    Bp = nblk * TB
    # Layout plumbing only: rows = (b, h), lanes = (w, c)  ->  (B*32, 96) bf16
    x_rows = jnp.transpose(x, (0, 2, 3, 1)).reshape(B * H0, W0 * C0)
    x_rows = x_rows.astype(jnp.bfloat16)
    if Bp != B:
        x_rows = jnp.concatenate(
            [x_rows, jnp.zeros(((Bp - B) * H0, W0 * C0), jnp.bfloat16)], axis=0)

    inputs = [x_rows,
              packed["m1"], packed["bias1"],
              packed["s1e"], packed["s1o"], packed["r1e"], packed["r1o"],
              packed["m2"], packed["bias2"],
              packed["s2e"], packed["s2o"], packed["r2e"], packed["r2o"],
              packed["w1f"], packed["b1f"],
              packed["w2f"], packed["b2f"],
              packed["w3f"], packed["b3f"]]

    in_specs = [pl.BlockSpec((TB * H0, W0 * C0), lambda b: (b, 0))]
    in_specs += [_full_spec(a) for a in inputs[1:]]

    out = pl.pallas_call(
        _lenet_kernel,
        grid=(nblk,),
        in_specs=in_specs,
        out_specs=pl.BlockSpec((TB, LANES), lambda b: (b, 0)),
        out_shape=jax.ShapeDtypeStruct((Bp, LANES), jnp.float32),
        scratch_shapes=[pltpu.VMEM((TB * H0, OW1 * C1), jnp.float32),
                        pltpu.VMEM((TB * PH1, OW2 * C2), jnp.float32)],
        compiler_params=pltpu.CompilerParams(
            dimension_semantics=("parallel",)),
    )(*inputs)
    return out[:B, :NF3]                                  # (B, 2)


# ----------------------------------------------------------------------------
# Parameter init (PyTorch layouts) and one-time packing into kernel operands
# ----------------------------------------------------------------------------
def _init_params(key):
    def uni(k, shape, fan_in):
        bound = float(1.0 / np.sqrt(fan_in))
        return jax.random.uniform(k, shape, jnp.float32, -bound, bound)

    keys = jax.random.split(key, 10)
    return {
        "conv1_w": uni(keys[0], (C1, C0, K, K), C0 * K * K),
        "conv1_b": uni(keys[1], (C1,), C0 * K * K),
        "conv2_w": uni(keys[2], (C2, C1, K, K), C1 * K * K),
        "conv2_b": uni(keys[3], (C2,), C1 * K * K),
        "fc1_w": uni(keys[4], (NF1, C2 * PH2 * PW2), C2 * PH2 * PW2),  # (out,in)
        "fc1_b": uni(keys[5], (NF1,), C2 * PH2 * PW2),
        "fc2_w": uni(keys[6], (NF2, NF1), NF1),
        "fc2_b": uni(keys[7], (NF2,), NF1),
        "fc3_w": uni(keys[8], (NF3, NF2), NF2),
        "fc3_b": uni(keys[9], (NF3,), NF2),
    }


def _pool_selectors(in_w, out_w, c):
    """Lane gather matrices for 2x2 pooling in a (w*c) lane packing."""
    se = np.zeros((in_w * c, out_w * c), np.float32)
    so = np.zeros((in_w * c, out_w * c), np.float32)
    for w2 in range(out_w):
        for ch in range(c):
            se[(2 * w2) * c + ch, w2 * c + ch] = 1.0
            so[(2 * w2 + 1) * c + ch, w2 * c + ch] = 1.0
    return se, so


def _row_selectors_batched(out_h, in_h, tb):
    """Per-sample-order row pooling: out row s*out_h+h2 <- src row s*in_h+2h2."""
    re = np.zeros((tb * out_h, tb * in_h), np.float32)
    ro = np.zeros_like(re)
    for s in range(tb):
        for h2 in range(out_h):
            re[s * out_h + h2, s * in_h + 2 * h2] = 1.0
            ro[s * out_h + h2, s * in_h + 2 * h2 + 1] = 1.0
    return re, ro


def _row_selectors_hmajor(out_h, in_h, tb):
    """h-major row pooling: out row h2*tb+s <- src row s*in_h+2h2 (for fc1)."""
    re = np.zeros((out_h * tb, tb * in_h), np.float32)
    ro = np.zeros_like(re)
    for h2 in range(out_h):
        for s in range(tb):
            re[h2 * tb + s, s * in_h + 2 * h2] = 1.0
            ro[h2 * tb + s, s * in_h + 2 * h2 + 1] = 1.0
    return re, ro


def _banded_conv(w, in_w, out_w, cin, cout):
    """Per-kh matmul weights: in lane = w*cin+ci, out lane = ow*cout+oc."""
    m = np.zeros((K, in_w * cin, out_w * cout), np.float32)
    for kh in range(K):
        for ow in range(out_w):
            for kw in range(K):
                ww = ow + kw
                for ci in range(cin):
                    for oc in range(cout):
                        m[kh, ww * cin + ci, ow * cout + oc] = w[oc, ci, kh, kw]
    return m


def _pack_params(params, tb=TB):
    w1 = np.asarray(params["conv1_w"], np.float32)
    b1 = np.asarray(params["conv1_b"], np.float32)
    w2 = np.asarray(params["conv2_w"], np.float32)
    b2 = np.asarray(params["conv2_b"], np.float32)
    fw1 = np.asarray(params["fc1_w"], np.float32)
    fb1 = np.asarray(params["fc1_b"], np.float32)
    fw2 = np.asarray(params["fc2_w"], np.float32)
    fb2 = np.asarray(params["fc2_b"], np.float32)
    fw3 = np.asarray(params["fc3_w"], np.float32)
    fb3 = np.asarray(params["fc3_b"], np.float32)

    m1 = _banded_conv(w1, W0, OW1, C0, C1)                 # (5, 96, 168)
    bias1 = np.tile(b1, OW1)[None, :]                      # (1, 168)
    s1e, s1o = _pool_selectors(OW1, PW1, C1)               # (168, 84)
    r1e, r1o = _row_selectors_batched(PH1, H0, tb)         # (tb*14, tb*32)

    m2 = _banded_conv(w2, PW1, OW2, C1, C2)                # (5, 84, 160)
    bias2 = np.tile(b2, OW2)[None, :]                      # (1, 160)
    s2e, s2o = _pool_selectors(OW2, PW2, C2)               # (160, 80)
    r2e, r2o = _row_selectors_hmajor(PH2, PH1, tb)         # (5*tb, tb*14)

    # fc1: PyTorch flattens NCHW as (c, h, w); our pooled row h has lanes
    # packed as (w, c).  Fold the permutation into per-row weight slabs.
    w1f = np.zeros((PH2, PW2 * C2, LANES), np.float32)
    for h in range(PH2):
        for w in range(PW2):
            for oc in range(C2):
                w1f[h, w * C2 + oc, :NF1] = fw1[:, oc * (PH2 * PW2) + h * PW2 + w]
    b1f = np.zeros((1, LANES), np.float32); b1f[0, :NF1] = fb1

    w2f = np.zeros((LANES, LANES), np.float32); w2f[:NF1, :NF2] = fw2.T
    b2f = np.zeros((1, LANES), np.float32); b2f[0, :NF2] = fb2
    w3f = np.zeros((LANES, LANES), np.float32); w3f[:NF2, :NF3] = fw3.T
    b3f = np.zeros((1, LANES), np.float32); b3f[0, :NF3] = fb3

    bf, f32 = jnp.bfloat16, jnp.float32
    return {
        "m1": jnp.asarray(m1, bf), "bias1": jnp.asarray(bias1, f32),
        "s1e": jnp.asarray(s1e, bf), "s1o": jnp.asarray(s1o, bf),
        "r1e": jnp.asarray(r1e, bf), "r1o": jnp.asarray(r1o, bf),
        "m2": jnp.asarray(m2, bf), "bias2": jnp.asarray(bias2, f32),
        "s2e": jnp.asarray(s2e, bf), "s2o": jnp.asarray(s2o, bf),
        "r2e": jnp.asarray(r2e, bf), "r2o": jnp.asarray(r2o, bf),
        "w1f": jnp.asarray(w1f, bf), "b1f": jnp.asarray(b1f, f32),
        "w2f": jnp.asarray(w2f, bf), "b2f": jnp.asarray(b2f, f32),
        "w3f": jnp.asarray(w3f, bf), "b3f": jnp.asarray(b3f, f32),
    }


# ----------------------------------------------------------------------------
# Plain-JAX f32 reference (mirrors PyTorch SimpleModel.forward)
# ----------------------------------------------------------------------------
def reference_forward(params, x):
    y = jax.lax.conv_general_dilated(
        x, params["conv1_w"], (1, 1), "VALID",
        dimension_numbers=("NCHW", "OIHW", "NCHW"))
    y = jax.nn.relu(y + params["conv1_b"][None, :, None, None])
    y = jax.lax.reduce_window(y, -jnp.inf, jax.lax.max,
                              (1, 1, 2, 2), (1, 1, 2, 2), "VALID")
    y = jax.lax.conv_general_dilated(
        y, params["conv2_w"], (1, 1), "VALID",
        dimension_numbers=("NCHW", "OIHW", "NCHW"))
    y = jax.nn.relu(y + params["conv2_b"][None, :, None, None])
    y = jax.lax.reduce_window(y, -jnp.inf, jax.lax.max,
                              (1, 1, 2, 2), (1, 1, 2, 2), "VALID")
    y = y.reshape(y.shape[0], -1)                    # NCHW flatten == PyTorch
    y = jax.nn.relu(y @ params["fc1_w"].T + params["fc1_b"])
    y = jax.nn.relu(y @ params["fc2_w"].T + params["fc2_b"])
    return y @ params["fc3_w"].T + params["fc3_b"]


# ----------------------------------------------------------------------------
if __name__ == "__main__":
    key = jax.random.PRNGKey(0)
    k_params, k_x = jax.random.split(key)
    params = _init_params(k_params)
    packed = _pack_params(params)
    B = 16                                            # 2 grid steps of TB=8
    x = jax.random.normal(k_x, (B, C0, H0, W0), dtype=jnp.float32)

    fwd = jax.jit(lenet_forward)
    out = jax.block_until_ready(fwd(packed, x))
    assert out.shape == (B, NF3), out.shape

    ref = reference_forward(params, x)
    if not bool(jnp.allclose(out, ref, rtol=1e-1, atol=1e-1)):
        err = float(jnp.max(jnp.abs(out - ref)))
        raise AssertionError(
            f"Pallas output does not match f32 reference (max abs err {err})")
    print("KERNEL_OK")
</pallas_src>

<mosaic_0001>
module attributes {stable_mosaic.version = 11 : i64} {
  func.func @_lenet_kernel(%arg0: i32, %arg1: memref<256x96xbf16, #tpu.memory_space<vmem>>, %arg2: memref<5x96x168xbf16, #tpu.memory_space<vmem>>, %arg3: memref<1x168xf32, #tpu.memory_space<vmem>>, %arg4: memref<168x84xbf16, #tpu.memory_space<vmem>>, %arg5: memref<168x84xbf16, #tpu.memory_space<vmem>>, %arg6: memref<112x256xbf16, #tpu.memory_space<vmem>>, %arg7: memref<112x256xbf16, #tpu.memory_space<vmem>>, %arg8: memref<5x84x160xbf16, #tpu.memory_space<vmem>>, %arg9: memref<1x160xf32, #tpu.memory_space<vmem>>, %arg10: memref<160x80xbf16, #tpu.memory_space<vmem>>, %arg11: memref<160x80xbf16, #tpu.memory_space<vmem>>, %arg12: memref<40x112xbf16, #tpu.memory_space<vmem>>, %arg13: memref<40x112xbf16, #tpu.memory_space<vmem>>, %arg14: memref<5x80x128xbf16, #tpu.memory_space<vmem>>, %arg15: memref<1x128xf32, #tpu.memory_space<vmem>>, %arg16: memref<128x128xbf16, #tpu.memory_space<vmem>>, %arg17: memref<1x128xf32, #tpu.memory_space<vmem>>, %arg18: memref<128x128xbf16, #tpu.memory_space<vmem>>, %arg19: memref<1x128xf32, #tpu.memory_space<vmem>>, %arg20: memref<8x128xf32, #tpu.memory_space<vmem>>, %arg21: memref<256x168xf32, #tpu.memory_space<vmem>>, %arg22: memref<112x160xf32, #tpu.memory_space<vmem>>) attributes {dimension_semantics = [#tpu.dimension_semantics<parallel>], iteration_bounds = array<i64: 2>, scalar_prefetch = 0 : i64, scratch_operands = 2 : i64, tpu.core_type = #tpu.core_type<tc>, window_params = [{transform_indices = @transform_0, window_bounds = array<i64: 256, 96>}, {pipeline_mode = #tpu.pipeline_mode<synchronous>, transform_indices = @transform_1, window_bounds = array<i64: 5, 96, 168>}, {pipeline_mode = #tpu.pipeline_mode<synchronous>, transform_indices = @transform_2, window_bounds = array<i64: 1, 168>}, {pipeline_mode = #tpu.pipeline_mode<synchronous>, transform_indices = @transform_3, window_bounds = array<i64: 168, 84>}, {pipeline_mode = #tpu.pipeline_mode<synchronous>, transform_indices = @transform_4, window_bounds = array<i64: 168, 84>}, {pipeline_mode = #tpu.pipeline_mode<synchronous>, transform_indices = @transform_5, window_bounds = array<i64: 112, 256>}, {pipeline_mode = #tpu.pipeline_mode<synchronous>, transform_indices = @transform_6, window_bounds = array<i64: 112, 256>}, {pipeline_mode = #tpu.pipeline_mode<synchronous>, transform_indices = @transform_7, window_bounds = array<i64: 5, 84, 160>}, {pipeline_mode = #tpu.pipeline_mode<synchronous>, transform_indices = @transform_8, window_bounds = array<i64: 1, 160>}, {pipeline_mode = #tpu.pipeline_mode<synchronous>, transform_indices = @transform_9, window_bounds = array<i64: 160, 80>}, {pipeline_mode = #tpu.pipeline_mode<synchronous>, transform_indices = @transform_10, window_bounds = array<i64: 160, 80>}, {pipeline_mode = #tpu.pipeline_mode<synchronous>, transform_indices = @transform_11, window_bounds = array<i64: 40, 112>}, {pipeline_mode = #tpu.pipeline_mode<synchronous>, transform_indices = @transform_12, window_bounds = array<i64: 40, 112>}, {pipeline_mode = #tpu.pipeline_mode<synchronous>, transform_indices = @transform_13, window_bounds = array<i64: 5, 80, 128>}, {pipeline_mode = #tpu.pipeline_mode<synchronous>, transform_indices = @transform_14, window_bounds = array<i64: 1, 128>}, {pipeline_mode = #tpu.pipeline_mode<synchronous>, transform_indices = @transform_15, window_bounds = array<i64: 128, 128>}, {pipeline_mode = #tpu.pipeline_mode<synchronous>, transform_indices = @transform_16, window_bounds = array<i64: 1, 128>}, {pipeline_mode = #tpu.pipeline_mode<synchronous>, transform_indices = @transform_17, window_bounds = array<i64: 128, 128>}, {pipeline_mode = #tpu.pipeline_mode<synchronous>, transform_indices = @transform_18, window_bounds = array<i64: 1, 128>}, {transform_indices = @transform_19, window_bounds = array<i64: 8, 128>}]} {
    %c0 = arith.constant 0 : index
    %c0_0 = arith.constant 0 : index
    %0 = vector.load %arg1[%c0, %c0_0] : memref<256x96xbf16, #tpu.memory_space<vmem>>, vector<256x96xbf16>
    %c0_1 = arith.constant 0 : index
    %c0_2 = arith.constant 0 : index
    %c0_3 = arith.constant 0 : index
    %1 = vector.load %arg2[%c0_1, %c0_2, %c0_3] : memref<5x96x168xbf16, #tpu.memory_space<vmem>>, vector<1x96x168xbf16>
    %2 = vector.shape_cast %1 : vector<1x96x168xbf16> to vector<96x168xbf16>
    %cst = arith.constant dense<0.000000e+00> : vector<256x168xf32>
    %3 = tpu.matmul %0, %2, %cst {dimension_numbers = #tpu.dot_dimension_numbers<[1], [0], [0], [1], [0, 0, 1, 1], [], []>} : vector<256x96xbf16>, vector<96x168xbf16>, vector<256x168xf32> -> vector<256x168xf32>
    %c0_4 = arith.constant 0 : index
    %c0_5 = arith.constant 0 : index
    %4 = vector.load %arg21[%c0_4, %c0_5] : memref<256x168xf32, #tpu.memory_space<vmem>>, vector<256x168xf32>
    tpu.vector_store %arg21[%c0_4, %c0_5], %3 {strides = array<i32>} : memref<256x168xf32, #tpu.memory_space<vmem>>, vector<256x168xf32>,
    %c1 = arith.constant 1 : index
    %c0_6 = arith.constant 0 : index
    %c0_7 = arith.constant 0 : index
    %5 = vector.load %arg2[%c1, %c0_6, %c0_7] : memref<5x96x168xbf16, #tpu.memory_space<vmem>>, vector<1x96x168xbf16>
    %6 = vector.shape_cast %5 : vector<1x96x168xbf16> to vector<96x168xbf16>
    %cst_8 = arith.constant dense<0.000000e+00> : vector<256x168xf32>
    %7 = tpu.matmul %0, %6, %cst_8 {dimension_numbers = #tpu.dot_dimension_numbers<[1], [0], [0], [1], [0, 0, 1, 1], [], []>} : vector<256x96xbf16>, vector<96x168xbf16>, vector<256x168xf32> -> vector<256x168xf32>
    %c0_9 = arith.constant 0 : index
    %c0_10 = arith.constant 0 : index
    %8 = vector.load %arg21[%c0_9, %c0_10] : memref<256x168xf32, #tpu.memory_space<vmem>>, vector<255x168xf32>
    %9 = vector.extract_strided_slice %7 {offsets = [1, 0], sizes = [255, 168], strides = [1, 1]} : vector<256x168xf32> to vector<255x168xf32>
    %10 = arith.addf %8, %9 : vector<255x168xf32>
    %c0_11 = arith.constant 0 : index
    %c0_12 = arith.constant 0 : index
    %11 = vector.load %arg21[%c0_11, %c0_12] : memref<256x168xf32, #tpu.memory_space<vmem>>, vector<255x168xf32>
    tpu.vector_store %arg21[%c0_11, %c0_12], %10 {strides = array<i32>} : memref<256x168xf32, #tpu.memory_space<vmem>>, vector<255x168xf32>,
    %c2 = arith.constant 2 : index
    %c0_13 = arith.constant 0 : index
    %c0_14 = arith.constant 0 : index
    %12 = vector.load %arg2[%c2, %c0_13, %c0_14] : memref<5x96x168xbf16, #tpu.memory_space<vmem>>, vector<1x96x168xbf16>
    %13 = vector.shape_cast %12 : vector<1x96x168xbf16> to vector<96x168xbf16>
    %cst_15 = arith.constant dense<0.000000e+00> : vector<256x168xf32>
    %14 = tpu.matmul %0, %13, %cst_15 {dimension_numbers = #tpu.dot_dimension_numbers<[1], [0], [0], [1], [0, 0, 1, 1], [], []>} : vector<256x96xbf16>, vector<96x168xbf16>, vector<256x168xf32> -> vector<256x168xf32>
    %c0_16 = arith.constant 0 : index
    %c0_17 = arith.constant 0 : index
    %15 = vector.load %arg21[%c0_16, %c0_17] : memref<256x168xf32, #tpu.memory_space<vmem>>, vector<254x168xf32>
    %16 = vector.extract_strided_slice %14 {offsets = [2, 0], sizes = [254, 168], strides = [1, 1]} : vector<256x168xf32> to vector<254x168xf32>
    %17 = arith.addf %15, %16 : vector<254x168xf32>
    %c0_18 = arith.constant 0 : index
    %c0_19 = arith.constant 0 : index
    %18 = vector.load %arg21[%c0_18, %c0_19] : memref<256x168xf32, #tpu.memory_space<vmem>>, vector<254x168xf32>
    tpu.vector_store %arg21[%c0_18, %c0_19], %17 {strides = array<i32>} : memref<256x168xf32, #tpu.memory_space<vmem>>, vector<254x168xf32>,
    %c3 = arith.constant 3 : index
    %c0_20 = arith.constant 0 : index
    %c0_21 = arith.constant 0 : index
    %19 = vector.load %arg2[%c3, %c0_20, %c0_21] : memref<5x96x168xbf16, #tpu.memory_space<vmem>>, vector<1x96x168xbf16>
    %20 = vector.shape_cast %19 : vector<1x96x168xbf16> to vector<96x168xbf16>
    %cst_22 = arith.constant dense<0.000000e+00> : vector<256x168xf32>
    %21 = tpu.matmul %0, %20, %cst_22 {dimension_numbers = #tpu.dot_dimension_numbers<[1], [0], [0], [1], [0, 0, 1, 1], [], []>} : vector<256x96xbf16>, vector<96x168xbf16>, vector<256x168xf32> -> vector<256x168xf32>
    %c0_23 = arith.constant 0 : index
    %c0_24 = arith.constant 0 : index
    %22 = vector.load %arg21[%c0_23, %c0_24] : memref<256x168xf32, #tpu.memory_space<vmem>>, vector<253x168xf32>
    %23 = vector.extract_strided_slice %21 {offsets = [3, 0], sizes = [253, 168], strides = [1, 1]} : vector<256x168xf32> to vector<253x168xf32>
    %24 = arith.addf %22, %23 : vector<253x168xf32>
    %c0_25 = arith.constant 0 : index
    %c0_26 = arith.constant 0 : index
    %25 = vector.load %arg21[%c0_25, %c0_26] : memref<256x168xf32, #tpu.memory_space<vmem>>, vector<253x168xf32>
    tpu.vector_store %arg21[%c0_25, %c0_26], %24 {strides = array<i32>} : memref<256x168xf32, #tpu.memory_space<vmem>>, vector<253x168xf32>,
    %c4 = arith.constant 4 : index
    %c0_27 = arith.constant 0 : index
    %c0_28 = arith.constant 0 : index
    %26 = vector.load %arg2[%c4, %c0_27, %c0_28] : memref<5x96x168xbf16, #tpu.memory_space<vmem>>, vector<1x96x168xbf16>
    %27 = vector.shape_cast %26 : vector<1x96x168xbf16> to vector<96x168xbf16>
    %cst_29 = arith.constant dense<0.000000e+00> : vector<256x168xf32>
    %28 = tpu.matmul %0, %27, %cst_29 {dimension_numbers = #tpu.dot_dimension_numbers<[1], [0], [0], [1], [0, 0, 1, 1], [], []>} : vector<256x96xbf16>, vector<96x168xbf16>, vector<256x168xf32> -> vector<256x168xf32>
    %c0_30 = arith.constant 0 : index
    %c0_31 = arith.constant 0 : index
    %29 = vector.load %arg21[%c0_30, %c0_31] : memref<256x168xf32, #tpu.memory_space<vmem>>, vector<252x168xf32>
    %30 = vector.extract_strided_slice %28 {offsets = [4, 0], sizes = [252, 168], strides = [1, 1]} : vector<256x168xf32> to vector<252x168xf32>
    %31 = arith.addf %29, %30 : vector<252x168xf32>
    %c0_32 = arith.constant 0 : index
    %c0_33 = arith.constant 0 : index
    %32 = vector.load %arg21[%c0_32, %c0_33] : memref<256x168xf32, #tpu.memory_space<vmem>>, vector<252x168xf32>
    tpu.vector_store %arg21[%c0_32, %c0_33], %31 {strides = array<i32>} : memref<256x168xf32, #tpu.memory_space<vmem>>, vector<252x168xf32>,
    %c0_34 = arith.constant 0 : index
    %c0_35 = arith.constant 0 : index
    %33 = vector.load %arg21[%c0_34, %c0_35] : memref<256x168xf32, #tpu.memory_space<vmem>>, vector<256x168xf32>
    %c0_36 = arith.constant 0 : index
    %c0_37 = arith.constant 0 : index
    %34 = vector.load %arg3[%c0_36, %c0_37] : memref<1x168xf32, #tpu.memory_space<vmem>>, vector<1x168xf32>
    %35 = vector.broadcast %34 : vector<1x168xf32> to vector<256x168xf32>
    %36 = arith.addf %33, %35 : vector<256x168xf32>
    %cst_38 = arith.constant 0.000000e+00 : f32
    %37 = vector.broadcast %cst_38 : f32 to vector<256x168xf32>
    %38 = arith.maximumf %36, %37 : vector<256x168xf32>
    %39 = arith.truncf %38 : vector<256x168xf32> to vector<256x168xbf16>
    %c0_39 = arith.constant 0 : index
    %c0_40 = arith.constant 0 : index
    %40 = vector.load %arg4[%c0_39, %c0_40] : memref<168x84xbf16, #tpu.memory_space<vmem>>, vector<168x84xbf16>
    %cst_41 = arith.constant dense<0.000000e+00> : vector<256x84xf32>
    %41 = tpu.matmul %39, %40, %cst_41 {dimension_numbers = #tpu.dot_dimension_numbers<[1], [0], [0], [1], [0, 0, 1, 1], [], []>} : vector<256x168xbf16>, vector<168x84xbf16>, vector<256x84xf32> -> vector<256x84xf32>
    %c0_42 = arith.constant 0 : index
    %c0_43 = arith.constant 0 : index
    %42 = vector.load %arg5[%c0_42, %c0_43] : memref<168x84xbf16, #tpu.memory_space<vmem>>, vector<168x84xbf16>
    %cst_44 = arith.constant dense<0.000000e+00> : vector<256x84xf32>
    %43 = tpu.matmul %39, %42, %cst_44 {dimension_numbers = #tpu.dot_dimension_numbers<[1], [0], [0], [1], [0, 0, 1, 1], [], []>} : vector<256x168xbf16>, vector<168x84xbf16>, vector<256x84xf32> -> vector<256x84xf32>
    %44 = arith.maximumf %41, %43 : vector<256x84xf32>
    %45 = arith.truncf %44 : vector<256x84xf32> to vector<256x84xbf16>
    %c0_45 = arith.constant 0 : index
    %c0_46 = arith.constant 0 : index
    %46 = vector.load %arg6[%c0_45, %c0_46] : memref<112x256xbf16, #tpu.memory_space<vmem>>, vector<112x256xbf16>
    %cst_47 = arith.constant dense<0.000000e+00> : vector<112x84xf32>
    %47 = tpu.matmul %46, %45, %cst_47 {dimension_numbers = #tpu.dot_dimension_numbers<[1], [0], [0], [1], [0, 0, 1, 1], [], []>} : vector<112x256xbf16>, vector<256x84xbf16>, vector<112x84xf32> -> vector<112x84xf32>
    %c0_48 = arith.constant 0 : index
    %c0_49 = arith.constant 0 : index
    %48 = vector.load %arg7[%c0_48, %c0_49] : memref<112x256xbf16, #tpu.memory_space<vmem>>, vector<112x256xbf16>
    %cst_50 = arith.constant dense<0.000000e+00> : vector<112x84xf32>
    %49 = tpu.matmul %48, %45, %cst_50 {dimension_numbers = #tpu.dot_dimension_numbers<[1], [0], [0], [1], [0, 0, 1, 1], [], []>} : vector<112x256xbf16>, vector<256x84xbf16>, vector<112x84xf32> -> vector<112x84xf32>
    %50 = arith.maximumf %47, %49 : vector<112x84xf32>
    %51 = arith.truncf %50 : vector<112x84xf32> to vector<112x84xbf16>
    %c0_51 = arith.constant 0 : index
    %c0_52 = arith.constant 0 : index
    %c0_53 = arith.constant 0 : index
    %52 = vector.load %arg8[%c0_51, %c0_52, %c0_53] : memref<5x84x160xbf16, #tpu.memory_space<vmem>>, vector<1x84x160xbf16>
    %53 = vector.shape_cast %52 : vector<1x84x160xbf16> to vector<84x160xbf16>
    %cst_54 = arith.constant dense<0.000000e+00> : vector<112x160xf32>
    %54 = tpu.matmul %51, %53, %cst_54 {dimension_numbers = #tpu.dot_dimension_numbers<[1], [0], [0], [1], [0, 0, 1, 1], [], []>} : vector<112x84xbf16>, vector<84x160xbf16>, vector<112x160xf32> -> vector<112x160xf32>
    %c0_55 = arith.constant 0 : index
    %c0_56 = arith.constant 0 : index
    %55 = vector.load %arg22[%c0_55, %c0_56] : memref<112x160xf32, #tpu.memory_space<vmem>>, vector<112x160xf32>
    tpu.vector_store %arg22[%c0_55, %c0_56], %54 {strides = array<i32>} : memref<112x160xf32, #tpu.memory_space<vmem>>, vector<112x160xf32>,
    %c1_57 = arith.constant 1 : index
    %c0_58 = arith.constant 0 : index
    %c0_59 = arith.constant 0 : index
    %56 = vector.load %arg8[%c1_57, %c0_58, %c0_59] : memref<5x84x160xbf16, #tpu.memory_space<vmem>>, vector<1x84x160xbf16>
    %57 = vector.shape_cast %56 : vector<1x84x160xbf16> to vector<84x160xbf16>
    %cst_60 = arith.constant dense<0.000000e+00> : vector<112x160xf32>
    %58 = tpu.matmul %51, %57, %cst_60 {dimension_numbers = #tpu.dot_dimension_numbers<[1], [0], [0], [1], [0, 0, 1, 1], [], []>} : vector<112x84xbf16>, vector<84x160xbf16>, vector<112x160xf32> -> vector<112x160xf32>
    %c0_61 = arith.constant 0 : index
    %c0_62 = arith.constant 0 : index
    %59 = vector.load %arg22[%c0_61, %c0_62] : memref<112x160xf32, #tpu.memory_space<vmem>>, vector<111x160xf32>
    %60 = vector.extract_strided_slice %58 {offsets = [1, 0], sizes = [111, 160], strides = [1, 1]} : vector<112x160xf32> to vector<111x160xf32>
    %61 = arith.addf %59, %60 : vector<111x160xf32>
    %c0_63 = arith.constant 0 : index
    %c0_64 = arith.constant 0 : index
    %62 = vector.load %arg22[%c0_63, %c0_64] : memref<112x160xf32, #tpu.memory_space<vmem>>, vector<111x160xf32>
    tpu.vector_store %arg22[%c0_63, %c0_64], %61 {strides = array<i32>} : memref<112x160xf32, #tpu.memory_space<vmem>>, vector<111x160xf32>,
    %c2_65 = arith.constant 2 : index
    %c0_66 = arith.constant 0 : index
    %c0_67 = arith.constant 0 : index
    %63 = vector.load %arg8[%c2_65, %c0_66, %c0_67] : memref<5x84x160xbf16, #tpu.memory_space<vmem>>, vector<1x84x160xbf16>
    %64 = vector.shape_cast %63 : vector<1x84x160xbf16> to vector<84x160xbf16>
    %cst_68 = arith.constant dense<0.000000e+00> : vector<112x160xf32>
    %65 = tpu.matmul %51, %64, %cst_68 {dimension_numbers = #tpu.dot_dimension_numbers<[1], [0], [0], [1], [0, 0, 1, 1], [], []>} : vector<112x84xbf16>, vector<84x160xbf16>, vector<112x160xf32> -> vector<112x160xf32>
    %c0_69 = arith.constant 0 : index
    %c0_70 = arith.constant 0 : index
    %66 = vector.load %arg22[%c0_69, %c0_70] : memref<112x160xf32, #tpu.memory_space<vmem>>, vector<110x160xf32>
    %67 = vector.extract_strided_slice %65 {offsets = [2, 0], sizes = [110, 160], strides = [1, 1]} : vector<112x160xf32> to vector<110x160xf32>
    %68 = arith.addf %66, %67 : vector<110x160xf32>
    %c0_71 = arith.constant 0 : index
    %c0_72 = arith.constant 0 : index
    %69 = vector.load %arg22[%c0_71, %c0_72] : memref<112x160xf32, #tpu.memory_space<vmem>>, vector<110x160xf32>
    tpu.vector_store %arg22[%c0_71, %c0_72], %68 {strides = array<i32>} : memref<112x160xf32, #tpu.memory_space<vmem>>, vector<110x160xf32>,
    %c3_73 = arith.constant 3 : index
    %c0_74 = arith.constant 0 : index
    %c0_75 = arith.constant 0 : index
    %70 = vector.load %arg8[%c3_73, %c0_74, %c0_75] : memref<5x84x160xbf16, #tpu.memory_space<vmem>>, vector<1x84x160xbf16>
    %71 = vector.shape_cast %70 : vector<1x84x160xbf16> to vector<84x160xbf16>
    %cst_76 = arith.constant dense<0.000000e+00> : vector<112x160xf32>
    %72 = tpu.matmul %51, %71, %cst_76 {dimension_numbers = #tpu.dot_dimension_numbers<[1], [0], [0], [1], [0, 0, 1, 1], [], []>} : vector<112x84xbf16>, vector<84x160xbf16>, vector<112x160xf32> -> vector<112x160xf32>
    %c0_77 = arith.constant 0 : index
    %c0_78 = arith.constant 0 : index
    %73 = vector.load %arg22[%c0_77, %c0_78] : memref<112x160xf32, #tpu.memory_space<vmem>>, vector<109x160xf32>
    %74 = vector.extract_strided_slice %72 {offsets = [3, 0], sizes = [109, 160], strides = [1, 1]} : vector<112x160xf32> to vector<109x160xf32>
    %75 = arith.addf %73, %74 : vector<109x160xf32>
    %c0_79 = arith.constant 0 : index
    %c0_80 = arith.constant 0 : index
    %76 = vector.load %arg22[%c0_79, %c0_80] : memref<112x160xf32, #tpu.memory_space<vmem>>, vector<109x160xf32>
    tpu.vector_store %arg22[%c0_79, %c0_80], %75 {strides = array<i32>} : memref<112x160xf32, #tpu.memory_space<vmem>>, vector<109x160xf32>,
    %c4_81 = arith.constant 4 : index
    %c0_82 = arith.constant 0 : index
    %c0_83 = arith.constant 0 : index
    %77 = vector.load %arg8[%c4_81, %c0_82, %c0_83] : memref<5x84x160xbf16, #tpu.memory_space<vmem>>, vector<1x84x160xbf16>
    %78 = vector.shape_cast %77 : vector<1x84x160xbf16> to vector<84x160xbf16>
    %cst_84 = arith.constant dense<0.000000e+00> : vector<112x160xf32>
    %79 = tpu.matmul %51, %78, %cst_84 {dimension_numbers = #tpu.dot_dimension_numbers<[1], [0], [0], [1], [0, 0, 1, 1], [], []>} : vector<112x84xbf16>, vector<84x160xbf16>, vector<112x160xf32> -> vector<112x160xf32>
    %c0_85 = arith.constant 0 : index
    %c0_86 = arith.constant 0 : index
    %80 = vector.load %arg22[%c0_85, %c0_86] : memref<112x160xf32, #tpu.memory_space<vmem>>, vector<108x160xf32>
    %81 = vector.extract_strided_slice %79 {offsets = [4, 0], sizes = [108, 160], strides = [1, 1]} : vector<112x160xf32> to vector<108x160xf32>
    %82 = arith.addf %80, %81 : vector<108x160xf32>
    %c0_87 = arith.constant 0 : index
    %c0_88 = arith.constant 0 : index
    %83 = vector.load %arg22[%c0_87, %c0_88] : memref<112x160xf32, #tpu.memory_space<vmem>>, vector<108x160xf32>
    tpu.vector_store %arg22[%c0_87, %c0_88], %82 {strides = array<i32>} : memref<112x160xf32, #tpu.memory_space<vmem>>, vector<108x160xf32>,
    %c0_89 = arith.constant 0 : index
    %c0_90 = arith.constant 0 : index
    %84 = vector.load %arg22[%c0_89, %c0_90] : memref<112x160xf32, #tpu.memory_space<vmem>>, vector<112x160xf32>
    %c0_91 = arith.constant 0 : index
    %c0_92 = arith.constant 0 : index
    %85 = vector.load %arg9[%c0_91, %c0_92] : memref<1x160xf32, #tpu.memory_space<vmem>>, vector<1x160xf32>
    %86 = vector.broadcast %85 : vector<1x160xf32> to vector<112x160xf32>
    %87 = arith.addf %84, %86 : vector<112x160xf32>
    %cst_93 = arith.constant 0.000000e+00 : f32
    %88 = vector.broadcast %cst_93 : f32 to vector<112x160xf32>
    %89 = arith.maximumf %87, %88 : vector<112x160xf32>
    %90 = arith.truncf %89 : vector<112x160xf32> to vector<112x160xbf16>
    %c0_94 = arith.constant 0 : index
    %c0_95 = arith.constant 0 : index
    %91 = vector.load %arg10[%c0_94, %c0_95] : memref<160x80xbf16, #tpu.memory_space<vmem>>, vector<160x80xbf16>
    %cst_96 = arith.constant dense<0.000000e+00> : vector<112x80xf32>
    %92 = tpu.matmul %90, %91, %cst_96 {dimension_numbers = #tpu.dot_dimension_numbers<[1], [0], [0], [1], [0, 0, 1, 1], [], []>} : vector<112x160xbf16>, vector<160x80xbf16>, vector<112x80xf32> -> vector<112x80xf32>
    %c0_97 = arith.constant 0 : index
    %c0_98 = arith.constant 0 : index
    %93 = vector.load %arg11[%c0_97, %c0_98] : memref<160x80xbf16, #tpu.memory_space<vmem>>, vector<160x80xbf16>
    %cst_99 = arith.constant dense<0.000000e+00> : vector<112x80xf32>
    %94 = tpu.matmul %90, %93, %cst_99 {dimension_numbers = #tpu.dot_dimension_numbers<[1], [0], [0], [1], [0, 0, 1, 1], [], []>} : vector<112x160xbf16>, vector<160x80xbf16>, vector<112x80xf32> -> vector<112x80xf32>
    %95 = arith.maximumf %92, %94 : vector<112x80xf32>
    %96 = arith.truncf %95 : vector<112x80xf32> to vector<112x80xbf16>
    %c0_100 = arith.constant 0 : index
    %c0_101 = arith.constant 0 : index
    %97 = vector.load %arg12[%c0_100, %c0_101] : memref<40x112xbf16, #tpu.memory_space<vmem>>, vector<40x112xbf16>
    %cst_102 = arith.constant dense<0.000000e+00> : vector<40x80xf32>
    %98 = tpu.matmul %97, %96, %cst_102 {dimension_numbers = #tpu.dot_dimension_numbers<[1], [0], [0], [1], [0, 0, 1, 1], [], []>} : vector<40x112xbf16>, vector<112x80xbf16>, vector<40x80xf32> -> vector<40x80xf32>
    %c0_103 = arith.constant 0 : index
    %c0_104 = arith.constant 0 : index
    %99 = vector.load %arg13[%c0_103, %c0_104] : memref<40x112xbf16, #tpu.memory_space<vmem>>, vector<40x112xbf16>
    %cst_105 = arith.constant dense<0.000000e+00> : vector<40x80xf32>
    %100 = tpu.matmul %99, %96, %cst_105 {dimension_numbers = #tpu.dot_dimension_numbers<[1], [0], [0], [1], [0, 0, 1, 1], [], []>} : vector<40x112xbf16>, vector<112x80xbf16>, vector<40x80xf32> -> vector<40x80xf32>
    %101 = arith.maximumf %98, %100 : vector<40x80xf32>
    %102 = vector.extract_strided_slice %101 {offsets = [0, 0], sizes = [8, 80], strides = [1, 1]} : vector<40x80xf32> to vector<8x80xf32>
    %103 = arith.truncf %102 : vector<8x80xf32> to vector<8x80xbf16>
    %c0_106 = arith.constant 0 : index
    %c0_107 = arith.constant 0 : index
    %c0_108 = arith.constant 0 : index
    %104 = vector.load %arg14[%c0_106, %c0_107, %c0_108] : memref<5x80x128xbf16, #tpu.memory_space<vmem>>, vector<1x80x128xbf16>
    %105 = vector.shape_cast %104 : vector<1x80x128xbf16> to vector<80x128xbf16>
    %cst_109 = arith.constant dense<0.000000e+00> : vector<8x128xf32>
    %106 = tpu.matmul %103, %105, %cst_109 {dimension_numbers = #tpu.dot_dimension_numbers<[1], [0], [0], [1], [0, 0, 1, 1], [], []>} : vector<8x80xbf16>, vector<80x128xbf16>, vector<8x128xf32> -> vector<8x128xf32>
    %107 = vector.extract_strided_slice %101 {offsets = [8, 0], sizes = [8, 80], strides = [1, 1]} : vector<40x80xf32> to vector<8x80xf32>
    %108 = arith.truncf %107 : vector<8x80xf32> to vector<8x80xbf16>
    %c1_110 = arith.constant 1 : index
    %c0_111 = arith.constant 0 : index
    %c0_112 = arith.constant 0 : index
    %109 = vector.load %arg14[%c1_110, %c0_111, %c0_112] : memref<5x80x128xbf16, #tpu.memory_space<vmem>>, vector<1x80x128xbf16>
    %110 = vector.shape_cast %109 : vector<1x80x128xbf16> to vector<80x128xbf16>
    %cst_113 = arith.constant dense<0.000000e+00> : vector<8x128xf32>
    %111 = tpu.matmul %108, %110, %cst_113 {dimension_numbers = #tpu.dot_dimension_numbers<[1], [0], [0], [1], [0, 0, 1, 1], [], []>} : vector<8x80xbf16>, vector<80x128xbf16>, vector<8x128xf32> -> vector<8x128xf32>
    %112 = arith.addf %106, %111 : vector<8x128xf32>
    %113 = vector.extract_strided_slice %101 {offsets = [16, 0], sizes = [8, 80], strides = [1, 1]} : vector<40x80xf32> to vector<8x80xf32>
    %114 = arith.truncf %113 : vector<8x80xf32> to vector<8x80xbf16>
    %c2_114 = arith.constant 2 : index
    %c0_115 = arith.constant 0 : index
    %c0_116 = arith.constant 0 : index
    %115 = vector.load %arg14[%c2_114, %c0_115, %c0_116] : memref<5x80x128xbf16, #tpu.memory_space<vmem>>, vector<1x80x128xbf16>
    %116 = vector.shape_cast %115 : vector<1x80x128xbf16> to vector<80x128xbf16>
    %cst_117 = arith.constant dense<0.000000e+00> : vector<8x128xf32>
    %117 = tpu.matmul %114, %116, %cst_117 {dimension_numbers = #tpu.dot_dimension_numbers<[1], [0], [0], [1], [0, 0, 1, 1], [], []>} : vector<8x80xbf16>, vector<80x128xbf16>, vector<8x128xf32> -> vector<8x128xf32>
    %118 = arith.addf %112, %117 : vector<8x128xf32>
    %119 = vector.extract_strided_slice %101 {offsets = [24, 0], sizes = [8, 80], strides = [1, 1]} : vector<40x80xf32> to vector<8x80xf32>
    %120 = arith.truncf %119 : vector<8x80xf32> to vector<8x80xbf16>
    %c3_118 = arith.constant 3 : index
    %c0_119 = arith.constant 0 : index
    %c0_120 = arith.constant 0 : index
    %121 = vector.load %arg14[%c3_118, %c0_119, %c0_120] : memref<5x80x128xbf16, #tpu.memory_space<vmem>>, vector<1x80x128xbf16>
    %122 = vector.shape_cast %121 : vector<1x80x128xbf16> to vector<80x128xbf16>
    %cst_121 = arith.constant dense<0.000000e+00> : vector<8x128xf32>
    %123 = tpu.matmul %120, %122, %cst_121 {dimension_numbers = #tpu.dot_dimension_numbers<[1], [0], [0], [1], [0, 0, 1, 1], [], []>} : vector<8x80xbf16>, vector<80x128xbf16>, vector<8x128xf32> -> vector<8x128xf32>
    %124 = arith.addf %118, %123 : vector<8x128xf32>
    %125 = vector.extract_strided_slice %101 {offsets = [32, 0], sizes = [8, 80], strides = [1, 1]} : vector<40x80xf32> to vector<8x80xf32>
    %126 = arith.truncf %125 : vector<8x80xf32> to vector<8x80xbf16>
    %c4_122 = arith.constant 4 : index
    %c0_123 = arith.constant 0 : index
    %c0_124 = arith.constant 0 : index
    %127 = vector.load %arg14[%c4_122, %c0_123, %c0_124] : memref<5x80x128xbf16, #tpu.memory_space<vmem>>, vector<1x80x128xbf16>
    %128 = vector.shape_cast %127 : vector<1x80x128xbf16> to vector<80x128xbf16>
    %cst_125 = arith.constant dense<0.000000e+00> : vector<8x128xf32>
    %129 = tpu.matmul %126, %128, %cst_125 {dimension_numbers = #tpu.dot_dimension_numbers<[1], [0], [0], [1], [0, 0, 1, 1], [], []>} : vector<8x80xbf16>, vector<80x128xbf16>, vector<8x128xf32> -> vector<8x128xf32>
    %130 = arith.addf %124, %129 : vector<8x128xf32>
    %c0_126 = arith.constant 0 : index
    %c0_127 = arith.constant 0 : index
    %131 = vector.load %arg15[%c0_126, %c0_127] : memref<1x128xf32, #tpu.memory_space<vmem>>, vector<1x128xf32>
    %132 = vector.broadcast %131 : vector<1x128xf32> to vector<8x128xf32>
    %133 = arith.addf %130, %132 : vector<8x128xf32>
    %cst_128 = arith.constant 0.000000e+00 : f32
    %134 = vector.broadcast %cst_128 : f32 to vector<8x128xf32>
    %135 = arith.maximumf %133, %134 : vector<8x128xf32>
    %136 = arith.truncf %135 : vector<8x128xf32> to vector<8x128xbf16>
    %c0_129 = arith.constant 0 : index
    %c0_130 = arith.constant 0 : index
    %137 = vector.load %arg16[%c0_129, %c0_130] : memref<128x128xbf16, #tpu.memory_space<vmem>>, vector<128x128xbf16>
    %cst_131 = arith.constant dense<0.000000e+00> : vector<8x128xf32>
    %138 = tpu.matmul %136, %137, %cst_131 {dimension_numbers = #tpu.dot_dimension_numbers<[1], [0], [0], [1], [0, 0, 1, 1], [], []>} : vector<8x128xbf16>, vector<128x128xbf16>, vector<8x128xf32> -> vector<8x128xf32>
    %c0_132 = arith.constant 0 : index
    %c0_133 = arith.constant 0 : index
    %139 = vector.load %arg17[%c0_132, %c0_133] : memref<1x128xf32, #tpu.memory_space<vmem>>, vector<1x128xf32>
    %140 = vector.broadcast %139 : vector<1x128xf32> to vector<8x128xf32>
    %141 = arith.addf %138, %140 : vector<8x128xf32>
    %cst_134 = arith.constant 0.000000e+00 : f32
    %142 = vector.broadcast %cst_134 : f32 to vector<8x128xf32>
    %143 = arith.maximumf %141, %142 : vector<8x128xf32>
    %144 = arith.truncf %143 : vector<8x128xf32> to vector<8x128xbf16>
    %c0_135 = arith.constant 0 : index
    %c0_136 = arith.constant 0 : index
    %145 = vector.load %arg18[%c0_135, %c0_136] : memref<128x128xbf16, #tpu.memory_space<vmem>>, vector<128x128xbf16>
    %cst_137 = arith.constant dense<0.000000e+00> : vector<8x128xf32>
    %146 = tpu.matmul %144, %145, %cst_137 {dimension_numbers = #tpu.dot_dimension_numbers<[1], [0], [0], [1], [0, 0, 1, 1], [], []>} : vector<8x128xbf16>, vector<128x128xbf16>, vector<8x128xf32> -> vector<8x128xf32>
    %c0_138 = arith.constant 0 : index
    %c0_139 = arith.constant 0 : index
    %147 = vector.load %arg19[%c0_138, %c0_139] : memref<1x128xf32, #tpu.memory_space<vmem>>, vector<1x128xf32>
    %148 = vector.broadcast %147 : vector<1x128xf32> to vector<8x128xf32>
    %149 = arith.addf %146, %148 : vector<8x128xf32>
    %c0_140 = arith.constant 0 : index
    %c0_141 = arith.constant 0 : index
    %150 = vector.load %arg20[%c0_140, %c0_141] : memref<8x128xf32, #tpu.memory_space<vmem>>, vector<8x128xf32>
    tpu.vector_store %arg20[%c0_140, %c0_141], %149 {strides = array<i32>} : memref<8x128xf32, #tpu.memory_space<vmem>>, vector<8x128xf32>,
    return
  }
  func.func @transform_0(%arg0: i32) -> (i32, i32) {
    %c0_i32 = arith.constant 0 : i32
    %c0_i32_0 = arith.constant 0 : i32
    return %arg0, %c0_i32 : i32, i32
  }
  func.func @transform_1(%arg0: i32) -> (i32, i32, i32) {
    %c0_i32 = arith.constant 0 : i32
    %c0_i32_0 = arith.constant 0 : i32
    %c0_i32_1 = arith.constant 0 : i32
    %c0_i32_2 = arith.constant 0 : i32
    return %c0_i32, %c0_i32_0, %c0_i32_1 : i32, i32, i32
  }
  func.func @transform_2(%arg0: i32) -> (i32, i32) {
    %c0_i32 = arith.constant 0 : i32
    %c0_i32_0 = arith.constant 0 : i32
    %c0_i32_1 = arith.constant 0 : i32
    return %c0_i32, %c0_i32_0 : i32, i32
  }
  func.func @transform_3(%arg0: i32) -> (i32, i32) {
    %c0_i32 = arith.constant 0 : i32
    %c0_i32_0 = arith.constant 0 : i32
    %c0_i32_1 = arith.constant 0 : i32
    return %c0_i32, %c0_i32_0 : i32, i32
  }
  func.func @transform_4(%arg0: i32) -> (i32, i32) {
    %c0_i32 = arith.constant 0 : i32
    %c0_i32_0 = arith.constant 0 : i32
    %c0_i32_1 = arith.constant 0 : i32
    return %c0_i32, %c0_i32_0 : i32, i32
  }
  func.func @transform_5(%arg0: i32) -> (i32, i32) {
    %c0_i32 = arith.constant 0 : i32
    %c0_i32_0 = arith.constant 0 : i32
    %c0_i32_1 = arith.constant 0 : i32
    return %c0_i32, %c0_i32_0 : i32, i32
  }
  func.func @transform_6(%arg0: i32) -> (i32, i32) {
    %c0_i32 = arith.constant 0 : i32
    %c0_i32_0 = arith.constant 0 : i32
    %c0_i32_1 = arith.constant 0 : i32
    return %c0_i32, %c0_i32_0 : i32, i32
  }
  func.func @transform_7(%arg0: i32) -> (i32, i32, i32) {
    %c0_i32 = arith.constant 0 : i32
    %c0_i32_0 = arith.constant 0 : i32
    %c0_i32_1 = arith.constant 0 : i32
    %c0_i32_2 = arith.constant 0 : i32
    return %c0_i32, %c0_i32_0, %c0_i32_1 : i32, i32, i32
  }
  func.func @transform_8(%arg0: i32) -> (i32, i32) {
    %c0_i32 = arith.constant 0 : i32
    %c0_i32_0 = arith.constant 0 : i32
    %c0_i32_1 = arith.constant 0 : i32
    return %c0_i32, %c0_i32_0 : i32, i32
  }
  func.func @transform_9(%arg0: i32) -> (i32, i32) {
    %c0_i32 = arith.constant 0 : i32
    %c0_i32_0 = arith.constant 0 : i32
    %c0_i32_1 = arith.constant 0 : i32
    return %c0_i32, %c0_i32_0 : i32, i32
  }
  func.func @transform_10(%arg0: i32) -> (i32, i32) {
    %c0_i32 = arith.constant 0 : i32
    %c0_i32_0 = arith.constant 0 : i32
    %c0_i32_1 = arith.constant 0 : i32
    return %c0_i32, %c0_i32_0 : i32, i32
  }
  func.func @transform_11(%arg0: i32) -> (i32, i32) {
    %c0_i32 = arith.constant 0 : i32
    %c0_i32_0 = arith.constant 0 : i32
    %c0_i32_1 = arith.constant 0 : i32
    return %c0_i32, %c0_i32_0 : i32, i32
  }
  func.func @transform_12(%arg0: i32) -> (i32, i32) {
    %c0_i32 = arith.constant 0 : i32
    %c0_i32_0 = arith.constant 0 : i32
    %c0_i32_1 = arith.constant 0 : i32
    return %c0_i32, %c0_i32_0 : i32, i32
  }
  func.func @transform_13(%arg0: i32) -> (i32, i32, i32) {
    %c0_i32 = arith.constant 0 : i32
    %c0_i32_0 = arith.constant 0 : i32
    %c0_i32_1 = arith.constant 0 : i32
    %c0_i32_2 = arith.constant 0 : i32
    return %c0_i32, %c0_i32_0, %c0_i32_1 : i32, i32, i32
  }
  func.func @transform_14(%arg0: i32) -> (i32, i32) {
    %c0_i32 = arith.constant 0 : i32
    %c0_i32_0 = arith.constant 0 : i32
    %c0_i32_1 = arith.constant 0 : i32
    return %c0_i32, %c0_i32_0 : i32, i32
  }
  func.func @transform_15(%arg0: i32) -> (i32, i32) {
    %c0_i32 = arith.constant 0 : i32
    %c0_i32_0 = arith.constant 0 : i32
    %c0_i32_1 = arith.constant 0 : i32
    return %c0_i32, %c0_i32_0 : i32, i32
  }
  func.func @transform_16(%arg0: i32) -> (i32, i32) {
    %c0_i32 = arith.constant 0 : i32
    %c0_i32_0 = arith.constant 0 : i32
    %c0_i32_1 = arith.constant 0 : i32
    return %c0_i32, %c0_i32_0 : i32, i32
  }
  func.func @transform_17(%arg0: i32) -> (i32, i32) {
    %c0_i32 = arith.constant 0 : i32
    %c0_i32_0 = arith.constant 0 : i32
    %c0_i32_1 = arith.constant 0 : i32
    return %c0_i32, %c0_i32_0 : i32, i32
  }
  func.func @transform_18(%arg0: i32) -> (i32, i32) {
    %c0_i32 = arith.constant 0 : i32
    %c0_i32_0 = arith.constant 0 : i32
    %c0_i32_1 = arith.constant 0 : i32
    return %c0_i32, %c0_i32_0 : i32, i32
  }
  func.func @transform_19(%arg0: i32) -> (i32, i32) {
    %c0_i32 = arith.constant 0 : i32
    %c0_i32_0 = arith.constant 0 : i32
    return %arg0, %c0_i32 : i32, i32
  }
}

</mosaic_0001>

<llo_original>
// kernel: lenet_forward.1
$region0: #{lenet_forward.1}
  #allocation0 [shape = 'u32[]', space=smem, size = 0x4, offset = 0x4, fixed_abs, tag = 'smem constant byte address 0x4 - core index']
  #allocation1 [shape = 'u32[144,128]{1,0:T(1,128)}', space=vmem, size = 0x12000, scoped, tag = 'internal scratch']
  #allocation2 [shape = 'f32[256,168]{1,0:T(8,128)}', space=vmem, size = 0x40000, scoped, tag = 'scratch operand']
  #allocation3 [shape = 'f32[112,160]{1,0:T(8,128)}', space=vmem, size = 0x1c000, scoped, tag = 'scratch operand']
  %s0 = inlined_call_operand.vmem [shape: bf16[512,96], index: 0, kind: input, shape index: {}]
  %s1 = inlined_call_operand.vmem [shape: bf16[5,96,168], index: 1, kind: input, shape index: {}]
  %s2 = inlined_call_operand.vmem [shape: f32[1,168], index: 2, kind: input, shape index: {}]
  %s3 = inlined_call_operand.vmem [shape: bf16[168,84], index: 3, kind: input, shape index: {}]
  %s4 = inlined_call_operand.vmem [shape: bf16[168,84], index: 4, kind: input, shape index: {}]
  %s5 = inlined_call_operand.vmem [shape: bf16[112,256], index: 5, kind: input, shape index: {}]
  %s6 = inlined_call_operand.vmem [shape: bf16[112,256], index: 6, kind: input, shape index: {}]
  %s7 = inlined_call_operand.vmem [shape: bf16[5,84,160], index: 7, kind: input, shape index: {}]
  %s8 = inlined_call_operand.vmem [shape: f32[1,160], index: 8, kind: input, shape index: {}]
  %s9 = inlined_call_operand.vmem [shape: bf16[160,80], index: 9, kind: input, shape index: {}]
  %s10 = inlined_call_operand.vmem [shape: bf16[160,80], index: 10, kind: input, shape index: {}]
  %s11 = inlined_call_operand.vmem [shape: bf16[40,112], index: 11, kind: input, shape index: {}]
  %s12 = inlined_call_operand.vmem [shape: bf16[40,112], index: 12, kind: input, shape index: {}]
  %s13 = inlined_call_operand.vmem [shape: bf16[5,80,128], index: 13, kind: input, shape index: {}]
  %s14 = inlined_call_operand.vmem [shape: f32[1,128], index: 14, kind: input, shape index: {}]
  %s15 = inlined_call_operand.vmem [shape: bf16[128,128], index: 15, kind: input, shape index: {}]
  %s16 = inlined_call_operand.vmem [shape: f32[1,128], index: 16, kind: input, shape index: {}]
  %s17 = inlined_call_operand.vmem [shape: bf16[128,128], index: 17, kind: input, shape index: {}]
  %s18 = inlined_call_operand.vmem [shape: f32[1,128], index: 18, kind: input, shape index: {}]
  %s19 = inlined_call_operand.vmem [shape: f32[16,128], index: 19, kind: output, shape index: {}]
  %s20 = sld [smem:[#allocation0]]
  $region109: #{lenet_forward.1} parent=0
    _
  %s22 = ssub.s32 1, %s20
  %s23 = scalar_select 0, %s22, %s20
  loop: start=0, step=1, limit=4
  $region2: #{lenet_forward.1} parent=0 // loop_pre_header
    _
  $region3: #{lenet_forward.1} parent=0 // loop_header
    %s25 = sphi 0, %s29
    %p26 = scmp.ge.s32.totalorder %s25, 4
    %s35 = sphi 0, %s37
    %s38 = sphi 0, %s35
    %s39 = sphi 0, %s38
    %s55 = sphi 0, %s39
    %s59 = sphi 0, %s59
    %s61 = sphi 0, %s59
    %s62 = sphi 0, %s61
    %s76 = sphi 0, %s62
    %s80 = sphi 0, %s80
    %s82 = sphi 0, %s80
    %s83 = sphi 0, %s82
    %s97 = sphi 0, %s83
    %s101 = sphi 0, %s101
    %s103 = sphi 0, %s101
    %s104 = sphi 0, %s103
    %s118 = sphi 0, %s104
    %s122 = sphi 0, %s122
    %s124 = sphi 0, %s122
    %s125 = sphi 0, %s124
    %s139 = sphi 0, %s125
    %s143 = sphi 0, %s143
    %s145 = sphi 0, %s143
    %s146 = sphi 0, %s145
    %s160 = sphi 0, %s146
    %s164 = sphi 0, %s164
    %s166 = sphi 0, %s164
    %s167 = sphi 0, %s166
    %s181 = sphi 0, %s167
    %s185 = sphi 0, %s185
    %s187 = sphi 0, %s185
    %s188 = sphi 0, %s187
    %s202 = sphi 0, %s188
    %s206 = sphi 0, %s206
    %s208 = sphi 0, %s206
    %s209 = sphi 0, %s208
    %s223 = sphi 0, %s209
    %s227 = sphi 0, %s227
    %s229 = sphi 0, %s227
    %s230 = sphi 0, %s229
    %s244 = sphi 0, %s230
    %s248 = sphi 0, %s248
    %s250 = sphi 0, %s248
    %s251 = sphi 0, %s250
    %s265 = sphi 0, %s251
    %s269 = sphi 0, %s269
    %s271 = sphi 0, %s269
    %s272 = sphi 0, %s271
    %s286 = sphi 0, %s272
    %s290 = sphi 0, %s290
    %s292 = sphi 0, %s290
    %s293 = sphi 0, %s292
    %s307 = sphi 0, %s293
    %s311 = sphi 0, %s311
    %s313 = sphi 0, %s311
    %s314 = sphi 0, %s313
    %s328 = sphi 0, %s314
    %s332 = sphi 0, %s332
    %s334 = sphi 0, %s332
    %s335 = sphi 0, %s334
    %s349 = sphi 0, %s335
    %s353 = sphi 0, %s353
    %s355 = sphi 0, %s353
    %s356 = sphi 0, %s355
    %s370 = sphi 0, %s356
    %s374 = sphi 0, %s374
    %s376 = sphi 0, %s374
    %s377 = sphi 0, %s376
    %s391 = sphi 0, %s377
    %s395 = sphi 0, %s395
    %s397 = sphi 0, %s395
    %s398 = sphi 0, %s397
    %s412 = sphi 0, %s398
    %s416 = sphi 0, %s416
    %s418 = sphi 0, %s416
    %s419 = sphi 0, %s418
    %s433 = sphi 0, %s419
    %s439 = sphi 0, %s441
    %s442 = sphi 0, %s439
    %s443 = sphi 0, %s442
    %s459 = sphi 0, %s443
  $region4: #{lenet_forward.1} parent=0 // loop_header_branch
    %28 = sbr.rel (%p26) target = $region8
  $region5: #{lenet_forward.1} parent=0 // loop_body
    %s30 = ssub.s32 %s25, 1
    %s31 = ssub.s32 %s25, 2
    %s32 = sadd.s32 %s25, 1
    %s33 = ssub.s32 %s25, %s32
    %p34 = scmp.eq.s32.totalorder %s33, 0
    %s36 = sadd.s32 %s35, 1
    %s37 = scalar_select %p34, %s35, %s36
    %p40 = pneg %p34
    %p41 = scmp.eq.s32.totalorder %s25, 1
    %p42 = por %p40, %p41
    %p43 = scmp.ne.s32.totalorder %s35, %s38
    %p44 = scmp.eq.s32.totalorder %s25, 0
    %p45 = por %p43, %p44
    %p46 = scmp.ne.s32.totalorder %s35, %s38
    %p47 = scmp.eq.s32.totalorder %s30, 1
    %p48 = por %p46, %p47
    %p49 = scmp.ne.s32.totalorder %s38, %s39
    %p50 = scmp.eq.s32.totalorder %s30, 0
    %p51 = por %p49, %p50
    %p52 = scmp.ne.s32.totalorder %s38, %s39
    %p53 = scmp.eq.s32.totalorder %s31, 1
    %p54 = por %p52, %p53
    %p56 = scmp.ne.s32.totalorder %s39, %s55
    %p57 = scmp.eq.s32.totalorder %s31, 0
    %p58 = por %p56, %p57
    %s60 = sadd.s32 %s59, 1
    %p63 = scmp.eq.s32.totalorder %s25, 1
    %p64 = scmp.ne.s32.totalorder %s59, %s61
    %p65 = scmp.eq.s32.totalorder %s25, 0
    %p66 = por %p64, %p65
    %p67 = scmp.ne.s32.totalorder %s59, %s61
    %p68 = scmp.eq.s32.totalorder %s30, 1
    %p69 = por %p67, %p68
    %p70 = scmp.ne.s32.totalorder %s61, %s62
    %p71 = scmp.eq.s32.totalorder %s30, 0
    %p72 = por %p70, %p71
    %p73 = scmp.ne.s32.totalorder %s61, %s62
    %p74 = scmp.eq.s32.totalorder %s31, 1
    %p75 = por %p73, %p74
    %p77 = scmp.ne.s32.totalorder %s62, %s76
    %p78 = scmp.eq.s32.totalorder %s31, 0
    %p79 = por %p77, %p78
    %s81 = sadd.s32 %s80, 1
    %p84 = scmp.eq.s32.totalorder %s25, 1
    %p85 = scmp.ne.s32.totalorder %s80, %s82
    %p86 = scmp.eq.s32.totalorder %s25, 0
    %p87 = por %p85, %p86
    %p88 = scmp.ne.s32.totalorder %s80, %s82
    %p89 = scmp.eq.s32.totalorder %s30, 1
    %p90 = por %p88, %p89
    %p91 = scmp.ne.s32.totalorder %s82, %s83
    %p92 = scmp.eq.s32.totalorder %s30, 0
    %p93 = por %p91, %p92
    %p94 = scmp.ne.s32.totalorder %s82, %s83
    %p95 = scmp.eq.s32.totalorder %s31, 1
    %p96 = por %p94, %p95
    %p98 = scmp.ne.s32.totalorder %s83, %s97
    %p99 = scmp.eq.s32.totalorder %s31, 0
    %p100 = por %p98, %p99
    %s102 = sadd.s32 %s101, 1
    %p105 = scmp.eq.s32.totalorder %s25, 1
    %p106 = scmp.ne.s32.totalorder %s101, %s103
    %p107 = scmp.eq.s32.totalorder %s25, 0
    %p108 = por %p106, %p107
    %p109 = scmp.ne.s32.totalorder %s101, %s103
    %p110 = scmp.eq.s32.totalorder %s30, 1
    %p111 = por %p109, %p110
    %p112 = scmp.ne.s32.totalorder %s103, %s104
    %p113 = scmp.eq.s32.totalorder %s30, 0
    %p114 = por %p112, %p113
    %p115 = scmp.ne.s32.totalorder %s103, %s104
    %p116 = scmp.eq.s32.totalorder %s31, 1
    %p117 = por %p115, %p116
    %p119 = scmp.ne.s32.totalorder %s104, %s118
    %p120 = scmp.eq.s32.totalorder %s31, 0
    %p121 = por %p119, %p120
    %s123 = sadd.s32 %s122, 1
    %p126 = scmp.eq.s32.totalorder %s25, 1
    %p127 = scmp.ne.s32.totalorder %s122, %s124
    %p128 = scmp.eq.s32.totalorder %s25, 0
    %p129 = por %p127, %p128
    %p130 = scmp.ne.s32.totalorder %s122, %s124
    %p131 = scmp.eq.s32.totalorder %s30, 1
    %p132 = por %p130, %p131
    %p133 = scmp.ne.s32.totalorder %s124, %s125
    %p134 = scmp.eq.s32.totalorder %s30, 0
    %p135 = por %p133, %p134
    %p136 = scmp.ne.s32.totalorder %s124, %s125
    %p137 = scmp.eq.s32.totalorder %s31, 1
    %p138 = por %p136, %p137
    %p140 = scmp.ne.s32.totalorder %s125, %s139
    %p141 = scmp.eq.s32.totalorder %s31, 0
    %p142 = por %p140, %p141
    %s144 = sadd.s32 %s143, 1
    %p147 = scmp.eq.s32.totalorder %s25, 1
    %p148 = scmp.ne.s32.totalorder %s143, %s145
    %p149 = scmp.eq.s32.totalorder %s25, 0
    %p150 = por %p148, %p149
    %p151 = scmp.ne.s32.totalorder %s143, %s145
    %p152 = scmp.eq.s32.totalorder %s30, 1
    %p153 = por %p151, %p152
    %p154 = scmp.ne.s32.totalorder %s145, %s146
    %p155 = scmp.eq.s32.totalorder %s30, 0
    %p156 = por %p154, %p155
    %p157 = scmp.ne.s32.totalorder %s145, %s146
    %p158 = scmp.eq.s32.totalorder %s31, 1
    %p159 = por %p157, %p158
    %p161 = scmp.ne.s32.totalorder %s146, %s160
    %p162 = scmp.eq.s32.totalorder %s31, 0
    %p163 = por %p161, %p162
    %s165 = sadd.s32 %s164, 1
    %p168 = scmp.eq.s32.totalorder %s25, 1
    %p169 = scmp.ne.s32.totalorder %s164, %s166
    %p170 = scmp.eq.s32.totalorder %s25, 0
    %p171 = por %p169, %p170
    %p172 = scmp.ne.s32.totalorder %s164, %s166
    %p173 = scmp.eq.s32.totalorder %s30, 1
    %p174 = por %p172, %p173
    %p175 = scmp.ne.s32.totalorder %s166, %s167
    %p176 = scmp.eq.s32.totalorder %s30, 0
    %p177 = por %p175, %p176
    %p178 = scmp.ne.s32.totalorder %s166, %s167
    %p179 = scmp.eq.s32.totalorder %s31, 1
    %p180 = por %p178, %p179
    %p182 = scmp.ne.s32.totalorder %s167, %s181
    %p183 = scmp.eq.s32.totalorder %s31, 0
    %p184 = por %p182, %p183
    %s186 = sadd.s32 %s185, 1
    %p189 = scmp.eq.s32.totalorder %s25, 1
    %p190 = scmp.ne.s32.totalorder %s185, %s187
    %p191 = scmp.eq.s32.totalorder %s25, 0
    %p192 = por %p190, %p191
    %p193 = scmp.ne.s32.totalorder %s185, %s187
    %p194 = scmp.eq.s32.totalorder %s30, 1
    %p195 = por %p193, %p194
    %p196 = scmp.ne.s32.totalorder %s187, %s188
    %p197 = scmp.eq.s32.totalorder %s30, 0
    %p198 = por %p196, %p197
    %p199 = scmp.ne.s32.totalorder %s187, %s188
    %p200 = scmp.eq.s32.totalorder %s31, 1
    %p201 = por %p199, %p200
    %p203 = scmp.ne.s32.totalorder %s188, %s202
    %p204 = scmp.eq.s32.totalorder %s31, 0
    %p205 = por %p203, %p204
    %s207 = sadd.s32 %s206, 1
    %p210 = scmp.eq.s32.totalorder %s25, 1
    %p211 = scmp.ne.s32.totalorder %s206, %s208
    %p212 = scmp.eq.s32.totalorder %s25, 0
    %p213 = por %p211, %p212
    %p214 = scmp.ne.s32.totalorder %s206, %s208
    %p215 = scmp.eq.s32.totalorder %s30, 1
    %p216 = por %p214, %p215
    %p217 = scmp.ne.s32.totalorder %s208, %s209
    %p218 = scmp.eq.s32.totalorder %s30, 0
    %p219 = por %p217, %p218
    %p220 = scmp.ne.s32.totalorder %s208, %s209
    %p221 = scmp.eq.s32.totalorder %s31, 1
    %p222 = por %p220, %p221
    %p224 = scmp.ne.s32.totalorder %s209, %s223
    %p225 = scmp.eq.s32.totalorder %s31, 0
    %p226 = por %p224, %p225
    %s228 = sadd.s32 %s227, 1
    %p231 = scmp.eq.s32.totalorder %s25, 1
    %p232 = scmp.ne.s32.totalorder %s227, %s229
    %p233 = scmp.eq.s32.totalorder %s25, 0
    %p234 = por %p232, %p233
    %p235 = scmp.ne.s32.totalorder %s227, %s229
    %p236 = scmp.eq.s32.totalorder %s30, 1
    %p237 = por %p235, %p236
    %p238 = scmp.ne.s32.totalorder %s229, %s230
    %p239 = scmp.eq.s32.totalorder %s30, 0
    %p240 = por %p238, %p239
    %p241 = scmp.ne.s32.totalorder %s229, %s230
    %p242 = scmp.eq.s32.totalorder %s31, 1
    %p243 = por %p241, %p242
    %p245 = scmp.ne.s32.totalorder %s230, %s244
    %p246 = scmp.eq.s32.totalorder %s31, 0
    %p247 = por %p245, %p246
    %s249 = sadd.s32 %s248, 1
    %p252 = scmp.eq.s32.totalorder %s25, 1
    %p253 = scmp.ne.s32.totalorder %s248, %s250
    %p254 = scmp.eq.s32.totalorder %s25, 0
    %p255 = por %p253, %p254
    %p256 = scmp.ne.s32.totalorder %s248, %s250
    %p257 = scmp.eq.s32.totalorder %s30, 1
    %p258 = por %p256, %p257
    %p259 = scmp.ne.s32.totalorder %s250, %s251
    %p260 = scmp.eq.s32.totalorder %s30, 0
    %p261 = por %p259, %p260
    %p262 = scmp.ne.s32.totalorder %s250, %s251
    %p263 = scmp.eq.s32.totalorder %s31, 1
    %p264 = por %p262, %p263
    %p266 = scmp.ne.s32.totalorder %s251, %s265
    %p267 = scmp.eq.s32.totalorder %s31, 0
    %p268 = por %p266, %p267
    %s270 = sadd.s32 %s269, 1
    %p273 = scmp.eq.s32.totalorder %s25, 1
    %p274 = scmp.ne.s32.totalorder %s269, %s271
    %p275 = scmp.eq.s32.totalorder %s25, 0
    %p276 = por %p274, %p275
    %p277 = scmp.ne.s32.totalorder %s269, %s271
    %p278 = scmp.eq.s32.totalorder %s30, 1
    %p279 = por %p277, %p278
    %p280 = scmp.ne.s32.totalorder %s271, %s272
    %p281 = scmp.eq.s32.totalorder %s30, 0
    %p282 = por %p280, %p281
    %p283 = scmp.ne.s32.totalorder %s271, %s272
    %p284 = scmp.eq.s32.totalorder %s31, 1
    %p285 = por %p283, %p284
    %p287 = scmp.ne.s32.totalorder %s272, %s286
    %p288 = scmp.eq.s32.totalorder %s31, 0
    %p289 = por %p287, %p288
    %s291 = sadd.s32 %s290, 1
    %p294 = scmp.eq.s32.totalorder %s25, 1
    %p295 = scmp.ne.s32.totalorder %s290, %s292
    %p296 = scmp.eq.s32.totalorder %s25, 0
    %p297 = por %p295, %p296
    %p298 = scmp.ne.s32.totalorder %s290, %s292
    %p299 = scmp.eq.s32.totalorder %s30, 1
    %p300 = por %p298, %p299
    %p301 = scmp.ne.s32.totalorder %s292, %s293
    %p302 = scmp.eq.s32.totalorder %s30, 0
    %p303 = por %p301, %p302
    %p304 = scmp.ne.s32.totalorder %s292, %s293
    %p305 = scmp.eq.s32.totalorder %s31, 1
    %p306 = por %p304, %p305
    %p308 = scmp.ne.s32.totalorder %s293, %s307
    %p309 = scmp.eq.s32.totalorder %s31, 0
    %p310 = por %p308, %p309
    %s312 = sadd.s32 %s311, 1
    %p315 = scmp.eq.s32.totalorder %s25, 1
    %p316 = scmp.ne.s32.totalorder %s311, %s313
    %p317 = scmp.eq.s32.totalorder %s25, 0
    %p318 = por %p316, %p317
    %p319 = scmp.ne.s32.totalorder %s311, %s313
    %p320 = scmp.eq.s32.totalorder %s30, 1
    %p321 = por %p319, %p320
    %p322 = scmp.ne.s32.totalorder %s313, %s314
    %p323 = scmp.eq.s32.totalorder %s30, 0
    %p324 = por %p322, %p323
    %p325 = scmp.ne.s32.totalorder %s313, %s314
    %p326 = scmp.eq.s32.totalorder %s31, 1
    %p327 = por %p325, %p326
    %p329 = scmp.ne.s32.totalorder %s314, %s328
    %p330 = scmp.eq.s32.totalorder %s31, 0
    %p331 = por %p329, %p330
    %s333 = sadd.s32 %s332, 1
    %p336 = scmp.eq.s32.totalorder %s25, 1
    %p337 = scmp.ne.s32.totalorder %s332, %s334
    %p338 = scmp.eq.s32.totalorder %s25, 0
    %p339 = por %p337, %p338
    %p340 = scmp.ne.s32.totalorder %s332, %s334
    %p341 = scmp.eq.s32.totalorder %s30, 1
    %p342 = por %p340, %p341
    %p343 = scmp.ne.s32.totalorder %s334, %s335
    %p344 = scmp.eq.s32.totalorder %s30, 0
    %p345 = por %p343, %p344
    %p346 = scmp.ne.s32.totalorder %s334, %s335
    %p347 = scmp.eq.s32.totalorder %s31, 1
    %p348 = por %p346, %p347
    %p350 = scmp.ne.s32.totalorder %s335, %s349
    %p351 = scmp.eq.s32.totalorder %s31, 0
    %p352 = por %p350, %p351
    %s354 = sadd.s32 %s353, 1
    %p357 = scmp.eq.s32.totalorder %s25, 1
    %p358 = scmp.ne.s32.totalorder %s353, %s355
    %p359 = scmp.eq.s32.totalorder %s25, 0
    %p360 = por %p358, %p359
    %p361 = scmp.ne.s32.totalorder %s353, %s355
    %p362 = scmp.eq.s32.totalorder %s30, 1
    %p363 = por %p361, %p362
    %p364 = scmp.ne.s32.totalorder %s355, %s356
    %p365 = scmp.eq.s32.totalorder %s30, 0
    %p366 = por %p364, %p365
    %p367 = scmp.ne.s32.totalorder %s355, %s356
    %p368 = scmp.eq.s32.totalorder %s31, 1
    %p369 = por %p367, %p368
    %p371 = scmp.ne.s32.totalorder %s356, %s370
    %p372 = scmp.eq.s32.totalorder %s31, 0
    %p373 = por %p371, %p372
    %s375 = sadd.s32 %s374, 1
    %p378 = scmp.eq.s32.totalorder %s25, 1
    %p379 = scmp.ne.s32.totalorder %s374, %s376
    %p380 = scmp.eq.s32.totalorder %s25, 0
    %p381 = por %p379, %p380
    %p382 = scmp.ne.s32.totalorder %s374, %s376
    %p383 = scmp.eq.s32.totalorder %s30, 1
    %p384 = por %p382, %p383
    %p385 = scmp.ne.s32.totalorder %s376, %s377
    %p386 = scmp.eq.s32.totalorder %s30, 0
    %p387 = por %p385, %p386
    %p388 = scmp.ne.s32.totalorder %s376, %s377
    %p389 = scmp.eq.s32.totalorder %s31, 1
    %p390 = por %p388, %p389
    %p392 = scmp.ne.s32.totalorder %s377, %s391
    %p393 = scmp.eq.s32.totalorder %s31, 0
    %p394 = por %p392, %p393
    %s396 = sadd.s32 %s395, 1
    %p399 = scmp.eq.s32.totalorder %s25, 1
    %p400 = scmp.ne.s32.totalorder %s395, %s397
    %p401 = scmp.eq.s32.totalorder %s25, 0
    %p402 = por %p400, %p401
    %p403 = scmp.ne.s32.totalorder %s395, %s397
    %p404 = scmp.eq.s32.totalorder %s30, 1
    %p405 = por %p403, %p404
    %p406 = scmp.ne.s32.totalorder %s397, %s398
    %p407 = scmp.eq.s32.totalorder %s30, 0
    %p408 = por %p406, %p407
    %p409 = scmp.ne.s32.totalorder %s397, %s398
    %p410 = scmp.eq.s32.totalorder %s31, 1
    %p411 = por %p409, %p410
    %p413 = scmp.ne.s32.totalorder %s398, %s412
    %p414 = scmp.eq.s32.totalorder %s31, 0
    %p415 = por %p413, %p414
    %s417 = sadd.s32 %s416, 1
    %p420 = scmp.eq.s32.totalorder %s25, 1
    %p421 = scmp.ne.s32.totalorder %s416, %s418
    %p422 = scmp.eq.s32.totalorder %s25, 0
    %p423 = por %p421, %p422
    %p424 = scmp.ne.s32.totalorder %s416, %s418
    %p425 = scmp.eq.s32.totalorder %s30, 1
    %p426 = por %p424, %p425
    %p427 = scmp.ne.s32.totalorder %s418, %s419
    %p428 = scmp.eq.s32.totalorder %s30, 0
    %p429 = por %p427, %p428
    %p430 = scmp.ne.s32.totalorder %s418, %s419
    %p431 = scmp.eq.s32.totalorder %s31, 1
    %p432 = por %p430, %p431
    %p434 = scmp.ne.s32.totalorder %s419, %s433
    %p435 = scmp.eq.s32.totalorder %s31, 0
    %p436 = por %p434, %p435
    %s437 = ssub.s32 %s25, %s32
    %p438 = scmp.eq.s32.totalorder %s437, 0
    %s440 = sadd.s32 %s439, 1
    %s441 = scalar_select %p438, %s439, %s440
    %p444 = pneg %p438
    %p445 = scmp.eq.s32.totalorder %s25, 1
    %p446 = por %p444, %p445
    %p447 = scmp.ne.s32.totalorder %s439, %s442
    %p448 = scmp.eq.s32.totalorder %s25, 0
    %p449 = por %p447, %p448
    %p450 = scmp.ne.s32.totalorder %s439, %s442
    %p451 = scmp.eq.s32.totalorder %s30, 1
    %p452 = por %p450, %p451
    %p453 = scmp.ne.s32.totalorder %s442, %s443
    %p454 = scmp.eq.s32.totalorder %s30, 0
    %p455 = por %p453, %p454
    %p456 = scmp.ne.s32.totalorder %s442, %s443
    %p457 = scmp.eq.s32.totalorder %s31, 1
    %p458 = por %p456, %p457
    %p460 = scmp.ne.s32.totalorder %s443, %s459
    %p461 = scmp.eq.s32.totalorder %s31, 0
    %p462 = por %p460, %p461
    %p463 = scmp.le.s32.totalorder 1, %s25
    %p464 = scmp.lt.s32.totalorder %s25, 3
    %p465 = pnand %p463, %p464
    %p466 = pneg %p465
    // Predicated region
    $region9: #{lenet_forward.1} parent=5 // pred_check
      _
    $region10: #{lenet_forward.1} parent=5 // pred_check_branch
      %468 = sbr.rel (%p465) target = $region12
    $region11: #{lenet_forward.1} parent=5 // pred_region
      %s469 = ssub.s32 %s25, 1
      // Predicated region
      $region13: #{lenet_forward.1} parent=11 // pred_check
        %p470 = pneg %p72
      $region14: #{lenet_forward.1} parent=11 // pred_check_branch
        %472 = sbr.rel (%p470) target = $region16
      $region15: #{lenet_forward.1} parent=11 // pred_region
        _
      $region16: #{lenet_forward.1} parent=11 // pred_fallthru
        _
      // Predicated region
      $region17: #{lenet_forward.1} parent=11 // pred_check
        %p473 = pneg %p93
      $region18: #{lenet_forward.1} parent=11 // pred_check_branch
        %475 = sbr.rel (%p473) target = $region20
      $region19: #{lenet_forward.1} parent=11 // pred_region
        _
      $region20: #{lenet_forward.1} parent=11 // pred_fallthru
        _
      // Predicated region
      $region21: #{lenet_forward.1} parent=11 // pred_check
        %p476 = pneg %p114
      $region22: #{lenet_forward.1} parent=11 // pred_check_branch
        %478 = sbr.rel (%p476) target = $region24
      $region23: #{lenet_forward.1} parent=11 // pred_region
        _
      $region24: #{lenet_forward.1} parent=11 // pred_fallthru
        _
      // Predicated region
      $region25: #{lenet_forward.1} parent=11 // pred_check
        %p479 = pneg %p135
      $region26: #{lenet_forward.1} parent=11 // pred_check_branch
        %481 = sbr.rel (%p479) target = $region28
      $region27: #{lenet_forward.1} parent=11 // pred_region
        _
      $region28: #{lenet_forward.1} parent=11 // pred_fallthru
        _
      // Predicated region
      $region29: #{lenet_forward.1} parent=11 // pred_check
        %p482 = pneg %p156
      $region30: #{lenet_forward.1} parent=11 // pred_check_branch
        %484 = sbr.rel (%p482) target = $region32
      $region31: #{lenet_forward.1} parent=11 // pred_region
        _
      $region32: #{lenet_forward.1} parent=11 // pred_fallthru
        _
      // Predicated region
      $region33: #{lenet_forward.1} parent=11 // pred_check
        %p485 = pneg %p177
      $region34: #{lenet_forward.1} parent=11 // pred_check_branch
        %487 = sbr.rel (%p485) target = $region36
      $region35: #{lenet_forward.1} parent=11 // pred_region
        _
      $region36: #{lenet_forward.1} parent=11 // pred_fallthru
        _
      // Predicated region
      $region37: #{lenet_forward.1} parent=11 // pred_check
        %p488 = pneg %p198
      $region38: #{lenet_forward.1} parent=11 // pred_check_branch
        %490 = sbr.rel (%p488) target = $region40
      $region39: #{lenet_forward.1} parent=11 // pred_region
        _
      $region40: #{lenet_forward.1} parent=11 // pred_fallthru
        _
      // Predicated region
      $region41: #{lenet_forward.1} parent=11 // pred_check
        %p491 = pneg %p219
      $region42: #{lenet_forward.1} parent=11 // pred_check_branch
        %493 = sbr.rel (%p491) target = $region44
      $region43: #{lenet_forward.1} parent=11 // pred_region
        _
      $region44: #{lenet_forward.1} parent=11 // pred_fallthru
        _
      // Predicated region
      $region45: #{lenet_forward.1} parent=11 // pred_check
        %p494 = pneg %p240
      $region46: #{lenet_forward.1} parent=11 // pred_check_branch
        %496 = sbr.rel (%p494) target = $region48
      $region47: #{lenet_forward.1} parent=11 // pred_region
        _
      $region48: #{lenet_forward.1} parent=11 // pred_fallthru
        _
      // Predicated region
      $region49: #{lenet_forward.1} parent=11 // pred_check
        %p497 = pneg %p261
      $region50: #{lenet_forward.1} parent=11 // pred_check_branch
        %499 = sbr.rel (%p497) target = $region52
      $region51: #{lenet_forward.1} parent=11 // pred_region
        _
      $region52: #{lenet_forward.1} parent=11 // pred_fallthru
        _
      // Predicated region
      $region53: #{lenet_forward.1} parent=11 // pred_check
        %p500 = pneg %p282
      $region54: #{lenet_forward.1} parent=11 // pred_check_branch
        %502 = sbr.rel (%p500) target = $region56
      $region55: #{lenet_forward.1} parent=11 // pred_region
        _
      $region56: #{lenet_forward.1} parent=11 // pred_fallthru
        _
      // Predicated region
      $region57: #{lenet_forward.1} parent=11 // pred_check
        %p503 = pneg %p303
      $region58: #{lenet_forward.1} parent=11 // pred_check_branch
        %505 = sbr.rel (%p503) target = $region60
      $region59: #{lenet_forward.1} parent=11 // pred_region
        _
      $region60: #{lenet_forward.1} parent=11 // pred_fallthru
        _
      // Predicated region
      $region61: #{lenet_forward.1} parent=11 // pred_check
        %p506 = pneg %p324
      $region62: #{lenet_forward.1} parent=11 // pred_check_branch
        %508 = sbr.rel (%p506) target = $region64
      $region63: #{lenet_forward.1} parent=11 // pred_region
        _
      $region64: #{lenet_forward.1} parent=11 // pred_fallthru
        _
      // Predicated region
      $region65: #{lenet_forward.1} parent=11 // pred_check
        %p509 = pneg %p345
      $region66: #{lenet_forward.1} parent=11 // pred_check_branch
        %511 = sbr.rel (%p509) target = $region68
      $region67: #{lenet_forward.1} parent=11 // pred_region
        _
      $region68: #{lenet_forward.1} parent=11 // pred_fallthru
        _
      // Predicated region
      $region69: #{lenet_forward.1} parent=11 // pred_check
        %p512 = pneg %p366
      $region70: #{lenet_forward.1} parent=11 // pred_check_branch
        %514 = sbr.rel (%p512) target = $region72
      $region71: #{lenet_forward.1} parent=11 // pred_region
        _
      $region72: #{lenet_forward.1} parent=11 // pred_fallthru
        _
      // Predicated region
      $region73: #{lenet_forward.1} parent=11 // pred_check
        %p515 = pneg %p387
      $region74: #{lenet_forward.1} parent=11 // pred_check_branch
        %517 = sbr.rel (%p515) target = $region76
      $region75: #{lenet_forward.1} parent=11 // pred_region
        _
      $region76: #{lenet_forward.1} parent=11 // pred_fallthru
        _
      // Predicated region
      $region77: #{lenet_forward.1} parent=11 // pred_check
        %p518 = pneg %p408
      $region78: #{lenet_forward.1} parent=11 // pred_check_branch
        %520 = sbr.rel (%p518) target = $region80
      $region79: #{lenet_forward.1} parent=11 // pred_region
        _
      $region80: #{lenet_forward.1} parent=11 // pred_fallthru
        _
      // Predicated region
      $region81: #{lenet_forward.1} parent=11 // pred_check
        %p521 = pneg %p429
      $region82: #{lenet_forward.1} parent=11 // pred_check_branch
        %523 = sbr.rel (%p521) target = $region84
      $region83: #{lenet_forward.1} parent=11 // pred_region
        _
      $region84: #{lenet_forward.1} parent=11 // pred_fallthru
        _
    $region12: #{lenet_forward.1} parent=5 // pred_fallthru
      _
    %p524 = scmp.lt.s32.totalorder %s25, 2
    // Predicated region
    $region85: #{lenet_forward.1} parent=5 // pred_check
      %p525 = pneg %p524
    $region86: #{lenet_forward.1} parent=5 // pred_check_branch
      %527 = sbr.rel (%p525) target = $region88
    $region87: #{lenet_forward.1} parent=5 // pred_region
      // Predicated region
      $region89: #{lenet_forward.1} parent=87 // pred_check
        %p528 = pneg %p45
      $region90: #{lenet_forward.1} parent=87 // pred_check_branch
        %530 = sbr.rel (%p528) target = $region92
      $region91: #{lenet_forward.1} parent=87 // pred_region
        %s531 = smul.u32 32, %s25
        %p532 = scmp.lt.s32.totalorder %s531, 63
        %s533 = scalar_select %p532, %s531, 63
        %s534 = smul.addr %s533, 4
        %s535 = scalar_lea.vmem %s0, %s534
        %s536 = smul.u32 32, %s25
      $region92: #{lenet_forward.1} parent=87 // pred_fallthru
        _
    $region88: #{lenet_forward.1} parent=5 // pred_fallthru
      _
    %p537 = scmp.le.s32.totalorder 1, %s25
    %p538 = scmp.lt.s32.totalorder %s25, 3
    %p539 = pnand %p537, %p538
    %p540 = pneg %p539
    // Predicated region
    $region93: #{lenet_forward.1} parent=5 // pred_check
      _
    $region94: #{lenet_forward.1} parent=5 // pred_check_branch
      %542 = sbr.rel (%p539) target = $region96
    $region95: #{lenet_forward.1} parent=5 // pred_region
      %s543 = ssub.s32 %s25, 1
      %s544 = smul.u32 32, %s30
      %p545 = scmp.lt.s32.totalorder %s544, 63
      %s546 = scalar_select %p545, %s544, 63
      %s547 = smul.addr %s546, 4
      %s548 = scalar_lea.vmem %s0, %s547
      %p549 = pneg %p51
      %p550 = pneg %p48
      %p551 = pneg %p72
      %p552 = pneg %p69
      %p553 = pneg %p93
      %p554 = pneg %p90
      %p555 = pneg %p114
      %p556 = pneg %p111
      %p557 = pneg %p135
      %p558 = pneg %p132
      %p559 = pneg %p156
      %p560 = pneg %p153
      %p561 = pneg %p177
      %p562 = pneg %p174
      %p563 = pneg %p198
      %p564 = pneg %p195
      %p565 = pneg %p219
      %p566 = pneg %p216
      %p567 = pneg %p240
      %p568 = pneg %p237
      %p569 = pneg %p261
      %p570 = pneg %p258
      %p571 = pneg %p282
      %p572 = pneg %p279
      %p573 = pneg %p303
      %p574 = pneg %p300
      %p575 = pneg %p324
      %p576 = pneg %p321
      %p577 = pneg %p345
      %p578 = pneg %p342
      %p579 = pneg %p366
      %p580 = pneg %p363
      %p581 = pneg %p387
      %p582 = pneg %p384
      %p583 = pneg %p408
      %p584 = pneg %p405
      %p585 = pneg %p429
      %p586 = pneg %p426
      %p587 = pneg %p455
      %p588 = pneg %p452
      %p589 = scmp.lt.s32.totalorder %s30, 1
      %s590 = scalar_select %p589, %s30, 1
      %s591 = smul.addr %s590, 8
      %s592 = scalar_lea.vmem %s19, %s591
      %s593 = smul.u32 32, %s30
      %p594 = scmp.lt.s32.totalorder %s593, 63
      %s595 = scalar_select %p594, %s593, 63
      %s596 = smul.addr %s595, 4
      %s597 = scalar_lea.vmem %s0, %s596
      %s598 = smul.u32 32, %s30
      %p599 = scmp.lt.s32.totalorder %s30, 1
      %s600 = scalar_select %p599, %s30, 1
      %s601 = smul.addr %s600, 8
      %s602 = scalar_lea.vmem %s19, %s601
      %v604 = vld [vmem:[%s597] sm:$0xf]
      %v605 = vld [vmem:[%s597 + $0x4] sm:$0xf]
      %v606 = vld [vmem:[%s597 + $0x8] sm:$0xf]
      %v607 = vld [vmem:[%s597 + $0xc] sm:$0xf]
      %v608 = vld [vmem:[%s597 + $0x10] sm:$0xf]
      %v609 = vld [vmem:[%s597 + $0x14] sm:$0xf]
      %v610 = vld [vmem:[%s597 + $0x18] sm:$0xf]
      %v611 = vld [vmem:[%s597 + $0x1c] sm:$0xf]
      %v612 = vld [vmem:[%s597 + $0x20] sm:$0xf]
      %v613 = vld [vmem:[%s597 + $0x24] sm:$0xf]
      %v614 = vld [vmem:[%s597 + $0x28] sm:$0xf]
      %v615 = vld [vmem:[%s597 + $0x2c] sm:$0xf]
      %v616 = vld [vmem:[%s597 + $0x30] sm:$0xf]
      %v617 = vld [vmem:[%s597 + $0x34] sm:$0xf]
      %v618 = vld [vmem:[%s597 + $0x38] sm:$0xf]
      %v619 = vld [vmem:[%s597 + $0x3c] sm:$0xf]
      %v620 = vld [vmem:[%s597 + $0x40] sm:$0xf]
      %v621 = vld [vmem:[%s597 + $0x44] sm:$0xf]
      %v622 = vld [vmem:[%s597 + $0x48] sm:$0xf]
      %v623 = vld [vmem:[%s597 + $0x4c] sm:$0xf]
      %v624 = vld [vmem:[%s597 + $0x50] sm:$0xf]
      %v625 = vld [vmem:[%s597 + $0x54] sm:$0xf]
      %v626 = vld [vmem:[%s597 + $0x58] sm:$0xf]
      %v627 = vld [vmem:[%s597 + $0x5c] sm:$0xf]
      %v628 = vld [vmem:[%s597 + $0x60] sm:$0xf]
      %v629 = vld [vmem:[%s597 + $0x64] sm:$0xf]
      %v630 = vld [vmem:[%s597 + $0x68] sm:$0xf]
      %v631 = vld [vmem:[%s597 + $0x6c] sm:$0xf]
      %v632 = vld [vmem:[%s597 + $0x70] sm:$0xf]
      %v633 = vld [vmem:[%s597 + $0x74] sm:$0xf]
      %v634 = vld [vmem:[%s597 + $0x78] sm:$0xf]
      %v635 = vld [vmem:[%s597 + $0x7c] sm:$0xf]
      %v636 = vld [vmem:[%s1] sm:$0xff]
      %v637 = vld [vmem:[%s1 + $0x8] sm:$0xff]
      %v638 = vld [vmem:[%s1 + $0x10] sm:$0xff]
      %v639 = vld [vmem:[%s1 + $0x18] sm:$0xff]
      %v640 = vld [vmem:[%s1 + $0x20] sm:$0xff]
      %v641 = vld [vmem:[%s1 + $0x28] sm:$0xff]
      %v642 = vld [vmem:[%s1 + $0x30] sm:$0xff]
      %v643 = vld [vmem:[%s1 + $0x38] sm:$0xff]
      %v644 = vld [vmem:[%s1 + $0x40] sm:$0xff]
      %v645 = vld [vmem:[%s1 + $0x48] sm:$0xff]
      %v646 = vld [vmem:[%s1 + $0x50] sm:$0xff]
      %v647 = vld [vmem:[%s1 + $0x58] sm:$0xff]
      %v680 = vunpack.c.l.b16 %v604
      %v681 = vunpack.c.l.b16 %v605
      %v682 = vunpack.c.l.b16 %v606
      %v683 = vunpack.c.l.b16 %v607
      %v684 = vunpack.c.l.b16 %v608
      %v685 = vunpack.c.l.b16 %v609
      %v686 = vunpack.c.l.b16 %v610
      %v687 = vunpack.c.l.b16 %v611
      %v688 = vunpack.c.l.b16 %v612
      %v689 = vunpack.c.l.b16 %v613
      %v690 = vunpack.c.l.b16 %v614
      %v691 = vunpack.c.l.b16 %v615
      %v692 = vunpack.c.l.b16 %v616
      %v693 = vunpack.c.l.b16 %v617
      %v694 = vunpack.c.l.b16 %v618
      %v695 = vunpack.c.l.b16 %v619
      %v696 = vunpack.c.l.b16 %v620
      %v697 = vunpack.c.l.b16 %v621
      %v698 = vunpack.c.l.b16 %v622
      %v699 = vunpack.c.l.b16 %v623
      %v700 = vunpack.c.l.b16 %v624
      %v701 = vunpack.c.l.b16 %v625
      %v702 = vunpack.c.l.b16 %v626
      %v703 = vunpack.c.l.b16 %v627
      %v704 = vunpack.c.l.b16 %v628
      %v705 = vunpack.c.l.b16 %v629
      %v706 = vunpack.c.l.b16 %v630
      %v707 = vunpack.c.l.b16 %v631
      %v708 = vunpack.c.l.b16 %v632
      %v709 = vunpack.c.l.b16 %v633
      %v710 = vunpack.c.l.b16 %v634
      %v711 = vunpack.c.l.b16 %v635
      %v712 = vpack.c.b16 %v681, %v680
      %v713 = vpack.c.b16 %v683, %v682
      %v714 = vpack.c.b16 %v685, %v684
      %v715 = vpack.c.b16 %v687, %v686
      %v716 = vpack.c.b16 %v689, %v688
      %v717 = vpack.c.b16 %v691, %v690
      %v718 = vpack.c.b16 %v693, %v692
      %v719 = vpack.c.b16 %v695, %v694
      %v720 = vpack.c.b16 %v697, %v696
      %v721 = vpack.c.b16 %v699, %v698
      %v722 = vpack.c.b16 %v701, %v700
      %v723 = vpack.c.b16 %v703, %v702
      %v724 = vpack.c.b16 %v705, %v704
      %v725 = vpack.c.b16 %v707, %v706
      %v726 = vpack.c.b16 %v709, %v708
      %v727 = vpack.c.b16 %v711, %v710
      %v740 = vunpack.c.l.b16 %v636
      %v741 = vunpack.c.h.b16 %v636
      %v742 = vunpack.c.l.b16 %v637
      %v743 = vunpack.c.h.b16 %v637
      %v744 = vunpack.c.l.b16 %v638
      %v745 = vunpack.c.h.b16 %v638
      %v746 = vunpack.c.l.b16 %v639
      %v747 = vunpack.c.h.b16 %v639
      %v748 = vunpack.c.l.b16 %v640
      %v749 = vunpack.c.h.b16 %v640
      %v750 = vunpack.c.l.b16 %v641
      %v751 = vunpack.c.h.b16 %v641
      %v752 = vunpack.c.l.b16 %v642
      %v753 = vunpack.c.h.b16 %v642
      %v754 = vunpack.c.l.b16 %v643
      %v755 = vunpack.c.h.b16 %v643
      %v756 = vunpack.c.l.b16 %v644
      %v757 = vunpack.c.h.b16 %v644
      %v758 = vunpack.c.l.b16 %v645
      %v759 = vunpack.c.h.b16 %v645
      %v760 = vunpack.c.l.b16 %v646
      %v761 = vunpack.c.h.b16 %v646
      %v762 = vunpack.c.l.b16 %v647
      %v763 = vunpack.c.h.b16 %v647
      %v764 = vpack.c.b16 %v742, %v740
      %v765 = vpack.c.b16 %v743, %v741
      %v766 = vpack.c.b16 %v746, %v744
      %v767 = vpack.c.b16 %v747, %v745
      %v768 = vpack.c.b16 %v750, %v748
      %v769 = vpack.c.b16 %v751, %v749
      %v770 = vpack.c.b16 %v754, %v752
      %v771 = vpack.c.b16 %v755, %v753
      %v772 = vpack.c.b16 %v758, %v756
      %v773 = vpack.c.b16 %v759, %v757
      %v774 = vpack.c.b16 %v762, %v760
      %v775 = vpack.c.b16 %v763, %v761
      %vm788 = vcmask 785408
      %v790 = vsel %vm788, %v712, 0
      %v793 = vsel %vm788, %v713, 0
      %v796 = vsel %vm788, %v714, 0
      %v799 = vsel %vm788, %v715, 0
      %v802 = vsel %vm788, %v716, 0
      %v805 = vsel %vm788, %v717, 0
      %v808 = vsel %vm788, %v718, 0
      %v811 = vsel %vm788, %v719, 0
      %v814 = vsel %vm788, %v720, 0
      %v817 = vsel %vm788, %v721, 0
      %v820 = vsel %vm788, %v722, 0
      %v823 = vsel %vm788, %v723, 0
      %v826 = vsel %vm788, %v724, 0
      %v829 = vsel %vm788, %v725, 0
      %v832 = vsel %vm788, %v726, 0
      %v835 = vsel %vm788, %v727, 0
      %837 = vmatprep.subr.bf16.mxu0 %v765
      %838 = vmatpush1.bf16.msra.mxu0 %v764
      %839 = vmatprep.subr.bf16.mxu0 %v767
      %840 = vmatpush1.bf16.msra.mxu0 %v766
      %841 = vmatprep.subr.bf16.mxu0 %v769
      %842 = vmatpush1.bf16.msra.mxu0 %v768
      %843 = vmatprep.subr.bf16.mxu0 %v771
      %844 = vmatpush1.bf16.msra.mxu0 %v770
      %845 = vmatprep.subr.bf16.mxu0 %v773
      %846 = vmatpush1.bf16.msra.mxu0 %v772
      %847 = vmatprep.subr.bf16.mxu0 %v775
      %848 = vmatpush1.bf16.msra.mxu0 %v774
      %849 = vmatprep.subr.bf16.mxu0 0
      %850 = vmatpush1.bf16.msra.mxu0 0
      %851 = vmatprep.subr.bf16.mxu0 0
      %852 = vmatpush1.bf16.msra.mxu0 0
      %853 = vmatprep.subr.bf16.mxu0 0
      %854 = vmatpush1.bf16.msra.mxu0 0
      %855 = vmatprep.subr.bf16.mxu0 0
      %856 = vmatpush1.bf16.msra.mxu0 0
      %857 = vmatprep.subr.bf16.mxu0 0
      %858 = vmatpush1.bf16.msra.mxu0 0
      %859 = vmatprep.subr.bf16.mxu0 0
      %860 = vmatpush1.bf16.msra.mxu0 0
      %861 = vmatprep.subr.bf16.mxu0 0
      %862 = vmatpush1.bf16.msra.mxu0 0
      %863 = vmatprep.subr.bf16.mxu0 0
      %864 = vmatpush1.bf16.msra.mxu0 0
      %865 = vmatprep.subr.bf16.mxu0 0
      %866 = vmatpush1.bf16.msra.mxu0 0
      %867 = vmatprep.subr.bf16.mxu0 0
      %868 = vmatpush1.bf16.msra.mxu0 0
      %869 = vmatprep.mubr.bf16.mxu0 0
      %870 = vmatmul.mubr.bf16.gmra.mrb[0].mxu0 %v790
      %v871 = vpop.f32.mrb[0].mxu0
      %v872 = vadd.f32 0.0, %v871
      %v873 = vpop.f32.mrb[0].mxu0
      %v874 = vadd.f32 0.0, %v873
      %v875 = vpop.f32.mrb[0].mxu0
      %v876 = vadd.f32 0.0, %v875
      %v877 = vpop.f32.mrb[0].mxu0
      %v878 = vadd.f32 0.0, %v877
      %879 = vmatprep.mubr.bf16.mxu0 0
      %880 = vmatmul.mubr.bf16.gmra.mrb[0].mxu0 %v793
      %v881 = vpop.f32.mrb[0].mxu0
      %v882 = vadd.f32 0.0, %v881
      %v883 = vpop.f32.mrb[0].mxu0
      %v884 = vadd.f32 0.0, %v883
      %v885 = vpop.f32.mrb[0].mxu0
      %v886 = vadd.f32 0.0, %v885
      %v887 = vpop.f32.mrb[0].mxu0
      %v888 = vadd.f32 0.0, %v887
      %889 = vmatprep.mubr.bf16.mxu0 0
      %890 = vmatmul.mubr.bf16.gmra.mrb[0].mxu0 %v796
      %v891 = vpop.f32.mrb[0].mxu0
      %v892 = vadd.f32 0.0, %v891
      %v893 = vpop.f32.mrb[0].mxu0
      %v894 = vadd.f32 0.0, %v893
      %v895 = vpop.f32.mrb[0].mxu0
      %v896 = vadd.f32 0.0, %v895
      %v897 = vpop.f32.mrb[0].mxu0
      %v898 = vadd.f32 0.0, %v897
      %899 = vmatprep.mubr.bf16.mxu0 0
      %900 = vmatmul.mubr.bf16.gmra.mrb[0].mxu0 %v799
      %v901 = vpop.f32.mrb[0].mxu0
      %v902 = vadd.f32 0.0, %v901
      %v903 = vpop.f32.mrb[0].mxu0
      %v904 = vadd.f32 0.0, %v903
      %v905 = vpop.f32.mrb[0].mxu0
      %v906 = vadd.f32 0.0, %v905
      %v907 = vpop.f32.mrb[0].mxu0
      %v908 = vadd.f32 0.0, %v907
      %909 = vmatprep.mubr.bf16.mxu0 0
      %910 = vmatmul.mubr.bf16.gmra.mrb[0].mxu0 %v802
      %v911 = vpop.f32.mrb[0].mxu0
      %v912 = vadd.f32 0.0, %v911
      %v913 = vpop.f32.mrb[0].mxu0
      %v914 = vadd.f32 0.0, %v913
      %v915 = vpop.f32.mrb[0].mxu0
      %v916 = vadd.f32 0.0, %v915
      %v917 = vpop.f32.mrb[0].mxu0
      %v918 = vadd.f32 0.0, %v917
      %919 = vmatprep.mubr.bf16.mxu0 0
      %920 = vmatmul.mubr.bf16.gmra.mrb[0].mxu0 %v805
      %v921 = vpop.f32.mrb[0].mxu0
      %v922 = vadd.f32 0.0, %v921
      %v923 = vpop.f32.mrb[0].mxu0
      %v924 = vadd.f32 0.0, %v923
      %v925 = vpop.f32.mrb[0].mxu0
      %v926 = vadd.f32 0.0, %v925
      %v927 = vpop.f32.mrb[0].mxu0
      %v928 = vadd.f32 0.0, %v927
      %929 = vmatprep.mubr.bf16.mxu0 0
      %930 = vmatmul.mubr.bf16.gmra.mrb[0].mxu0 %v808
      %v931 = vpop.f32.mrb[0].mxu0
      %v932 = vadd.f32 0.0, %v931
      %v933 = vpop.f32.mrb[0].mxu0
      %v934 = vadd.f32 0.0, %v933
      %v935 = vpop.f32.mrb[0].mxu0
      %v936 = vadd.f32 0.0, %v935
      %v937 = vpop.f32.mrb[0].mxu0
      %v938 = vadd.f32 0.0, %v937
      %939 = vmatprep.mubr.bf16.mxu0 0
      %940 = vmatmul.mubr.bf16.gmra.mrb[0].mxu0 %v811
      %v941 = vpop.f32.mrb[0].mxu0
      %v942 = vadd.f32 0.0, %v941
      %v943 = vpop.f32.mrb[0].mxu0
      %v944 = vadd.f32 0.0, %v943
      %v945 = vpop.f32.mrb[0].mxu0
      %v946 = vadd.f32 0.0, %v945
      %v947 = vpop.f32.mrb[0].mxu0
      %v948 = vadd.f32 0.0, %v947
      %949 = vmatprep.mubr.bf16.mxu0 0
      %950 = vmatmul.mubr.bf16.gmra.mrb[0].mxu0 %v814
      %v951 = vpop.f32.mrb[0].mxu0
      %v952 = vadd.f32 0.0, %v951
      %v953 = vpop.f32.mrb[0].mxu0
      %v954 = vadd.f32 0.0, %v953
      %v955 = vpop.f32.mrb[0].mxu0
      %v956 = vadd.f32 0.0, %v955
      %v957 = vpop.f32.mrb[0].mxu0
      %v958 = vadd.f32 0.0, %v957
      %959 = vmatprep.mubr.bf16.mxu0 0
      %960 = vmatmul.mubr.bf16.gmra.mrb[0].mxu0 %v817
      %v961 = vpop.f32.mrb[0].mxu0
      %v962 = vadd.f32 0.0, %v961
      %v963 = vpop.f32.mrb[0].mxu0
      %v964 = vadd.f32 0.0, %v963
      %v965 = vpop.f32.mrb[0].mxu0
      %v966 = vadd.f32 0.0, %v965
      %v967 = vpop.f32.mrb[0].mxu0
      %v968 = vadd.f32 0.0, %v967
      %969 = vmatprep.mubr.bf16.mxu0 0
      %970 = vmatmul.mubr.bf16.gmra.mrb[0].mxu0 %v820
      %v971 = vpop.f32.mrb[0].mxu0
      %v972 = vadd.f32 0.0, %v971
      %v973 = vpop.f32.mrb[0].mxu0
      %v974 = vadd.f32 0.0, %v973
      %v975 = vpop.f32.mrb[0].mxu0
      %v976 = vadd.f32 0.0, %v975
      %v977 = vpop.f32.mrb[0].mxu0
      %v978 = vadd.f32 0.0, %v977
      %979 = vmatprep.mubr.bf16.mxu0 0
      %980 = vmatmul.mubr.bf16.gmra.mrb[0].mxu0 %v823
      %v981 = vpop.f32.mrb[0].mxu0
      %v982 = vadd.f32 0.0, %v981
      %v983 = vpop.f32.mrb[0].mxu0
      %v984 = vadd.f32 0.0, %v983
      %v985 = vpop.f32.mrb[0].mxu0
      %v986 = vadd.f32 0.0, %v985
      %v987 = vpop.f32.mrb[0].mxu0
      %v988 = vadd.f32 0.0, %v987
      %989 = vmatprep.mubr.bf16.mxu0 0
      %990 = vmatmul.mubr.bf16.gmra.mrb[0].mxu0 %v826
      %v991 = vpop.f32.mrb[0].mxu0
      %v992 = vadd.f32 0.0, %v991
      %v993 = vpop.f32.mrb[0].mxu0
      %v994 = vadd.f32 0.0, %v993
      %v995 = vpop.f32.mrb[0].mxu0
      %v996 = vadd.f32 0.0, %v995
      %v997 = vpop.f32.mrb[0].mxu0
      %v998 = vadd.f32 0.0, %v997
      %999 = vmatprep.mubr.bf16.mxu0 0
      %1000 = vmatmul.mubr.bf16.gmra.mrb[0].mxu0 %v829
      %v1001 = vpop.f32.mrb[0].mxu0
      %v1002 = vadd.f32 0.0, %v1001
      %v1003 = vpop.f32.mrb[0].mxu0
      %v1004 = vadd.f32 0.0, %v1003
      %v1005 = vpop.f32.mrb[0].mxu0
      %v1006 = vadd.f32 0.0, %v1005
      %v1007 = vpop.f32.mrb[0].mxu0
      %v1008 = vadd.f32 0.0, %v1007
      %1009 = vmatprep.mubr.bf16.mxu0 0
      %1010 = vmatmul.mubr.bf16.gmra.mrb[0].mxu0 %v832
      %v1011 = vpop.f32.mrb[0].mxu0
      %v1012 = vadd.f32 0.0, %v1011
      %v1013 = vpop.f32.mrb[0].mxu0
      %v1014 = vadd.f32 0.0, %v1013
      %v1015 = vpop.f32.mrb[0].mxu0
      %v1016 = vadd.f32 0.0, %v1015
      %v1017 = vpop.f32.mrb[0].mxu0
      %v1018 = vadd.f32 0.0, %v1017
      %1019 = vmatprep.mubr.bf16.mxu0 0
      %1020 = vmatmul.mubr.bf16.gmra.mrb[0].mxu0 %v835
      %v1021 = vpop.f32.mrb[0].mxu0
      %v1022 = vadd.f32 0.0, %v1021
      %v1023 = vpop.f32.mrb[0].mxu0
      %v1024 = vadd.f32 0.0, %v1023
      %v1025 = vpop.f32.mrb[0].mxu0
      %v1026 = vadd.f32 0.0, %v1025
      %v1027 = vpop.f32.mrb[0].mxu0
      %v1028 = vadd.f32 0.0, %v1027
      %1029 = vdwg.mxu0
      %1030 = vst [vmem:[#allocation2] sm:$0xff] %v872
      %vm1031 = vcmask 326656
      %1032 = vst.msk [vmem:[#allocation2 + $0x8] sm:$0xff] %vm1031, %v874
      %1033 = vst [vmem:[#allocation2 + $0x10] sm:$0xff] %v876
      %1034 = vst.msk [vmem:[#allocation2 + $0x18] sm:$0xff] %vm1031, %v878
      %1035 = vst [vmem:[#allocation2 + $0x20] sm:$0xff] %v882
      %1036 = vst.msk [vmem:[#allocation2 + $0x28] sm:$0xff] %vm1031, %v884
      %1037 = vst [vmem:[#allocation2 + $0x30] sm:$0xff] %v886
      %1038 = vst.msk [vmem:[#allocation2 + $0x38] sm:$0xff] %vm1031, %v888
      %1039 = vst [vmem:[#allocation2 + $0x40] sm:$0xff] %v892
      %1040 = vst.msk [vmem:[#allocation2 + $0x48] sm:$0xff] %vm1031, %v894
      %1041 = vst [vmem:[#allocation2 + $0x50] sm:$0xff] %v896
      %1042 = vst.msk [vmem:[#allocation2 + $0x58] sm:$0xff] %vm1031, %v898
      %1043 = vst [vmem:[#allocation2 + $0x60] sm:$0xff] %v902
      %1044 = vst.msk [vmem:[#allocation2 + $0x68] sm:$0xff] %vm1031, %v904
      %1045 = vst [vmem:[#allocation2 + $0x70] sm:$0xff] %v906
      %1046 = vst.msk [vmem:[#allocation2 + $0x78] sm:$0xff] %vm1031, %v908
      %1047 = vst [vmem:[#allocation2 + $0x80] sm:$0xff] %v912
      %1048 = vst.msk [vmem:[#allocation2 + $0x88] sm:$0xff] %vm1031, %v914
      %1049 = vst [vmem:[#allocation2 + $0x90] sm:$0xff] %v916
      %1050 = vst.msk [vmem:[#allocation2 + $0x98] sm:$0xff] %vm1031, %v918
      %1051 = vst [vmem:[#allocation2 + $0xa0] sm:$0xff] %v922
      %1052 = vst.msk [vmem:[#allocation2 + $0xa8] sm:$0xff] %vm1031, %v924
      %1053 = vst [vmem:[#allocation2 + $0xb0] sm:$0xff] %v926
      %1054 = vst.msk [vmem:[#allocation2 + $0xb8] sm:$0xff] %vm1031, %v928
      %1055 = vst [vmem:[#allocation2 + $0xc0] sm:$0xff] %v932
      %1056 = vst.msk [vmem:[#allocation2 + $0xc8] sm:$0xff] %vm1031, %v934
      %1057 = vst [vmem:[#allocation2 + $0xd0] sm:$0xff] %v936
      %1058 = vst.msk [vmem:[#allocation2 + $0xd8] sm:$0xff] %vm1031, %v938
      %1059 = vst [vmem:[#allocation2 + $0xe0] sm:$0xff] %v942
      %1060 = vst.msk [vmem:[#allocation2 + $0xe8] sm:$0xff] %vm1031, %v944
      %1061 = vst [vmem:[#allocation2 + $0xf0] sm:$0xff] %v946
      %1062 = vst.msk [vmem:[#allocation2 + $0xf8] sm:$0xff] %vm1031, %v948
      %1063 = vst [vmem:[#allocation2 + $0x100] sm:$0xff] %v952
      %1064 = vst.msk [vmem:[#allocation2 + $0x108] sm:$0xff] %vm1031, %v954
      %1065 = vst [vmem:[#allocation2 + $0x110] sm:$0xff] %v956
      %1066 = vst.msk [vmem:[#allocation2 + $0x118] sm:$0xff] %vm1031, %v958
      %1067 = vst [vmem:[#allocation2 + $0x120] sm:$0xff] %v962
      %1068 = vst.msk [vmem:[#allocation2 + $0x128] sm:$0xff] %vm1031, %v964
      %1069 = vst [vmem:[#allocation2 + $0x130] sm:$0xff] %v966
      %1070 = vst.msk [vmem:[#allocation2 + $0x138] sm:$0xff] %vm1031, %v968
      %1071 = vst [vmem:[#allocation2 + $0x140] sm:$0xff] %v972
      %1072 = vst.msk [vmem:[#allocation2 + $0x148] sm:$0xff] %vm1031, %v974
      %1073 = vst [vmem:[#allocation2 + $0x150] sm:$0xff] %v976
      %1074 = vst.msk [vmem:[#allocation2 + $0x158] sm:$0xff] %vm1031, %v978
      %1075 = vst [vmem:[#allocation2 + $0x160] sm:$0xff] %v982
      %1076 = vst.msk [vmem:[#allocation2 + $0x168] sm:$0xff] %vm1031, %v984
      %1077 = vst [vmem:[#allocation2 + $0x170] sm:$0xff] %v986
      %1078 = vst.msk [vmem:[#allocation2 + $0x178] sm:$0xff] %vm1031, %v988
      %1079 = vst [vmem:[#allocation2 + $0x180] sm:$0xff] %v992
      %1080 = vst.msk [vmem:[#allocation2 + $0x188] sm:$0xff] %vm1031, %v994
      %1081 = vst [vmem:[#allocation2 + $0x190] sm:$0xff] %v996
      %1082 = vst.msk [vmem:[#allocation2 + $0x198] sm:$0xff] %vm1031, %v998
      %1083 = vst [vmem:[#allocation2 + $0x1a0] sm:$0xff] %v1002
      %1084 = vst.msk [vmem:[#allocation2 + $0x1a8] sm:$0xff] %vm1031, %v1004
      %1085 = vst [vmem:[#allocation2 + $0x1b0] sm:$0xff] %v1006
      %1086 = vst.msk [vmem:[#allocation2 + $0x1b8] sm:$0xff] %vm1031, %v1008
      %1087 = vst [vmem:[#allocation2 + $0x1c0] sm:$0xff] %v1012
      %1088 = vst.msk [vmem:[#allocation2 + $0x1c8] sm:$0xff] %vm1031, %v1014
      %1089 = vst [vmem:[#allocation2 + $0x1d0] sm:$0xff] %v1016
      %1090 = vst.msk [vmem:[#allocation2 + $0x1d8] sm:$0xff] %vm1031, %v1018
      %1091 = vst [vmem:[#allocation2 + $0x1e0] sm:$0xff] %v1022
      %1092 = vst.msk [vmem:[#allocation2 + $0x1e8] sm:$0xff] %vm1031, %v1024
      %1093 = vst [vmem:[#allocation2 + $0x1f0] sm:$0xff] %v1026
      %1094 = vst.msk [vmem:[#allocation2 + $0x1f8] sm:$0xff] %vm1031, %v1028
      %s1095 = scalar_lea.vmem %s1, 96
      %v1096 = vld [vmem:[%s1095] sm:$0xff]
      %v1097 = vld [vmem:[%s1095 + $0x8] sm:$0xff]
      %v1098 = vld [vmem:[%s1095 + $0x10] sm:$0xff]
      %v1099 = vld [vmem:[%s1095 + $0x18] sm:$0xff]
      %v1100 = vld [vmem:[%s1095 + $0x20] sm:$0xff]
      %v1101 = vld [vmem:[%s1095 + $0x28] sm:$0xff]
      %v1102 = vld [vmem:[%s1095 + $0x30] sm:$0xff]
      %v1103 = vld [vmem:[%s1095 + $0x38] sm:$0xff]
      %v1104 = vld [vmem:[%s1095 + $0x40] sm:$0xff]
      %v1105 = vld [vmem:[%s1095 + $0x48] sm:$0xff]
      %v1106 = vld [vmem:[%s1095 + $0x50] sm:$0xff]
      %v1107 = vld [vmem:[%s1095 + $0x58] sm:$0xff]
      %v1120 = vunpack.c.l.b16 %v1096
      %v1121 = vunpack.c.h.b16 %v1096
      %v1122 = vunpack.c.l.b16 %v1097
      %v1123 = vunpack.c.h.b16 %v1097
      %v1124 = vunpack.c.l.b16 %v1098
      %v1125 = vunpack.c.h.b16 %v1098
      %v1126 = vunpack.c.l.b16 %v1099
      %v1127 = vunpack.c.h.b16 %v1099
      %v1128 = vunpack.c.l.b16 %v1100
      %v1129 = vunpack.c.h.b16 %v1100
      %v1130 = vunpack.c.l.b16 %v1101
      %v1131 = vunpack.c.h.b16 %v1101
      %v1132 = vunpack.c.l.b16 %v1102
      %v1133 = vunpack.c.h.b16 %v1102
      %v1134 = vunpack.c.l.b16 %v1103
      %v1135 = vunpack.c.h.b16 %v1103
      %v1136 = vunpack.c.l.b16 %v1104
      %v1137 = vunpack.c.h.b16 %v1104
      %v1138 = vunpack.c.l.b16 %v1105
      %v1139 = vunpack.c.h.b16 %v1105
      %v1140 = vunpack.c.l.b16 %v1106
      %v1141 = vunpack.c.h.b16 %v1106
      %v1142 = vunpack.c.l.b16 %v1107
      %v1143 = vunpack.c.h.b16 %v1107
      %v1144 = vpack.c.b16 %v1122, %v1120
      %v1145 = vpack.c.b16 %v1123, %v1121
      %v1146 = vpack.c.b16 %v1126, %v1124
      %v1147 = vpack.c.b16 %v1127, %v1125
      %v1148 = vpack.c.b16 %v1130, %v1128
      %v1149 = vpack.c.b16 %v1131, %v1129
      %v1150 = vpack.c.b16 %v1134, %v1132
      %v1151 = vpack.c.b16 %v1135, %v1133
      %v1152 = vpack.c.b16 %v1138, %v1136
      %v1153 = vpack.c.b16 %v1139, %v1137
      %v1154 = vpack.c.b16 %v1142, %v1140
      %v1155 = vpack.c.b16 %v1143, %v1141
      %1168 = vmatprep.subr.bf16.mxu0 %v1145
      %1169 = vmatpush1.bf16.msra.mxu0 %v1144
      %1170 = vmatprep.subr.bf16.mxu0 %v1147
      %1171 = vmatpush1.bf16.msra.mxu0 %v1146
      %1172 = vmatprep.subr.bf16.mxu0 %v1149
      %1173 = vmatpush1.bf16.msra.mxu0 %v1148
      %1174 = vmatprep.subr.bf16.mxu0 %v1151
      %1175 = vmatpush1.bf16.msra.mxu0 %v1150
      %1176 = vmatprep.subr.bf16.mxu0 %v1153
      %1177 = vmatpush1.bf16.msra.mxu0 %v1152
      %1178 = vmatprep.subr.bf16.mxu0 %v1155
      %1179 = vmatpush1.bf16.msra.mxu0 %v1154
      %1180 = vmatprep.subr.bf16.mxu0 0
      %1181 = vmatpush1.bf16.msra.mxu0 0
      %1182 = vmatprep.subr.bf16.mxu0 0
      %1183 = vmatpush1.bf16.msra.mxu0 0
      %1184 = vmatprep.subr.bf16.mxu0 0
      %1185 = vmatpush1.bf16.msra.mxu0 0
      %1186 = vmatprep.subr.bf16.mxu0 0
      %1187 = vmatpush1.bf16.msra.mxu0 0
      %1188 = vmatprep.subr.bf16.mxu0 0
      %1189 = vmatpush1.bf16.msra.mxu0 0
      %1190 = vmatprep.subr.bf16.mxu0 0
      %1191 = vmatpush1.bf16.msra.mxu0 0
      %1192 = vmatprep.subr.bf16.mxu0 0
      %1193 = vmatpush1.bf16.msra.mxu0 0
      %1194 = vmatprep.subr.bf16.mxu0 0
      %1195 = vmatpush1.bf16.msra.mxu0 0
      %1196 = vmatprep.subr.bf16.mxu0 0
      %1197 = vmatpush1.bf16.msra.mxu0 0
      %1198 = vmatprep.subr.bf16.mxu0 0
      %1199 = vmatpush1.bf16.msra.mxu0 0
      %1200 = vmatprep.mubr.bf16.mxu0 0
      %1201 = vmatmul.mubr.bf16.gmra.mrb[0].mxu0 %v790
      %v1202 = vpop.f32.mrb[0].mxu0
      %v1203 = vadd.f32 0.0, %v1202
      %v1204 = vpop.f32.mrb[0].mxu0
      %v1205 = vadd.f32 0.0, %v1204
      %v1206 = vpop.f32.mrb[0].mxu0
      %v1207 = vadd.f32 0.0, %v1206
      %v1208 = vpop.f32.mrb[0].mxu0
      %v1209 = vadd.f32 0.0, %v1208
      %1210 = vmatprep.mubr.bf16.mxu0 0
      %1211 = vmatmul.mubr.bf16.gmra.mrb[0].mxu0 %v793
      %v1212 = vpop.f32.mrb[0].mxu0
      %v1213 = vadd.f32 0.0, %v1212
      %v1214 = vpop.f32.mrb[0].mxu0
      %v1215 = vadd.f32 0.0, %v1214
      %v1216 = vpop.f32.mrb[0].mxu0
      %v1217 = vadd.f32 0.0, %v1216
      %v1218 = vpop.f32.mrb[0].mxu0
      %v1219 = vadd.f32 0.0, %v1218
      %1220 = vmatprep.mubr.bf16.mxu0 0
      %1221 = vmatmul.mubr.bf16.gmra.mrb[0].mxu0 %v796
      %v1222 = vpop.f32.mrb[0].mxu0
      %v1223 = vadd.f32 0.0, %v1222
      %v1224 = vpop.f32.mrb[0].mxu0
      %v1225 = vadd.f32 0.0, %v1224
      %v1226 = vpop.f32.mrb[0].mxu0
      %v1227 = vadd.f32 0.0, %v1226
      %v1228 = vpop.f32.mrb[0].mxu0
      %v1229 = vadd.f32 0.0, %v1228
      %1230 = vmatprep.mubr.bf16.mxu0 0
      %1231 = vmatmul.mubr.bf16.gmra.mrb[0].mxu0 %v799
      %v1232 = vpop.f32.mrb[0].mxu0
      %v1233 = vadd.f32 0.0, %v1232
      %v1234 = vpop.f32.mrb[0].mxu0
      %v1235 = vadd.f32 0.0, %v1234
      %v1236 = vpop.f32.mrb[0].mxu0
      %v1237 = vadd.f32 0.0, %v1236
      %v1238 = vpop.f32.mrb[0].mxu0
      %v1239 = vadd.f32 0.0, %v1238
      %1240 = vmatprep.mubr.bf16.mxu0 0
      %1241 = vmatmul.mubr.bf16.gmra.mrb[0].mxu0 %v802
      %v1242 = vpop.f32.mrb[0].mxu0
      %v1243 = vadd.f32 0.0, %v1242
      %v1244 = vpop.f32.mrb[0].mxu0
      %v1245 = vadd.f32 0.0, %v1244
      %v1246 = vpop.f32.mrb[0].mxu0
      %v1247 = vadd.f32 0.0, %v1246
      %v1248 = vpop.f32.mrb[0].mxu0
      %v1249 = vadd.f32 0.0, %v1248
      %1250 = vmatprep.mubr.bf16.mxu0 0
      %1251 = vmatmul.mubr.bf16.gmra.mrb[0].mxu0 %v805
      %v1252 = vpop.f32.mrb[0].mxu0
      %v1253 = vadd.f32 0.0, %v1252
      %v1254 = vpop.f32.mrb[0].mxu0
      %v1255 = vadd.f32 0.0, %v1254
      %v1256 = vpop.f32.mrb[0].mxu0
      %v1257 = vadd.f32 0.0, %v1256
      %v1258 = vpop.f32.mrb[0].mxu0
      %v1259 = vadd.f32 0.0, %v1258
      %1260 = vmatprep.mubr.bf16.mxu0 0
      %1261 = vmatmul.mubr.bf16.gmra.mrb[0].mxu0 %v808
      %v1262 = vpop.f32.mrb[0].mxu0
      %v1263 = vadd.f32 0.0, %v1262
      %v1264 = vpop.f32.mrb[0].mxu0
      %v1265 = vadd.f32 0.0, %v1264
      %v1266 = vpop.f32.mrb[0].mxu0
      %v1267 = vadd.f32 0.0, %v1266
      %v1268 = vpop.f32.mrb[0].mxu0
      %v1269 = vadd.f32 0.0, %v1268
      %1270 = vmatprep.mubr.bf16.mxu0 0
      %1271 = vmatmul.mubr.bf16.gmra.mrb[0].mxu0 %v811
      %v1272 = vpop.f32.mrb[0].mxu0
      %v1273 = vadd.f32 0.0, %v1272
      %v1274 = vpop.f32.mrb[0].mxu0
      %v1275 = vadd.f32 0.0, %v1274
      %v1276 = vpop.f32.mrb[0].mxu0
      %v1277 = vadd.f32 0.0, %v1276
      %v1278 = vpop.f32.mrb[0].mxu0
      %v1279 = vadd.f32 0.0, %v1278
      %1280 = vmatprep.mubr.bf16.mxu0 0
      %1281 = vmatmul.mubr.bf16.gmra.mrb[0].mxu0 %v814
      %v1282 = vpop.f32.mrb[0].mxu0
      %v1283 = vadd.f32 0.0, %v1282
      %v1284 = vpop.f32.mrb[0].mxu0
      %v1285 = vadd.f32 0.0, %v1284
      %v1286 = vpop.f32.mrb[0].mxu0
      %v1287 = vadd.f32 0.0, %v1286
      %v1288 = vpop.f32.mrb[0].mxu0
      %v1289 = vadd.f32 0.0, %v1288
      %1290 = vmatprep.mubr.bf16.mxu0 0
      %1291 = vmatmul.mubr.bf16.gmra.mrb[0].mxu0 %v817
      %v1292 = vpop.f32.mrb[0].mxu0
      %v1293 = vadd.f32 0.0, %v1292
      %v1294 = vpop.f32.mrb[0].mxu0
      %v1295 = vadd.f32 0.0, %v1294
      %v1296 = vpop.f32.mrb[0].mxu0
      %v1297 = vadd.f32 0.0, %v1296
      %v1298 = vpop.f32.mrb[0].mxu0
      %v1299 = vadd.f32 0.0, %v1298
      %1300 = vmatprep.mubr.bf16.mxu0 0
      %1301 = vmatmul.mubr.bf16.gmra.mrb[0].mxu0 %v820
      %v1302 = vpop.f32.mrb[0].mxu0
      %v1303 = vadd.f32 0.0, %v1302
      %v1304 = vpop.f32.mrb[0].mxu0
      %v1305 = vadd.f32 0.0, %v1304
      %v1306 = vpop.f32.mrb[0].mxu0
      %v1307 = vadd.f32 0.0, %v1306
      %v1308 = vpop.f32.mrb[0].mxu0
      %v1309 = vadd.f32 0.0, %v1308
      %1310 = vmatprep.mubr.bf16.mxu0 0
      %1311 = vmatmul.mubr.bf16.gmra.mrb[0].mxu0 %v823
      %v1312 = vpop.f32.mrb[0].mxu0
      %v1313 = vadd.f32 0.0, %v1312
      %v1314 = vpop.f32.mrb[0].mxu0
      %v1315 = vadd.f32 0.0, %v1314
      %v1316 = vpop.f32.mrb[0].mxu0
      %v1317 = vadd.f32 0.0, %v1316
      %v1318 = vpop.f32.mrb[0].mxu0
      %v1319 = vadd.f32 0.0, %v1318
      %1320 = vmatprep.mubr.bf16.mxu0 0
      %1321 = vmatmul.mubr.bf16.gmra.mrb[0].mxu0 %v826
      %v1322 = vpop.f32.mrb[0].mxu0
      %v1323 = vadd.f32 0.0, %v1322
      %v1324 = vpop.f32.mrb[0].mxu0
      %v1325 = vadd.f32 0.0, %v1324
      %v1326 = vpop.f32.mrb[0].mxu0
      %v1327 = vadd.f32 0.0, %v1326
      %v1328 = vpop.f32.mrb[0].mxu0
      %v1329 = vadd.f32 0.0, %v1328
      %1330 = vmatprep.mubr.bf16.mxu0 0
      %1331 = vmatmul.mubr.bf16.gmra.mrb[0].mxu0 %v829
      %v1332 = vpop.f32.mrb[0].mxu0
      %v1333 = vadd.f32 0.0, %v1332
      %v1334 = vpop.f32.mrb[0].mxu0
      %v1335 = vadd.f32 0.0, %v1334
      %v1336 = vpop.f32.mrb[0].mxu0
      %v1337 = vadd.f32 0.0, %v1336
      %v1338 = vpop.f32.mrb[0].mxu0
      %v1339 = vadd.f32 0.0, %v1338
      %1340 = vmatprep.mubr.bf16.mxu0 0
      %1341 = vmatmul.mubr.bf16.gmra.mrb[0].mxu0 %v832
      %v1342 = vpop.f32.mrb[0].mxu0
      %v1343 = vadd.f32 0.0, %v1342
      %v1344 = vpop.f32.mrb[0].mxu0
      %v1345 = vadd.f32 0.0, %v1344
      %v1346 = vpop.f32.mrb[0].mxu0
      %v1347 = vadd.f32 0.0, %v1346
      %v1348 = vpop.f32.mrb[0].mxu0
      %v1349 = vadd.f32 0.0, %v1348
      %1350 = vmatprep.mubr.bf16.mxu0 0
      %1351 = vmatmul.mubr.bf16.gmra.mrb[0].mxu0 %v835
      %v1352 = vpop.f32.mrb[0].mxu0
      %v1353 = vadd.f32 0.0, %v1352
      %v1354 = vpop.f32.mrb[0].mxu0
      %v1355 = vadd.f32 0.0, %v1354
      %v1356 = vpop.f32.mrb[0].mxu0
      %v1357 = vadd.f32 0.0, %v1356
      %v1358 = vpop.f32.mrb[0].mxu0
      %v1359 = vadd.f32 0.0, %v1358
      %1360 = vdwg.mxu0
      %v1361 = vld [vmem:[#allocation2] sm:$0xff]
      %v1362 = vld [vmem:[#allocation2 + $0x8] sm:$0xff]
      %v1363 = vld [vmem:[#allocation2 + $0x10] sm:$0xff]
      %v1364 = vld [vmem:[#allocation2 + $0x18] sm:$0xff]
      %v1365 = vld [vmem:[#allocation2 + $0x20] sm:$0xff]
      %v1366 = vld [vmem:[#allocation2 + $0x28] sm:$0xff]
      %v1367 = vld [vmem:[#allocation2 + $0x30] sm:$0xff]
      %v1368 = vld [vmem:[#allocation2 + $0x38] sm:$0xff]
      %v1369 = vld [vmem:[#allocation2 + $0x40] sm:$0xff]
      %v1370 = vld [vmem:[#allocation2 + $0x48] sm:$0xff]
      %v1371 = vld [vmem:[#allocation2 + $0x50] sm:$0xff]
      %v1372 = vld [vmem:[#allocation2 + $0x58] sm:$0xff]
      %v1373 = vld [vmem:[#allocation2 + $0x60] sm:$0xff]
      %v1374 = vld [vmem:[#allocation2 + $0x68] sm:$0xff]
      %v1375 = vld [vmem:[#allocation2 + $0x70] sm:$0xff]
      %v1376 = vld [vmem:[#allocation2 + $0x78] sm:$0xff]
      %v1377 = vld [vmem:[#allocation2 + $0x80] sm:$0xff]
      %v1378 = vld [vmem:[#allocation2 + $0x88] sm:$0xff]
      %v1379 = vld [vmem:[#allocation2 + $0x90] sm:$0xff]
      %v1380 = vld [vmem:[#allocation2 + $0x98] sm:$0xff]
      %v1381 = vld [vmem:[#allocation2 + $0xa0] sm:$0xff]
      %v1382 = vld [vmem:[#allocation2 + $0xa8] sm:$0xff]
      %v1383 = vld [vmem:[#allocation2 + $0xb0] sm:$0xff]
      %v1384 = vld [vmem:[#allocation2 + $0xb8] sm:$0xff]
      %v1385 = vld [vmem:[#allocation2 + $0xc0] sm:$0xff]
      %v1386 = vld [vmem:[#allocation2 + $0xc8] sm:$0xff]
      %v1387 = vld [vmem:[#allocation2 + $0xd0] sm:$0xff]
      %v1388 = vld [vmem:[#allocation2 + $0xd8] sm:$0xff]
      %v1389 = vld [vmem:[#allocation2 + $0xe0] sm:$0xff]
      %v1390 = vld [vmem:[#allocation2 + $0xe8] sm:$0xff]
      %v1391 = vld [vmem:[#allocation2 + $0xf0] sm:$0xff]
      %v1392 = vld [vmem:[#allocation2 + $0xf8] sm:$0xff]
      %v1393 = vld [vmem:[#allocation2 + $0x100] sm:$0xff]
      %v1394 = vld [vmem:[#allocation2 + $0x108] sm:$0xff]
      %v1395 = vld [vmem:[#allocation2 + $0x110] sm:$0xff]
      %v1396 = vld [vmem:[#allocation2 + $0x118] sm:$0xff]
      %v1397 = vld [vmem:[#allocation2 + $0x120] sm:$0xff]
      %v1398 = vld [vmem:[#allocation2 + $0x128] sm:$0xff]
      %v1399 = vld [vmem:[#allocation2 + $0x130] sm:$0xff]
      %v1400 = vld [vmem:[#allocation2 + $0x138] sm:$0xff]
      %v1401 = vld [vmem:[#allocation2 + $0x140] sm:$0xff]
      %v1402 = vld [vmem:[#allocation2 + $0x148] sm:$0xff]
      %v1403 = vld [vmem:[#allocation2 + $0x150] sm:$0xff]
      %v1404 = vld [vmem:[#allocation2 + $0x158] sm:$0xff]
      %v1405 = vld [vmem:[#allocation2 + $0x160] sm:$0xff]
      %v1406 = vld [vmem:[#allocation2 + $0x168] sm:$0xff]
      %v1407 = vld [vmem:[#allocation2 + $0x170] sm:$0xff]
      %v1408 = vld [vmem:[#allocation2 + $0x178] sm:$0xff]
      %v1409 = vld [vmem:[#allocation2 + $0x180] sm:$0xff]
      %v1410 = vld [vmem:[#allocation2 + $0x188] sm:$0xff]
      %v1411 = vld [vmem:[#allocation2 + $0x190] sm:$0xff]
      %v1412 = vld [vmem:[#allocation2 + $0x198] sm:$0xff]
      %v1413 = vld [vmem:[#allocation2 + $0x1a0] sm:$0xff]
      %v1414 = vld [vmem:[#allocation2 + $0x1a8] sm:$0xff]
      %v1415 = vld [vmem:[#allocation2 + $0x1b0] sm:$0xff]
      %v1416 = vld [vmem:[#allocation2 + $0x1b8] sm:$0xff]
      %v1417 = vld [vmem:[#allocation2 + $0x1c0] sm:$0xff]
      %v1418 = vld [vmem:[#allocation2 + $0x1c8] sm:$0xff]
      %v1419 = vld [vmem:[#allocation2 + $0x1d0] sm:$0xff]
      %v1420 = vld [vmem:[#allocation2 + $0x1d8] sm:$0xff]
      %v1421 = vld [vmem:[#allocation2 + $0x1e0] sm:$0xff]
      %v1422 = vld [vmem:[#allocation2 + $0x1e8] sm:$0xff]
      %v1423 = vld [vmem:[#allocation2 + $0x1f0] sm:$0x7f]
      %v1424 = vld [vmem:[#allocation2 + $0x1f8] sm:$0x7f]
      %vm1489 = vcmask 1046528
      %v1490 = vrot.slane %v1203, 1
      %v1491 = vrot.slane %v1207, 1
      %v1492 = vsel %vm1489, %v1490, %v1491
      %v1493 = vrot.slane %v1205, 1
      %v1494 = vrot.slane %v1209, 1
      %v1495 = vsel %vm1489, %v1493, %v1494
      %v1496 = vrot.slane %v1213, 1
      %v1497 = vsel %vm1489, %v1491, %v1496
      %v1498 = vrot.slane %v1215, 1
      %v1499 = vsel %vm1489, %v1494, %v1498
      %v1500 = vrot.slane %v1217, 1
      %v1501 = vsel %vm1489, %v1496, %v1500
      %v1502 = vrot.slane %v1219, 1
      %v1503 = vsel %vm1489, %v1498, %v1502
      %v1504 = vrot.slane %v1223, 1
      %v1505 = vsel %vm1489, %v1500, %v1504
      %v1506 = vrot.slane %v1225, 1
      %v1507 = vsel %vm1489, %v1502, %v1506
      %v1508 = vrot.slane %v1227, 1
      %v1509 = vsel %vm1489, %v1504, %v1508
      %v1510 = vrot.slane %v1229, 1
      %v1511 = vsel %vm1489, %v1506, %v1510
      %v1512 = vrot.slane %v1233, 1
      %v1513 = vsel %vm1489, %v1508, %v1512
      %v1514 = vrot.slane %v1235, 1
      %v1515 = vsel %vm1489, %v1510, %v1514
      %v1516 = vrot.slane %v1237, 1
      %v1517 = vsel %vm1489, %v1512, %v1516
      %v1518 = vrot.slane %v1239, 1
      %v1519 = vsel %vm1489, %v1514, %v1518
      %v1520 = vrot.slane %v1243, 1
      %v1521 = vsel %vm1489, %v1516, %v1520
      %v1522 = vrot.slane %v1245, 1
      %v1523 = vsel %vm1489, %v1518, %v1522
      %v1524 = vrot.slane %v1247, 1
      %v1525 = vsel %vm1489, %v1520, %v1524
      %v1526 = vrot.slane %v1249, 1
      %v1527 = vsel %vm1489, %v1522, %v1526
      %v1528 = vrot.slane %v1253, 1
      %v1529 = vsel %vm1489, %v1524, %v1528
      %v1530 = vrot.slane %v1255, 1
      %v1531 = vsel %vm1489, %v1526, %v1530
      %v1532 = vrot.slane %v1257, 1
      %v1533 = vsel %vm1489, %v1528, %v1532
      %v1534 = vrot.slane %v1259, 1
      %v1535 = vsel %vm1489, %v1530, %v1534
      %v1536 = vrot.slane %v1263, 1
      %v1537 = vsel %vm1489, %v1532, %v1536
      %v1538 = vrot.slane %v1265, 1
      %v1539 = vsel %vm1489, %v1534, %v1538
      %v1540 = vrot.slane %v1267, 1
      %v1541 = vsel %vm1489, %v1536, %v1540
      %v1542 = vrot.slane %v1269, 1
      %v1543 = vsel %vm1489, %v1538, %v1542
      %v1544 = vrot.slane %v1273, 1
      %v1545 = vsel %vm1489, %v1540, %v1544
      %v1546 = vrot.slane %v1275, 1
      %v1547 = vsel %vm1489, %v1542, %v1546
      %v1548 = vrot.slane %v1277, 1
      %v1549 = vsel %vm1489, %v1544, %v1548
      %v1550 = vrot.slane %v1279, 1
      %v1551 = vsel %vm1489, %v1546, %v1550
      %v1552 = vrot.slane %v1283, 1
      %v1553 = vsel %vm1489, %v1548, %v1552
      %v1554 = vrot.slane %v1285, 1
      %v1555 = vsel %vm1489, %v1550, %v1554
      %v1556 = vrot.slane %v1287, 1
      %v1557 = vsel %vm1489, %v1552, %v1556
      %v1558 = vrot.slane %v1289, 1
      %v1559 = vsel %vm1489, %v1554, %v1558
      %v1560 = vrot.slane %v1293, 1
      %v1561 = vsel %vm1489, %v1556, %v1560
      %v1562 = vrot.slane %v1295, 1
      %v1563 = vsel %vm1489, %v1558, %v1562
      %v1564 = vrot.slane %v1297, 1
      %v1565 = vsel %vm1489, %v1560, %v1564
      %v1566 = vrot.slane %v1299, 1
      %v1567 = vsel %vm1489, %v1562, %v1566
      %v1568 = vrot.slane %v1303, 1
      %v1569 = vsel %vm1489, %v1564, %v1568
      %v1570 = vrot.slane %v1305, 1
      %v1571 = vsel %vm1489, %v1566, %v1570
      %v1572 = vrot.slane %v1307, 1
      %v1573 = vsel %vm1489, %v1568, %v1572
      %v1574 = vrot.slane %v1309, 1
      %v1575 = vsel %vm1489, %v1570, %v1574
      %v1576 = vrot.slane %v1313, 1
      %v1577 = vsel %vm1489, %v1572, %v1576
      %v1578 = vrot.slane %v1315, 1
      %v1579 = vsel %vm1489, %v1574, %v1578
      %v1580 = vrot.slane %v1317, 1
      %v1581 = vsel %vm1489, %v1576, %v1580
      %v1582 = vrot.slane %v1319, 1
      %v1583 = vsel %vm1489, %v1578, %v1582
      %v1584 = vrot.slane %v1323, 1
      %v1585 = vsel %vm1489, %v1580, %v1584
      %v1586 = vrot.slane %v1325, 1
      %v1587 = vsel %vm1489, %v1582, %v1586
      %v1588 = vrot.slane %v1327, 1
      %v1589 = vsel %vm1489, %v1584, %v1588
      %v1590 = vrot.slane %v1329, 1
      %v1591 = vsel %vm1489, %v1586, %v1590
      %v1592 = vrot.slane %v1333, 1
      %v1593 = vsel %vm1489, %v1588, %v1592
      %v1594 = vrot.slane %v1335, 1
      %v1595 = vsel %vm1489, %v1590, %v1594
      %v1596 = vrot.slane %v1337, 1
      %v1597 = vsel %vm1489, %v1592, %v1596
      %v1598 = vrot.slane %v1339, 1
      %v1599 = vsel %vm1489, %v1594, %v1598
      %v1600 = vrot.slane %v1343, 1
      %v1601 = vsel %vm1489, %v1596, %v1600
      %v1602 = vrot.slane %v1345, 1
      %v1603 = vsel %vm1489, %v1598, %v1602
      %v1604 = vrot.slane %v1347, 1
      %v1605 = vsel %vm1489, %v1600, %v1604
      %v1606 = vrot.slane %v1349, 1
      %v1607 = vsel %vm1489, %v1602, %v1606
      %v1608 = vrot.slane %v1353, 1
      %v1609 = vsel %vm1489, %v1604, %v1608
      %v1610 = vrot.slane %v1355, 1
      %v1611 = vsel %vm1489, %v1606, %v1610
      %v1612 = vrot.slane %v1357, 1
      %v1613 = vsel %vm1489, %v1608, %v1612
      %v1614 = vrot.slane %v1359, 1
      %v1615 = vsel %vm1489, %v1610, %v1614
      %v1680 = vadd.f32 %v1361, %v1492
      %v1681 = vadd.f32 %v1362, %v1495
      %v1682 = vadd.f32 %v1363, %v1497
      %v1683 = vadd.f32 %v1364, %v1499
      %v1684 = vadd.f32 %v1365, %v1501
      %v1685 = vadd.f32 %v1366, %v1503
      %v1686 = vadd.f32 %v1367, %v1505
      %v1687 = vadd.f32 %v1368, %v1507
      %v1688 = vadd.f32 %v1369, %v1509
      %v1689 = vadd.f32 %v1370, %v1511
      %v1690 = vadd.f32 %v1371, %v1513
      %v1691 = vadd.f32 %v1372, %v1515
      %v1692 = vadd.f32 %v1373, %v1517
      %v1693 = vadd.f32 %v1374, %v1519
      %v1694 = vadd.f32 %v1375, %v1521
      %v1695 = vadd.f32 %v1376, %v1523
      %v1696 = vadd.f32 %v1377, %v1525
      %v1697 = vadd.f32 %v1378, %v1527
      %v1698 = vadd.f32 %v1379, %v1529
      %v1699 = vadd.f32 %v1380, %v1531
      %v1700 = vadd.f32 %v1381, %v1533
      %v1701 = vadd.f32 %v1382, %v1535
      %v1702 = vadd.f32 %v1383, %v1537
      %v1703 = vadd.f32 %v1384, %v1539
      %v1704 = vadd.f32 %v1385, %v1541
      %v1705 = vadd.f32 %v1386, %v1543
      %v1706 = vadd.f32 %v1387, %v1545
      %v1707 = vadd.f32 %v1388, %v1547
      %v1708 = vadd.f32 %v1389, %v1549
      %v1709 = vadd.f32 %v1390, %v1551
      %v1710 = vadd.f32 %v1391, %v1553
      %v1711 = vadd.f32 %v1392, %v1555
      %v1712 = vadd.f32 %v1393, %v1557
      %v1713 = vadd.f32 %v1394, %v1559
      %v1714 = vadd.f32 %v1395, %v1561
      %v1715 = vadd.f32 %v1396, %v1563
      %v1716 = vadd.f32 %v1397, %v1565
      %v1717 = vadd.f32 %v1398, %v1567
      %v1718 = vadd.f32 %v1399, %v1569
      %v1719 = vadd.f32 %v1400, %v1571
      %v1720 = vadd.f32 %v1401, %v1573
      %v1721 = vadd.f32 %v1402, %v1575
      %v1722 = vadd.f32 %v1403, %v1577
      %v1723 = vadd.f32 %v1404, %v1579
      %v1724 = vadd.f32 %v1405, %v1581
      %v1725 = vadd.f32 %v1406, %v1583
      %v1726 = vadd.f32 %v1407, %v1585
      %v1727 = vadd.f32 %v1408, %v1587
      %v1728 = vadd.f32 %v1409, %v1589
      %v1729 = vadd.f32 %v1410, %v1591
      %v1730 = vadd.f32 %v1411, %v1593
      %v1731 = vadd.f32 %v1412, %v1595
      %v1732 = vadd.f32 %v1413, %v1597
      %v1733 = vadd.f32 %v1414, %v1599
      %v1734 = vadd.f32 %v1415, %v1601
      %v1735 = vadd.f32 %v1416, %v1603
      %v1736 = vadd.f32 %v1417, %v1605
      %v1737 = vadd.f32 %v1418, %v1607
      %v1738 = vadd.f32 %v1419, %v1609
      %v1739 = vadd.f32 %v1420, %v1611
      %v1740 = vadd.f32 %v1421, %v1613
      %v1741 = vadd.f32 %v1422, %v1615
      %v1742 = vadd.f32 %v1423, %v1612
      %v1743 = vadd.f32 %v1424, %v1614
      %1744 = vst [vmem:[#allocation2] sm:$0xff] %v1680
      %1745 = vst.msk [vmem:[#allocation2 + $0x8] sm:$0xff] %vm1031, %v1681
      %1746 = vst [vmem:[#allocation2 + $0x10] sm:$0xff] %v1682
      %1747 = vst.msk [vmem:[#allocation2 + $0x18] sm:$0xff] %vm1031, %v1683
      %1748 = vst [vmem:[#allocation2 + $0x20] sm:$0xff] %v1684
      %1749 = vst.msk [vmem:[#allocation2 + $0x28] sm:$0xff] %vm1031, %v1685
      %1750 = vst [vmem:[#allocation2 + $0x30] sm:$0xff] %v1686
      %1751 = vst.msk [vmem:[#allocation2 + $0x38] sm:$0xff] %vm1031, %v1687
      %1752 = vst [vmem:[#allocation2 + $0x40] sm:$0xff] %v1688
      %1753 = vst.msk [vmem:[#allocation2 + $0x48] sm:$0xff] %vm1031, %v1689
      %1754 = vst [vmem:[#allocation2 + $0x50] sm:$0xff] %v1690
      %1755 = vst.msk [vmem:[#allocation2 + $0x58] sm:$0xff] %vm1031, %v1691
      %1756 = vst [vmem:[#allocation2 + $0x60] sm:$0xff] %v1692
      %1757 = vst.msk [vmem:[#allocation2 + $0x68] sm:$0xff] %vm1031, %v1693
      %1758 = vst [vmem:[#allocation2 + $0x70] sm:$0xff] %v1694
      %1759 = vst.msk [vmem:[#allocation2 + $0x78] sm:$0xff] %vm1031, %v1695
      %1760 = vst [vmem:[#allocation2 + $0x80] sm:$0xff] %v1696
      %1761 = vst.msk [vmem:[#allocation2 + $0x88] sm:$0xff] %vm1031, %v1697
      %1762 = vst [vmem:[#allocation2 + $0x90] sm:$0xff] %v1698
      %1763 = vst.msk [vmem:[#allocation2 + $0x98] sm:$0xff] %vm1031, %v1699
      %1764 = vst [vmem:[#allocation2 + $0xa0] sm:$0xff] %v1700
      %1765 = vst.msk [vmem:[#allocation2 + $0xa8] sm:$0xff] %vm1031, %v1701
      %1766 = vst [vmem:[#allocation2 + $0xb0] sm:$0xff] %v1702
      %1767 = vst.msk [vmem:[#allocation2 + $0xb8] sm:$0xff] %vm1031, %v1703
      %1768 = vst [vmem:[#allocation2 + $0xc0] sm:$0xff] %v1704
      %1769 = vst.msk [vmem:[#allocation2 + $0xc8] sm:$0xff] %vm1031, %v1705
      %1770 = vst [vmem:[#allocation2 + $0xd0] sm:$0xff] %v1706
      %1771 = vst.msk [vmem:[#allocation2 + $0xd8] sm:$0xff] %vm1031, %v1707
      %1772 = vst [vmem:[#allocation2 + $0xe0] sm:$0xff] %v1708
      %1773 = vst.msk [vmem:[#allocation2 + $0xe8] sm:$0xff] %vm1031, %v1709
      %1774 = vst [vmem:[#allocation2 + $0xf0] sm:$0xff] %v1710
      %1775 = vst.msk [vmem:[#allocation2 + $0xf8] sm:$0xff] %vm1031, %v1711
      %1776 = vst [vmem:[#allocation2 + $0x100] sm:$0xff] %v1712
      %1777 = vst.msk [vmem:[#allocation2 + $0x108] sm:$0xff] %vm1031, %v1713
      %1778 = vst [vmem:[#allocation2 + $0x110] sm:$0xff] %v1714
      %1779 = vst.msk [vmem:[#allocation2 + $0x118] sm:$0xff] %vm1031, %v1715
      %1780 = vst [vmem:[#allocation2 + $0x120] sm:$0xff] %v1716
      %1781 = vst.msk [vmem:[#allocation2 + $0x128] sm:$0xff] %vm1031, %v1717
      %1782 = vst [vmem:[#allocation2 + $0x130] sm:$0xff] %v1718
      %1783 = vst.msk [vmem:[#allocation2 + $0x138] sm:$0xff] %vm1031, %v1719
      %1784 = vst [vmem:[#allocation2 + $0x140] sm:$0xff] %v1720
      %1785 = vst.msk [vmem:[#allocation2 + $0x148] sm:$0xff] %vm1031, %v1721
      %1786 = vst [vmem:[#allocation2 + $0x150] sm:$0xff] %v1722
      %1787 = vst.msk [vmem:[#allocation2 + $0x158] sm:$0xff] %vm1031, %v1723
      %1788 = vst [vmem:[#allocation2 + $0x160] sm:$0xff] %v1724
      %1789 = vst.msk [vmem:[#allocation2 + $0x168] sm:$0xff] %vm1031, %v1725
      %1790 = vst [vmem:[#allocation2 + $0x170] sm:$0xff] %v1726
      %1791 = vst.msk [vmem:[#allocation2 + $0x178] sm:$0xff] %vm1031, %v1727
      %1792 = vst [vmem:[#allocation2 + $0x180] sm:$0xff] %v1728
      %1793 = vst.msk [vmem:[#allocation2 + $0x188] sm:$0xff] %vm1031, %v1729
      %1794 = vst [vmem:[#allocation2 + $0x190] sm:$0xff] %v1730
      %1795 = vst.msk [vmem:[#allocation2 + $0x198] sm:$0xff] %vm1031, %v1731
      %1796 = vst [vmem:[#allocation2 + $0x1a0] sm:$0xff] %v1732
      %1797 = vst.msk [vmem:[#allocation2 + $0x1a8] sm:$0xff] %vm1031, %v1733
      %1798 = vst [vmem:[#allocation2 + $0x1b0] sm:$0xff] %v1734
      %1799 = vst.msk [vmem:[#allocation2 + $0x1b8] sm:$0xff] %vm1031, %v1735
      %1800 = vst [vmem:[#allocation2 + $0x1c0] sm:$0xff] %v1736
      %1801 = vst.msk [vmem:[#allocation2 + $0x1c8] sm:$0xff] %vm1031, %v1737
      %1802 = vst [vmem:[#allocation2 + $0x1d0] sm:$0xff] %v1738
      %1803 = vst.msk [vmem:[#allocation2 + $0x1d8] sm:$0xff] %vm1031, %v1739
      %1804 = vst [vmem:[#allocation2 + $0x1e0] sm:$0xff] %v1740
      %1805 = vst.msk [vmem:[#allocation2 + $0x1e8] sm:$0xff] %vm1031, %v1741
      %1806 = vst [vmem:[#allocation2 + $0x1f0] sm:$0x7f] %v1742
      %vm1807 = vcmask 325632
      %1808 = vst.msk [vmem:[#allocation2 + $0x1f8] sm:$0x7f] %vm1807, %v1743
      %s1809 = scalar_lea.vmem %s1, 192
      %v1810 = vld [vmem:[%s1809] sm:$0xff]
      %v1811 = vld [vmem:[%s1809 + $0x8] sm:$0xff]
      %v1812 = vld [vmem:[%s1809 + $0x10] sm:$0xff]
      %v1813 = vld [vmem:[%s1809 + $0x18] sm:$0xff]
      %v1814 = vld [vmem:[%s1809 + $0x20] sm:$0xff]
      %v1815 = vld [vmem:[%s1809 + $0x28] sm:$0xff]
      %v1816 = vld [vmem:[%s1809 + $0x30] sm:$0xff]
      %v1817 = vld [vmem:[%s1809 + $0x38] sm:$0xff]
      %v1818 = vld [vmem:[%s1809 + $0x40] sm:$0xff]
      %v1819 = vld [vmem:[%s1809 + $0x48] sm:$0xff]
      %v1820 = vld [vmem:[%s1809 + $0x50] sm:$0xff]
      %v1821 = vld [vmem:[%s1809 + $0x58] sm:$0xff]
      %v1834 = vunpack.c.l.b16 %v1810
      %v1835 = vunpack.c.h.b16 %v1810
      %v1836 = vunpack.c.l.b16 %v1811
      %v1837 = vunpack.c.h.b16 %v1811
      %v1838 = vunpack.c.l.b16 %v1812
      %v1839 = vunpack.c.h.b16 %v1812
      %v1840 = vunpack.c.l.b16 %v1813
      %v1841 = vunpack.c.h.b16 %v1813
      %v1842 = vunpack.c.l.b16 %v1814
      %v1843 = vunpack.c.h.b16 %v1814
      %v1844 = vunpack.c.l.b16 %v1815
      %v1845 = vunpack.c.h.b16 %v1815
      %v1846 = vunpack.c.l.b16 %v1816
      %v1847 = vunpack.c.h.b16 %v1816
      %v1848 = vunpack.c.l.b16 %v1817
      %v1849 = vunpack.c.h.b16 %v1817
      %v1850 = vunpack.c.l.b16 %v1818
      %v1851 = vunpack.c.h.b16 %v1818
      %v1852 = vunpack.c.l.b16 %v1819
      %v1853 = vunpack.c.h.b16 %v1819
      %v1854 = vunpack.c.l.b16 %v1820
      %v1855 = vunpack.c.h.b16 %v1820
      %v1856 = vunpack.c.l.b16 %v1821
      %v1857 = vunpack.c.h.b16 %v1821
      %v1858 = vpack.c.b16 %v1836, %v1834
      %v1859 = vpack.c.b16 %v1837, %v1835
      %v1860 = vpack.c.b16 %v1840, %v1838
      %v1861 = vpack.c.b16 %v1841, %v1839
      %v1862 = vpack.c.b16 %v1844, %v1842
      %v1863 = vpack.c.b16 %v1845, %v1843
      %v1864 = vpack.c.b16 %v1848, %v1846
      %v1865 = vpack.c.b16 %v1849, %v1847
      %v1866 = vpack.c.b16 %v1852, %v1850
      %v1867 = vpack.c.b16 %v1853, %v1851
      %v1868 = vpack.c.b16 %v1856, %v1854
      %v1869 = vpack.c.b16 %v1857, %v1855
      %1882 = vmatprep.subr.bf16.mxu0 %v1859
      %1883 = vmatpush1.bf16.msra.mxu0 %v1858
      %1884 = vmatprep.subr.bf16.mxu0 %v1861
      %1885 = vmatpush1.bf16.msra.mxu0 %v1860
      %1886 = vmatprep.subr.bf16.mxu0 %v1863
      %1887 = vmatpush1.bf16.msra.mxu0 %v1862
      %1888 = vmatprep.subr.bf16.mxu0 %v1865
      %1889 = vmatpush1.bf16.msra.mxu0 %v1864
      %1890 = vmatprep.subr.bf16.mxu0 %v1867
      %1891 = vmatpush1.bf16.msra.mxu0 %v1866
      %1892 = vmatprep.subr.bf16.mxu0 %v1869
      %1893 = vmatpush1.bf16.msra.mxu0 %v1868
      %1894 = vmatprep.subr.bf16.mxu0 0
      %1895 = vmatpush1.bf16.msra.mxu0 0
      %1896 = vmatprep.subr.bf16.mxu0 0
      %1897 = vmatpush1.bf16.msra.mxu0 0
      %1898 = vmatprep.subr.bf16.mxu0 0
      %1899 = vmatpush1.bf16.msra.mxu0 0
      %1900 = vmatprep.subr.bf16.mxu0 0
      %1901 = vmatpush1.bf16.msra.mxu0 0
      %1902 = vmatprep.subr.bf16.mxu0 0
      %1903 = vmatpush1.bf16.msra.mxu0 0
      %1904 = vmatprep.subr.bf16.mxu0 0
      %1905 = vmatpush1.bf16.msra.mxu0 0
      %1906 = vmatprep.subr.bf16.mxu0 0
      %1907 = vmatpush1.bf16.msra.mxu0 0
      %1908 = vmatprep.subr.bf16.mxu0 0
      %1909 = vmatpush1.bf16.msra.mxu0 0
      %1910 = vmatprep.subr.bf16.mxu0 0
      %1911 = vmatpush1.bf16.msra.mxu0 0
      %1912 = vmatprep.subr.bf16.mxu0 0
      %1913 = vmatpush1.bf16.msra.mxu0 0
      %1914 = vmatprep.mubr.bf16.mxu0 0
      %1915 = vmatmul.mubr.bf16.gmra.mrb[0].mxu0 %v790
      %v1916 = vpop.f32.mrb[0].mxu0
      %v1917 = vadd.f32 0.0, %v1916
      %v1918 = vpop.f32.mrb[0].mxu0
      %v1919 = vadd.f32 0.0, %v1918
      %v1920 = vpop.f32.mrb[0].mxu0
      %v1921 = vadd.f32 0.0, %v1920
      %v1922 = vpop.f32.mrb[0].mxu0
      %v1923 = vadd.f32 0.0, %v1922
      %1924 = vmatprep.mubr.bf16.mxu0 0
      %1925 = vmatmul.mubr.bf16.gmra.mrb[0].mxu0 %v793
      %v1926 = vpop.f32.mrb[0].mxu0
      %v1927 = vadd.f32 0.0, %v1926
      %v1928 = vpop.f32.mrb[0].mxu0
      %v1929 = vadd.f32 0.0, %v1928
      %v1930 = vpop.f32.mrb[0].mxu0
      %v1931 = vadd.f32 0.0, %v1930
      %v1932 = vpop.f32.mrb[0].mxu0
      %v1933 = vadd.f32 0.0, %v1932
      %1934 = vmatprep.mubr.bf16.mxu0 0
      %1935 = vmatmul.mubr.bf16.gmra.mrb[0].mxu0 %v796
      %v1936 = vpop.f32.mrb[0].mxu0
      %v1937 = vadd.f32 0.0, %v1936
      %v1938 = vpop.f32.mrb[0].mxu0
      %v1939 = vadd.f32 0.0, %v1938
      %v1940 = vpop.f32.mrb[0].mxu0
      %v1941 = vadd.f32 0.0, %v1940
      %v1942 = vpop.f32.mrb[0].mxu0
      %v1943 = vadd.f32 0.0, %v1942
      %1944 = vmatprep.mubr.bf16.mxu0 0
      %1945 = vmatmul.mubr.bf16.gmra.mrb[0].mxu0 %v799
      %v1946 = vpop.f32.mrb[0].mxu0
      %v1947 = vadd.f32 0.0, %v1946
      %v1948 = vpop.f32.mrb[0].mxu0
      %v1949 = vadd.f32 0.0, %v1948
      %v1950 = vpop.f32.mrb[0].mxu0
      %v1951 = vadd.f32 0.0, %v1950
      %v1952 = vpop.f32.mrb[0].mxu0
      %v1953 = vadd.f32 0.0, %v1952
      %1954 = vmatprep.mubr.bf16.mxu0 0
      %1955 = vmatmul.mubr.bf16.gmra.mrb[0].mxu0 %v802
      %v1956 = vpop.f32.mrb[0].mxu0
      %v1957 = vadd.f32 0.0, %v1956
      %v1958 = vpop.f32.mrb[0].mxu0
      %v1959 = vadd.f32 0.0, %v1958
      %v1960 = vpop.f32.mrb[0].mxu0
      %v1961 = vadd.f32 0.0, %v1960
      %v1962 = vpop.f32.mrb[0].mxu0
      %v1963 = vadd.f32 0.0, %v1962
      %1964 = vmatprep.mubr.bf16.mxu0 0
      %1965 = vmatmul.mubr.bf16.gmra.mrb[0].mxu0 %v805
      %v1966 = vpop.f32.mrb[0].mxu0
      %v1967 = vadd.f32 0.0, %v1966
      %v1968 = vpop.f32.mrb[0].mxu0
      %v1969 = vadd.f32 0.0, %v1968
      %v1970 = vpop.f32.mrb[0].mxu0
      %v1971 = vadd.f32 0.0, %v1970
      %v1972 = vpop.f32.mrb[0].mxu0
      %v1973 = vadd.f32 0.0, %v1972
      %1974 = vmatprep.mubr.bf16.mxu0 0
      %1975 = vmatmul.mubr.bf16.gmra.mrb[0].mxu0 %v808
      %v1976 = vpop.f32.mrb[0].mxu0
      %v1977 = vadd.f32 0.0, %v1976
      %v1978 = vpop.f32.mrb[0].mxu0
      %v1979 = vadd.f32 0.0, %v1978
      %v1980 = vpop.f32.mrb[0].mxu0
      %v1981 = vadd.f32 0.0, %v1980
      %v1982 = vpop.f32.mrb[0].mxu0
      %v1983 = vadd.f32 0.0, %v1982
      %1984 = vmatprep.mubr.bf16.mxu0 0
      %1985 = vmatmul.mubr.bf16.gmra.mrb[0].mxu0 %v811
      %v1986 = vpop.f32.mrb[0].mxu0
      %v1987 = vadd.f32 0.0, %v1986
      %v1988 = vpop.f32.mrb[0].mxu0
      %v1989 = vadd.f32 0.0, %v1988
      %v1990 = vpop.f32.mrb[0].mxu0
      %v1991 = vadd.f32 0.0, %v1990
      %v1992 = vpop.f32.mrb[0].mxu0
      %v1993 = vadd.f32 0.0, %v1992
      %1994 = vmatprep.mubr.bf16.mxu0 0
      %1995 = vmatmul.mubr.bf16.gmra.mrb[0].mxu0 %v814
      %v1996 = vpop.f32.mrb[0].mxu0
      %v1997 = vadd.f32 0.0, %v1996
      %v1998 = vpop.f32.mrb[0].mxu0
      %v1999 = vadd.f32 0.0, %v1998
      %v2000 = vpop.f32.mrb[0].mxu0
      %v2001 = vadd.f32 0.0, %v2000
      %v2002 = vpop.f32.mrb[0].mxu0
      %v2003 = vadd.f32 0.0, %v2002
      %2004 = vmatprep.mubr.bf16.mxu0 0
      %2005 = vmatmul.mubr.bf16.gmra.mrb[0].mxu0 %v817
      %v2006 = vpop.f32.mrb[0].mxu0
      %v2007 = vadd.f32 0.0, %v2006
      %v2008 = vpop.f32.mrb[0].mxu0
      %v2009 = vadd.f32 0.0, %v2008
      %v2010 = vpop.f32.mrb[0].mxu0
      %v2011 = vadd.f32 0.0, %v2010
      %v2012 = vpop.f32.mrb[0].mxu0
      %v2013 = vadd.f32 0.0, %v2012
      %2014 = vmatprep.mubr.bf16.mxu0 0
      %2015 = vmatmul.mubr.bf16.gmra.mrb[0].mxu0 %v820
      %v2016 = vpop.f32.mrb[0].mxu0
      %v2017 = vadd.f32 0.0, %v2016
      %v2018 = vpop.f32.mrb[0].mxu0
      %v2019 = vadd.f32 0.0, %v2018
      %v2020 = vpop.f32.mrb[0].mxu0
      %v2021 = vadd.f32 0.0, %v2020
      %v2022 = vpop.f32.mrb[0].mxu0
      %v2023 = vadd.f32 0.0, %v2022
      %2024 = vmatprep.mubr.bf16.mxu0 0
      %2025 = vmatmul.mubr.bf16.gmra.mrb[0].mxu0 %v823
      %v2026 = vpop.f32.mrb[0].mxu0
      %v2027 = vadd.f32 0.0, %v2026
      %v2028 = vpop.f32.mrb[0].mxu0
      %v2029 = vadd.f32 0.0, %v2028
      %v2030 = vpop.f32.mrb[0].mxu0
      %v2031 = vadd.f32 0.0, %v2030
      %v2032 = vpop.f32.mrb[0].mxu0
      %v2033 = vadd.f32 0.0, %v2032
      %2034 = vmatprep.mubr.bf16.mxu0 0
      %2035 = vmatmul.mubr.bf16.gmra.mrb[0].mxu0 %v826
      %v2036 = vpop.f32.mrb[0].mxu0
      %v2037 = vadd.f32 0.0, %v2036
      %v2038 = vpop.f32.mrb[0].mxu0
      %v2039 = vadd.f32 0.0, %v2038
      %v2040 = vpop.f32.mrb[0].mxu0
      %v2041 = vadd.f32 0.0, %v2040
      %v2042 = vpop.f32.mrb[0].mxu0
      %v2043 = vadd.f32 0.0, %v2042
      %2044 = vmatprep.mubr.bf16.mxu0 0
      %2045 = vmatmul.mubr.bf16.gmra.mrb[0].mxu0 %v829
      %v2046 = vpop.f32.mrb[0].mxu0
      %v2047 = vadd.f32 0.0, %v2046
      %v2048 = vpop.f32.mrb[0].mxu0
      %v2049 = vadd.f32 0.0, %v2048
      %v2050 = vpop.f32.mrb[0].mxu0
      %v2051 = vadd.f32 0.0, %v2050
      %v2052 = vpop.f32.mrb[0].mxu0
      %v2053 = vadd.f32 0.0, %v2052
      %2054 = vmatprep.mubr.bf16.mxu0 0
      %2055 = vmatmul.mubr.bf16.gmra.mrb[0].mxu0 %v832
      %v2056 = vpop.f32.mrb[0].mxu0
      %v2057 = vadd.f32 0.0, %v2056
      %v2058 = vpop.f32.mrb[0].mxu0
      %v2059 = vadd.f32 0.0, %v2058
      %v2060 = vpop.f32.mrb[0].mxu0
      %v2061 = vadd.f32 0.0, %v2060
      %v2062 = vpop.f32.mrb[0].mxu0
      %v2063 = vadd.f32 0.0, %v2062
      %2064 = vmatprep.mubr.bf16.mxu0 0
      %2065 = vmatmul.mubr.bf16.gmra.mrb[0].mxu0 %v835
      %v2066 = vpop.f32.mrb[0].mxu0
      %v2067 = vadd.f32 0.0, %v2066
      %v2068 = vpop.f32.mrb[0].mxu0
      %v2069 = vadd.f32 0.0, %v2068
      %v2070 = vpop.f32.mrb[0].mxu0
      %v2071 = vadd.f32 0.0, %v2070
      %v2072 = vpop.f32.mrb[0].mxu0
      %v2073 = vadd.f32 0.0, %v2072
      %2074 = vdwg.mxu0
      %v2075 = vld [vmem:[#allocation2] sm:$0xff]
      %v2076 = vld [vmem:[#allocation2 + $0x8] sm:$0xff]
      %v2077 = vld [vmem:[#allocation2 + $0x10] sm:$0xff]
      %v2078 = vld [vmem:[#allocation2 + $0x18] sm:$0xff]
      %v2079 = vld [vmem:[#allocation2 + $0x20] sm:$0xff]
      %v2080 = vld [vmem:[#allocation2 + $0x28] sm:$0xff]
      %v2081 = vld [vmem:[#allocation2 + $0x30] sm:$0xff]
      %v2082 = vld [vmem:[#allocation2 + $0x38] sm:$0xff]
      %v2083 = vld [vmem:[#allocation2 + $0x40] sm:$0xff]
      %v2084 = vld [vmem:[#allocation2 + $0x48] sm:$0xff]
      %v2085 = vld [vmem:[#allocation2 + $0x50] sm:$0xff]
      %v2086 = vld [vmem:[#allocation2 + $0x58] sm:$0xff]
      %v2087 = vld [vmem:[#allocation2 + $0x60] sm:$0xff]
      %v2088 = vld [vmem:[#allocation2 + $0x68] sm:$0xff]
      %v2089 = vld [vmem:[#allocation2 + $0x70] sm:$0xff]
      %v2090 = vld [vmem:[#allocation2 + $0x78] sm:$0xff]
      %v2091 = vld [vmem:[#allocation2 + $0x80] sm:$0xff]
      %v2092 = vld [vmem:[#allocation2 + $0x88] sm:$0xff]
      %v2093 = vld [vmem:[#allocation2 + $0x90] sm:$0xff]
      %v2094 = vld [vmem:[#allocation2 + $0x98] sm:$0xff]
      %v2095 = vld [vmem:[#allocation2 + $0xa0] sm:$0xff]
      %v2096 = vld [vmem:[#allocation2 + $0xa8] sm:$0xff]
      %v2097 = vld [vmem:[#allocation2 + $0xb0] sm:$0xff]
      %v2098 = vld [vmem:[#allocation2 + $0xb8] sm:$0xff]
      %v2099 = vld [vmem:[#allocation2 + $0xc0] sm:$0xff]
      %v2100 = vld [vmem:[#allocation2 + $0xc8] sm:$0xff]
      %v2101 = vld [vmem:[#allocation2 + $0xd0] sm:$0xff]
      %v2102 = vld [vmem:[#allocation2 + $0xd8] sm:$0xff]
      %v2103 = vld [vmem:[#allocation2 + $0xe0] sm:$0xff]
      %v2104 = vld [vmem:[#allocation2 + $0xe8] sm:$0xff]
      %v2105 = vld [vmem:[#allocation2 + $0xf0] sm:$0xff]
      %v2106 = vld [vmem:[#allocation2 + $0xf8] sm:$0xff]
      %v2107 = vld [vmem:[#allocation2 + $0x100] sm:$0xff]
      %v2108 = vld [vmem:[#allocation2 + $0x108] sm:$0xff]
      %v2109 = vld [vmem:[#allocation2 + $0x110] sm:$0xff]
      %v2110 = vld [vmem:[#allocation2 + $0x118] sm:$0xff]
      %v2111 = vld [vmem:[#allocation2 + $0x120] sm:$0xff]
      %v2112 = vld [vmem:[#allocation2 + $0x128] sm:$0xff]
      %v2113 = vld [vmem:[#allocation2 + $0x130] sm:$0xff]
      %v2114 = vld [vmem:[#allocation2 + $0x138] sm:$0xff]
      %v2115 = vld [vmem:[#allocation2 + $0x140] sm:$0xff]
      %v2116 = vld [vmem:[#allocation2 + $0x148] sm:$0xff]
      %v2117 = vld [vmem:[#allocation2 + $0x150] sm:$0xff]
      %v2118 = vld [vmem:[#allocation2 + $0x158] sm:$0xff]
      %v2119 = vld [vmem:[#allocation2 + $0x160] sm:$0xff]
      %v2120 = vld [vmem:[#allocation2 + $0x168] sm:$0xff]
      %v2121 = vld [vmem:[#allocation2 + $0x170] sm:$0xff]
      %v2122 = vld [vmem:[#allocation2 + $0x178] sm:$0xff]
      %v2123 = vld [vmem:[#allocation2 + $0x180] sm:$0xff]
      %v2124 = vld [vmem:[#allocation2 + $0x188] sm:$0xff]
      %v2125 = vld [vmem:[#allocation2 + $0x190] sm:$0xff]
      %v2126 = vld [vmem:[#allocation2 + $0x198] sm:$0xff]
      %v2127 = vld [vmem:[#allocation2 + $0x1a0] sm:$0xff]
      %v2128 = vld [vmem:[#allocation2 + $0x1a8] sm:$0xff]
      %v2129 = vld [vmem:[#allocation2 + $0x1b0] sm:$0xff]
      %v2130 = vld [vmem:[#allocation2 + $0x1b8] sm:$0xff]
      %v2131 = vld [vmem:[#allocation2 + $0x1c0] sm:$0xff]
      %v2132 = vld [vmem:[#allocation2 + $0x1c8] sm:$0xff]
      %v2133 = vld [vmem:[#allocation2 + $0x1d0] sm:$0xff]
      %v2134 = vld [vmem:[#allocation2 + $0x1d8] sm:$0xff]
      %v2135 = vld [vmem:[#allocation2 + $0x1e0] sm:$0xff]
      %v2136 = vld [vmem:[#allocation2 + $0x1e8] sm:$0xff]
      %v2137 = vld [vmem:[#allocation2 + $0x1f0] sm:$0x3f]
      %v2138 = vld [vmem:[#allocation2 + $0x1f8] sm:$0x3f]
      %vm2203 = vcmask 1045504
      %v2204 = vrot.slane %v1917, 2
      %v2205 = vrot.slane %v1921, 2
      %v2206 = vsel %vm2203, %v2204, %v2205
      %v2207 = vrot.slane %v1919, 2
      %v2208 = vrot.slane %v1923, 2
      %v2209 = vsel %vm2203, %v2207, %v2208
      %v2210 = vrot.slane %v1927, 2
      %v2211 = vsel %vm2203, %v2205, %v2210
      %v2212 = vrot.slane %v1929, 2
      %v2213 = vsel %vm2203, %v2208, %v2212
      %v2214 = vrot.slane %v1931, 2
      %v2215 = vsel %vm2203, %v2210, %v2214
      %v2216 = vrot.slane %v1933, 2
      %v2217 = vsel %vm2203, %v2212, %v2216
      %v2218 = vrot.slane %v1937, 2
      %v2219 = vsel %vm2203, %v2214, %v2218
      %v2220 = vrot.slane %v1939, 2
      %v2221 = vsel %vm2203, %v2216, %v2220
      %v2222 = vrot.slane %v1941, 2
      %v2223 = vsel %vm2203, %v2218, %v2222
      %v2224 = vrot.slane %v1943, 2
      %v2225 = vsel %vm2203, %v2220, %v2224
      %v2226 = vrot.slane %v1947, 2
      %v2227 = vsel %vm2203, %v2222, %v2226
      %v2228 = vrot.slane %v1949, 2
      %v2229 = vsel %vm2203, %v2224, %v2228
      %v2230 = vrot.slane %v1951, 2
      %v2231 = vsel %vm2203, %v2226, %v2230
      %v2232 = vrot.slane %v1953, 2
      %v2233 = vsel %vm2203, %v2228, %v2232
      %v2234 = vrot.slane %v1957, 2
      %v2235 = vsel %vm2203, %v2230, %v2234
      %v2236 = vrot.slane %v1959, 2
      %v2237 = vsel %vm2203, %v2232, %v2236
      %v2238 = vrot.slane %v1961, 2
      %v2239 = vsel %vm2203, %v2234, %v2238
      %v2240 = vrot.slane %v1963, 2
      %v2241 = vsel %vm2203, %v2236, %v2240
      %v2242 = vrot.slane %v1967, 2
      %v2243 = vsel %vm2203, %v2238, %v2242
      %v2244 = vrot.slane %v1969, 2
      %v2245 = vsel %vm2203, %v2240, %v2244
      %v2246 = vrot.slane %v1971, 2
      %v2247 = vsel %vm2203, %v2242, %v2246
      %v2248 = vrot.slane %v1973, 2
      %v2249 = vsel %vm2203, %v2244, %v2248
      %v2250 = vrot.slane %v1977, 2
      %v2251 = vsel %vm2203, %v2246, %v2250
      %v2252 = vrot.slane %v1979, 2
      %v2253 = vsel %vm2203, %v2248, %v2252
      %v2254 = vrot.slane %v1981, 2
      %v2255 = vsel %vm2203, %v2250, %v2254
      %v2256 = vrot.slane %v1983, 2
      %v2257 = vsel %vm2203, %v2252, %v2256
      %v2258 = vrot.slane %v1987, 2
      %v2259 = vsel %vm2203, %v2254, %v2258
      %v2260 = vrot.slane %v1989, 2
      %v2261 = vsel %vm2203, %v2256, %v2260
      %v2262 = vrot.slane %v1991, 2
      %v2263 = vsel %vm2203, %v2258, %v2262
      %v2264 = vrot.slane %v1993, 2
      %v2265 = vsel %vm2203, %v2260, %v2264
      %v2266 = vrot.slane %v1997, 2
      %v2267 = vsel %vm2203, %v2262, %v2266
      %v2268 = vrot.slane %v1999, 2
      %v2269 = vsel %vm2203, %v2264, %v2268
      %v2270 = vrot.slane %v2001, 2
      %v2271 = vsel %vm2203, %v2266, %v2270
      %v2272 = vrot.slane %v2003, 2
      %v2273 = vsel %vm2203, %v2268, %v2272
      %v2274 = vrot.slane %v2007, 2
      %v2275 = vsel %vm2203, %v2270, %v2274
      %v2276 = vrot.slane %v2009, 2
      %v2277 = vsel %vm2203, %v2272, %v2276
      %v2278 = vrot.slane %v2011, 2
      %v2279 = vsel %vm2203, %v2274, %v2278
      %v2280 = vrot.slane %v2013, 2
      %v2281 = vsel %vm2203, %v2276, %v2280
      %v2282 = vrot.slane %v2017, 2
      %v2283 = vsel %vm2203, %v2278, %v2282
      %v2284 = vrot.slane %v2019, 2
      %v2285 = vsel %vm2203, %v2280, %v2284
      %v2286 = vrot.slane %v2021, 2
      %v2287 = vsel %vm2203, %v2282, %v2286
      %v2288 = vrot.slane %v2023, 2
      %v2289 = vsel %vm2203, %v2284, %v2288
      %v2290 = vrot.slane %v2027, 2
      %v2291 = vsel %vm2203, %v2286, %v2290
      %v2292 = vrot.slane %v2029, 2
      %v2293 = vsel %vm2203, %v2288, %v2292
      %v2294 = vrot.slane %v2031, 2
      %v2295 = vsel %vm2203, %v2290, %v2294
      %v2296 = vrot.slane %v2033, 2
      %v2297 = vsel %vm2203, %v2292, %v2296
      %v2298 = vrot.slane %v2037, 2
      %v2299 = vsel %vm2203, %v2294, %v2298
      %v2300 = vrot.slane %v2039, 2
      %v2301 = vsel %vm2203, %v2296, %v2300
      %v2302 = vrot.slane %v2041, 2
      %v2303 = vsel %vm2203, %v2298, %v2302
      %v2304 = vrot.slane %v2043, 2
      %v2305 = vsel %vm2203, %v2300, %v2304
      %v2306 = vrot.slane %v2047, 2
      %v2307 = vsel %vm2203, %v2302, %v2306
      %v2308 = vrot.slane %v2049, 2
      %v2309 = vsel %vm2203, %v2304, %v2308
      %v2310 = vrot.slane %v2051, 2
      %v2311 = vsel %vm2203, %v2306, %v2310
      %v2312 = vrot.slane %v2053, 2
      %v2313 = vsel %vm2203, %v2308, %v2312
      %v2314 = vrot.slane %v2057, 2
      %v2315 = vsel %vm2203, %v2310, %v2314
      %v2316 = vrot.slane %v2059, 2
      %v2317 = vsel %vm2203, %v2312, %v2316
      %v2318 = vrot.slane %v2061, 2
      %v2319 = vsel %vm2203, %v2314, %v2318
      %v2320 = vrot.slane %v2063, 2
      %v2321 = vsel %vm2203, %v2316, %v2320
      %v2322 = vrot.slane %v2067, 2
      %v2323 = vsel %vm2203, %v2318, %v2322
      %v2324 = vrot.slane %v2069, 2
      %v2325 = vsel %vm2203, %v2320, %v2324
      %v2326 = vrot.slane %v2071, 2
      %v2327 = vsel %vm2203, %v2322, %v2326
      %v2328 = vrot.slane %v2073, 2
      %v2329 = vsel %vm2203, %v2324, %v2328
      %v2394 = vadd.f32 %v2075, %v2206
      %v2395 = vadd.f32 %v2076, %v2209
      %v2396 = vadd.f32 %v2077, %v2211
      %v2397 = vadd.f32 %v2078, %v2213
      %v2398 = vadd.f32 %v2079, %v2215
      %v2399 = vadd.f32 %v2080, %v2217
      %v2400 = vadd.f32 %v2081, %v2219
      %v2401 = vadd.f32 %v2082, %v2221
      %v2402 = vadd.f32 %v2083, %v2223
      %v2403 = vadd.f32 %v2084, %v2225
      %v2404 = vadd.f32 %v2085, %v2227
      %v2405 = vadd.f32 %v2086, %v2229
      %v2406 = vadd.f32 %v2087, %v2231
      %v2407 = vadd.f32 %v2088, %v2233
      %v2408 = vadd.f32 %v2089, %v2235
      %v2409 = vadd.f32 %v2090, %v2237
      %v2410 = vadd.f32 %v2091, %v2239
      %v2411 = vadd.f32 %v2092, %v2241
      %v2412 = vadd.f32 %v2093, %v2243
      %v2413 = vadd.f32 %v2094, %v2245
      %v2414 = vadd.f32 %v2095, %v2247
      %v2415 = vadd.f32 %v2096, %v2249
      %v2416 = vadd.f32 %v2097, %v2251
      %v2417 = vadd.f32 %v2098, %v2253
      %v2418 = vadd.f32 %v2099, %v2255
      %v2419 = vadd.f32 %v2100, %v2257
      %v2420 = vadd.f32 %v2101, %v2259
      %v2421 = vadd.f32 %v2102, %v2261
      %v2422 = vadd.f32 %v2103, %v2263
      %v2423 = vadd.f32 %v2104, %v2265
      %v2424 = vadd.f32 %v2105, %v2267
      %v2425 = vadd.f32 %v2106, %v2269
      %v2426 = vadd.f32 %v2107, %v2271
      %v2427 = vadd.f32 %v2108, %v2273
      %v2428 = vadd.f32 %v2109, %v2275
      %v2429 = vadd.f32 %v2110, %v2277
      %v2430 = vadd.f32 %v2111, %v2279
      %v2431 = vadd.f32 %v2112, %v2281
      %v2432 = vadd.f32 %v2113, %v2283
      %v2433 = vadd.f32 %v2114, %v2285
      %v2434 = vadd.f32 %v2115, %v2287
      %v2435 = vadd.f32 %v2116, %v2289
      %v2436 = vadd.f32 %v2117, %v2291
      %v2437 = vadd.f32 %v2118, %v2293
      %v2438 = vadd.f32 %v2119, %v2295
      %v2439 = vadd.f32 %v2120, %v2297
      %v2440 = vadd.f32 %v2121, %v2299
      %v2441 = vadd.f32 %v2122, %v2301
      %v2442 = vadd.f32 %v2123, %v2303
      %v2443 = vadd.f32 %v2124, %v2305
      %v2444 = vadd.f32 %v2125, %v2307
      %v2445 = vadd.f32 %v2126, %v2309
      %v2446 = vadd.f32 %v2127, %v2311
      %v2447 = vadd.f32 %v2128, %v2313
      %v2448 = vadd.f32 %v2129, %v2315
      %v2449 = vadd.f32 %v2130, %v2317
      %v2450 = vadd.f32 %v2131, %v2319
      %v2451 = vadd.f32 %v2132, %v2321
      %v2452 = vadd.f32 %v2133, %v2323
      %v2453 = vadd.f32 %v2134, %v2325
      %v2454 = vadd.f32 %v2135, %v2327
      %v2455 = vadd.f32 %v2136, %v2329
      %v2456 = vadd.f32 %v2137, %v2326
      %v2457 = vadd.f32 %v2138, %v2328
      %2458 = vst [vmem:[#allocation2] sm:$0xff] %v2394
      %2459 = vst.msk [vmem:[#allocation2 + $0x8] sm:$0xff] %vm1031, %v2395
      %2460 = vst [vmem:[#allocation2 + $0x10] sm:$0xff] %v2396
      %2461 = vst.msk [vmem:[#allocation2 + $0x18] sm:$0xff] %vm1031, %v2397
      %2462 = vst [vmem:[#allocation2 + $0x20] sm:$0xff] %v2398
      %2463 = vst.msk [vmem:[#allocation2 + $0x28] sm:$0xff] %vm1031, %v2399
      %2464 = vst [vmem:[#allocation2 + $0x30] sm:$0xff] %v2400
      %2465 = vst.msk [vmem:[#allocation2 + $0x38] sm:$0xff] %vm1031, %v2401
      %2466 = vst [vmem:[#allocation2 + $0x40] sm:$0xff] %v2402
      %2467 = vst.msk [vmem:[#allocation2 + $0x48] sm:$0xff] %vm1031, %v2403
      %2468 = vst [vmem:[#allocation2 + $0x50] sm:$0xff] %v2404
      %2469 = vst.msk [vmem:[#allocation2 + $0x58] sm:$0xff] %vm1031, %v2405
      %2470 = vst [vmem:[#allocation2 + $0x60] sm:$0xff] %v2406
      %2471 = vst.msk [vmem:[#allocation2 + $0x68] sm:$0xff] %vm1031, %v2407
      %2472 = vst [vmem:[#allocation2 + $0x70] sm:$0xff] %v2408
      %2473 = vst.msk [vmem:[#allocation2 + $0x78] sm:$0xff] %vm1031, %v2409
      %2474 = vst [vmem:[#allocation2 + $0x80] sm:$0xff] %v2410
      %2475 = vst.msk [vmem:[#allocation2 + $0x88] sm:$0xff] %vm1031, %v2411
      %2476 = vst [vmem:[#allocation2 + $0x90] sm:$0xff] %v2412
      %2477 = vst.msk [vmem:[#allocation2 + $0x98] sm:$0xff] %vm1031, %v2413
      %2478 = vst [vmem:[#allocation2 + $0xa0] sm:$0xff] %v2414
      %2479 = vst.msk [vmem:[#allocation2 + $0xa8] sm:$0xff] %vm1031, %v2415
      %2480 = vst [vmem:[#allocation2 + $0xb0] sm:$0xff] %v2416
      %2481 = vst.msk [vmem:[#allocation2 + $0xb8] sm:$0xff] %vm1031, %v2417
      %2482 = vst [vmem:[#allocation2 + $0xc0] sm:$0xff] %v2418
      %2483 = vst.msk [vmem:[#allocation2 + $0xc8] sm:$0xff] %vm1031, %v2419
      %2484 = vst [vmem:[#allocation2 + $0xd0] sm:$0xff] %v2420
      %2485 = vst.msk [vmem:[#allocation2 + $0xd8] sm:$0xff] %vm1031, %v2421
      %2486 = vst [vmem:[#allocation2 + $0xe0] sm:$0xff] %v2422
      %2487 = vst.msk [vmem:[#allocation2 + $0xe8] sm:$0xff] %vm1031, %v2423
      %2488 = vst [vmem:[#allocation2 + $0xf0] sm:$0xff] %v2424
      %2489 = vst.msk [vmem:[#allocation2 + $0xf8] sm:$0xff] %vm1031, %v2425
      %2490 = vst [vmem:[#allocation2 + $0x100] sm:$0xff] %v2426
      %2491 = vst.msk [vmem:[#allocation2 + $0x108] sm:$0xff] %vm1031, %v2427
      %2492 = vst [vmem:[#allocation2 + $0x110] sm:$0xff] %v2428
      %2493 = vst.msk [vmem:[#allocation2 + $0x118] sm:$0xff] %vm1031, %v2429
      %2494 = vst [vmem:[#allocation2 + $0x120] sm:$0xff] %v2430
      %2495 = vst.msk [vmem:[#allocation2 + $0x128] sm:$0xff] %vm1031, %v2431
      %2496 = vst [vmem:[#allocation2 + $0x130] sm:$0xff] %v2432
      %2497 = vst.msk [vmem:[#allocation2 + $0x138] sm:$0xff] %vm1031, %v2433
      %2498 = vst [vmem:[#allocation2 + $0x140] sm:$0xff] %v2434
      %2499 = vst.msk [vmem:[#allocation2 + $0x148] sm:$0xff] %vm1031, %v2435
      %2500 = vst [vmem:[#allocation2 + $0x150] sm:$0xff] %v2436
      %2501 = vst.msk [vmem:[#allocation2 + $0x158] sm:$0xff] %vm1031, %v2437
      %2502 = vst [vmem:[#allocation2 + $0x160] sm:$0xff] %v2438
      %2503 = vst.msk [vmem:[#allocation2 + $0x168] sm:$0xff] %vm1031, %v2439
      %2504 = vst [vmem:[#allocation2 + $0x170] sm:$0xff] %v2440
      %2505 = vst.msk [vmem:[#allocation2 + $0x178] sm:$0xff] %vm1031, %v2441
      %2506 = vst [vmem:[#allocation2 + $0x180] sm:$0xff] %v2442
      %2507 = vst.msk [vmem:[#allocation2 + $0x188] sm:$0xff] %vm1031, %v2443
      %2508 = vst [vmem:[#allocation2 + $0x190] sm:$0xff] %v2444
      %2509 = vst.msk [vmem:[#allocation2 + $0x198] sm:$0xff] %vm1031, %v2445
      %2510 = vst [vmem:[#allocation2 + $0x1a0] sm:$0xff] %v2446
      %2511 = vst.msk [vmem:[#allocation2 + $0x1a8] sm:$0xff] %vm1031, %v2447
      %2512 = vst [vmem:[#allocation2 + $0x1b0] sm:$0xff] %v2448
      %2513 = vst.msk [vmem:[#allocation2 + $0x1b8] sm:$0xff] %vm1031, %v2449
      %2514 = vst [vmem:[#allocation2 + $0x1c0] sm:$0xff] %v2450
      %2515 = vst.msk [vmem:[#allocation2 + $0x1c8] sm:$0xff] %vm1031, %v2451
      %2516 = vst [vmem:[#allocation2 + $0x1d0] sm:$0xff] %v2452
      %2517 = vst.msk [vmem:[#allocation2 + $0x1d8] sm:$0xff] %vm1031, %v2453
      %2518 = vst [vmem:[#allocation2 + $0x1e0] sm:$0xff] %v2454
      %2519 = vst.msk [vmem:[#allocation2 + $0x1e8] sm:$0xff] %vm1031, %v2455
      %2520 = vst [vmem:[#allocation2 + $0x1f0] sm:$0x3f] %v2456
      %vm2521 = vcmask 324608
      %2522 = vst.msk [vmem:[#allocation2 + $0x1f8] sm:$0x3f] %vm2521, %v2457
      %s2523 = scalar_lea.vmem %s1, 288
      %v2524 = vld [vmem:[%s2523] sm:$0xff]
      %v2525 = vld [vmem:[%s2523 + $0x8] sm:$0xff]
      %v2526 = vld [vmem:[%s2523 + $0x10] sm:$0xff]
      %v2527 = vld [vmem:[%s2523 + $0x18] sm:$0xff]
      %v2528 = vld [vmem:[%s2523 + $0x20] sm:$0xff]
      %v2529 = vld [vmem:[%s2523 + $0x28] sm:$0xff]
      %v2530 = vld [vmem:[%s2523 + $0x30] sm:$0xff]
      %v2531 = vld [vmem:[%s2523 + $0x38] sm:$0xff]
      %v2532 = vld [vmem:[%s2523 + $0x40] sm:$0xff]
      %v2533 = vld [vmem:[%s2523 + $0x48] sm:$0xff]
      %v2534 = vld [vmem:[%s2523 + $0x50] sm:$0xff]
      %v2535 = vld [vmem:[%s2523 + $0x58] sm:$0xff]
      %v2548 = vunpack.c.l.b16 %v2524
      %v2549 = vunpack.c.h.b16 %v2524
      %v2550 = vunpack.c.l.b16 %v2525
      %v2551 = vunpack.c.h.b16 %v2525
      %v2552 = vunpack.c.l.b16 %v2526
      %v2553 = vunpack.c.h.b16 %v2526
      %v2554 = vunpack.c.l.b16 %v2527
      %v2555 = vunpack.c.h.b16 %v2527
      %v2556 = vunpack.c.l.b16 %v2528
      %v2557 = vunpack.c.h.b16 %v2528
      %v2558 = vunpack.c.l.b16 %v2529
      %v2559 = vunpack.c.h.b16 %v2529
      %v2560 = vunpack.c.l.b16 %v2530
      %v2561 = vunpack.c.h.b16 %v2530
      %v2562 = vunpack.c.l.b16 %v2531
      %v2563 = vunpack.c.h.b16 %v2531
      %v2564 = vunpack.c.l.b16 %v2532
      %v2565 = vunpack.c.h.b16 %v2532
      %v2566 = vunpack.c.l.b16 %v2533
      %v2567 = vunpack.c.h.b16 %v2533
      %v2568 = vunpack.c.l.b16 %v2534
      %v2569 = vunpack.c.h.b16 %v2534
      %v2570 = vunpack.c.l.b16 %v2535
      %v2571 = vunpack.c.h.b16 %v2535
      %v2572 = vpack.c.b16 %v2550, %v2548
      %v2573 = vpack.c.b16 %v2551, %v2549
      %v2574 = vpack.c.b16 %v2554, %v2552
      %v2575 = vpack.c.b16 %v2555, %v2553
      %v2576 = vpack.c.b16 %v2558, %v2556
      %v2577 = vpack.c.b16 %v2559, %v2557
      %v2578 = vpack.c.b16 %v2562, %v2560
      %v2579 = vpack.c.b16 %v2563, %v2561
      %v2580 = vpack.c.b16 %v2566, %v2564
      %v2581 = vpack.c.b16 %v2567, %v2565
      %v2582 = vpack.c.b16 %v2570, %v2568
      %v2583 = vpack.c.b16 %v2571, %v2569
      %2596 = vmatprep.subr.bf16.mxu0 %v2573
      %2597 = vmatpush1.bf16.msra.mxu0 %v2572
      %2598 = vmatprep.subr.bf16.mxu0 %v2575
      %2599 = vmatpush1.bf16.msra.mxu0 %v2574
      %2600 = vmatprep.subr.bf16.mxu0 %v2577
      %2601 = vmatpush1.bf16.msra.mxu0 %v2576
      %2602 = vmatprep.subr.bf16.mxu0 %v2579
      %2603 = vmatpush1.bf16.msra.mxu0 %v2578
      %2604 = vmatprep.subr.bf16.mxu0 %v2581
      %2605 = vmatpush1.bf16.msra.mxu0 %v2580
      %2606 = vmatprep.subr.bf16.mxu0 %v2583
      %2607 = vmatpush1.bf16.msra.mxu0 %v2582
      %2608 = vmatprep.subr.bf16.mxu0 0
      %2609 = vmatpush1.bf16.msra.mxu0 0
      %2610 = vmatprep.subr.bf16.mxu0 0
      %2611 = vmatpush1.bf16.msra.mxu0 0
      %2612 = vmatprep.subr.bf16.mxu0 0
      %2613 = vmatpush1.bf16.msra.mxu0 0
      %2614 = vmatprep.subr.bf16.mxu0 0
      %2615 = vmatpush1.bf16.msra.mxu0 0
      %2616 = vmatprep.subr.bf16.mxu0 0
      %2617 = vmatpush1.bf16.msra.mxu0 0
      %2618 = vmatprep.subr.bf16.mxu0 0
      %2619 = vmatpush1.bf16.msra.mxu0 0
      %2620 = vmatprep.subr.bf16.mxu0 0
      %2621 = vmatpush1.bf16.msra.mxu0 0
      %2622 = vmatprep.subr.bf16.mxu0 0
      %2623 = vmatpush1.bf16.msra.mxu0 0
      %2624 = vmatprep.subr.bf16.mxu0 0
      %2625 = vmatpush1.bf16.msra.mxu0 0
      %2626 = vmatprep.subr.bf16.mxu0 0
      %2627 = vmatpush1.bf16.msra.mxu0 0
      %2628 = vmatprep.mubr.bf16.mxu0 0
      %2629 = vmatmul.mubr.bf16.gmra.mrb[0].mxu0 %v790
      %v2630 = vpop.f32.mrb[0].mxu0
      %v2631 = vadd.f32 0.0, %v2630
      %v2632 = vpop.f32.mrb[0].mxu0
      %v2633 = vadd.f32 0.0, %v2632
      %v2634 = vpop.f32.mrb[0].mxu0
      %v2635 = vadd.f32 0.0, %v2634
      %v2636 = vpop.f32.mrb[0].mxu0
      %v2637 = vadd.f32 0.0, %v2636
      %2638 = vmatprep.mubr.bf16.mxu0 0
      %2639 = vmatmul.mubr.bf16.gmra.mrb[0].mxu0 %v793
      %v2640 = vpop.f32.mrb[0].mxu0
      %v2641 = vadd.f32 0.0, %v2640
      %v2642 = vpop.f32.mrb[0].mxu0
      %v2643 = vadd.f32 0.0, %v2642
      %v2644 = vpop.f32.mrb[0].mxu0
      %v2645 = vadd.f32 0.0, %v2644
      %v2646 = vpop.f32.mrb[0].mxu0
      %v2647 = vadd.f32 0.0, %v2646
      %2648 = vmatprep.mubr.bf16.mxu0 0
      %2649 = vmatmul.mubr.bf16.gmra.mrb[0].mxu0 %v796
      %v2650 = vpop.f32.mrb[0].mxu0
      %v2651 = vadd.f32 0.0, %v2650
      %v2652 = vpop.f32.mrb[0].mxu0
      %v2653 = vadd.f32 0.0, %v2652
      %v2654 = vpop.f32.mrb[0].mxu0
      %v2655 = vadd.f32 0.0, %v2654
      %v2656 = vpop.f32.mrb[0].mxu0
      %v2657 = vadd.f32 0.0, %v2656
      %2658 = vmatprep.mubr.bf16.mxu0 0
      %2659 = vmatmul.mubr.bf16.gmra.mrb[0].mxu0 %v799
      %v2660 = vpop.f32.mrb[0].mxu0
      %v2661 = vadd.f32 0.0, %v2660
      %v2662 = vpop.f32.mrb[0].mxu0
      %v2663 = vadd.f32 0.0, %v2662
      %v2664 = vpop.f32.mrb[0].mxu0
      %v2665 = vadd.f32 0.0, %v2664
      %v2666 = vpop.f32.mrb[0].mxu0
      %v2667 = vadd.f32 0.0, %v2666
      %2668 = vmatprep.mubr.bf16.mxu0 0
      %2669 = vmatmul.mubr.bf16.gmra.mrb[0].mxu0 %v802
      %v2670 = vpop.f32.mrb[0].mxu0
      %v2671 = vadd.f32 0.0, %v2670
      %v2672 = vpop.f32.mrb[0].mxu0
      %v2673 = vadd.f32 0.0, %v2672
      %v2674 = vpop.f32.mrb[0].mxu0
      %v2675 = vadd.f32 0.0, %v2674
      %v2676 = vpop.f32.mrb[0].mxu0
      %v2677 = vadd.f32 0.0, %v2676
      %2678 = vmatprep.mubr.bf16.mxu0 0
      %2679 = vmatmul.mubr.bf16.gmra.mrb[0].mxu0 %v805
      %v2680 = vpop.f32.mrb[0].mxu0
      %v2681 = vadd.f32 0.0, %v2680
      %v2682 = vpop.f32.mrb[0].mxu0
      %v2683 = vadd.f32 0.0, %v2682
      %v2684 = vpop.f32.mrb[0].mxu0
      %v2685 = vadd.f32 0.0, %v2684
      %v2686 = vpop.f32.mrb[0].mxu0
      %v2687 = vadd.f32 0.0, %v2686
      %2688 = vmatprep.mubr.bf16.mxu0 0
      %2689 = vmatmul.mubr.bf16.gmra.mrb[0].mxu0 %v808
      %v2690 = vpop.f32.mrb[0].mxu0
      %v2691 = vadd.f32 0.0, %v2690
      %v2692 = vpop.f32.mrb[0].mxu0
      %v2693 = vadd.f32 0.0, %v2692
      %v2694 = vpop.f32.mrb[0].mxu0
      %v2695 = vadd.f32 0.0, %v2694
      %v2696 = vpop.f32.mrb[0].mxu0
      %v2697 = vadd.f32 0.0, %v2696
      %2698 = vmatprep.mubr.bf16.mxu0 0
      %2699 = vmatmul.mubr.bf16.gmra.mrb[0].mxu0 %v811
      %v2700 = vpop.f32.mrb[0].mxu0
      %v2701 = vadd.f32 0.0, %v2700
      %v2702 = vpop.f32.mrb[0].mxu0
      %v2703 = vadd.f32 0.0, %v2702
      %v2704 = vpop.f32.mrb[0].mxu0
      %v2705 = vadd.f32 0.0, %v2704
      %v2706 = vpop.f32.mrb[0].mxu0
      %v2707 = vadd.f32 0.0, %v2706
      %2708 = vmatprep.mubr.bf16.mxu0 0
      %2709 = vmatmul.mubr.bf16.gmra.mrb[0].mxu0 %v814
      %v2710 = vpop.f32.mrb[0].mxu0
      %v2711 = vadd.f32 0.0, %v2710
      %v2712 = vpop.f32.mrb[0].mxu0
      %v2713 = vadd.f32 0.0, %v2712
      %v2714 = vpop.f32.mrb[0].mxu0
      %v2715 = vadd.f32 0.0, %v2714
      %v2716 = vpop.f32.mrb[0].mxu0
      %v2717 = vadd.f32 0.0, %v2716
      %2718 = vmatprep.mubr.bf16.mxu0 0
      %2719 = vmatmul.mubr.bf16.gmra.mrb[0].mxu0 %v817
      %v2720 = vpop.f32.mrb[0].mxu0
      %v2721 = vadd.f32 0.0, %v2720
      %v2722 = vpop.f32.mrb[0].mxu0
      %v2723 = vadd.f32 0.0, %v2722
      %v2724 = vpop.f32.mrb[0].mxu0
      %v2725 = vadd.f32 0.0, %v2724
      %v2726 = vpop.f32.mrb[0].mxu0
      %v2727 = vadd.f32 0.0, %v2726
      %2728 = vmatprep.mubr.bf16.mxu0 0
      %2729 = vmatmul.mubr.bf16.gmra.mrb[0].mxu0 %v820
      %v2730 = vpop.f32.mrb[0].mxu0
      %v2731 = vadd.f32 0.0, %v2730
      %v2732 = vpop.f32.mrb[0].mxu0
      %v2733 = vadd.f32 0.0, %v2732
      %v2734 = vpop.f32.mrb[0].mxu0
      %v2735 = vadd.f32 0.0, %v2734
      %v2736 = vpop.f32.mrb[0].mxu0
      %v2737 = vadd.f32 0.0, %v2736
      %2738 = vmatprep.mubr.bf16.mxu0 0
      %2739 = vmatmul.mubr.bf16.gmra.mrb[0].mxu0 %v823
      %v2740 = vpop.f32.mrb[0].mxu0
      %v2741 = vadd.f32 0.0, %v2740
      %v2742 = vpop.f32.mrb[0].mxu0
      %v2743 = vadd.f32 0.0, %v2742
      %v2744 = vpop.f32.mrb[0].mxu0
      %v2745 = vadd.f32 0.0, %v2744
      %v2746 = vpop.f32.mrb[0].mxu0
      %v2747 = vadd.f32 0.0, %v2746
      %2748 = vmatprep.mubr.bf16.mxu0 0
      %2749 = vmatmul.mubr.bf16.gmra.mrb[0].mxu0 %v826
      %v2750 = vpop.f32.mrb[0].mxu0
      %v2751 = vadd.f32 0.0, %v2750
      %v2752 = vpop.f32.mrb[0].mxu0
      %v2753 = vadd.f32 0.0, %v2752
      %v2754 = vpop.f32.mrb[0].mxu0
      %v2755 = vadd.f32 0.0, %v2754
      %v2756 = vpop.f32.mrb[0].mxu0
      %v2757 = vadd.f32 0.0, %v2756
      %2758 = vmatprep.mubr.bf16.mxu0 0
      %2759 = vmatmul.mubr.bf16.gmra.mrb[0].mxu0 %v829
      %v2760 = vpop.f32.mrb[0].mxu0
      %v2761 = vadd.f32 0.0, %v2760
      %v2762 = vpop.f32.mrb[0].mxu0
      %v2763 = vadd.f32 0.0, %v2762
      %v2764 = vpop.f32.mrb[0].mxu0
      %v2765 = vadd.f32 0.0, %v2764
      %v2766 = vpop.f32.mrb[0].mxu0
      %v2767 = vadd.f32 0.0, %v2766
      %2768 = vmatprep.mubr.bf16.mxu0 0
      %2769 = vmatmul.mubr.bf16.gmra.mrb[0].mxu0 %v832
      %v2770 = vpop.f32.mrb[0].mxu0
      %v2771 = vadd.f32 0.0, %v2770
      %v2772 = vpop.f32.mrb[0].mxu0
      %v2773 = vadd.f32 0.0, %v2772
      %v2774 = vpop.f32.mrb[0].mxu0
      %v2775 = vadd.f32 0.0, %v2774
      %v2776 = vpop.f32.mrb[0].mxu0
      %v2777 = vadd.f32 0.0, %v2776
      %2778 = vmatprep.mubr.bf16.mxu0 0
      %2779 = vmatmul.mubr.bf16.gmra.mrb[0].mxu0 %v835
      %v2780 = vpop.f32.mrb[0].mxu0
      %v2781 = vadd.f32 0.0, %v2780
      %v2782 = vpop.f32.mrb[0].mxu0
      %v2783 = vadd.f32 0.0, %v2782
      %v2784 = vpop.f32.mrb[0].mxu0
      %v2785 = vadd.f32 0.0, %v2784
      %v2786 = vpop.f32.mrb[0].mxu0
      %v2787 = vadd.f32 0.0, %v2786
      %2788 = vdwg.mxu0
      %v2789 = vld [vmem:[#allocation2] sm:$0xff]
      %v2790 = vld [vmem:[#allocation2 + $0x8] sm:$0xff]
      %v2791 = vld [vmem:[#allocation2 + $0x10] sm:$0xff]
      %v2792 = vld [vmem:[#allocation2 + $0x18] sm:$0xff]
      %v2793 = vld [vmem:[#allocation2 + $0x20] sm:$0xff]
      %v2794 = vld [vmem:[#allocation2 + $0x28] sm:$0xff]
      %v2795 = vld [vmem:[#allocation2 + $0x30] sm:$0xff]
      %v2796 = vld [vmem:[#allocation2 + $0x38] sm:$0xff]
      %v2797 = vld [vmem:[#allocation2 + $0x40] sm:$0xff]
      %v2798 = vld [vmem:[#allocation2 + $0x48] sm:$0xff]
      %v2799 = vld [vmem:[#allocation2 + $0x50] sm:$0xff]
      %v2800 = vld [vmem:[#allocation2 + $0x58] sm:$0xff]
      %v2801 = vld [vmem:[#allocation2 + $0x60] sm:$0xff]
      %v2802 = vld [vmem:[#allocation2 + $0x68] sm:$0xff]
      %v2803 = vld [vmem:[#allocation2 + $0x70] sm:$0xff]
      %v2804 = vld [vmem:[#allocation2 + $0x78] sm:$0xff]
      %v2805 = vld [vmem:[#allocation2 + $0x80] sm:$0xff]
      %v2806 = vld [vmem:[#allocation2 + $0x88] sm:$0xff]
      %v2807 = vld [vmem:[#allocation2 + $0x90] sm:$0xff]
      %v2808 = vld [vmem:[#allocation2 + $0x98] sm:$0xff]
      %v2809 = vld [vmem:[#allocation2 + $0xa0] sm:$0xff]
      %v2810 = vld [vmem:[#allocation2 + $0xa8] sm:$0xff]
      %v2811 = vld [vmem:[#allocation2 + $0xb0] sm:$0xff]
      %v2812 = vld [vmem:[#allocation2 + $0xb8] sm:$0xff]
      %v2813 = vld [vmem:[#allocation2 + $0xc0] sm:$0xff]
      %v2814 = vld [vmem:[#allocation2 + $0xc8] sm:$0xff]
      %v2815 = vld [vmem:[#allocation2 + $0xd0] sm:$0xff]
      %v2816 = vld [vmem:[#allocation2 + $0xd8] sm:$0xff]
      %v2817 = vld [vmem:[#allocation2 + $0xe0] sm:$0xff]
      %v2818 = vld [vmem:[#allocation2 + $0xe8] sm:$0xff]
      %v2819 = vld [vmem:[#allocation2 + $0xf0] sm:$0xff]
      %v2820 = vld [vmem:[#allocation2 + $0xf8] sm:$0xff]
      %v2821 = vld [vmem:[#allocation2 + $0x100] sm:$0xff]
      %v2822 = vld [vmem:[#allocation2 + $0x108] sm:$0xff]
      %v2823 = vld [vmem:[#allocation2 + $0x110] sm:$0xff]
      %v2824 = vld [vmem:[#allocation2 + $0x118] sm:$0xff]
      %v2825 = vld [vmem:[#allocation2 + $0x120] sm:$0xff]
      %v2826 = vld [vmem:[#allocation2 + $0x128] sm:$0xff]
      %v2827 = vld [vmem:[#allocation2 + $0x130] sm:$0xff]
      %v2828 = vld [vmem:[#allocation2 + $0x138] sm:$0xff]
      %v2829 = vld [vmem:[#allocation2 + $0x140] sm:$0xff]
      %v2830 = vld [vmem:[#allocation2 + $0x148] sm:$0xff]
      %v2831 = vld [vmem:[#allocation2 + $0x150] sm:$0xff]
      %v2832 = vld [vmem:[#allocation2 + $0x158] sm:$0xff]
      %v2833 = vld [vmem:[#allocation2 + $0x160] sm:$0xff]
      %v2834 = vld [vmem:[#allocation2 + $0x168] sm:$0xff]
      %v2835 = vld [vmem:[#allocation2 + $0x170] sm:$0xff]
      %v2836 = vld [vmem:[#allocation2 + $0x178] sm:$0xff]
      %v2837 = vld [vmem:[#allocation2 + $0x180] sm:$0xff]
      %v2838 = vld [vmem:[#allocation2 + $0x188] sm:$0xff]
      %v2839 = vld [vmem:[#allocation2 + $0x190] sm:$0xff]
      %v2840 = vld [vmem:[#allocation2 + $0x198] sm:$0xff]
      %v2841 = vld [vmem:[#allocation2 + $0x1a0] sm:$0xff]
      %v2842 = vld [vmem:[#allocation2 + $0x1a8] sm:$0xff]
      %v2843 = vld [vmem:[#allocation2 + $0x1b0] sm:$0xff]
      %v2844 = vld [vmem:[#allocation2 + $0x1b8] sm:$0xff]
      %v2845 = vld [vmem:[#allocation2 + $0x1c0] sm:$0xff]
      %v2846 = vld [vmem:[#allocation2 + $0x1c8] sm:$0xff]
      %v2847 = vld [vmem:[#allocation2 + $0x1d0] sm:$0xff]
      %v2848 = vld [vmem:[#allocation2 + $0x1d8] sm:$0xff]
      %v2849 = vld [vmem:[#allocation2 + $0x1e0] sm:$0xff]
      %v2850 = vld [vmem:[#allocation2 + $0x1e8] sm:$0xff]
      %v2851 = vld [vmem:[#allocation2 + $0x1f0] sm:$0x1f]
      %v2852 = vld [vmem:[#allocation2 + $0x1f8] sm:$0x1f]
      %vm2917 = vcmask 1044480
      %v2918 = vrot.slane %v2631, 3
      %v2919 = vrot.slane %v2635, 3
      %v2920 = vsel %vm2917, %v2918, %v2919
      %v2921 = vrot.slane %v2633, 3
      %v2922 = vrot.slane %v2637, 3
      %v2923 = vsel %vm2917, %v2921, %v2922
      %v2924 = vrot.slane %v2641, 3
      %v2925 = vsel %vm2917, %v2919, %v2924
      %v2926 = vrot.slane %v2643, 3
      %v2927 = vsel %vm2917, %v2922, %v2926
      %v2928 = vrot.slane %v2645, 3
      %v2929 = vsel %vm2917, %v2924, %v2928
      %v2930 = vrot.slane %v2647, 3
      %v2931 = vsel %vm2917, %v2926, %v2930
      %v2932 = vrot.slane %v2651, 3
      %v2933 = vsel %vm2917, %v2928, %v2932
      %v2934 = vrot.slane %v2653, 3
      %v2935 = vsel %vm2917, %v2930, %v2934
      %v2936 = vrot.slane %v2655, 3
      %v2937 = vsel %vm2917, %v2932, %v2936
      %v2938 = vrot.slane %v2657, 3
      %v2939 = vsel %vm2917, %v2934, %v2938
      %v2940 = vrot.slane %v2661, 3
      %v2941 = vsel %vm2917, %v2936, %v2940
      %v2942 = vrot.slane %v2663, 3
      %v2943 = vsel %vm2917, %v2938, %v2942
      %v2944 = vrot.slane %v2665, 3
      %v2945 = vsel %vm2917, %v2940, %v2944
      %v2946 = vrot.slane %v2667, 3
      %v2947 = vsel %vm2917, %v2942, %v2946
      %v2948 = vrot.slane %v2671, 3
      %v2949 = vsel %vm2917, %v2944, %v2948
      %v2950 = vrot.slane %v2673, 3
      %v2951 = vsel %vm2917, %v2946, %v2950
      %v2952 = vrot.slane %v2675, 3
      %v2953 = vsel %vm2917, %v2948, %v2952
      %v2954 = vrot.slane %v2677, 3
      %v2955 = vsel %vm2917, %v2950, %v2954
      %v2956 = vrot.slane %v2681, 3
      %v2957 = vsel %vm2917, %v2952, %v2956
      %v2958 = vrot.slane %v2683, 3
      %v2959 = vsel %vm2917, %v2954, %v2958
      %v2960 = vrot.slane %v2685, 3
      %v2961 = vsel %vm2917, %v2956, %v2960
      %v2962 = vrot.slane %v2687, 3
      %v2963 = vsel %vm2917, %v2958, %v2962
      %v2964 = vrot.slane %v2691, 3
      %v2965 = vsel %vm2917, %v2960, %v2964
      %v2966 = vrot.slane %v2693, 3
      %v2967 = vsel %vm2917, %v2962, %v2966
      %v2968 = vrot.slane %v2695, 3
      %v2969 = vsel %vm2917, %v2964, %v2968
      %v2970 = vrot.slane %v2697, 3
      %v2971 = vsel %vm2917, %v2966, %v2970
      %v2972 = vrot.slane %v2701, 3
      %v2973 = vsel %vm2917, %v2968, %v2972
      %v2974 = vrot.slane %v2703, 3
      %v2975 = vsel %vm2917, %v2970, %v2974
      %v2976 = vrot.slane %v2705, 3
      %v2977 = vsel %vm2917, %v2972, %v2976
      %v2978 = vrot.slane %v2707, 3
      %v2979 = vsel %vm2917, %v2974, %v2978
      %v2980 = vrot.slane %v2711, 3
      %v2981 = vsel %vm2917, %v2976, %v2980
      %v2982 = vrot.slane %v2713, 3
      %v2983 = vsel %vm2917, %v2978, %v2982
      %v2984 = vrot.slane %v2715, 3
      %v2985 = vsel %vm2917, %v2980, %v2984
      %v2986 = vrot.slane %v2717, 3
      %v2987 = vsel %vm2917, %v2982, %v2986
      %v2988 = vrot.slane %v2721, 3
      %v2989 = vsel %vm2917, %v2984, %v2988
      %v2990 = vrot.slane %v2723, 3
      %v2991 = vsel %vm2917, %v2986, %v2990
      %v2992 = vrot.slane %v2725, 3
      %v2993 = vsel %vm2917, %v2988, %v2992
      %v2994 = vrot.slane %v2727, 3
      %v2995 = vsel %vm2917, %v2990, %v2994
      %v2996 = vrot.slane %v2731, 3
      %v2997 = vsel %vm2917, %v2992, %v2996
      %v2998 = vrot.slane %v2733, 3
      %v2999 = vsel %vm2917, %v2994, %v2998
      %v3000 = vrot.slane %v2735, 3
      %v3001 = vsel %vm2917, %v2996, %v3000
      %v3002 = vrot.slane %v2737, 3
      %v3003 = vsel %vm2917, %v2998, %v3002
      %v3004 = vrot.slane %v2741, 3
      %v3005 = vsel %vm2917, %v3000, %v3004
      %v3006 = vrot.slane %v2743, 3
      %v3007 = vsel %vm2917, %v3002, %v3006
      %v3008 = vrot.slane %v2745, 3
      %v3009 = vsel %vm2917, %v3004, %v3008
      %v3010 = vrot.slane %v2747, 3
      %v3011 = vsel %vm2917, %v3006, %v3010
      %v3012 = vrot.slane %v2751, 3
      %v3013 = vsel %vm2917, %v3008, %v3012
      %v3014 = vrot.slane %v2753, 3
      %v3015 = vsel %vm2917, %v3010, %v3014
      %v3016 = vrot.slane %v2755, 3
      %v3017 = vsel %vm2917, %v3012, %v3016
      %v3018 = vrot.slane %v2757, 3
      %v3019 = vsel %vm2917, %v3014, %v3018
      %v3020 = vrot.slane %v2761, 3
      %v3021 = vsel %vm2917, %v3016, %v3020
      %v3022 = vrot.slane %v2763, 3
      %v3023 = vsel %vm2917, %v3018, %v3022
      %v3024 = vrot.slane %v2765, 3
      %v3025 = vsel %vm2917, %v3020, %v3024
      %v3026 = vrot.slane %v2767, 3
      %v3027 = vsel %vm2917, %v3022, %v3026
      %v3028 = vrot.slane %v2771, 3
      %v3029 = vsel %vm2917, %v3024, %v3028
      %v3030 = vrot.slane %v2773, 3
      %v3031 = vsel %vm2917, %v3026, %v3030
      %v3032 = vrot.slane %v2775, 3
      %v3033 = vsel %vm2917, %v3028, %v3032
      %v3034 = vrot.slane %v2777, 3
      %v3035 = vsel %vm2917, %v3030, %v3034
      %v3036 = vrot.slane %v2781, 3
      %v3037 = vsel %vm2917, %v3032, %v3036
      %v3038 = vrot.slane %v2783, 3
      %v3039 = vsel %vm2917, %v3034, %v3038
      %v3040 = vrot.slane %v2785, 3
      %v3041 = vsel %vm2917, %v3036, %v3040
      %v3042 = vrot.slane %v2787, 3
      %v3043 = vsel %vm2917, %v3038, %v3042
      %v3108 = vadd.f32 %v2789, %v2920
      %v3109 = vadd.f32 %v2790, %v2923
      %v3110 = vadd.f32 %v2791, %v2925
      %v3111 = vadd.f32 %v2792, %v2927
      %v3112 = vadd.f32 %v2793, %v2929
      %v3113 = vadd.f32 %v2794, %v2931
      %v3114 = vadd.f32 %v2795, %v2933
      %v3115 = vadd.f32 %v2796, %v2935
      %v3116 = vadd.f32 %v2797, %v2937
      %v3117 = vadd.f32 %v2798, %v2939
      %v3118 = vadd.f32 %v2799, %v2941
      %v3119 = vadd.f32 %v2800, %v2943
      %v3120 = vadd.f32 %v2801, %v2945
      %v3121 = vadd.f32 %v2802, %v2947
      %v3122 = vadd.f32 %v2803, %v2949
      %v3123 = vadd.f32 %v2804, %v2951
      %v3124 = vadd.f32 %v2805, %v2953
      %v3125 = vadd.f32 %v2806, %v2955
      %v3126 = vadd.f32 %v2807, %v2957
      %v3127 = vadd.f32 %v2808, %v2959
      %v3128 = vadd.f32 %v2809, %v2961
      %v3129 = vadd.f32 %v2810, %v2963
      %v3130 = vadd.f32 %v2811, %v2965
      %v3131 = vadd.f32 %v2812, %v2967
      %v3132 = vadd.f32 %v2813, %v2969
      %v3133 = vadd.f32 %v2814, %v2971
      %v3134 = vadd.f32 %v2815, %v2973
      %v3135 = vadd.f32 %v2816, %v2975
      %v3136 = vadd.f32 %v2817, %v2977
      %v3137 = vadd.f32 %v2818, %v2979
      %v3138 = vadd.f32 %v2819, %v2981
      %v3139 = vadd.f32 %v2820, %v2983
      %v3140 = vadd.f32 %v2821, %v2985
      %v3141 = vadd.f32 %v2822, %v2987
      %v3142 = vadd.f32 %v2823, %v2989
      %v3143 = vadd.f32 %v2824, %v2991
      %v3144 = vadd.f32 %v2825, %v2993
      %v3145 = vadd.f32 %v2826, %v2995
      %v3146 = vadd.f32 %v2827, %v2997
      %v3147 = vadd.f32 %v2828, %v2999
      %v3148 = vadd.f32 %v2829, %v3001
      %v3149 = vadd.f32 %v2830, %v3003
      %v3150 = vadd.f32 %v2831, %v3005
      %v3151 = vadd.f32 %v2832, %v3007
      %v3152 = vadd.f32 %v2833, %v3009
      %v3153 = vadd.f32 %v2834, %v3011
      %v3154 = vadd.f32 %v2835, %v3013
      %v3155 = vadd.f32 %v2836, %v3015
      %v3156 = vadd.f32 %v2837, %v3017
      %v3157 = vadd.f32 %v2838, %v3019
      %v3158 = vadd.f32 %v2839, %v3021
      %v3159 = vadd.f32 %v2840, %v3023
      %v3160 = vadd.f32 %v2841, %v3025
      %v3161 = vadd.f32 %v2842, %v3027
      %v3162 = vadd.f32 %v2843, %v3029
      %v3163 = vadd.f32 %v2844, %v3031
      %v3164 = vadd.f32 %v2845, %v3033
      %v3165 = vadd.f32 %v2846, %v3035
      %v3166 = vadd.f32 %v2847, %v3037
      %v3167 = vadd.f32 %v2848, %v3039
      %v3168 = vadd.f32 %v2849, %v3041
      %v3169 = vadd.f32 %v2850, %v3043
      %v3170 = vadd.f32 %v2851, %v3040
      %v3171 = vadd.f32 %v2852, %v3042
      %3172 = vst [vmem:[#allocation2] sm:$0xff] %v3108
      %3173 = vst.msk [vmem:[#allocation2 + $0x8] sm:$0xff] %vm1031, %v3109
      %3174 = vst [vmem:[#allocation2 + $0x10] sm:$0xff] %v3110
      %3175 = vst.msk [vmem:[#allocation2 + $0x18] sm:$0xff] %vm1031, %v3111
      %3176 = vst [vmem:[#allocation2 + $0x20] sm:$0xff] %v3112
      %3177 = vst.msk [vmem:[#allocation2 + $0x28] sm:$0xff] %vm1031, %v3113
      %3178 = vst [vmem:[#allocation2 + $0x30] sm:$0xff] %v3114
      %3179 = vst.msk [vmem:[#allocation2 + $0x38] sm:$0xff] %vm1031, %v3115
      %3180 = vst [vmem:[#allocation2 + $0x40] sm:$0xff] %v3116
      %3181 = vst.msk [vmem:[#allocation2 + $0x48] sm:$0xff] %vm1031, %v3117
      %3182 = vst [vmem:[#allocation2 + $0x50] sm:$0xff] %v3118
      %3183 = vst.msk [vmem:[#allocation2 + $0x58] sm:$0xff] %vm1031, %v3119
      %3184 = vst [vmem:[#allocation2 + $0x60] sm:$0xff] %v3120
      %3185 = vst.msk [vmem:[#allocation2 + $0x68] sm:$0xff] %vm1031, %v3121
      %3186 = vst [vmem:[#allocation2 + $0x70] sm:$0xff] %v3122
      %3187 = vst.msk [vmem:[#allocation2 + $0x78] sm:$0xff] %vm1031, %v3123
      %3188 = vst [vmem:[#allocation2 + $0x80] sm:$0xff] %v3124
      %3189 = vst.msk [vmem:[#allocation2 + $0x88] sm:$0xff] %vm1031, %v3125
      %3190 = vst [vmem:[#allocation2 + $0x90] sm:$0xff] %v3126
      %3191 = vst.msk [vmem:[#allocation2 + $0x98] sm:$0xff] %vm1031, %v3127
      %3192 = vst [vmem:[#allocation2 + $0xa0] sm:$0xff] %v3128
      %3193 = vst.msk [vmem:[#allocation2 + $0xa8] sm:$0xff] %vm1031, %v3129
      %3194 = vst [vmem:[#allocation2 + $0xb0] sm:$0xff] %v3130
      %3195 = vst.msk [vmem:[#allocation2 + $0xb8] sm:$0xff] %vm1031, %v3131
      %3196 = vst [vmem:[#allocation2 + $0xc0] sm:$0xff] %v3132
      %3197 = vst.msk [vmem:[#allocation2 + $0xc8] sm:$0xff] %vm1031, %v3133
      %3198 = vst [vmem:[#allocation2 + $0xd0] sm:$0xff] %v3134
      %3199 = vst.msk [vmem:[#allocation2 + $0xd8] sm:$0xff] %vm1031, %v3135
      %3200 = vst [vmem:[#allocation2 + $0xe0] sm:$0xff] %v3136
      %3201 = vst.msk [vmem:[#allocation2 + $0xe8] sm:$0xff] %vm1031, %v3137
      %3202 = vst [vmem:[#allocation2 + $0xf0] sm:$0xff] %v3138
      %3203 = vst.msk [vmem:[#allocation2 + $0xf8] sm:$0xff] %vm1031, %v3139
      %3204 = vst [vmem:[#allocation2 + $0x100] sm:$0xff] %v3140
      %3205 = vst.msk [vmem:[#allocation2 + $0x108] sm:$0xff] %vm1031, %v3141
      %3206 = vst [vmem:[#allocation2 + $0x110] sm:$0xff] %v3142
      %3207 = vst.msk [vmem:[#allocation2 + $0x118] sm:$0xff] %vm1031, %v3143
      %3208 = vst [vmem:[#allocation2 + $0x120] sm:$0xff] %v3144
      %3209 = vst.msk [vmem:[#allocation2 + $0x128] sm:$0xff] %vm1031, %v3145
      %3210 = vst [vmem:[#allocation2 + $0x130] sm:$0xff] %v3146
      %3211 = vst.msk [vmem:[#allocation2 + $0x138] sm:$0xff] %vm1031, %v3147
      %3212 = vst [vmem:[#allocation2 + $0x140] sm:$0xff] %v3148
      %3213 = vst.msk [vmem:[#allocation2 + $0x148] sm:$0xff] %vm1031, %v3149
      %3214 = vst [vmem:[#allocation2 + $0x150] sm:$0xff] %v3150
      %3215 = vst.msk [vmem:[#allocation2 + $0x158] sm:$0xff] %vm1031, %v3151
      %3216 = vst [vmem:[#allocation2 + $0x160] sm:$0xff] %v3152
      %3217 = vst.msk [vmem:[#allocation2 + $0x168] sm:$0xff] %vm1031, %v3153
      %3218 = vst [vmem:[#allocation2 + $0x170] sm:$0xff] %v3154
      %3219 = vst.msk [vmem:[#allocation2 + $0x178] sm:$0xff] %vm1031, %v3155
      %3220 = vst [vmem:[#allocation2 + $0x180] sm:$0xff] %v3156
      %3221 = vst.msk [vmem:[#allocation2 + $0x188] sm:$0xff] %vm1031, %v3157
      %3222 = vst [vmem:[#allocation2 + $0x190] sm:$0xff] %v3158
      %3223 = vst.msk [vmem:[#allocation2 + $0x198] sm:$0xff] %vm1031, %v3159
      %3224 = vst [vmem:[#allocation2 + $0x1a0] sm:$0xff] %v3160
      %3225 = vst.msk [vmem:[#allocation2 + $0x1a8] sm:$0xff] %vm1031, %v3161
      %3226 = vst [vmem:[#allocation2 + $0x1b0] sm:$0xff] %v3162
      %3227 = vst.msk [vmem:[#allocation2 + $0x1b8] sm:$0xff] %vm1031, %v3163
      %3228 = vst [vmem:[#allocation2 + $0x1c0] sm:$0xff] %v3164
      %3229 = vst.msk [vmem:[#allocation2 + $0x1c8] sm:$0xff] %vm1031, %v3165
      %3230 = vst [vmem:[#allocation2 + $0x1d0] sm:$0xff] %v3166
      %3231 = vst.msk [vmem:[#allocation2 + $0x1d8] sm:$0xff] %vm1031, %v3167
      %3232 = vst [vmem:[#allocation2 + $0x1e0] sm:$0xff] %v3168
      %3233 = vst.msk [vmem:[#allocation2 + $0x1e8] sm:$0xff] %vm1031, %v3169
      %3234 = vst [vmem:[#allocation2 + $0x1f0] sm:$0x1f] %v3170
      %vm3235 = vcmask 323584
      %3236 = vst.msk [vmem:[#allocation2 + $0x1f8] sm:$0x1f] %vm3235, %v3171
      %s3237 = scalar_lea.vmem %s1, 384
      %v3238 = vld [vmem:[%s3237] sm:$0xff]
      %v3239 = vld [vmem:[%s3237 + $0x8] sm:$0xff]
      %v3240 = vld [vmem:[%s3237 + $0x10] sm:$0xff]
      %v3241 = vld [vmem:[%s3237 + $0x18] sm:$0xff]
      %v3242 = vld [vmem:[%s3237 + $0x20] sm:$0xff]
      %v3243 = vld [vmem:[%s3237 + $0x28] sm:$0xff]
      %v3244 = vld [vmem:[%s3237 + $0x30] sm:$0xff]
      %v3245 = vld [vmem:[%s3237 + $0x38] sm:$0xff]
      %v3246 = vld [vmem:[%s3237 + $0x40] sm:$0xff]
      %v3247 = vld [vmem:[%s3237 + $0x48] sm:$0xff]
      %v3248 = vld [vmem:[%s3237 + $0x50] sm:$0xff]
      %v3249 = vld [vmem:[%s3237 + $0x58] sm:$0xff]
      %v3262 = vunpack.c.l.b16 %v3238
      %v3263 = vunpack.c.h.b16 %v3238
      %v3264 = vunpack.c.l.b16 %v3239
      %v3265 = vunpack.c.h.b16 %v3239
      %v3266 = vunpack.c.l.b16 %v3240
      %v3267 = vunpack.c.h.b16 %v3240
      %v3268 = vunpack.c.l.b16 %v3241
      %v3269 = vunpack.c.h.b16 %v3241
      %v3270 = vunpack.c.l.b16 %v3242
      %v3271 = vunpack.c.h.b16 %v3242
      %v3272 = vunpack.c.l.b16 %v3243
      %v3273 = vunpack.c.h.b16 %v3243
      %v3274 = vunpack.c.l.b16 %v3244
      %v3275 = vunpack.c.h.b16 %v3244
      %v3276 = vunpack.c.l.b16 %v3245
      %v3277 = vunpack.c.h.b16 %v3245
      %v3278 = vunpack.c.l.b16 %v3246
      %v3279 = vunpack.c.h.b16 %v3246
      %v3280 = vunpack.c.l.b16 %v3247
      %v3281 = vunpack.c.h.b16 %v3247
      %v3282 = vunpack.c.l.b16 %v3248
      %v3283 = vunpack.c.h.b16 %v3248
      %v3284 = vunpack.c.l.b16 %v3249
      %v3285 = vunpack.c.h.b16 %v3249
      %v3286 = vpack.c.b16 %v3264, %v3262
      %v3287 = vpack.c.b16 %v3265, %v3263
      %v3288 = vpack.c.b16 %v3268, %v3266
      %v3289 = vpack.c.b16 %v3269, %v3267
      %v3290 = vpack.c.b16 %v3272, %v3270
      %v3291 = vpack.c.b16 %v3273, %v3271
      %v3292 = vpack.c.b16 %v3276, %v3274
      %v3293 = vpack.c.b16 %v3277, %v3275
      %v3294 = vpack.c.b16 %v3280, %v3278
      %v3295 = vpack.c.b16 %v3281, %v3279
      %v3296 = vpack.c.b16 %v3284, %v3282
      %v3297 = vpack.c.b16 %v3285, %v3283
      %3310 = vmatprep.subr.bf16.mxu0 %v3287
      %3311 = vmatpush1.bf16.msra.mxu0 %v3286
      %3312 = vmatprep.subr.bf16.mxu0 %v3289
      %3313 = vmatpush1.bf16.msra.mxu0 %v3288
      %3314 = vmatprep.subr.bf16.mxu0 %v3291
      %3315 = vmatpush1.bf16.msra.mxu0 %v3290
      %3316 = vmatprep.subr.bf16.mxu0 %v3293
      %3317 = vmatpush1.bf16.msra.mxu0 %v3292
      %3318 = vmatprep.subr.bf16.mxu0 %v3295
      %3319 = vmatpush1.bf16.msra.mxu0 %v3294
      %3320 = vmatprep.subr.bf16.mxu0 %v3297
      %3321 = vmatpush1.bf16.msra.mxu0 %v3296
      %3322 = vmatprep.subr.bf16.mxu0 0
      %3323 = vmatpush1.bf16.msra.mxu0 0
      %3324 = vmatprep.subr.bf16.mxu0 0
      %3325 = vmatpush1.bf16.msra.mxu0 0
      %3326 = vmatprep.subr.bf16.mxu0 0
      %3327 = vmatpush1.bf16.msra.mxu0 0
      %3328 = vmatprep.subr.bf16.mxu0 0
      %3329 = vmatpush1.bf16.msra.mxu0 0
      %3330 = vmatprep.subr.bf16.mxu0 0
      %3331 = vmatpush1.bf16.msra.mxu0 0
      %3332 = vmatprep.subr.bf16.mxu0 0
      %3333 = vmatpush1.bf16.msra.mxu0 0
      %3334 = vmatprep.subr.bf16.mxu0 0
      %3335 = vmatpush1.bf16.msra.mxu0 0
      %3336 = vmatprep.subr.bf16.mxu0 0
      %3337 = vmatpush1.bf16.msra.mxu0 0
      %3338 = vmatprep.subr.bf16.mxu0 0
      %3339 = vmatpush1.bf16.msra.mxu0 0
      %3340 = vmatprep.subr.bf16.mxu0 0
      %3341 = vmatpush1.bf16.msra.mxu0 0
      %3342 = vmatprep.mubr.bf16.mxu0 0
      %3343 = vmatmul.mubr.bf16.gmra.mrb[0].mxu0 %v790
      %v3344 = vpop.f32.mrb[0].mxu0
      %v3345 = vadd.f32 0.0, %v3344
      %v3346 = vpop.f32.mrb[0].mxu0
      %v3347 = vadd.f32 0.0, %v3346
      %v3348 = vpop.f32.mrb[0].mxu0
      %v3349 = vadd.f32 0.0, %v3348
      %v3350 = vpop.f32.mrb[0].mxu0
      %v3351 = vadd.f32 0.0, %v3350
      %3352 = vmatprep.mubr.bf16.mxu0 0
      %3353 = vmatmul.mubr.bf16.gmra.mrb[0].mxu0 %v793
      %v3354 = vpop.f32.mrb[0].mxu0
      %v3355 = vadd.f32 0.0, %v3354
      %v3356 = vpop.f32.mrb[0].mxu0
      %v3357 = vadd.f32 0.0, %v3356
      %v3358 = vpop.f32.mrb[0].mxu0
      %v3359 = vadd.f32 0.0, %v3358
      %v3360 = vpop.f32.mrb[0].mxu0
      %v3361 = vadd.f32 0.0, %v3360
      %3362 = vmatprep.mubr.bf16.mxu0 0
      %3363 = vmatmul.mubr.bf16.gmra.mrb[0].mxu0 %v796
      %v3364 = vpop.f32.mrb[0].mxu0
      %v3365 = vadd.f32 0.0, %v3364
      %v3366 = vpop.f32.mrb[0].mxu0
      %v3367 = vadd.f32 0.0, %v3366
      %v3368 = vpop.f32.mrb[0].mxu0
      %v3369 = vadd.f32 0.0, %v3368
      %v3370 = vpop.f32.mrb[0].mxu0
      %v3371 = vadd.f32 0.0, %v3370
      %3372 = vmatprep.mubr.bf16.mxu0 0
      %3373 = vmatmul.mubr.bf16.gmra.mrb[0].mxu0 %v799
      %v3374 = vpop.f32.mrb[0].mxu0
      %v3375 = vadd.f32 0.0, %v3374
      %v3376 = vpop.f32.mrb[0].mxu0
      %v3377 = vadd.f32 0.0, %v3376
      %v3378 = vpop.f32.mrb[0].mxu0
      %v3379 = vadd.f32 0.0, %v3378
      %v3380 = vpop.f32.mrb[0].mxu0
      %v3381 = vadd.f32 0.0, %v3380
      %3382 = vmatprep.mubr.bf16.mxu0 0
      %3383 = vmatmul.mubr.bf16.gmra.mrb[0].mxu0 %v802
      %v3384 = vpop.f32.mrb[0].mxu0
      %v3385 = vadd.f32 0.0, %v3384
      %v3386 = vpop.f32.mrb[0].mxu0
      %v3387 = vadd.f32 0.0, %v3386
      %v3388 = vpop.f32.mrb[0].mxu0
      %v3389 = vadd.f32 0.0, %v3388
      %v3390 = vpop.f32.mrb[0].mxu0
      %v3391 = vadd.f32 0.0, %v3390
      %3392 = vmatprep.mubr.bf16.mxu0 0
      %3393 = vmatmul.mubr.bf16.gmra.mrb[0].mxu0 %v805
      %v3394 = vpop.f32.mrb[0].mxu0
      %v3395 = vadd.f32 0.0, %v3394
      %v3396 = vpop.f32.mrb[0].mxu0
      %v3397 = vadd.f32 0.0, %v3396
      %v3398 = vpop.f32.mrb[0].mxu0
      %v3399 = vadd.f32 0.0, %v3398
      %v3400 = vpop.f32.mrb[0].mxu0
      %v3401 = vadd.f32 0.0, %v3400
      %3402 = vmatprep.mubr.bf16.mxu0 0
      %3403 = vmatmul.mubr.bf16.gmra.mrb[0].mxu0 %v808
      %v3404 = vpop.f32.mrb[0].mxu0
      %v3405 = vadd.f32 0.0, %v3404
      %v3406 = vpop.f32.mrb[0].mxu0
      %v3407 = vadd.f32 0.0, %v3406
      %v3408 = vpop.f32.mrb[0].mxu0
      %v3409 = vadd.f32 0.0, %v3408
      %v3410 = vpop.f32.mrb[0].mxu0
      %v3411 = vadd.f32 0.0, %v3410
      %3412 = vmatprep.mubr.bf16.mxu0 0
      %3413 = vmatmul.mubr.bf16.gmra.mrb[0].mxu0 %v811
      %v3414 = vpop.f32.mrb[0].mxu0
      %v3415 = vadd.f32 0.0, %v3414
      %v3416 = vpop.f32.mrb[0].mxu0
      %v3417 = vadd.f32 0.0, %v3416
      %v3418 = vpop.f32.mrb[0].mxu0
      %v3419 = vadd.f32 0.0, %v3418
      %v3420 = vpop.f32.mrb[0].mxu0
      %v3421 = vadd.f32 0.0, %v3420
      %3422 = vmatprep.mubr.bf16.mxu0 0
      %3423 = vmatmul.mubr.bf16.gmra.mrb[0].mxu0 %v814
      %v3424 = vpop.f32.mrb[0].mxu0
      %v3425 = vadd.f32 0.0, %v3424
      %v3426 = vpop.f32.mrb[0].mxu0
      %v3427 = vadd.f32 0.0, %v3426
      %v3428 = vpop.f32.mrb[0].mxu0
      %v3429 = vadd.f32 0.0, %v3428
      %v3430 = vpop.f32.mrb[0].mxu0
      %v3431 = vadd.f32 0.0, %v3430
      %3432 = vmatprep.mubr.bf16.mxu0 0
      %3433 = vmatmul.mubr.bf16.gmra.mrb[0].mxu0 %v817
      %v3434 = vpop.f32.mrb[0].mxu0
      %v3435 = vadd.f32 0.0, %v3434
      %v3436 = vpop.f32.mrb[0].mxu0
      %v3437 = vadd.f32 0.0, %v3436
      %v3438 = vpop.f32.mrb[0].mxu0
      %v3439 = vadd.f32 0.0, %v3438
      %v3440 = vpop.f32.mrb[0].mxu0
      %v3441 = vadd.f32 0.0, %v3440
      %3442 = vmatprep.mubr.bf16.mxu0 0
      %3443 = vmatmul.mubr.bf16.gmra.mrb[0].mxu0 %v820
      %v3444 = vpop.f32.mrb[0].mxu0
      %v3445 = vadd.f32 0.0, %v3444
      %v3446 = vpop.f32.mrb[0].mxu0
      %v3447 = vadd.f32 0.0, %v3446
      %v3448 = vpop.f32.mrb[0].mxu0
      %v3449 = vadd.f32 0.0, %v3448
      %v3450 = vpop.f32.mrb[0].mxu0
      %v3451 = vadd.f32 0.0, %v3450
      %3452 = vmatprep.mubr.bf16.mxu0 0
      %3453 = vmatmul.mubr.bf16.gmra.mrb[0].mxu0 %v823
      %v3454 = vpop.f32.mrb[0].mxu0
      %v3455 = vadd.f32 0.0, %v3454
      %v3456 = vpop.f32.mrb[0].mxu0
      %v3457 = vadd.f32 0.0, %v3456
      %v3458 = vpop.f32.mrb[0].mxu0
      %v3459 = vadd.f32 0.0, %v3458
      %v3460 = vpop.f32.mrb[0].mxu0
      %v3461 = vadd.f32 0.0, %v3460
      %3462 = vmatprep.mubr.bf16.mxu0 0
      %3463 = vmatmul.mubr.bf16.gmra.mrb[0].mxu0 %v826
      %v3464 = vpop.f32.mrb[0].mxu0
      %v3465 = vadd.f32 0.0, %v3464
      %v3466 = vpop.f32.mrb[0].mxu0
      %v3467 = vadd.f32 0.0, %v3466
      %v3468 = vpop.f32.mrb[0].mxu0
      %v3469 = vadd.f32 0.0, %v3468
      %v3470 = vpop.f32.mrb[0].mxu0
      %v3471 = vadd.f32 0.0, %v3470
      %3472 = vmatprep.mubr.bf16.mxu0 0
      %3473 = vmatmul.mubr.bf16.gmra.mrb[0].mxu0 %v829
      %v3474 = vpop.f32.mrb[0].mxu0
      %v3475 = vadd.f32 0.0, %v3474
      %v3476 = vpop.f32.mrb[0].mxu0
      %v3477 = vadd.f32 0.0, %v3476
      %v3478 = vpop.f32.mrb[0].mxu0
      %v3479 = vadd.f32 0.0, %v3478
      %v3480 = vpop.f32.mrb[0].mxu0
      %v3481 = vadd.f32 0.0, %v3480
      %3482 = vmatprep.mubr.bf16.mxu0 0
      %3483 = vmatmul.mubr.bf16.gmra.mrb[0].mxu0 %v832
      %v3484 = vpop.f32.mrb[0].mxu0
      %v3485 = vadd.f32 0.0, %v3484
      %v3486 = vpop.f32.mrb[0].mxu0
      %v3487 = vadd.f32 0.0, %v3486
      %v3488 = vpop.f32.mrb[0].mxu0
      %v3489 = vadd.f32 0.0, %v3488
      %v3490 = vpop.f32.mrb[0].mxu0
      %v3491 = vadd.f32 0.0, %v3490
      %3492 = vmatprep.mubr.bf16.mxu0 0
      %3493 = vmatmul.mubr.bf16.gmra.mrb[0].mxu0 %v835
      %v3494 = vpop.f32.mrb[0].mxu0
      %v3495 = vadd.f32 0.0, %v3494
      %v3496 = vpop.f32.mrb[0].mxu0
      %v3497 = vadd.f32 0.0, %v3496
      %v3498 = vpop.f32.mrb[0].mxu0
      %v3499 = vadd.f32 0.0, %v3498
      %v3500 = vpop.f32.mrb[0].mxu0
      %v3501 = vadd.f32 0.0, %v3500
      %3502 = vdwg.mxu0
      %v3503 = vld [vmem:[#allocation2] sm:$0xff]
      %v3504 = vld [vmem:[#allocation2 + $0x8] sm:$0xff]
      %v3505 = vld [vmem:[#allocation2 + $0x10] sm:$0xff]
      %v3506 = vld [vmem:[#allocation2 + $0x18] sm:$0xff]
      %v3507 = vld [vmem:[#allocation2 + $0x20] sm:$0xff]
      %v3508 = vld [vmem:[#allocation2 + $0x28] sm:$0xff]
      %v3509 = vld [vmem:[#allocation2 + $0x30] sm:$0xff]
      %v3510 = vld [vmem:[#allocation2 + $0x38] sm:$0xff]
      %v3511 = vld [vmem:[#allocation2 + $0x40] sm:$0xff]
      %v3512 = vld [vmem:[#allocation2 + $0x48] sm:$0xff]
      %v3513 = vld [vmem:[#allocation2 + $0x50] sm:$0xff]
      %v3514 = vld [vmem:[#allocation2 + $0x58] sm:$0xff]
      %v3515 = vld [vmem:[#allocation2 + $0x60] sm:$0xff]
      %v3516 = vld [vmem:[#allocation2 + $0x68] sm:$0xff]
      %v3517 = vld [vmem:[#allocation2 + $0x70] sm:$0xff]
      %v3518 = vld [vmem:[#allocation2 + $0x78] sm:$0xff]
      %v3519 = vld [vmem:[#allocation2 + $0x80] sm:$0xff]
      %v3520 = vld [vmem:[#allocation2 + $0x88] sm:$0xff]
      %v3521 = vld [vmem:[#allocation2 + $0x90] sm:$0xff]
      %v3522 = vld [vmem:[#allocation2 + $0x98] sm:$0xff]
      %v3523 = vld [vmem:[#allocation2 + $0xa0] sm:$0xff]
      %v3524 = vld [vmem:[#allocation2 + $0xa8] sm:$0xff]
      %v3525 = vld [vmem:[#allocation2 + $0xb0] sm:$0xff]
      %v3526 = vld [vmem:[#allocation2 + $0xb8] sm:$0xff]
      %v3527 = vld [vmem:[#allocation2 + $0xc0] sm:$0xff]
      %v3528 = vld [vmem:[#allocation2 + $0xc8] sm:$0xff]
      %v3529 = vld [vmem:[#allocation2 + $0xd0] sm:$0xff]
      %v3530 = vld [vmem:[#allocation2 + $0xd8] sm:$0xff]
      %v3531 = vld [vmem:[#allocation2 + $0xe0] sm:$0xff]
      %v3532 = vld [vmem:[#allocation2 + $0xe8] sm:$0xff]
      %v3533 = vld [vmem:[#allocation2 + $0xf0] sm:$0xff]
      %v3534 = vld [vmem:[#allocation2 + $0xf8] sm:$0xff]
      %v3535 = vld [vmem:[#allocation2 + $0x100] sm:$0xff]
      %v3536 = vld [vmem:[#allocation2 + $0x108] sm:$0xff]
      %v3537 = vld [vmem:[#allocation2 + $0x110] sm:$0xff]
      %v3538 = vld [vmem:[#allocation2 + $0x118] sm:$0xff]
      %v3539 = vld [vmem:[#allocation2 + $0x120] sm:$0xff]
      %v3540 = vld [vmem:[#allocation2 + $0x128] sm:$0xff]
      %v3541 = vld [vmem:[#allocation2 + $0x130] sm:$0xff]
      %v3542 = vld [vmem:[#allocation2 + $0x138] sm:$0xff]
      %v3543 = vld [vmem:[#allocation2 + $0x140] sm:$0xff]
      %v3544 = vld [vmem:[#allocation2 + $0x148] sm:$0xff]
      %v3545 = vld [vmem:[#allocation2 + $0x150] sm:$0xff]
      %v3546 = vld [vmem:[#allocation2 + $0x158] sm:$0xff]
      %v3547 = vld [vmem:[#allocation2 + $0x160] sm:$0xff]
      %v3548 = vld [vmem:[#allocation2 + $0x168] sm:$0xff]
      %v3549 = vld [vmem:[#allocation2 + $0x170] sm:$0xff]
      %v3550 = vld [vmem:[#allocation2 + $0x178] sm:$0xff]
      %v3551 = vld [vmem:[#allocation2 + $0x180] sm:$0xff]
      %v3552 = vld [vmem:[#allocation2 + $0x188] sm:$0xff]
      %v3553 = vld [vmem:[#allocation2 + $0x190] sm:$0xff]
      %v3554 = vld [vmem:[#allocation2 + $0x198] sm:$0xff]
      %v3555 = vld [vmem:[#allocation2 + $0x1a0] sm:$0xff]
      %v3556 = vld [vmem:[#allocation2 + $0x1a8] sm:$0xff]
      %v3557 = vld [vmem:[#allocation2 + $0x1b0] sm:$0xff]
      %v3558 = vld [vmem:[#allocation2 + $0x1b8] sm:$0xff]
      %v3559 = vld [vmem:[#allocation2 + $0x1c0] sm:$0xff]
      %v3560 = vld [vmem:[#allocation2 + $0x1c8] sm:$0xff]
      %v3561 = vld [vmem:[#allocation2 + $0x1d0] sm:$0xff]
      %v3562 = vld [vmem:[#allocation2 + $0x1d8] sm:$0xff]
      %v3563 = vld [vmem:[#allocation2 + $0x1e0] sm:$0xff]
      %v3564 = vld [vmem:[#allocation2 + $0x1e8] sm:$0xff]
      %v3565 = vld [vmem:[#allocation2 + $0x1f0] sm:$0xf]
      %v3566 = vld [vmem:[#allocation2 + $0x1f8] sm:$0xf]
      %vm3631 = vcmask 1043456
      %v3632 = vrot.slane %v3345, 4
      %v3633 = vrot.slane %v3349, 4
      %v3634 = vsel %vm3631, %v3632, %v3633
      %v3635 = vrot.slane %v3347, 4
      %v3636 = vrot.slane %v3351, 4
      %v3637 = vsel %vm3631, %v3635, %v3636
      %v3638 = vrot.slane %v3355, 4
      %v3639 = vsel %vm3631, %v3633, %v3638
      %v3640 = vrot.slane %v3357, 4
      %v3641 = vsel %vm3631, %v3636, %v3640
      %v3642 = vrot.slane %v3359, 4
      %v3643 = vsel %vm3631, %v3638, %v3642
      %v3644 = vrot.slane %v3361, 4
      %v3645 = vsel %vm3631, %v3640, %v3644
      %v3646 = vrot.slane %v3365, 4
      %v3647 = vsel %vm3631, %v3642, %v3646
      %v3648 = vrot.slane %v3367, 4
      %v3649 = vsel %vm3631, %v3644, %v3648
      %v3650 = vrot.slane %v3369, 4
      %v3651 = vsel %vm3631, %v3646, %v3650
      %v3652 = vrot.slane %v3371, 4
      %v3653 = vsel %vm3631, %v3648, %v3652
      %v3654 = vrot.slane %v3375, 4
      %v3655 = vsel %vm3631, %v3650, %v3654
      %v3656 = vrot.slane %v3377, 4
      %v3657 = vsel %vm3631, %v3652, %v3656
      %v3658 = vrot.slane %v3379, 4
      %v3659 = vsel %vm3631, %v3654, %v3658
      %v3660 = vrot.slane %v3381, 4
      %v3661 = vsel %vm3631, %v3656, %v3660
      %v3662 = vrot.slane %v3385, 4
      %v3663 = vsel %vm3631, %v3658, %v3662
      %v3664 = vrot.slane %v3387, 4
      %v3665 = vsel %vm3631, %v3660, %v3664
      %v3666 = vrot.slane %v3389, 4
      %v3667 = vsel %vm3631, %v3662, %v3666
      %v3668 = vrot.slane %v3391, 4
      %v3669 = vsel %vm3631, %v3664, %v3668
      %v3670 = vrot.slane %v3395, 4
      %v3671 = vsel %vm3631, %v3666, %v3670
      %v3672 = vrot.slane %v3397, 4
      %v3673 = vsel %vm3631, %v3668, %v3672
      %v3674 = vrot.slane %v3399, 4
      %v3675 = vsel %vm3631, %v3670, %v3674
      %v3676 = vrot.slane %v3401, 4
      %v3677 = vsel %vm3631, %v3672, %v3676
      %v3678 = vrot.slane %v3405, 4
      %v3679 = vsel %vm3631, %v3674, %v3678
      %v3680 = vrot.slane %v3407, 4
      %v3681 = vsel %vm3631, %v3676, %v3680
      %v3682 = vrot.slane %v3409, 4
      %v3683 = vsel %vm3631, %v3678, %v3682
      %v3684 = vrot.slane %v3411, 4
      %v3685 = vsel %vm3631, %v3680, %v3684
      %v3686 = vrot.slane %v3415, 4
      %v3687 = vsel %vm3631, %v3682, %v3686
      %v3688 = vrot.slane %v3417, 4
      %v3689 = vsel %vm3631, %v3684, %v3688
      %v3690 = vrot.slane %v3419, 4
      %v3691 = vsel %vm3631, %v3686, %v3690
      %v3692 = vrot.slane %v3421, 4
      %v3693 = vsel %vm3631, %v3688, %v3692
      %v3694 = vrot.slane %v3425, 4
      %v3695 = vsel %vm3631, %v3690, %v3694
      %v3696 = vrot.slane %v3427, 4
      %v3697 = vsel %vm3631, %v3692, %v3696
      %v3698 = vrot.slane %v3429, 4
      %v3699 = vsel %vm3631, %v3694, %v3698
      %v3700 = vrot.slane %v3431, 4
      %v3701 = vsel %vm3631, %v3696, %v3700
      %v3702 = vrot.slane %v3435, 4
      %v3703 = vsel %vm3631, %v3698, %v3702
      %v3704 = vrot.slane %v3437, 4
      %v3705 = vsel %vm3631, %v3700, %v3704
      %v3706 = vrot.slane %v3439, 4
      %v3707 = vsel %vm3631, %v3702, %v3706
      %v3708 = vrot.slane %v3441, 4
      %v3709 = vsel %vm3631, %v3704, %v3708
      %v3710 = vrot.slane %v3445, 4
      %v3711 = vsel %vm3631, %v3706, %v3710
      %v3712 = vrot.slane %v3447, 4
      %v3713 = vsel %vm3631, %v3708, %v3712
      %v3714 = vrot.slane %v3449, 4
      %v3715 = vsel %vm3631, %v3710, %v3714
      %v3716 = vrot.slane %v3451, 4
      %v3717 = vsel %vm3631, %v3712, %v3716
      %v3718 = vrot.slane %v3455, 4
      %v3719 = vsel %vm3631, %v3714, %v3718
      %v3720 = vrot.slane %v3457, 4
      %v3721 = vsel %vm3631, %v3716, %v3720
      %v3722 = vrot.slane %v3459, 4
      %v3723 = vsel %vm3631, %v3718, %v3722
      %v3724 = vrot.slane %v3461, 4
      %v3725 = vsel %vm3631, %v3720, %v3724
      %v3726 = vrot.slane %v3465, 4
      %v3727 = vsel %vm3631, %v3722, %v3726
      %v3728 = vrot.slane %v3467, 4
      %v3729 = vsel %vm3631, %v3724, %v3728
      %v3730 = vrot.slane %v3469, 4
      %v3731 = vsel %vm3631, %v3726, %v3730
      %v3732 = vrot.slane %v3471, 4
      %v3733 = vsel %vm3631, %v3728, %v3732
      %v3734 = vrot.slane %v3475, 4
      %v3735 = vsel %vm3631, %v3730, %v3734
      %v3736 = vrot.slane %v3477, 4
      %v3737 = vsel %vm3631, %v3732, %v3736
      %v3738 = vrot.slane %v3479, 4
      %v3739 = vsel %vm3631, %v3734, %v3738
      %v3740 = vrot.slane %v3481, 4
      %v3741 = vsel %vm3631, %v3736, %v3740
      %v3742 = vrot.slane %v3485, 4
      %v3743 = vsel %vm3631, %v3738, %v3742
      %v3744 = vrot.slane %v3487, 4
      %v3745 = vsel %vm3631, %v3740, %v3744
      %v3746 = vrot.slane %v3489, 4
      %v3747 = vsel %vm3631, %v3742, %v3746
      %v3748 = vrot.slane %v3491, 4
      %v3749 = vsel %vm3631, %v3744, %v3748
      %v3750 = vrot.slane %v3495, 4
      %v3751 = vsel %vm3631, %v3746, %v3750
      %v3752 = vrot.slane %v3497, 4
      %v3753 = vsel %vm3631, %v3748, %v3752
      %v3754 = vrot.slane %v3499, 4
      %v3755 = vsel %vm3631, %v3750, %v3754
      %v3756 = vrot.slane %v3501, 4
      %v3757 = vsel %vm3631, %v3752, %v3756
      %v3822 = vadd.f32 %v3503, %v3634
      %v3823 = vadd.f32 %v3504, %v3637
      %v3824 = vadd.f32 %v3505, %v3639
      %v3825 = vadd.f32 %v3506, %v3641
      %v3826 = vadd.f32 %v3507, %v3643
      %v3827 = vadd.f32 %v3508, %v3645
      %v3828 = vadd.f32 %v3509, %v3647
      %v3829 = vadd.f32 %v3510, %v3649
      %v3830 = vadd.f32 %v3511, %v3651
      %v3831 = vadd.f32 %v3512, %v3653
      %v3832 = vadd.f32 %v3513, %v3655
      %v3833 = vadd.f32 %v3514, %v3657
      %v3834 = vadd.f32 %v3515, %v3659
      %v3835 = vadd.f32 %v3516, %v3661
      %v3836 = vadd.f32 %v3517, %v3663
      %v3837 = vadd.f32 %v3518, %v3665
      %v3838 = vadd.f32 %v3519, %v3667
      %v3839 = vadd.f32 %v3520, %v3669
      %v3840 = vadd.f32 %v3521, %v3671
      %v3841 = vadd.f32 %v3522, %v3673
      %v3842 = vadd.f32 %v3523, %v3675
      %v3843 = vadd.f32 %v3524, %v3677
      %v3844 = vadd.f32 %v3525, %v3679
      %v3845 = vadd.f32 %v3526, %v3681
      %v3846 = vadd.f32 %v3527, %v3683
      %v3847 = vadd.f32 %v3528, %v3685
      %v3848 = vadd.f32 %v3529, %v3687
      %v3849 = vadd.f32 %v3530, %v3689
      %v3850 = vadd.f32 %v3531, %v3691
      %v3851 = vadd.f32 %v3532, %v3693
      %v3852 = vadd.f32 %v3533, %v3695
      %v3853 = vadd.f32 %v3534, %v3697
      %v3854 = vadd.f32 %v3535, %v3699
      %v3855 = vadd.f32 %v3536, %v3701
      %v3856 = vadd.f32 %v3537, %v3703
      %v3857 = vadd.f32 %v3538, %v3705
      %v3858 = vadd.f32 %v3539, %v3707
      %v3859 = vadd.f32 %v3540, %v3709
      %v3860 = vadd.f32 %v3541, %v3711
      %v3861 = vadd.f32 %v3542, %v3713
      %v3862 = vadd.f32 %v3543, %v3715
      %v3863 = vadd.f32 %v3544, %v3717
      %v3864 = vadd.f32 %v3545, %v3719
      %v3865 = vadd.f32 %v3546, %v3721
      %v3866 = vadd.f32 %v3547, %v3723
      %v3867 = vadd.f32 %v3548, %v3725
      %v3868 = vadd.f32 %v3549, %v3727
      %v3869 = vadd.f32 %v3550, %v3729
      %v3870 = vadd.f32 %v3551, %v3731
      %v3871 = vadd.f32 %v3552, %v3733
      %v3872 = vadd.f32 %v3553, %v3735
      %v3873 = vadd.f32 %v3554, %v3737
      %v3874 = vadd.f32 %v3555, %v3739
      %v3875 = vadd.f32 %v3556, %v3741
      %v3876 = vadd.f32 %v3557, %v3743
      %v3877 = vadd.f32 %v3558, %v3745
      %v3878 = vadd.f32 %v3559, %v3747
      %v3879 = vadd.f32 %v3560, %v3749
      %v3880 = vadd.f32 %v3561, %v3751
      %v3881 = vadd.f32 %v3562, %v3753
      %v3882 = vadd.f32 %v3563, %v3755
      %v3883 = vadd.f32 %v3564, %v3757
      %v3884 = vadd.f32 %v3565, %v3754
      %v3885 = vadd.f32 %v3566, %v3756
      %3886 = vst [vmem:[#allocation2] sm:$0xff] %v3822
      %3887 = vst.msk [vmem:[#allocation2 + $0x8] sm:$0xff] %vm1031, %v3823
      %3888 = vst [vmem:[#allocation2 + $0x10] sm:$0xff] %v3824
      %3889 = vst.msk [vmem:[#allocation2 + $0x18] sm:$0xff] %vm1031, %v3825
      %3890 = vst [vmem:[#allocation2 + $0x20] sm:$0xff] %v3826
      %3891 = vst.msk [vmem:[#allocation2 + $0x28] sm:$0xff] %vm1031, %v3827
      %3892 = vst [vmem:[#allocation2 + $0x30] sm:$0xff] %v3828
      %3893 = vst.msk [vmem:[#allocation2 + $0x38] sm:$0xff] %vm1031, %v3829
      %3894 = vst [vmem:[#allocation2 + $0x40] sm:$0xff] %v3830
      %3895 = vst.msk [vmem:[#allocation2 + $0x48] sm:$0xff] %vm1031, %v3831
      %3896 = vst [vmem:[#allocation2 + $0x50] sm:$0xff] %v3832
      %3897 = vst.msk [vmem:[#allocation2 + $0x58] sm:$0xff] %vm1031, %v3833
      %3898 = vst [vmem:[#allocation2 + $0x60] sm:$0xff] %v3834
      %3899 = vst.msk [vmem:[#allocation2 + $0x68] sm:$0xff] %vm1031, %v3835
      %3900 = vst [vmem:[#allocation2 + $0x70] sm:$0xff] %v3836
      %3901 = vst.msk [vmem:[#allocation2 + $0x78] sm:$0xff] %vm1031, %v3837
      %3902 = vst [vmem:[#allocation2 + $0x80] sm:$0xff] %v3838
      %3903 = vst.msk [vmem:[#allocation2 + $0x88] sm:$0xff] %vm1031, %v3839
      %3904 = vst [vmem:[#allocation2 + $0x90] sm:$0xff] %v3840
      %3905 = vst.msk [vmem:[#allocation2 + $0x98] sm:$0xff] %vm1031, %v3841
      %3906 = vst [vmem:[#allocation2 + $0xa0] sm:$0xff] %v3842
      %3907 = vst.msk [vmem:[#allocation2 + $0xa8] sm:$0xff] %vm1031, %v3843
      %3908 = vst [vmem:[#allocation2 + $0xb0] sm:$0xff] %v3844
      %3909 = vst.msk [vmem:[#allocation2 + $0xb8] sm:$0xff] %vm1031, %v3845
      %3910 = vst [vmem:[#allocation2 + $0xc0] sm:$0xff] %v3846
      %3911 = vst.msk [vmem:[#allocation2 + $0xc8] sm:$0xff] %vm1031, %v3847
      %3912 = vst [vmem:[#allocation2 + $0xd0] sm:$0xff] %v3848
      %3913 = vst.msk [vmem:[#allocation2 + $0xd8] sm:$0xff] %vm1031, %v3849
      %3914 = vst [vmem:[#allocation2 + $0xe0] sm:$0xff] %v3850
      %3915 = vst.msk [vmem:[#allocation2 + $0xe8] sm:$0xff] %vm1031, %v3851
      %3916 = vst [vmem:[#allocation2 + $0xf0] sm:$0xff] %v3852
      %3917 = vst.msk [vmem:[#allocation2 + $0xf8] sm:$0xff] %vm1031, %v3853
      %3918 = vst [vmem:[#allocation2 + $0x100] sm:$0xff] %v3854
      %3919 = vst.msk [vmem:[#allocation2 + $0x108] sm:$0xff] %vm1031, %v3855
      %3920 = vst [vmem:[#allocation2 + $0x110] sm:$0xff] %v3856
      %3921 = vst.msk [vmem:[#allocation2 + $0x118] sm:$0xff] %vm1031, %v3857
      %3922 = vst [vmem:[#allocation2 + $0x120] sm:$0xff] %v3858
      %3923 = vst.msk [vmem:[#allocation2 + $0x128] sm:$0xff] %vm1031, %v3859
      %3924 = vst [vmem:[#allocation2 + $0x130] sm:$0xff] %v3860
      %3925 = vst.msk [vmem:[#allocation2 + $0x138] sm:$0xff] %vm1031, %v3861
      %3926 = vst [vmem:[#allocation2 + $0x140] sm:$0xff] %v3862
      %3927 = vst.msk [vmem:[#allocation2 + $0x148] sm:$0xff] %vm1031, %v3863
      %3928 = vst [vmem:[#allocation2 + $0x150] sm:$0xff] %v3864
      %3929 = vst.msk [vmem:[#allocation2 + $0x158] sm:$0xff] %vm1031, %v3865
      %3930 = vst [vmem:[#allocation2 + $0x160] sm:$0xff] %v3866
      %3931 = vst.msk [vmem:[#allocation2 + $0x168] sm:$0xff] %vm1031, %v3867
      %3932 = vst [vmem:[#allocation2 + $0x170] sm:$0xff] %v3868
      %3933 = vst.msk [vmem:[#allocation2 + $0x178] sm:$0xff] %vm1031, %v3869
      %3934 = vst [vmem:[#allocation2 + $0x180] sm:$0xff] %v3870
      %3935 = vst.msk [vmem:[#allocation2 + $0x188] sm:$0xff] %vm1031, %v3871
      %3936 = vst [vmem:[#allocation2 + $0x190] sm:$0xff] %v3872
      %3937 = vst.msk [vmem:[#allocation2 + $0x198] sm:$0xff] %vm1031, %v3873
      %3938 = vst [vmem:[#allocation2 + $0x1a0] sm:$0xff] %v3874
      %3939 = vst.msk [vmem:[#allocation2 + $0x1a8] sm:$0xff] %vm1031, %v3875
      %3940 = vst [vmem:[#allocation2 + $0x1b0] sm:$0xff] %v3876
      %3941 = vst.msk [vmem:[#allocation2 + $0x1b8] sm:$0xff] %vm1031, %v3877
      %3942 = vst [vmem:[#allocation2 + $0x1c0] sm:$0xff] %v3878
      %3943 = vst.msk [vmem:[#allocation2 + $0x1c8] sm:$0xff] %vm1031, %v3879
      %3944 = vst [vmem:[#allocation2 + $0x1d0] sm:$0xff] %v3880
      %3945 = vst.msk [vmem:[#allocation2 + $0x1d8] sm:$0xff] %vm1031, %v3881
      %3946 = vst [vmem:[#allocation2 + $0x1e0] sm:$0xff] %v3882
      %3947 = vst.msk [vmem:[#allocation2 + $0x1e8] sm:$0xff] %vm1031, %v3883
      %3948 = vst [vmem:[#allocation2 + $0x1f0] sm:$0xf] %v3884
      %vm3949 = vcmask 322560
      %3950 = vst.msk [vmem:[#allocation2 + $0x1f8] sm:$0xf] %vm3949, %v3885
      %v3951 = vld [vmem:[#allocation2] sm:$0xff]
      %v3952 = vld [vmem:[#allocation2 + $0x8] sm:$0xff]
      %v3953 = vld [vmem:[#allocation2 + $0x10] sm:$0xff]
      %v3954 = vld [vmem:[#allocation2 + $0x18] sm:$0xff]
      %v3955 = vld [vmem:[#allocation2 + $0x20] sm:$0xff]
      %v3956 = vld [vmem:[#allocation2 + $0x28] sm:$0xff]
      %v3957 = vld [vmem:[#allocation2 + $0x30] sm:$0xff]
      %v3958 = vld [vmem:[#allocation2 + $0x38] sm:$0xff]
      %v3959 = vld [vmem:[#allocation2 + $0x40] sm:$0xff]
      %v3960 = vld [vmem:[#allocation2 + $0x48] sm:$0xff]
      %v3961 = vld [vmem:[#allocation2 + $0x50] sm:$0xff]
      %v3962 = vld [vmem:[#allocation2 + $0x58] sm:$0xff]
      %v3963 = vld [vmem:[#allocation2 + $0x60] sm:$0xff]
      %v3964 = vld [vmem:[#allocation2 + $0x68] sm:$0xff]
      %v3965 = vld [vmem:[#allocation2 + $0x70] sm:$0xff]
      %v3966 = vld [vmem:[#allocation2 + $0x78] sm:$0xff]
      %v3967 = vld [vmem:[#allocation2 + $0x80] sm:$0xff]
      %v3968 = vld [vmem:[#allocation2 + $0x88] sm:$0xff]
      %v3969 = vld [vmem:[#allocation2 + $0x90] sm:$0xff]
      %v3970 = vld [vmem:[#allocation2 + $0x98] sm:$0xff]
      %v3971 = vld [vmem:[#allocation2 + $0xa0] sm:$0xff]
      %v3972 = vld [vmem:[#allocation2 + $0xa8] sm:$0xff]
      %v3973 = vld [vmem:[#allocation2 + $0xb0] sm:$0xff]
      %v3974 = vld [vmem:[#allocation2 + $0xb8] sm:$0xff]
      %v3975 = vld [vmem:[#allocation2 + $0xc0] sm:$0xff]
      %v3976 = vld [vmem:[#allocation2 + $0xc8] sm:$0xff]
      %v3977 = vld [vmem:[#allocation2 + $0xd0] sm:$0xff]
      %v3978 = vld [vmem:[#allocation2 + $0xd8] sm:$0xff]
      %v3979 = vld [vmem:[#allocation2 + $0xe0] sm:$0xff]
      %v3980 = vld [vmem:[#allocation2 + $0xe8] sm:$0xff]
      %v3981 = vld [vmem:[#allocation2 + $0xf0] sm:$0xff]
      %v3982 = vld [vmem:[#allocation2 + $0xf8] sm:$0xff]
      %v3983 = vld [vmem:[#allocation2 + $0x100] sm:$0xff]
      %v3984 = vld [vmem:[#allocation2 + $0x108] sm:$0xff]
      %v3985 = vld [vmem:[#allocation2 + $0x110] sm:$0xff]
      %v3986 = vld [vmem:[#allocation2 + $0x118] sm:$0xff]
      %v3987 = vld [vmem:[#allocation2 + $0x120] sm:$0xff]
      %v3988 = vld [vmem:[#allocation2 + $0x128] sm:$0xff]
      %v3989 = vld [vmem:[#allocation2 + $0x130] sm:$0xff]
      %v3990 = vld [vmem:[#allocation2 + $0x138] sm:$0xff]
      %v3991 = vld [vmem:[#allocation2 + $0x140] sm:$0xff]
      %v3992 = vld [vmem:[#allocation2 + $0x148] sm:$0xff]
      %v3993 = vld [vmem:[#allocation2 + $0x150] sm:$0xff]
      %v3994 = vld [vmem:[#allocation2 + $0x158] sm:$0xff]
      %v3995 = vld [vmem:[#allocation2 + $0x160] sm:$0xff]
      %v3996 = vld [vmem:[#allocation2 + $0x168] sm:$0xff]
      %v3997 = vld [vmem:[#allocation2 + $0x170] sm:$0xff]
      %v3998 = vld [vmem:[#allocation2 + $0x178] sm:$0xff]
      %v3999 = vld [vmem:[#allocation2 + $0x180] sm:$0xff]
      %v4000 = vld [vmem:[#allocation2 + $0x188] sm:$0xff]
      %v4001 = vld [vmem:[#allocation2 + $0x190] sm:$0xff]
      %v4002 = vld [vmem:[#allocation2 + $0x198] sm:$0xff]
      %v4003 = vld [vmem:[#allocation2 + $0x1a0] sm:$0xff]
      %v4004 = vld [vmem:[#allocation2 + $0x1a8] sm:$0xff]
      %v4005 = vld [vmem:[#allocation2 + $0x1b0] sm:$0xff]
      %v4006 = vld [vmem:[#allocation2 + $0x1b8] sm:$0xff]
      %v4007 = vld [vmem:[#allocation2 + $0x1c0] sm:$0xff]
      %v4008 = vld [vmem:[#allocation2 + $0x1c8] sm:$0xff]
      %v4009 = vld [vmem:[#allocation2 + $0x1d0] sm:$0xff]
      %v4010 = vld [vmem:[#allocation2 + $0x1d8] sm:$0xff]
      %v4011 = vld [vmem:[#allocation2 + $0x1e0] sm:$0xff]
      %v4012 = vld [vmem:[#allocation2 + $0x1e8] sm:$0xff]
      %v4013 = vld [vmem:[#allocation2 + $0x1f0] sm:$0xff]
      %v4014 = vld [vmem:[#allocation2 + $0x1f8] sm:$0xff]
      %v4015 = vld [vmem:[%s2] sm:$0x3]
      %v4017 = vlaneseq
      %v4018 = vshrl.u32 %v4017, 7
      %v4019 = vsub.s32 0, %v4018
      %v4020 = vrot.slane %v4015, %v4019
      %v4021 = vlaneseq
      %v4022 = vshrl.u32 %v4021, 7
      %v4023 = vsub.s32 1, %v4022
      %v4024 = vrot.slane %v4015, %v4023
      %v4027 = vadd.f32 %v3951, %v4020
      %v4028 = vadd.f32 %v3952, %v4024
      %v4029 = vadd.f32 %v3953, %v4020
      %v4030 = vadd.f32 %v3954, %v4024
      %v4031 = vadd.f32 %v3955, %v4020
      %v4032 = vadd.f32 %v3956, %v4024
      %v4033 = vadd.f32 %v3957, %v4020
      %v4034 = vadd.f32 %v3958, %v4024
      %v4035 = vadd.f32 %v3959, %v4020
      %v4036 = vadd.f32 %v3960, %v4024
      %v4037 = vadd.f32 %v3961, %v4020
      %v4038 = vadd.f32 %v3962, %v4024
      %v4039 = vadd.f32 %v3963, %v4020
      %v4040 = vadd.f32 %v3964, %v4024
      %v4041 = vadd.f32 %v3965, %v4020
      %v4042 = vadd.f32 %v3966, %v4024
      %v4043 = vadd.f32 %v3967, %v4020
      %v4044 = vadd.f32 %v3968, %v4024
      %v4045 = vadd.f32 %v3969, %v4020
      %v4046 = vadd.f32 %v3970, %v4024
      %v4047 = vadd.f32 %v3971, %v4020
      %v4048 = vadd.f32 %v3972, %v4024
      %v4049 = vadd.f32 %v3973, %v4020
      %v4050 = vadd.f32 %v3974, %v4024
      %v4051 = vadd.f32 %v3975, %v4020
      %v4052 = vadd.f32 %v3976, %v4024
      %v4053 = vadd.f32 %v3977, %v4020
      %v4054 = vadd.f32 %v3978, %v4024
      %v4055 = vadd.f32 %v3979, %v4020
      %v4056 = vadd.f32 %v3980, %v4024
      %v4057 = vadd.f32 %v3981, %v4020
      %v4058 = vadd.f32 %v3982, %v4024
      %v4059 = vadd.f32 %v3983, %v4020
      %v4060 = vadd.f32 %v3984, %v4024
      %v4061 = vadd.f32 %v3985, %v4020
      %v4062 = vadd.f32 %v3986, %v4024
      %v4063 = vadd.f32 %v3987, %v4020
      %v4064 = vadd.f32 %v3988, %v4024
      %v4065 = vadd.f32 %v3989, %v4020
      %v4066 = vadd.f32 %v3990, %v4024
      %v4067 = vadd.f32 %v3991, %v4020
      %v4068 = vadd.f32 %v3992, %v4024
      %v4069 = vadd.f32 %v3993, %v4020
      %v4070 = vadd.f32 %v3994, %v4024
      %v4071 = vadd.f32 %v3995, %v4020
      %v4072 = vadd.f32 %v3996, %v4024
      %v4073 = vadd.f32 %v3997, %v4020
      %v4074 = vadd.f32 %v3998, %v4024
      %v4075 = vadd.f32 %v3999, %v4020
      %v4076 = vadd.f32 %v4000, %v4024
      %v4077 = vadd.f32 %v4001, %v4020
      %v4078 = vadd.f32 %v4002, %v4024
      %v4079 = vadd.f32 %v4003, %v4020
      %v4080 = vadd.f32 %v4004, %v4024
      %v4081 = vadd.f32 %v4005, %v4020
      %v4082 = vadd.f32 %v4006, %v4024
      %v4083 = vadd.f32 %v4007, %v4020
      %v4084 = vadd.f32 %v4008, %v4024
      %v4085 = vadd.f32 %v4009, %v4020
      %v4086 = vadd.f32 %v4010, %v4024
      %v4087 = vadd.f32 %v4011, %v4020
      %v4088 = vadd.f32 %v4012, %v4024
      %v4089 = vadd.f32 %v4013, %v4020
      %v4090 = vadd.f32 %v4014, %v4024
      %v4091 = vmax.f32 %v4027, 0.0
      %v4092 = vmax.f32 %v4028, 0.0
      %v4093 = vmax.f32 %v4029, 0.0
      %v4094 = vmax.f32 %v4030, 0.0
      %v4095 = vmax.f32 %v4031, 0.0
      %v4096 = vmax.f32 %v4032, 0.0
      %v4097 = vmax.f32 %v4033, 0.0
      %v4098 = vmax.f32 %v4034, 0.0
      %v4099 = vmax.f32 %v4035, 0.0
      %v4100 = vmax.f32 %v4036, 0.0
      %v4101 = vmax.f32 %v4037, 0.0
      %v4102 = vmax.f32 %v4038, 0.0
      %v4103 = vmax.f32 %v4039, 0.0
      %v4104 = vmax.f32 %v4040, 0.0
      %v4105 = vmax.f32 %v4041, 0.0
      %v4106 = vmax.f32 %v4042, 0.0
      %v4107 = vmax.f32 %v4043, 0.0
      %v4108 = vmax.f32 %v4044, 0.0
      %v4109 = vmax.f32 %v4045, 0.0
      %v4110 = vmax.f32 %v4046, 0.0
      %v4111 = vmax.f32 %v4047, 0.0
      %v4112 = vmax.f32 %v4048, 0.0
      %v4113 = vmax.f32 %v4049, 0.0
      %v4114 = vmax.f32 %v4050, 0.0
      %v4115 = vmax.f32 %v4051, 0.0
      %v4116 = vmax.f32 %v4052, 0.0
      %v4117 = vmax.f32 %v4053, 0.0
      %v4118 = vmax.f32 %v4054, 0.0
      %v4119 = vmax.f32 %v4055, 0.0
      %v4120 = vmax.f32 %v4056, 0.0
      %v4121 = vmax.f32 %v4057, 0.0
      %v4122 = vmax.f32 %v4058, 0.0
      %v4123 = vmax.f32 %v4059, 0.0
      %v4124 = vmax.f32 %v4060, 0.0
      %v4125 = vmax.f32 %v4061, 0.0
      %v4126 = vmax.f32 %v4062, 0.0
      %v4127 = vmax.f32 %v4063, 0.0
      %v4128 = vmax.f32 %v4064, 0.0
      %v4129 = vmax.f32 %v4065, 0.0
      %v4130 = vmax.f32 %v4066, 0.0
      %v4131 = vmax.f32 %v4067, 0.0
      %v4132 = vmax.f32 %v4068, 0.0
      %v4133 = vmax.f32 %v4069, 0.0
      %v4134 = vmax.f32 %v4070, 0.0
      %v4135 = vmax.f32 %v4071, 0.0
      %v4136 = vmax.f32 %v4072, 0.0
      %v4137 = vmax.f32 %v4073, 0.0
      %v4138 = vmax.f32 %v4074, 0.0
      %v4139 = vmax.f32 %v4075, 0.0
      %v4140 = vmax.f32 %v4076, 0.0
      %v4141 = vmax.f32 %v4077, 0.0
      %v4142 = vmax.f32 %v4078, 0.0
      %v4143 = vmax.f32 %v4079, 0.0
      %v4144 = vmax.f32 %v4080, 0.0
      %v4145 = vmax.f32 %v4081, 0.0
      %v4146 = vmax.f32 %v4082, 0.0
      %v4147 = vmax.f32 %v4083, 0.0
      %v4148 = vmax.f32 %v4084, 0.0
      %v4149 = vmax.f32 %v4085, 0.0
      %v4150 = vmax.f32 %v4086, 0.0
      %v4151 = vmax.f32 %v4087, 0.0
      %v4152 = vmax.f32 %v4088, 0.0
      %v4153 = vmax.f32 %v4089, 0.0
      %v4154 = vmax.f32 %v4090, 0.0
      %v4155 = vpack.c.bf16 %v4093, %v4091
      %v4156 = vpack.c.bf16 %v4094, %v4092
      %v4157 = vpack.c.bf16 %v4097, %v4095
      %v4158 = vpack.c.bf16 %v4098, %v4096
      %v4159 = vpack.c.bf16 %v4101, %v4099
      %v4160 = vpack.c.bf16 %v4102, %v4100
      %v4161 = vpack.c.bf16 %v4105, %v4103
      %v4162 = vpack.c.bf16 %v4106, %v4104
      %v4163 = vpack.c.bf16 %v4109, %v4107
      %v4164 = vpack.c.bf16 %v4110, %v4108
      %v4165 = vpack.c.bf16 %v4113, %v4111
      %v4166 = vpack.c.bf16 %v4114, %v4112
      %v4167 = vpack.c.bf16 %v4117, %v4115
      %v4168 = vpack.c.bf16 %v4118, %v4116
      %v4169 = vpack.c.bf16 %v4121, %v4119
      %v4170 = vpack.c.bf16 %v4122, %v4120
      %v4171 = vpack.c.bf16 %v4125, %v4123
      %v4172 = vpack.c.bf16 %v4126, %v4124
      %v4173 = vpack.c.bf16 %v4129, %v4127
      %v4174 = vpack.c.bf16 %v4130, %v4128
      %v4175 = vpack.c.bf16 %v4133, %v4131
      %v4176 = vpack.c.bf16 %v4134, %v4132
      %v4177 = vpack.c.bf16 %v4137, %v4135
      %v4178 = vpack.c.bf16 %v4138, %v4136
      %v4179 = vpack.c.bf16 %v4141, %v4139
      %v4180 = vpack.c.bf16 %v4142, %v4140
      %v4181 = vpack.c.bf16 %v4145, %v4143
      %v4182 = vpack.c.bf16 %v4146, %v4144
      %v4183 = vpack.c.bf16 %v4149, %v4147
      %v4184 = vpack.c.bf16 %v4150, %v4148
      %v4185 = vpack.c.bf16 %v4153, %v4151
      %v4186 = vpack.c.bf16 %v4154, %v4152
      %v4187 = vld [vmem:[%s3] sm:$0xf]
      %v4188 = vld [vmem:[%s3 + $0x4] sm:$0xf]
      %v4189 = vld [vmem:[%s3 + $0x8] sm:$0xf]
      %v4190 = vld [vmem:[%s3 + $0xc] sm:$0xf]
      %v4191 = vld [vmem:[%s3 + $0x10] sm:$0xf]
      %v4192 = vld [vmem:[%s3 + $0x14] sm:$0xf]
      %v4193 = vld [vmem:[%s3 + $0x18] sm:$0xf]
      %v4194 = vld [vmem:[%s3 + $0x1c] sm:$0xf]
      %v4195 = vld [vmem:[%s3 + $0x20] sm:$0xf]
      %v4196 = vld [vmem:[%s3 + $0x24] sm:$0xf]
      %v4197 = vld [vmem:[%s3 + $0x28] sm:$0xf]
      %v4198 = vld [vmem:[%s3 + $0x2c] sm:$0xf]
      %v4199 = vld [vmem:[%s3 + $0x30] sm:$0xf]
      %v4200 = vld [vmem:[%s3 + $0x34] sm:$0xf]
      %v4201 = vld [vmem:[%s3 + $0x38] sm:$0xf]
      %v4202 = vld [vmem:[%s3 + $0x3c] sm:$0xf]
      %v4203 = vld [vmem:[%s3 + $0x40] sm:$0xf]
      %v4204 = vld [vmem:[%s3 + $0x44] sm:$0xf]
      %v4205 = vld [vmem:[%s3 + $0x48] sm:$0xf]
      %v4206 = vld [vmem:[%s3 + $0x4c] sm:$0xf]
      %v4207 = vld [vmem:[%s3 + $0x50] sm:$0xf]
      %v4229 = vunpack.c.l.b16 %v4187
      %v4230 = vunpack.c.l.b16 %v4188
      %v4231 = vunpack.c.l.b16 %v4189
      %v4232 = vunpack.c.l.b16 %v4190
      %v4233 = vunpack.c.l.b16 %v4191
      %v4234 = vunpack.c.l.b16 %v4192
      %v4235 = vunpack.c.l.b16 %v4193
      %v4236 = vunpack.c.l.b16 %v4194
      %v4237 = vunpack.c.l.b16 %v4195
      %v4238 = vunpack.c.l.b16 %v4196
      %v4239 = vunpack.c.l.b16 %v4197
      %v4240 = vunpack.c.l.b16 %v4198
      %v4241 = vunpack.c.l.b16 %v4199
      %v4242 = vunpack.c.l.b16 %v4200
      %v4243 = vunpack.c.l.b16 %v4201
      %v4244 = vunpack.c.l.b16 %v4202
      %v4245 = vunpack.c.l.b16 %v4203
      %v4246 = vunpack.c.l.b16 %v4204
      %v4247 = vunpack.c.l.b16 %v4205
      %v4248 = vunpack.c.l.b16 %v4206
      %v4249 = vunpack.c.l.b16 %v4207
      %v4250 = vpack.c.b16 %v4230, %v4229
      %v4251 = vpack.c.b16 %v4232, %v4231
      %v4252 = vpack.c.b16 %v4234, %v4233
      %v4253 = vpack.c.b16 %v4236, %v4235
      %v4254 = vpack.c.b16 %v4238, %v4237
      %v4255 = vpack.c.b16 %v4240, %v4239
      %v4256 = vpack.c.b16 %v4242, %v4241
      %v4257 = vpack.c.b16 %v4244, %v4243
      %v4258 = vpack.c.b16 %v4246, %v4245
      %v4259 = vpack.c.b16 %v4248, %v4247
      %v4260 = vpack.c.b16 %v4249, %v4249
      %v4272 = vsel %vm1031, %v4156, 0
      %v4275 = vsel %vm1031, %v4158, 0
      %v4278 = vsel %vm1031, %v4160, 0
      %v4281 = vsel %vm1031, %v4162, 0
      %v4284 = vsel %vm1031, %v4164, 0
      %v4287 = vsel %vm1031, %v4166, 0
      %v4290 = vsel %vm1031, %v4168, 0
      %v4293 = vsel %vm1031, %v4170, 0
      %v4296 = vsel %vm1031, %v4172, 0
      %v4299 = vsel %vm1031, %v4174, 0
      %v4302 = vsel %vm1031, %v4176, 0
      %v4305 = vsel %vm1031, %v4178, 0
      %v4308 = vsel %vm1031, %v4180, 0
      %v4311 = vsel %vm1031, %v4182, 0
      %v4314 = vsel %vm1031, %v4184, 0
      %v4317 = vsel %vm1031, %v4186, 0
      %v4320 = vsel %vm3631, %v4260, 0
      %4322 = vmatprep.subr.bf16.mxu0 0
      %4323 = vmatpush1.bf16.msra.mxu0 %v4250
      %4324 = vmatprep.subr.bf16.mxu0 0
      %4325 = vmatpush1.bf16.msra.mxu0 %v4251
      %4326 = vmatprep.subr.bf16.mxu0 0
      %4327 = vmatpush1.bf16.msra.mxu0 %v4252
      %4328 = vmatprep.subr.bf16.mxu0 0
      %4329 = vmatpush1.bf16.msra.mxu0 %v4253
      %4330 = vmatprep.subr.bf16.mxu0 0
      %4331 = vmatpush1.bf16.msra.mxu0 %v4254
      %4332 = vmatprep.subr.bf16.mxu0 0
      %4333 = vmatpush1.bf16.msra.mxu0 %v4255
      %4334 = vmatprep.subr.bf16.mxu0 0
      %4335 = vmatpush1.bf16.msra.mxu0 %v4256
      %4336 = vmatprep.subr.bf16.mxu0 0
      %4337 = vmatpush1.bf16.msra.mxu0 %v4257
      %4338 = vmatprep.subr.bf16.mxu0 0
      %4339 = vmatpush1.bf16.msra.mxu0 %v4258
      %4340 = vmatprep.subr.bf16.mxu0 0
      %4341 = vmatpush1.bf16.msra.mxu0 %v4259
      %4342 = vmatprep.subr.bf16.mxu0 0
      %4343 = vmatpush1.bf16.msra.mxu0 %v4320
      %4344 = vmatprep.subr.bf16.mxu0 0
      %4345 = vmatpush1.bf16.msra.mxu0 0
      %4346 = vmatprep.subr.bf16.mxu0 0
      %4347 = vmatpush1.bf16.msra.mxu0 0
      %4348 = vmatprep.subr.bf16.mxu0 0
      %4349 = vmatpush1.bf16.msra.mxu0 0
      %4350 = vmatprep.subr.bf16.mxu0 0
      %4351 = vmatpush1.bf16.msra.mxu0 0
      %4352 = vmatprep.subr.bf16.mxu0 0
      %4353 = vmatpush1.bf16.msra.mxu0 0
      %4354 = vmatprep.mubr.bf16.mxu0 %v4272
      %4355 = vmatmul.mubr.bf16.gmra.mrb[0].mxu0 %v4155
      %v4356 = vpop.f32.mrb[0].mxu0
      %v4357 = vadd.f32 0.0, %v4356
      %v4358 = vpop.f32.mrb[0].mxu0
      %v4359 = vpop.f32.mrb[0].mxu0
      %v4360 = vadd.f32 0.0, %v4359
      %v4361 = vpop.f32.mrb[0].mxu0
      %4362 = vmatprep.mubr.bf16.mxu0 %v4275
      %4363 = vmatmul.mubr.bf16.gmra.mrb[0].mxu0 %v4157
      %v4364 = vpop.f32.mrb[0].mxu0
      %v4365 = vadd.f32 0.0, %v4364
      %v4366 = vpop.f32.mrb[0].mxu0
      %v4367 = vpop.f32.mrb[0].mxu0
      %v4368 = vadd.f32 0.0, %v4367
      %v4369 = vpop.f32.mrb[0].mxu0
      %4370 = vmatprep.mubr.bf16.mxu0 %v4278
      %4371 = vmatmul.mubr.bf16.gmra.mrb[0].mxu0 %v4159
      %v4372 = vpop.f32.mrb[0].mxu0
      %v4373 = vadd.f32 0.0, %v4372
      %v4374 = vpop.f32.mrb[0].mxu0
      %v4375 = vpop.f32.mrb[0].mxu0
      %v4376 = vadd.f32 0.0, %v4375
      %v4377 = vpop.f32.mrb[0].mxu0
      %4378 = vmatprep.mubr.bf16.mxu0 %v4281
      %4379 = vmatmul.mubr.bf16.gmra.mrb[0].mxu0 %v4161
      %v4380 = vpop.f32.mrb[0].mxu0
      %v4381 = vadd.f32 0.0, %v4380
      %v4382 = vpop.f32.mrb[0].mxu0
      %v4383 = vpop.f32.mrb[0].mxu0
      %v4384 = vadd.f32 0.0, %v4383
      %v4385 = vpop.f32.mrb[0].mxu0
      %4386 = vmatprep.mubr.bf16.mxu0 %v4284
      %4387 = vmatmul.mubr.bf16.gmra.mrb[0].mxu0 %v4163
      %v4388 = vpop.f32.mrb[0].mxu0
      %v4389 = vadd.f32 0.0, %v4388
      %v4390 = vpop.f32.mrb[0].mxu0
      %v4391 = vpop.f32.mrb[0].mxu0
      %v4392 = vadd.f32 0.0, %v4391
      %v4393 = vpop.f32.mrb[0].mxu0
      %4394 = vmatprep.mubr.bf16.mxu0 %v4287
      %4395 = vmatmul.mubr.bf16.gmra.mrb[0].mxu0 %v4165
      %v4396 = vpop.f32.mrb[0].mxu0
      %v4397 = vadd.f32 0.0, %v4396
      %v4398 = vpop.f32.mrb[0].mxu0
      %v4399 = vpop.f32.mrb[0].mxu0
      %v4400 = vadd.f32 0.0, %v4399
      %v4401 = vpop.f32.mrb[0].mxu0
      %4402 = vmatprep.mubr.bf16.mxu0 %v4290
      %4403 = vmatmul.mubr.bf16.gmra.mrb[0].mxu0 %v4167
      %v4404 = vpop.f32.mrb[0].mxu0
      %v4405 = vadd.f32 0.0, %v4404
      %v4406 = vpop.f32.mrb[0].mxu0
      %v4407 = vpop.f32.mrb[0].mxu0
      %v4408 = vadd.f32 0.0, %v4407
      %v4409 = vpop.f32.mrb[0].mxu0
      %4410 = vmatprep.mubr.bf16.mxu0 %v4293
      %4411 = vmatmul.mubr.bf16.gmra.mrb[0].mxu0 %v4169
      %v4412 = vpop.f32.mrb[0].mxu0
      %v4413 = vadd.f32 0.0, %v4412
      %v4414 = vpop.f32.mrb[0].mxu0
      %v4415 = vpop.f32.mrb[0].mxu0
      %v4416 = vadd.f32 0.0, %v4415
      %v4417 = vpop.f32.mrb[0].mxu0
      %4418 = vmatprep.mubr.bf16.mxu0 %v4296
      %4419 = vmatmul.mubr.bf16.gmra.mrb[0].mxu0 %v4171
      %v4420 = vpop.f32.mrb[0].mxu0
      %v4421 = vadd.f32 0.0, %v4420
      %v4422 = vpop.f32.mrb[0].mxu0
      %v4423 = vpop.f32.mrb[0].mxu0
      %v4424 = vadd.f32 0.0, %v4423
      %v4425 = vpop.f32.mrb[0].mxu0
      %4426 = vmatprep.mubr.bf16.mxu0 %v4299
      %4427 = vmatmul.mubr.bf16.gmra.mrb[0].mxu0 %v4173
      %v4428 = vpop.f32.mrb[0].mxu0
      %v4429 = vadd.f32 0.0, %v4428
      %v4430 = vpop.f32.mrb[0].mxu0
      %v4431 = vpop.f32.mrb[0].mxu0
      %v4432 = vadd.f32 0.0, %v4431
      %v4433 = vpop.f32.mrb[0].mxu0
      %4434 = vmatprep.mubr.bf16.mxu0 %v4302
      %4435 = vmatmul.mubr.bf16.gmra.mrb[0].mxu0 %v4175
      %v4436 = vpop.f32.mrb[0].mxu0
      %v4437 = vadd.f32 0.0, %v4436
      %v4438 = vpop.f32.mrb[0].mxu0
      %v4439 = vpop.f32.mrb[0].mxu0
      %v4440 = vadd.f32 0.0, %v4439
      %v4441 = vpop.f32.mrb[0].mxu0
      %4442 = vmatprep.mubr.bf16.mxu0 %v4305
      %4443 = vmatmul.mubr.bf16.gmra.mrb[0].mxu0 %v4177
      %v4444 = vpop.f32.mrb[0].mxu0
      %v4445 = vadd.f32 0.0, %v4444
      %v4446 = vpop.f32.mrb[0].mxu0
      %v4447 = vpop.f32.mrb[0].mxu0
      %v4448 = vadd.f32 0.0, %v4447
      %v4449 = vpop.f32.mrb[0].mxu0
      %4450 = vmatprep.mubr.bf16.mxu0 %v4308
      %4451 = vmatmul.mubr.bf16.gmra.mrb[0].mxu0 %v4179
      %v4452 = vpop.f32.mrb[0].mxu0
      %v4453 = vadd.f32 0.0, %v4452
      %v4454 = vpop.f32.mrb[0].mxu0
      %v4455 = vpop.f32.mrb[0].mxu0
      %v4456 = vadd.f32 0.0, %v4455
      %v4457 = vpop.f32.mrb[0].mxu0
      %4458 = vmatprep.mubr.bf16.mxu0 %v4311
      %4459 = vmatmul.mubr.bf16.gmra.mrb[0].mxu0 %v4181
      %v4460 = vpop.f32.mrb[0].mxu0
      %v4461 = vadd.f32 0.0, %v4460
      %v4462 = vpop.f32.mrb[0].mxu0
      %v4463 = vpop.f32.mrb[0].mxu0
      %v4464 = vadd.f32 0.0, %v4463
      %v4465 = vpop.f32.mrb[0].mxu0
      %4466 = vmatprep.mubr.bf16.mxu0 %v4314
      %4467 = vmatmul.mubr.bf16.gmra.mrb[0].mxu0 %v4183
      %v4468 = vpop.f32.mrb[0].mxu0
      %v4469 = vadd.f32 0.0, %v4468
      %v4470 = vpop.f32.mrb[0].mxu0
      %v4471 = vpop.f32.mrb[0].mxu0
      %v4472 = vadd.f32 0.0, %v4471
      %v4473 = vpop.f32.mrb[0].mxu0
      %4474 = vmatprep.mubr.bf16.mxu0 %v4317
      %4475 = vmatmul.mubr.bf16.gmra.mrb[0].mxu0 %v4185
      %v4476 = vpop.f32.mrb[0].mxu0
      %v4477 = vadd.f32 0.0, %v4476
      %v4478 = vpop.f32.mrb[0].mxu0
      %v4479 = vpop.f32.mrb[0].mxu0
      %v4480 = vadd.f32 0.0, %v4479
      %v4481 = vpop.f32.mrb[0].mxu0
      %4482 = vdwg.mxu0
      %v4483 = vld [vmem:[%s4] sm:$0xf]
      %v4484 = vld [vmem:[%s4 + $0x4] sm:$0xf]
      %v4485 = vld [vmem:[%s4 + $0x8] sm:$0xf]
      %v4486 = vld [vmem:[%s4 + $0xc] sm:$0xf]
      %v4487 = vld [vmem:[%s4 + $0x10] sm:$0xf]
      %v4488 = vld [vmem:[%s4 + $0x14] sm:$0xf]
      %v4489 = vld [vmem:[%s4 + $0x18] sm:$0xf]
      %v4490 = vld [vmem:[%s4 + $0x1c] sm:$0xf]
      %v4491 = vld [vmem:[%s4 + $0x20] sm:$0xf]
      %v4492 = vld [vmem:[%s4 + $0x24] sm:$0xf]
      %v4493 = vld [vmem:[%s4 + $0x28] sm:$0xf]
      %v4494 = vld [vmem:[%s4 + $0x2c] sm:$0xf]
      %v4495 = vld [vmem:[%s4 + $0x30] sm:$0xf]
      %v4496 = vld [vmem:[%s4 + $0x34] sm:$0xf]
      %v4497 = vld [vmem:[%s4 + $0x38] sm:$0xf]
      %v4498 = vld [vmem:[%s4 + $0x3c] sm:$0xf]
      %v4499 = vld [vmem:[%s4 + $0x40] sm:$0xf]
      %v4500 = vld [vmem:[%s4 + $0x44] sm:$0xf]
      %v4501 = vld [vmem:[%s4 + $0x48] sm:$0xf]
      %v4502 = vld [vmem:[%s4 + $0x4c] sm:$0xf]
      %v4503 = vld [vmem:[%s4 + $0x50] sm:$0xf]
      %v4525 = vunpack.c.l.b16 %v4483
      %v4526 = vunpack.c.l.b16 %v4484
      %v4527 = vunpack.c.l.b16 %v4485
      %v4528 = vunpack.c.l.b16 %v4486
      %v4529 = vunpack.c.l.b16 %v4487
      %v4530 = vunpack.c.l.b16 %v4488
      %v4531 = vunpack.c.l.b16 %v4489
      %v4532 = vunpack.c.l.b16 %v4490
      %v4533 = vunpack.c.l.b16 %v4491
      %v4534 = vunpack.c.l.b16 %v4492
      %v4535 = vunpack.c.l.b16 %v4493
      %v4536 = vunpack.c.l.b16 %v4494
      %v4537 = vunpack.c.l.b16 %v4495
      %v4538 = vunpack.c.l.b16 %v4496
      %v4539 = vunpack.c.l.b16 %v4497
      %v4540 = vunpack.c.l.b16 %v4498
      %v4541 = vunpack.c.l.b16 %v4499
      %v4542 = vunpack.c.l.b16 %v4500
      %v4543 = vunpack.c.l.b16 %v4501
      %v4544 = vunpack.c.l.b16 %v4502
      %v4545 = vunpack.c.l.b16 %v4503
      %v4546 = vpack.c.b16 %v4526, %v4525
      %v4547 = vpack.c.b16 %v4528, %v4527
      %v4548 = vpack.c.b16 %v4530, %v4529
      %v4549 = vpack.c.b16 %v4532, %v4531
      %v4550 = vpack.c.b16 %v4534, %v4533
      %v4551 = vpack.c.b16 %v4536, %v4535
      %v4552 = vpack.c.b16 %v4538, %v4537
      %v4553 = vpack.c.b16 %v4540, %v4539
      %v4554 = vpack.c.b16 %v4542, %v4541
      %v4555 = vpack.c.b16 %v4544, %v4543
      %v4556 = vpack.c.b16 %v4545, %v4545
      %v4568 = vsel %vm3631, %v4556, 0
      %4570 = vmatprep.subr.bf16.mxu0 0
      %4571 = vmatpush1.bf16.msra.mxu0 %v4546
      %4572 = vmatprep.subr.bf16.mxu0 0
      %4573 = vmatpush1.bf16.msra.mxu0 %v4547
      %4574 = vmatprep.subr.bf16.mxu0 0
      %4575 = vmatpush1.bf16.msra.mxu0 %v4548
      %4576 = vmatprep.subr.bf16.mxu0 0
      %4577 = vmatpush1.bf16.msra.mxu0 %v4549
      %4578 = vmatprep.subr.bf16.mxu0 0
      %4579 = vmatpush1.bf16.msra.mxu0 %v4550
      %4580 = vmatprep.subr.bf16.mxu0 0
      %4581 = vmatpush1.bf16.msra.mxu0 %v4551
      %4582 = vmatprep.subr.bf16.mxu0 0
      %4583 = vmatpush1.bf16.msra.mxu0 %v4552
      %4584 = vmatprep.subr.bf16.mxu0 0
      %4585 = vmatpush1.bf16.msra.mxu0 %v4553
      %4586 = vmatprep.subr.bf16.mxu0 0
      %4587 = vmatpush1.bf16.msra.mxu0 %v4554
      %4588 = vmatprep.subr.bf16.mxu0 0
      %4589 = vmatpush1.bf16.msra.mxu0 %v4555
      %4590 = vmatprep.subr.bf16.mxu0 0
      %4591 = vmatpush1.bf16.msra.mxu0 %v4568
      %4592 = vmatprep.subr.bf16.mxu0 0
      %4593 = vmatpush1.bf16.msra.mxu0 0
      %4594 = vmatprep.subr.bf16.mxu0 0
      %4595 = vmatpush1.bf16.msra.mxu0 0
      %4596 = vmatprep.subr.bf16.mxu0 0
      %4597 = vmatpush1.bf16.msra.mxu0 0
      %4598 = vmatprep.subr.bf16.mxu0 0
      %4599 = vmatpush1.bf16.msra.mxu0 0
      %4600 = vmatprep.subr.bf16.mxu0 0
      %4601 = vmatpush1.bf16.msra.mxu0 0
      %4602 = vmatprep.mubr.bf16.mxu0 %v4272
      %4603 = vmatmul.mubr.bf16.gmra.mrb[0].mxu0 %v4155
      %v4604 = vpop.f32.mrb[0].mxu0
      %v4605 = vadd.f32 0.0, %v4604
      %v4606 = vpop.f32.mrb[0].mxu0
      %v4607 = vpop.f32.mrb[0].mxu0
      %v4608 = vadd.f32 0.0, %v4607
      %v4609 = vpop.f32.mrb[0].mxu0
      %4610 = vmatprep.mubr.bf16.mxu0 %v4275
      %4611 = vmatmul.mubr.bf16.gmra.mrb[0].mxu0 %v4157
      %v4612 = vpop.f32.mrb[0].mxu0
      %v4613 = vadd.f32 0.0, %v4612
      %v4614 = vpop.f32.mrb[0].mxu0
      %v4615 = vpop.f32.mrb[0].mxu0
      %v4616 = vadd.f32 0.0, %v4615
      %v4617 = vpop.f32.mrb[0].mxu0
      %4618 = vmatprep.mubr.bf16.mxu0 %v4278
      %4619 = vmatmul.mubr.bf16.gmra.mrb[0].mxu0 %v4159
      %v4620 = vpop.f32.mrb[0].mxu0
      %v4621 = vadd.f32 0.0, %v4620
      %v4622 = vpop.f32.mrb[0].mxu0
      %v4623 = vpop.f32.mrb[0].mxu0
      %v4624 = vadd.f32 0.0, %v4623
      %v4625 = vpop.f32.mrb[0].mxu0
      %4626 = vmatprep.mubr.bf16.mxu0 %v4281
      %4627 = vmatmul.mubr.bf16.gmra.mrb[0].mxu0 %v4161
      %v4628 = vpop.f32.mrb[0].mxu0
      %v4629 = vadd.f32 0.0, %v4628
      %v4630 = vpop.f32.mrb[0].mxu0
      %v4631 = vpop.f32.mrb[0].mxu0
      %v4632 = vadd.f32 0.0, %v4631
      %v4633 = vpop.f32.mrb[0].mxu0
      %4634 = vmatprep.mubr.bf16.mxu0 %v4284
      %4635 = vmatmul.mubr.bf16.gmra.mrb[0].mxu0 %v4163
      %v4636 = vpop.f32.mrb[0].mxu0
      %v4637 = vadd.f32 0.0, %v4636
      %v4638 = vpop.f32.mrb[0].mxu0
      %v4639 = vpop.f32.mrb[0].mxu0
      %v4640 = vadd.f32 0.0, %v4639
      %v4641 = vpop.f32.mrb[0].mxu0
      %4642 = vmatprep.mubr.bf16.mxu0 %v4287
      %4643 = vmatmul.mubr.bf16.gmra.mrb[0].mxu0 %v4165
      %v4644 = vpop.f32.mrb[0].mxu0
      %v4645 = vadd.f32 0.0, %v4644
      %v4646 = vpop.f32.mrb[0].mxu0
      %v4647 = vpop.f32.mrb[0].mxu0
      %v4648 = vadd.f32 0.0, %v4647
      %v4649 = vpop.f32.mrb[0].mxu0
      %4650 = vmatprep.mubr.bf16.mxu0 %v4290
      %4651 = vmatmul.mubr.bf16.gmra.mrb[0].mxu0 %v4167
      %v4652 = vpop.f32.mrb[0].mxu0
      %v4653 = vadd.f32 0.0, %v4652
      %v4654 = vpop.f32.mrb[0].mxu0
      %v4655 = vpop.f32.mrb[0].mxu0
      %v4656 = vadd.f32 0.0, %v4655
      %v4657 = vpop.f32.mrb[0].mxu0
      %4658 = vmatprep.mubr.bf16.mxu0 %v4293
      %4659 = vmatmul.mubr.bf16.gmra.mrb[0].mxu0 %v4169
      %v4660 = vpop.f32.mrb[0].mxu0
      %v4661 = vadd.f32 0.0, %v4660
      %v4662 = vpop.f32.mrb[0].mxu0
      %v4663 = vpop.f32.mrb[0].mxu0
      %v4664 = vadd.f32 0.0, %v4663
      %v4665 = vpop.f32.mrb[0].mxu0
      %4666 = vmatprep.mubr.bf16.mxu0 %v4296
      %4667 = vmatmul.mubr.bf16.gmra.mrb[0].mxu0 %v4171
      %v4668 = vpop.f32.mrb[0].mxu0
      %v4669 = vadd.f32 0.0, %v4668
      %v4670 = vpop.f32.mrb[0].mxu0
      %v4671 = vpop.f32.mrb[0].mxu0
      %v4672 = vadd.f32 0.0, %v4671
      %v4673 = vpop.f32.mrb[0].mxu0
      %4674 = vmatprep.mubr.bf16.mxu0 %v4299
      %4675 = vmatmul.mubr.bf16.gmra.mrb[0].mxu0 %v4173
      %v4676 = vpop.f32.mrb[0].mxu0
      %v4677 = vadd.f32 0.0, %v4676
      %v4678 = vpop.f32.mrb[0].mxu0
      %v4679 = vpop.f32.mrb[0].mxu0
      %v4680 = vadd.f32 0.0, %v4679
      %v4681 = vpop.f32.mrb[0].mxu0
      %4682 = vmatprep.mubr.bf16.mxu0 %v4302
      %4683 = vmatmul.mubr.bf16.gmra.mrb[0].mxu0 %v4175
      %v4684 = vpop.f32.mrb[0].mxu0
      %v4685 = vadd.f32 0.0, %v4684
      %v4686 = vpop.f32.mrb[0].mxu0
      %v4687 = vpop.f32.mrb[0].mxu0
      %v4688 = vadd.f32 0.0, %v4687
      %v4689 = vpop.f32.mrb[0].mxu0
      %4690 = vmatprep.mubr.bf16.mxu0 %v4305
      %4691 = vmatmul.mubr.bf16.gmra.mrb[0].mxu0 %v4177
      %v4692 = vpop.f32.mrb[0].mxu0
      %v4693 = vadd.f32 0.0, %v4692
      %v4694 = vpop.f32.mrb[0].mxu0
      %v4695 = vpop.f32.mrb[0].mxu0
      %v4696 = vadd.f32 0.0, %v4695
      %v4697 = vpop.f32.mrb[0].mxu0
      %4698 = vmatprep.mubr.bf16.mxu0 %v4308
      %4699 = vmatmul.mubr.bf16.gmra.mrb[0].mxu0 %v4179
      %v4700 = vpop.f32.mrb[0].mxu0
      %v4701 = vadd.f32 0.0, %v4700
      %v4702 = vpop.f32.mrb[0].mxu0
      %v4703 = vpop.f32.mrb[0].mxu0
      %v4704 = vadd.f32 0.0, %v4703
      %v4705 = vpop.f32.mrb[0].mxu0
      %4706 = vmatprep.mubr.bf16.mxu0 %v4311
      %4707 = vmatmul.mubr.bf16.gmra.mrb[0].mxu0 %v4181
      %v4708 = vpop.f32.mrb[0].mxu0
      %v4709 = vadd.f32 0.0, %v4708
      %v4710 = vpop.f32.mrb[0].mxu0
      %v4711 = vpop.f32.mrb[0].mxu0
      %v4712 = vadd.f32 0.0, %v4711
      %v4713 = vpop.f32.mrb[0].mxu0
      %4714 = vmatprep.mubr.bf16.mxu0 %v4314
      %4715 = vmatmul.mubr.bf16.gmra.mrb[0].mxu0 %v4183
      %v4716 = vpop.f32.mrb[0].mxu0
      %v4717 = vadd.f32 0.0, %v4716
      %v4718 = vpop.f32.mrb[0].mxu0
      %v4719 = vpop.f32.mrb[0].mxu0
      %v4720 = vadd.f32 0.0, %v4719
      %v4721 = vpop.f32.mrb[0].mxu0
      %4722 = vmatprep.mubr.bf16.mxu0 %v4317
      %4723 = vmatmul.mubr.bf16.gmra.mrb[0].mxu0 %v4185
      %v4724 = vpop.f32.mrb[0].mxu0
      %v4725 = vadd.f32 0.0, %v4724
      %v4726 = vpop.f32.mrb[0].mxu0
      %v4727 = vpop.f32.mrb[0].mxu0
      %v4728 = vadd.f32 0.0, %v4727
      %v4729 = vpop.f32.mrb[0].mxu0
      %4730 = vdwg.mxu0
      %v4731 = vmax.f32 %v4357, %v4605
      %v4732 = vmax.f32 %v4360, %v4608
      %v4733 = vmax.f32 %v4365, %v4613
      %v4734 = vmax.f32 %v4368, %v4616
      %v4735 = vmax.f32 %v4373, %v4621
      %v4736 = vmax.f32 %v4376, %v4624
      %v4737 = vmax.f32 %v4381, %v4629
      %v4738 = vmax.f32 %v4384, %v4632
      %v4739 = vmax.f32 %v4389, %v4637
      %v4740 = vmax.f32 %v4392, %v4640
      %v4741 = vmax.f32 %v4397, %v4645
      %v4742 = vmax.f32 %v4400, %v4648
      %v4743 = vmax.f32 %v4405, %v4653
      %v4744 = vmax.f32 %v4408, %v4656
      %v4745 = vmax.f32 %v4413, %v4661
      %v4746 = vmax.f32 %v4416, %v4664
      %v4747 = vmax.f32 %v4421, %v4669
      %v4748 = vmax.f32 %v4424, %v4672
      %v4749 = vmax.f32 %v4429, %v4677
      %v4750 = vmax.f32 %v4432, %v4680
      %v4751 = vmax.f32 %v4437, %v4685
      %v4752 = vmax.f32 %v4440, %v4688
      %v4753 = vmax.f32 %v4445, %v4693
      %v4754 = vmax.f32 %v4448, %v4696
      %v4755 = vmax.f32 %v4453, %v4701
      %v4756 = vmax.f32 %v4456, %v4704
      %v4757 = vmax.f32 %v4461, %v4709
      %v4758 = vmax.f32 %v4464, %v4712
      %v4759 = vmax.f32 %v4469, %v4717
      %v4760 = vmax.f32 %v4472, %v4720
      %v4761 = vmax.f32 %v4477, %v4725
      %v4762 = vmax.f32 %v4480, %v4728
      %v4763 = vpack.c.bf16 %v4732, %v4731
      %v4764 = vpack.c.bf16 %v4734, %v4733
      %v4765 = vpack.c.bf16 %v4736, %v4735
      %v4766 = vpack.c.bf16 %v4738, %v4737
      %v4767 = vpack.c.bf16 %v4740, %v4739
      %v4768 = vpack.c.bf16 %v4742, %v4741
      %v4769 = vpack.c.bf16 %v4744, %v4743
      %v4770 = vpack.c.bf16 %v4746, %v4745
      %v4771 = vpack.c.bf16 %v4748, %v4747
      %v4772 = vpack.c.bf16 %v4750, %v4749
      %v4773 = vpack.c.bf16 %v4752, %v4751
      %v4774 = vpack.c.bf16 %v4754, %v4753
      %v4775 = vpack.c.bf16 %v4756, %v4755
      %v4776 = vpack.c.bf16 %v4758, %v4757
      %v4777 = vpack.c.bf16 %v4760, %v4759
      %v4778 = vpack.c.bf16 %v4762, %v4761
      %v4779 = vld [vmem:[%s5] sm:$0xff]
      %v4780 = vld [vmem:[%s5 + $0x8] sm:$0xff]
      %v4781 = vld [vmem:[%s5 + $0x10] sm:$0xff]
      %v4782 = vld [vmem:[%s5 + $0x18] sm:$0xff]
      %v4783 = vld [vmem:[%s5 + $0x20] sm:$0xff]
      %v4784 = vld [vmem:[%s5 + $0x28] sm:$0xff]
      %v4785 = vld [vmem:[%s5 + $0x30] sm:$0xff]
      %v4786 = vld [vmem:[%s5 + $0x38] sm:$0xff]
      %v4787 = vld [vmem:[%s5 + $0x40] sm:$0xff]
      %v4788 = vld [vmem:[%s5 + $0x48] sm:$0xff]
      %v4789 = vld [vmem:[%s5 + $0x50] sm:$0xff]
      %v4790 = vld [vmem:[%s5 + $0x58] sm:$0xff]
      %v4791 = vld [vmem:[%s5 + $0x60] sm:$0xff]
      %v4792 = vld [vmem:[%s5 + $0x68] sm:$0xff]
      %v4807 = vunpack.c.l.b16 %v4779
      %v4808 = vunpack.c.h.b16 %v4779
      %v4809 = vunpack.c.l.b16 %v4780
      %v4810 = vunpack.c.h.b16 %v4780
      %v4811 = vunpack.c.l.b16 %v4781
      %v4812 = vunpack.c.h.b16 %v4781
      %v4813 = vunpack.c.l.b16 %v4782
      %v4814 = vunpack.c.h.b16 %v4782
      %v4815 = vunpack.c.l.b16 %v4783
      %v4816 = vunpack.c.h.b16 %v4783
      %v4817 = vunpack.c.l.b16 %v4784
      %v4818 = vunpack.c.h.b16 %v4784
      %v4819 = vunpack.c.l.b16 %v4785
      %v4820 = vunpack.c.h.b16 %v4785
      %v4821 = vunpack.c.l.b16 %v4786
      %v4822 = vunpack.c.h.b16 %v4786
      %v4823 = vunpack.c.l.b16 %v4787
      %v4824 = vunpack.c.h.b16 %v4787
      %v4825 = vunpack.c.l.b16 %v4788
      %v4826 = vunpack.c.h.b16 %v4788
      %v4827 = vunpack.c.l.b16 %v4789
      %v4828 = vunpack.c.h.b16 %v4789
      %v4829 = vunpack.c.l.b16 %v4790
      %v4830 = vunpack.c.h.b16 %v4790
      %v4831 = vunpack.c.l.b16 %v4791
      %v4832 = vunpack.c.h.b16 %v4791
      %v4833 = vunpack.c.l.b16 %v4792
      %v4834 = vunpack.c.h.b16 %v4792
      %v4835 = vpack.c.b16 %v4809, %v4807
      %v4836 = vpack.c.b16 %v4810, %v4808
      %v4837 = vpack.c.b16 %v4813, %v4811
      %v4838 = vpack.c.b16 %v4814, %v4812
      %v4839 = vpack.c.b16 %v4817, %v4815
      %v4840 = vpack.c.b16 %v4818, %v4816
      %v4841 = vpack.c.b16 %v4821, %v4819
      %v4842 = vpack.c.b16 %v4822, %v4820
      %v4843 = vpack.c.b16 %v4825, %v4823
      %v4844 = vpack.c.b16 %v4826, %v4824
      %v4845 = vpack.c.b16 %v4829, %v4827
      %v4846 = vpack.c.b16 %v4830, %v4828
      %v4847 = vpack.c.b16 %v4833, %v4831
      %v4848 = vpack.c.b16 %v4834, %v4832
      %4863 = vmatprep.subr.bf16.mxu0 0
      %4864 = vmatpush1.bf16.msra.mxu0 %v4763
      %4865 = vmatprep.subr.bf16.mxu0 0
      %4866 = vmatpush1.bf16.msra.mxu0 %v4764
      %4867 = vmatprep.subr.bf16.mxu0 0
      %4868 = vmatpush1.bf16.msra.mxu0 %v4765
      %4869 = vmatprep.subr.bf16.mxu0 0
      %4870 = vmatpush1.bf16.msra.mxu0 %v4766
      %4871 = vmatprep.subr.bf16.mxu0 0
      %4872 = vmatpush1.bf16.msra.mxu0 %v4767
      %4873 = vmatprep.subr.bf16.mxu0 0
      %4874 = vmatpush1.bf16.msra.mxu0 %v4768
      %4875 = vmatprep.subr.bf16.mxu0 0
      %4876 = vmatpush1.bf16.msra.mxu0 %v4769
      %4877 = vmatprep.subr.bf16.mxu0 0
      %4878 = vmatpush1.bf16.msra.mxu0 %v4770
      %4879 = vmatprep.subr.bf16.mxu0 0
      %4880 = vmatpush1.bf16.msra.mxu0 %v4771
      %4881 = vmatprep.subr.bf16.mxu0 0
      %4882 = vmatpush1.bf16.msra.mxu0 %v4772
      %4883 = vmatprep.subr.bf16.mxu0 0
      %4884 = vmatpush1.bf16.msra.mxu0 %v4773
      %4885 = vmatprep.subr.bf16.mxu0 0
      %4886 = vmatpush1.bf16.msra.mxu0 %v4774
      %4887 = vmatprep.subr.bf16.mxu0 0
      %4888 = vmatpush1.bf16.msra.mxu0 %v4775
      %4889 = vmatprep.subr.bf16.mxu0 0
      %4890 = vmatpush1.bf16.msra.mxu0 %v4776
      %4891 = vmatprep.subr.bf16.mxu0 0
      %4892 = vmatpush1.bf16.msra.mxu0 %v4777
      %4893 = vmatprep.subr.bf16.mxu0 0
      %4894 = vmatpush1.bf16.msra.mxu0 %v4778
      %4895 = vmatprep.mubr.bf16.mxu0 %v4836
      %4896 = vmatmul.mubr.bf16.gmra.mrb[0].mxu0 %v4835
      %v4897 = vpop.f32.mrb[0].mxu0
      %v4898 = vadd.f32 0.0, %v4897
      %v4899 = vpop.f32.mrb[0].mxu0
      %v4900 = vpop.f32.mrb[0].mxu0
      %v4901 = vadd.f32 0.0, %v4900
      %v4902 = vpop.f32.mrb[0].mxu0
      %4903 = vmatprep.mubr.bf16.mxu0 %v4838
      %4904 = vmatmul.mubr.bf16.gmra.mrb[0].mxu0 %v4837
      %v4905 = vpop.f32.mrb[0].mxu0
      %v4906 = vadd.f32 0.0, %v4905
      %v4907 = vpop.f32.mrb[0].mxu0
      %v4908 = vpop.f32.mrb[0].mxu0
      %v4909 = vadd.f32 0.0, %v4908
      %v4910 = vpop.f32.mrb[0].mxu0
      %4911 = vmatprep.mubr.bf16.mxu0 %v4840
      %4912 = vmatmul.mubr.bf16.gmra.mrb[0].mxu0 %v4839
      %v4913 = vpop.f32.mrb[0].mxu0
      %v4914 = vadd.f32 0.0, %v4913
      %v4915 = vpop.f32.mrb[0].mxu0
      %v4916 = vpop.f32.mrb[0].mxu0
      %v4917 = vadd.f32 0.0, %v4916
      %v4918 = vpop.f32.mrb[0].mxu0
      %4919 = vmatprep.mubr.bf16.mxu0 %v4842
      %4920 = vmatmul.mubr.bf16.gmra.mrb[0].mxu0 %v4841
      %v4921 = vpop.f32.mrb[0].mxu0
      %v4922 = vadd.f32 0.0, %v4921
      %v4923 = vpop.f32.mrb[0].mxu0
      %v4924 = vpop.f32.mrb[0].mxu0
      %v4925 = vadd.f32 0.0, %v4924
      %v4926 = vpop.f32.mrb[0].mxu0
      %4927 = vmatprep.mubr.bf16.mxu0 %v4844
      %4928 = vmatmul.mubr.bf16.gmra.mrb[0].mxu0 %v4843
      %v4929 = vpop.f32.mrb[0].mxu0
      %v4930 = vadd.f32 0.0, %v4929
      %v4931 = vpop.f32.mrb[0].mxu0
      %v4932 = vpop.f32.mrb[0].mxu0
      %v4933 = vadd.f32 0.0, %v4932
      %v4934 = vpop.f32.mrb[0].mxu0
      %4935 = vmatprep.mubr.bf16.mxu0 %v4846
      %4936 = vmatmul.mubr.bf16.gmra.mrb[0].mxu0 %v4845
      %v4937 = vpop.f32.mrb[0].mxu0
      %v4938 = vadd.f32 0.0, %v4937
      %v4939 = vpop.f32.mrb[0].mxu0
      %v4940 = vpop.f32.mrb[0].mxu0
      %v4941 = vadd.f32 0.0, %v4940
      %v4942 = vpop.f32.mrb[0].mxu0
      %4943 = vmatprep.mubr.bf16.mxu0 %v4848
      %4944 = vmatmul.mubr.bf16.gmra.mrb[0].mxu0 %v4847
      %v4945 = vpop.f32.mrb[0].mxu0
      %v4946 = vadd.f32 0.0, %v4945
      %v4947 = vpop.f32.mrb[0].mxu0
      %v4948 = vpop.f32.mrb[0].mxu0
      %v4949 = vadd.f32 0.0, %v4948
      %v4950 = vpop.f32.mrb[0].mxu0
      %4951 = vdwg.mxu0
      %v4952 = vld [vmem:[%s6] sm:$0xff]
      %v4953 = vld [vmem:[%s6 + $0x8] sm:$0xff]
      %v4954 = vld [vmem:[%s6 + $0x10] sm:$0xff]
      %v4955 = vld [vmem:[%s6 + $0x18] sm:$0xff]
      %v4956 = vld [vmem:[%s6 + $0x20] sm:$0xff]
      %v4957 = vld [vmem:[%s6 + $0x28] sm:$0xff]
      %v4958 = vld [vmem:[%s6 + $0x30] sm:$0xff]
      %v4959 = vld [vmem:[%s6 + $0x38] sm:$0xff]
      %v4960 = vld [vmem:[%s6 + $0x40] sm:$0xff]
      %v4961 = vld [vmem:[%s6 + $0x48] sm:$0xff]
      %v4962 = vld [vmem:[%s6 + $0x50] sm:$0xff]
      %v4963 = vld [vmem:[%s6 + $0x58] sm:$0xff]
      %v4964 = vld [vmem:[%s6 + $0x60] sm:$0xff]
      %v4965 = vld [vmem:[%s6 + $0x68] sm:$0xff]
      %v4980 = vunpack.c.l.b16 %v4952
      %v4981 = vunpack.c.h.b16 %v4952
      %v4982 = vunpack.c.l.b16 %v4953
      %v4983 = vunpack.c.h.b16 %v4953
      %v4984 = vunpack.c.l.b16 %v4954
      %v4985 = vunpack.c.h.b16 %v4954
      %v4986 = vunpack.c.l.b16 %v4955
      %v4987 = vunpack.c.h.b16 %v4955
      %v4988 = vunpack.c.l.b16 %v4956
      %v4989 = vunpack.c.h.b16 %v4956
      %v4990 = vunpack.c.l.b16 %v4957
      %v4991 = vunpack.c.h.b16 %v4957
      %v4992 = vunpack.c.l.b16 %v4958
      %v4993 = vunpack.c.h.b16 %v4958
      %v4994 = vunpack.c.l.b16 %v4959
      %v4995 = vunpack.c.h.b16 %v4959
      %v4996 = vunpack.c.l.b16 %v4960
      %v4997 = vunpack.c.h.b16 %v4960
      %v4998 = vunpack.c.l.b16 %v4961
      %v4999 = vunpack.c.h.b16 %v4961
      %v5000 = vunpack.c.l.b16 %v4962
      %v5001 = vunpack.c.h.b16 %v4962
      %v5002 = vunpack.c.l.b16 %v4963
      %v5003 = vunpack.c.h.b16 %v4963
      %v5004 = vunpack.c.l.b16 %v4964
      %v5005 = vunpack.c.h.b16 %v4964
      %v5006 = vunpack.c.l.b16 %v4965
      %v5007 = vunpack.c.h.b16 %v4965
      %v5008 = vpack.c.b16 %v4982, %v4980
      %v5009 = vpack.c.b16 %v4983, %v4981
      %v5010 = vpack.c.b16 %v4986, %v4984
      %v5011 = vpack.c.b16 %v4987, %v4985
      %v5012 = vpack.c.b16 %v4990, %v4988
      %v5013 = vpack.c.b16 %v4991, %v4989
      %v5014 = vpack.c.b16 %v4994, %v4992
      %v5015 = vpack.c.b16 %v4995, %v4993
      %v5016 = vpack.c.b16 %v4998, %v4996
      %v5017 = vpack.c.b16 %v4999, %v4997
      %v5018 = vpack.c.b16 %v5002, %v5000
      %v5019 = vpack.c.b16 %v5003, %v5001
      %v5020 = vpack.c.b16 %v5006, %v5004
      %v5021 = vpack.c.b16 %v5007, %v5005
      %5036 = vmatprep.subr.bf16.mxu0 0
      %5037 = vmatpush1.bf16.msra.mxu0 %v4763
      %5038 = vmatprep.subr.bf16.mxu0 0
      %5039 = vmatpush1.bf16.msra.mxu0 %v4764
      %5040 = vmatprep.subr.bf16.mxu0 0
      %5041 = vmatpush1.bf16.msra.mxu0 %v4765
      %5042 = vmatprep.subr.bf16.mxu0 0
      %5043 = vmatpush1.bf16.msra.mxu0 %v4766
      %5044 = vmatprep.subr.bf16.mxu0 0
      %5045 = vmatpush1.bf16.msra.mxu0 %v4767
      %5046 = vmatprep.subr.bf16.mxu0 0
      %5047 = vmatpush1.bf16.msra.mxu0 %v4768
      %5048 = vmatprep.subr.bf16.mxu0 0
      %5049 = vmatpush1.bf16.msra.mxu0 %v4769
      %5050 = vmatprep.subr.bf16.mxu0 0
      %5051 = vmatpush1.bf16.msra.mxu0 %v4770
      %5052 = vmatprep.subr.bf16.mxu0 0
      %5053 = vmatpush1.bf16.msra.mxu0 %v4771
      %5054 = vmatprep.subr.bf16.mxu0 0
      %5055 = vmatpush1.bf16.msra.mxu0 %v4772
      %5056 = vmatprep.subr.bf16.mxu0 0
      %5057 = vmatpush1.bf16.msra.mxu0 %v4773
      %5058 = vmatprep.subr.bf16.mxu0 0
      %5059 = vmatpush1.bf16.msra.mxu0 %v4774
      %5060 = vmatprep.subr.bf16.mxu0 0
      %5061 = vmatpush1.bf16.msra.mxu0 %v4775
      %5062 = vmatprep.subr.bf16.mxu0 0
      %5063 = vmatpush1.bf16.msra.mxu0 %v4776
      %5064 = vmatprep.subr.bf16.mxu0 0
      %5065 = vmatpush1.bf16.msra.mxu0 %v4777
      %5066 = vmatprep.subr.bf16.mxu0 0
      %5067 = vmatpush1.bf16.msra.mxu0 %v4778
      %5068 = vmatprep.mubr.bf16.mxu0 %v5009
      %5069 = vmatmul.mubr.bf16.gmra.mrb[0].mxu0 %v5008
      %v5070 = vpop.f32.mrb[0].mxu0
      %v5071 = vadd.f32 0.0, %v5070
      %v5072 = vpop.f32.mrb[0].mxu0
      %v5073 = vpop.f32.mrb[0].mxu0
      %v5074 = vadd.f32 0.0, %v5073
      %v5075 = vpop.f32.mrb[0].mxu0
      %5076 = vmatprep.mubr.bf16.mxu0 %v5011
      %5077 = vmatmul.mubr.bf16.gmra.mrb[0].mxu0 %v5010
      %v5078 = vpop.f32.mrb[0].mxu0
      %v5079 = vadd.f32 0.0, %v5078
      %v5080 = vpop.f32.mrb[0].mxu0
      %v5081 = vpop.f32.mrb[0].mxu0
      %v5082 = vadd.f32 0.0, %v5081
      %v5083 = vpop.f32.mrb[0].mxu0
      %5084 = vmatprep.mubr.bf16.mxu0 %v5013
      %5085 = vmatmul.mubr.bf16.gmra.mrb[0].mxu0 %v5012
      %v5086 = vpop.f32.mrb[0].mxu0
      %v5087 = vadd.f32 0.0, %v5086
      %v5088 = vpop.f32.mrb[0].mxu0
      %v5089 = vpop.f32.mrb[0].mxu0
      %v5090 = vadd.f32 0.0, %v5089
      %v5091 = vpop.f32.mrb[0].mxu0
      %5092 = vmatprep.mubr.bf16.mxu0 %v5015
      %5093 = vmatmul.mubr.bf16.gmra.mrb[0].mxu0 %v5014
      %v5094 = vpop.f32.mrb[0].mxu0
      %v5095 = vadd.f32 0.0, %v5094
      %v5096 = vpop.f32.mrb[0].mxu0
      %v5097 = vpop.f32.mrb[0].mxu0
      %v5098 = vadd.f32 0.0, %v5097
      %v5099 = vpop.f32.mrb[0].mxu0
      %5100 = vmatprep.mubr.bf16.mxu0 %v5017
      %5101 = vmatmul.mubr.bf16.gmra.mrb[0].mxu0 %v5016
      %v5102 = vpop.f32.mrb[0].mxu0
      %v5103 = vadd.f32 0.0, %v5102
      %v5104 = vpop.f32.mrb[0].mxu0
      %v5105 = vpop.f32.mrb[0].mxu0
      %v5106 = vadd.f32 0.0, %v5105
      %v5107 = vpop.f32.mrb[0].mxu0
      %5108 = vmatprep.mubr.bf16.mxu0 %v5019
      %5109 = vmatmul.mubr.bf16.gmra.mrb[0].mxu0 %v5018
      %v5110 = vpop.f32.mrb[0].mxu0
      %v5111 = vadd.f32 0.0, %v5110
      %v5112 = vpop.f32.mrb[0].mxu0
      %v5113 = vpop.f32.mrb[0].mxu0
      %v5114 = vadd.f32 0.0, %v5113
      %v5115 = vpop.f32.mrb[0].mxu0
      %5116 = vmatprep.mubr.bf16.mxu0 %v5021
      %5117 = vmatmul.mubr.bf16.gmra.mrb[0].mxu0 %v5020
      %v5118 = vpop.f32.mrb[0].mxu0
      %v5119 = vadd.f32 0.0, %v5118
      %v5120 = vpop.f32.mrb[0].mxu0
      %v5121 = vpop.f32.mrb[0].mxu0
      %v5122 = vadd.f32 0.0, %v5121
      %v5123 = vpop.f32.mrb[0].mxu0
      %5124 = vdwg.mxu0
      %v5125 = vmax.f32 %v4898, %v5071
      %v5126 = vmax.f32 %v4901, %v5074
      %v5127 = vmax.f32 %v4906, %v5079
      %v5128 = vmax.f32 %v4909, %v5082
      %v5129 = vmax.f32 %v4914, %v5087
      %v5130 = vmax.f32 %v4917, %v5090
      %v5131 = vmax.f32 %v4922, %v5095
      %v5132 = vmax.f32 %v4925, %v5098
      %v5133 = vmax.f32 %v4930, %v5103
      %v5134 = vmax.f32 %v4933, %v5106
      %v5135 = vmax.f32 %v4938, %v5111
      %v5136 = vmax.f32 %v4941, %v5114
      %v5137 = vmax.f32 %v4946, %v5119
      %v5138 = vmax.f32 %v4949, %v5122
      %v5139 = vpack.c.bf16 %v5126, %v5125
      %v5140 = vpack.c.bf16 %v5128, %v5127
      %v5141 = vpack.c.bf16 %v5130, %v5129
      %v5142 = vpack.c.bf16 %v5132, %v5131
      %v5143 = vpack.c.bf16 %v5134, %v5133
      %v5144 = vpack.c.bf16 %v5136, %v5135
      %v5145 = vpack.c.bf16 %v5138, %v5137
      %v5146 = vld [vmem:[%s7] sm:$0xff]
      %v5147 = vld [vmem:[%s7 + $0x8] sm:$0xff]
      %v5148 = vld [vmem:[%s7 + $0x10] sm:$0xff]
      %v5149 = vld [vmem:[%s7 + $0x18] sm:$0xff]
      %v5150 = vld [vmem:[%s7 + $0x20] sm:$0xff]
      %v5151 = vld [vmem:[%s7 + $0x28] sm:$0xff]
      %v5152 = vld [vmem:[%s7 + $0x30] sm:$0xff]
      %v5153 = vld [vmem:[%s7 + $0x38] sm:$0xff]
      %v5154 = vld [vmem:[%s7 + $0x40] sm:$0xff]
      %v5155 = vld [vmem:[%s7 + $0x48] sm:$0xff]
      %v5156 = vld [vmem:[%s7 + $0x50] sm:$0x33]
      %v5168 = vunpack.c.l.b16 %v5146
      %v5169 = vunpack.c.h.b16 %v5146
      %v5170 = vunpack.c.l.b16 %v5147
      %v5171 = vunpack.c.h.b16 %v5147
      %v5172 = vunpack.c.l.b16 %v5148
      %v5173 = vunpack.c.h.b16 %v5148
      %v5174 = vunpack.c.l.b16 %v5149
      %v5175 = vunpack.c.h.b16 %v5149
      %v5176 = vunpack.c.l.b16 %v5150
      %v5177 = vunpack.c.h.b16 %v5150
      %v5178 = vunpack.c.l.b16 %v5151
      %v5179 = vunpack.c.h.b16 %v5151
      %v5180 = vunpack.c.l.b16 %v5152
      %v5181 = vunpack.c.h.b16 %v5152
      %v5182 = vunpack.c.l.b16 %v5153
      %v5183 = vunpack.c.h.b16 %v5153
      %v5184 = vunpack.c.l.b16 %v5154
      %v5185 = vunpack.c.h.b16 %v5154
      %v5186 = vunpack.c.l.b16 %v5155
      %v5187 = vunpack.c.h.b16 %v5155
      %v5188 = vunpack.c.l.b16 %v5156
      %v5189 = vunpack.c.h.b16 %v5156
      %v5190 = vpack.c.b16 %v5170, %v5168
      %v5191 = vpack.c.b16 %v5171, %v5169
      %v5192 = vpack.c.b16 %v5174, %v5172
      %v5193 = vpack.c.b16 %v5175, %v5173
      %v5194 = vpack.c.b16 %v5178, %v5176
      %v5195 = vpack.c.b16 %v5179, %v5177
      %v5196 = vpack.c.b16 %v5182, %v5180
      %v5197 = vpack.c.b16 %v5183, %v5181
      %v5198 = vpack.c.b16 %v5186, %v5184
      %v5199 = vpack.c.b16 %v5187, %v5185
      %v5200 = vpack.c.b16 %v5188, %v5188
      %v5201 = vpack.c.b16 %v5189, %v5189
      %vm5212 = vcmask 687104
      %v5214 = vsel %vm5212, %v5139, 0
      %v5217 = vsel %vm5212, %v5140, 0
      %v5220 = vsel %vm5212, %v5141, 0
      %v5223 = vsel %vm5212, %v5142, 0
      %v5226 = vsel %vm5212, %v5143, 0
      %v5229 = vsel %vm5212, %v5144, 0
      %v5232 = vsel %vm5212, %v5145, 0
      %vm5234 = vcmask 1041408
      %v5236 = vsel %vm5234, %v5200, 0
      %v5239 = vsel %vm5234, %v5201, 0
      %5241 = vmatprep.subr.bf16.mxu0 %v5191
      %5242 = vmatpush1.bf16.msra.mxu0 %v5190
      %5243 = vmatprep.subr.bf16.mxu0 %v5193
      %5244 = vmatpush1.bf16.msra.mxu0 %v5192
      %5245 = vmatprep.subr.bf16.mxu0 %v5195
      %5246 = vmatpush1.bf16.msra.mxu0 %v5194
      %5247 = vmatprep.subr.bf16.mxu0 %v5197
      %5248 = vmatpush1.bf16.msra.mxu0 %v5196
      %5249 = vmatprep.subr.bf16.mxu0 %v5199
      %5250 = vmatpush1.bf16.msra.mxu0 %v5198
      %5251 = vmatprep.subr.bf16.mxu0 %v5239
      %5252 = vmatpush1.bf16.msra.mxu0 %v5236
      %5253 = vmatprep.subr.bf16.mxu0 0
      %5254 = vmatpush1.bf16.msra.mxu0 0
      %5255 = vmatprep.subr.bf16.mxu0 0
      %5256 = vmatpush1.bf16.msra.mxu0 0
      %5257 = vmatprep.subr.bf16.mxu0 0
      %5258 = vmatpush1.bf16.msra.mxu0 0
      %5259 = vmatprep.subr.bf16.mxu0 0
      %5260 = vmatpush1.bf16.msra.mxu0 0
      %5261 = vmatprep.subr.bf16.mxu0 0
      %5262 = vmatpush1.bf16.msra.mxu0 0
      %5263 = vmatprep.subr.bf16.mxu0 0
      %5264 = vmatpush1.bf16.msra.mxu0 0
      %5265 = vmatprep.subr.bf16.mxu0 0
      %5266 = vmatpush1.bf16.msra.mxu0 0
      %5267 = vmatprep.subr.bf16.mxu0 0
      %5268 = vmatpush1.bf16.msra.mxu0 0
      %5269 = vmatprep.subr.bf16.mxu0 0
      %5270 = vmatpush1.bf16.msra.mxu0 0
      %5271 = vmatprep.subr.bf16.mxu0 0
      %5272 = vmatpush1.bf16.msra.mxu0 0
      %5273 = vmatprep.mubr.bf16.mxu0 0
      %5274 = vmatmul.mubr.bf16.gmra.mrb[0].mxu0 %v5214
      %v5275 = vpop.f32.mrb[0].mxu0
      %v5276 = vadd.f32 0.0, %v5275
      %v5277 = vpop.f32.mrb[0].mxu0
      %v5278 = vadd.f32 0.0, %v5277
      %v5279 = vpop.f32.mrb[0].mxu0
      %v5280 = vadd.f32 0.0, %v5279
      %v5281 = vpop.f32.mrb[0].mxu0
      %v5282 = vadd.f32 0.0, %v5281
      %5283 = vmatprep.mubr.bf16.mxu0 0
      %5284 = vmatmul.mubr.bf16.gmra.mrb[0].mxu0 %v5217
      %v5285 = vpop.f32.mrb[0].mxu0
      %v5286 = vadd.f32 0.0, %v5285
      %v5287 = vpop.f32.mrb[0].mxu0
      %v5288 = vadd.f32 0.0, %v5287
      %v5289 = vpop.f32.mrb[0].mxu0
      %v5290 = vadd.f32 0.0, %v5289
      %v5291 = vpop.f32.mrb[0].mxu0
      %v5292 = vadd.f32 0.0, %v5291
      %5293 = vmatprep.mubr.bf16.mxu0 0
      %5294 = vmatmul.mubr.bf16.gmra.mrb[0].mxu0 %v5220
      %v5295 = vpop.f32.mrb[0].mxu0
      %v5296 = vadd.f32 0.0, %v5295
      %v5297 = vpop.f32.mrb[0].mxu0
      %v5298 = vadd.f32 0.0, %v5297
      %v5299 = vpop.f32.mrb[0].mxu0
      %v5300 = vadd.f32 0.0, %v5299
      %v5301 = vpop.f32.mrb[0].mxu0
      %v5302 = vadd.f32 0.0, %v5301
      %5303 = vmatprep.mubr.bf16.mxu0 0
      %5304 = vmatmul.mubr.bf16.gmra.mrb[0].mxu0 %v5223
      %v5305 = vpop.f32.mrb[0].mxu0
      %v5306 = vadd.f32 0.0, %v5305
      %v5307 = vpop.f32.mrb[0].mxu0
      %v5308 = vadd.f32 0.0, %v5307
      %v5309 = vpop.f32.mrb[0].mxu0
      %v5310 = vadd.f32 0.0, %v5309
      %v5311 = vpop.f32.mrb[0].mxu0
      %v5312 = vadd.f32 0.0, %v5311
      %5313 = vmatprep.mubr.bf16.mxu0 0
      %5314 = vmatmul.mubr.bf16.gmra.mrb[0].mxu0 %v5226
      %v5315 = vpop.f32.mrb[0].mxu0
      %v5316 = vadd.f32 0.0, %v5315
      %v5317 = vpop.f32.mrb[0].mxu0
      %v5318 = vadd.f32 0.0, %v5317
      %v5319 = vpop.f32.mrb[0].mxu0
      %v5320 = vadd.f32 0.0, %v5319
      %v5321 = vpop.f32.mrb[0].mxu0
      %v5322 = vadd.f32 0.0, %v5321
      %5323 = vmatprep.mubr.bf16.mxu0 0
      %5324 = vmatmul.mubr.bf16.gmra.mrb[0].mxu0 %v5229
      %v5325 = vpop.f32.mrb[0].mxu0
      %v5326 = vadd.f32 0.0, %v5325
      %v5327 = vpop.f32.mrb[0].mxu0
      %v5328 = vadd.f32 0.0, %v5327
      %v5329 = vpop.f32.mrb[0].mxu0
      %v5330 = vadd.f32 0.0, %v5329
      %v5331 = vpop.f32.mrb[0].mxu0
      %v5332 = vadd.f32 0.0, %v5331
      %5333 = vmatprep.mubr.bf16.mxu0 0
      %5334 = vmatmul.mubr.bf16.gmra.mrb[0].mxu0 %v5232
      %v5335 = vpop.f32.mrb[0].mxu0
      %v5336 = vadd.f32 0.0, %v5335
      %v5337 = vpop.f32.mrb[0].mxu0
      %v5338 = vadd.f32 0.0, %v5337
      %v5339 = vpop.f32.mrb[0].mxu0
      %v5340 = vadd.f32 0.0, %v5339
      %v5341 = vpop.f32.mrb[0].mxu0
      %v5342 = vadd.f32 0.0, %v5341
      %5343 = vdwg.mxu0
      %5344 = vst [vmem:[#allocation3] sm:$0xff] %v5276
      %vm5345 = vcmask 261120
      %5346 = vst.msk [vmem:[#allocation3 + $0x8] sm:$0xff] %vm5345, %v5278
      %5347 = vst [vmem:[#allocation3 + $0x10] sm:$0xff] %v5280
      %5348 = vst.msk [vmem:[#allocation3 + $0x18] sm:$0xff] %vm5345, %v5282
      %5349 = vst [vmem:[#allocation3 + $0x20] sm:$0xff] %v5286
      %5350 = vst.msk [vmem:[#allocation3 + $0x28] sm:$0xff] %vm5345, %v5288
      %5351 = vst [vmem:[#allocation3 + $0x30] sm:$0xff] %v5290
      %5352 = vst.msk [vmem:[#allocation3 + $0x38] sm:$0xff] %vm5345, %v5292
      %5353 = vst [vmem:[#allocation3 + $0x40] sm:$0xff] %v5296
      %5354 = vst.msk [vmem:[#allocation3 + $0x48] sm:$0xff] %vm5345, %v5298
      %5355 = vst [vmem:[#allocation3 + $0x50] sm:$0xff] %v5300
      %5356 = vst.msk [vmem:[#allocation3 + $0x58] sm:$0xff] %vm5345, %v5302
      %5357 = vst [vmem:[#allocation3 + $0x60] sm:$0xff] %v5306
      %5358 = vst.msk [vmem:[#allocation3 + $0x68] sm:$0xff] %vm5345, %v5308
      %5359 = vst [vmem:[#allocation3 + $0x70] sm:$0xff] %v5310
      %5360 = vst.msk [vmem:[#allocation3 + $0x78] sm:$0xff] %vm5345, %v5312
      %5361 = vst [vmem:[#allocation3 + $0x80] sm:$0xff] %v5316
      %5362 = vst.msk [vmem:[#allocation3 + $0x88] sm:$0xff] %vm5345, %v5318
      %5363 = vst [vmem:[#allocation3 + $0x90] sm:$0xff] %v5320
      %5364 = vst.msk [vmem:[#allocation3 + $0x98] sm:$0xff] %vm5345, %v5322
      %5365 = vst [vmem:[#allocation3 + $0xa0] sm:$0xff] %v5326
      %5366 = vst.msk [vmem:[#allocation3 + $0xa8] sm:$0xff] %vm5345, %v5328
      %5367 = vst [vmem:[#allocation3 + $0xb0] sm:$0xff] %v5330
      %5368 = vst.msk [vmem:[#allocation3 + $0xb8] sm:$0xff] %vm5345, %v5332
      %5369 = vst [vmem:[#allocation3 + $0xc0] sm:$0xff] %v5336
      %5370 = vst.msk [vmem:[#allocation3 + $0xc8] sm:$0xff] %vm5345, %v5338
      %5371 = vst [vmem:[#allocation3 + $0xd0] sm:$0xff] %v5340
      %5372 = vst.msk [vmem:[#allocation3 + $0xd8] sm:$0xff] %vm5345, %v5342
      %s5373 = scalar_lea.vmem %s7, 88
      %v5374 = vld [vmem:[%s5373] sm:$0xff]
      %v5375 = vld [vmem:[%s5373 + $0x8] sm:$0xff]
      %v5376 = vld [vmem:[%s5373 + $0x10] sm:$0xff]
      %v5377 = vld [vmem:[%s5373 + $0x18] sm:$0xff]
      %v5378 = vld [vmem:[%s5373 + $0x20] sm:$0xff]
      %v5379 = vld [vmem:[%s5373 + $0x28] sm:$0xff]
      %v5380 = vld [vmem:[%s5373 + $0x30] sm:$0xff]
      %v5381 = vld [vmem:[%s5373 + $0x38] sm:$0xff]
      %v5382 = vld [vmem:[%s5373 + $0x40] sm:$0xff]
      %v5383 = vld [vmem:[%s5373 + $0x48] sm:$0xff]
      %v5384 = vld [vmem:[%s5373 + $0x50] sm:$0x33]
      %v5396 = vunpack.c.l.b16 %v5374
      %v5397 = vunpack.c.h.b16 %v5374
      %v5398 = vunpack.c.l.b16 %v5375
      %v5399 = vunpack.c.h.b16 %v5375
      %v5400 = vunpack.c.l.b16 %v5376
      %v5401 = vunpack.c.h.b16 %v5376
      %v5402 = vunpack.c.l.b16 %v5377
      %v5403 = vunpack.c.h.b16 %v5377
      %v5404 = vunpack.c.l.b16 %v5378
      %v5405 = vunpack.c.h.b16 %v5378
      %v5406 = vunpack.c.l.b16 %v5379
      %v5407 = vunpack.c.h.b16 %v5379
      %v5408 = vunpack.c.l.b16 %v5380
      %v5409 = vunpack.c.h.b16 %v5380
      %v5410 = vunpack.c.l.b16 %v5381
      %v5411 = vunpack.c.h.b16 %v5381
      %v5412 = vunpack.c.l.b16 %v5382
      %v5413 = vunpack.c.h.b16 %v5382
      %v5414 = vunpack.c.l.b16 %v5383
      %v5415 = vunpack.c.h.b16 %v5383
      %v5416 = vunpack.c.l.b16 %v5384
      %v5417 = vunpack.c.h.b16 %v5384
      %v5418 = vpack.c.b16 %v5398, %v5396
      %v5419 = vpack.c.b16 %v5399, %v5397
      %v5420 = vpack.c.b16 %v5402, %v5400
      %v5421 = vpack.c.b16 %v5403, %v5401
      %v5422 = vpack.c.b16 %v5406, %v5404
      %v5423 = vpack.c.b16 %v5407, %v5405
      %v5424 = vpack.c.b16 %v5410, %v5408
      %v5425 = vpack.c.b16 %v5411, %v5409
      %v5426 = vpack.c.b16 %v5414, %v5412
      %v5427 = vpack.c.b16 %v5415, %v5413
      %v5428 = vpack.c.b16 %v5416, %v5416
      %v5429 = vpack.c.b16 %v5417, %v5417
      %v5441 = vsel %vm5234, %v5428, 0
      %v5444 = vsel %vm5234, %v5429, 0
      %5446 = vmatprep.subr.bf16.mxu0 %v5419
      %5447 = vmatpush1.bf16.msra.mxu0 %v5418
      %5448 = vmatprep.subr.bf16.mxu0 %v5421
      %5449 = vmatpush1.bf16.msra.mxu0 %v5420
      %5450 = vmatprep.subr.bf16.mxu0 %v5423
      %5451 = vmatpush1.bf16.msra.mxu0 %v5422
      %5452 = vmatprep.subr.bf16.mxu0 %v5425
      %5453 = vmatpush1.bf16.msra.mxu0 %v5424
      %5454 = vmatprep.subr.bf16.mxu0 %v5427
      %5455 = vmatpush1.bf16.msra.mxu0 %v5426
      %5456 = vmatprep.subr.bf16.mxu0 %v5444
      %5457 = vmatpush1.bf16.msra.mxu0 %v5441
      %5458 = vmatprep.subr.bf16.mxu0 0
      %5459 = vmatpush1.bf16.msra.mxu0 0
      %5460 = vmatprep.subr.bf16.mxu0 0
      %5461 = vmatpush1.bf16.msra.mxu0 0
      %5462 = vmatprep.subr.bf16.mxu0 0
      %5463 = vmatpush1.bf16.msra.mxu0 0
      %5464 = vmatprep.subr.bf16.mxu0 0
      %5465 = vmatpush1.bf16.msra.mxu0 0
      %5466 = vmatprep.subr.bf16.mxu0 0
      %5467 = vmatpush1.bf16.msra.mxu0 0
      %5468 = vmatprep.subr.bf16.mxu0 0
      %5469 = vmatpush1.bf16.msra.mxu0 0
      %5470 = vmatprep.subr.bf16.mxu0 0
      %5471 = vmatpush1.bf16.msra.mxu0 0
      %5472 = vmatprep.subr.bf16.mxu0 0
      %5473 = vmatpush1.bf16.msra.mxu0 0
      %5474 = vmatprep.subr.bf16.mxu0 0
      %5475 = vmatpush1.bf16.msra.mxu0 0
      %5476 = vmatprep.subr.bf16.mxu0 0
      %5477 = vmatpush1.bf16.msra.mxu0 0
      %5478 = vmatprep.mubr.bf16.mxu0 0
      %5479 = vmatmul.mubr.bf16.gmra.mrb[0].mxu0 %v5214
      %v5480 = vpop.f32.mrb[0].mxu0
      %v5481 = vadd.f32 0.0, %v5480
      %v5482 = vpop.f32.mrb[0].mxu0
      %v5483 = vadd.f32 0.0, %v5482
      %v5484 = vpop.f32.mrb[0].mxu0
      %v5485 = vadd.f32 0.0, %v5484
      %v5486 = vpop.f32.mrb[0].mxu0
      %v5487 = vadd.f32 0.0, %v5486
      %5488 = vmatprep.mubr.bf16.mxu0 0
      %5489 = vmatmul.mubr.bf16.gmra.mrb[0].mxu0 %v5217
      %v5490 = vpop.f32.mrb[0].mxu0
      %v5491 = vadd.f32 0.0, %v5490
      %v5492 = vpop.f32.mrb[0].mxu0
      %v5493 = vadd.f32 0.0, %v5492
      %v5494 = vpop.f32.mrb[0].mxu0
      %v5495 = vadd.f32 0.0, %v5494
      %v5496 = vpop.f32.mrb[0].mxu0
      %v5497 = vadd.f32 0.0, %v5496
      %5498 = vmatprep.mubr.bf16.mxu0 0
      %5499 = vmatmul.mubr.bf16.gmra.mrb[0].mxu0 %v5220
      %v5500 = vpop.f32.mrb[0].mxu0
      %v5501 = vadd.f32 0.0, %v5500
      %v5502 = vpop.f32.mrb[0].mxu0
      %v5503 = vadd.f32 0.0, %v5502
      %v5504 = vpop.f32.mrb[0].mxu0
      %v5505 = vadd.f32 0.0, %v5504
      %v5506 = vpop.f32.mrb[0].mxu0
      %v5507 = vadd.f32 0.0, %v5506
      %5508 = vmatprep.mubr.bf16.mxu0 0
      %5509 = vmatmul.mubr.bf16.gmra.mrb[0].mxu0 %v5223
      %v5510 = vpop.f32.mrb[0].mxu0
      %v5511 = vadd.f32 0.0, %v5510
      %v5512 = vpop.f32.mrb[0].mxu0
      %v5513 = vadd.f32 0.0, %v5512
      %v5514 = vpop.f32.mrb[0].mxu0
      %v5515 = vadd.f32 0.0, %v5514
      %v5516 = vpop.f32.mrb[0].mxu0
      %v5517 = vadd.f32 0.0, %v5516
      %5518 = vmatprep.mubr.bf16.mxu0 0
      %5519 = vmatmul.mubr.bf16.gmra.mrb[0].mxu0 %v5226
      %v5520 = vpop.f32.mrb[0].mxu0
      %v5521 = vadd.f32 0.0, %v5520
      %v5522 = vpop.f32.mrb[0].mxu0
      %v5523 = vadd.f32 0.0, %v5522
      %v5524 = vpop.f32.mrb[0].mxu0
      %v5525 = vadd.f32 0.0, %v5524
      %v5526 = vpop.f32.mrb[0].mxu0
      %v5527 = vadd.f32 0.0, %v5526
      %5528 = vmatprep.mubr.bf16.mxu0 0
      %5529 = vmatmul.mubr.bf16.gmra.mrb[0].mxu0 %v5229
      %v5530 = vpop.f32.mrb[0].mxu0
      %v5531 = vadd.f32 0.0, %v5530
      %v5532 = vpop.f32.mrb[0].mxu0
      %v5533 = vadd.f32 0.0, %v5532
      %v5534 = vpop.f32.mrb[0].mxu0
      %v5535 = vadd.f32 0.0, %v5534
      %v5536 = vpop.f32.mrb[0].mxu0
      %v5537 = vadd.f32 0.0, %v5536
      %5538 = vmatprep.mubr.bf16.mxu0 0
      %5539 = vmatmul.mubr.bf16.gmra.mrb[0].mxu0 %v5232
      %v5540 = vpop.f32.mrb[0].mxu0
      %v5541 = vadd.f32 0.0, %v5540
      %v5542 = vpop.f32.mrb[0].mxu0
      %v5543 = vadd.f32 0.0, %v5542
      %v5544 = vpop.f32.mrb[0].mxu0
      %v5545 = vadd.f32 0.0, %v5544
      %v5546 = vpop.f32.mrb[0].mxu0
      %v5547 = vadd.f32 0.0, %v5546
      %5548 = vdwg.mxu0
      %v5549 = vld [vmem:[#allocation3] sm:$0xff]
      %v5550 = vld [vmem:[#allocation3 + $0x8] sm:$0xff]
      %v5551 = vld [vmem:[#allocation3 + $0x10] sm:$0xff]
      %v5552 = vld [vmem:[#allocation3 + $0x18] sm:$0xff]
      %v5553 = vld [vmem:[#allocation3 + $0x20] sm:$0xff]
      %v5554 = vld [vmem:[#allocation3 + $0x28] sm:$0xff]
      %v5555 = vld [vmem:[#allocation3 + $0x30] sm:$0xff]
      %v5556 = vld [vmem:[#allocation3 + $0x38] sm:$0xff]
      %v5557 = vld [vmem:[#allocation3 + $0x40] sm:$0xff]
      %v5558 = vld [vmem:[#allocation3 + $0x48] sm:$0xff]
      %v5559 = vld [vmem:[#allocation3 + $0x50] sm:$0xff]
      %v5560 = vld [vmem:[#allocation3 + $0x58] sm:$0xff]
      %v5561 = vld [vmem:[#allocation3 + $0x60] sm:$0xff]
      %v5562 = vld [vmem:[#allocation3 + $0x68] sm:$0xff]
      %v5563 = vld [vmem:[#allocation3 + $0x70] sm:$0xff]
      %v5564 = vld [vmem:[#allocation3 + $0x78] sm:$0xff]
      %v5565 = vld [vmem:[#allocation3 + $0x80] sm:$0xff]
      %v5566 = vld [vmem:[#allocation3 + $0x88] sm:$0xff]
      %v5567 = vld [vmem:[#allocation3 + $0x90] sm:$0xff]
      %v5568 = vld [vmem:[#allocation3 + $0x98] sm:$0xff]
      %v5569 = vld [vmem:[#allocation3 + $0xa0] sm:$0xff]
      %v5570 = vld [vmem:[#allocation3 + $0xa8] sm:$0xff]
      %v5571 = vld [vmem:[#allocation3 + $0xb0] sm:$0xff]
      %v5572 = vld [vmem:[#allocation3 + $0xb8] sm:$0xff]
      %v5573 = vld [vmem:[#allocation3 + $0xc0] sm:$0xff]
      %v5574 = vld [vmem:[#allocation3 + $0xc8] sm:$0xff]
      %v5575 = vld [vmem:[#allocation3 + $0xd0] sm:$0x7f]
      %v5576 = vld [vmem:[#allocation3 + $0xd8] sm:$0x7f]
      %v5605 = vrot.slane %v5481, 1
      %v5606 = vrot.slane %v5485, 1
      %v5607 = vsel %vm1489, %v5605, %v5606
      %v5608 = vrot.slane %v5483, 1
      %v5609 = vrot.slane %v5487, 1
      %v5610 = vsel %vm1489, %v5608, %v5609
      %v5611 = vrot.slane %v5491, 1
      %v5612 = vsel %vm1489, %v5606, %v5611
      %v5613 = vrot.slane %v5493, 1
      %v5614 = vsel %vm1489, %v5609, %v5613
      %v5615 = vrot.slane %v5495, 1
      %v5616 = vsel %vm1489, %v5611, %v5615
      %v5617 = vrot.slane %v5497, 1
      %v5618 = vsel %vm1489, %v5613, %v5617
      %v5619 = vrot.slane %v5501, 1
      %v5620 = vsel %vm1489, %v5615, %v5619
      %v5621 = vrot.slane %v5503, 1
      %v5622 = vsel %vm1489, %v5617, %v5621
      %v5623 = vrot.slane %v5505, 1
      %v5624 = vsel %vm1489, %v5619, %v5623
      %v5625 = vrot.slane %v5507, 1
      %v5626 = vsel %vm1489, %v5621, %v5625
      %v5627 = vrot.slane %v5511, 1
      %v5628 = vsel %vm1489, %v5623, %v5627
      %v5629 = vrot.slane %v5513, 1
      %v5630 = vsel %vm1489, %v5625, %v5629
      %v5631 = vrot.slane %v5515, 1
      %v5632 = vsel %vm1489, %v5627, %v5631
      %v5633 = vrot.slane %v5517, 1
      %v5634 = vsel %vm1489, %v5629, %v5633
      %v5635 = vrot.slane %v5521, 1
      %v5636 = vsel %vm1489, %v5631, %v5635
      %v5637 = vrot.slane %v5523, 1
      %v5638 = vsel %vm1489, %v5633, %v5637
      %v5639 = vrot.slane %v5525, 1
      %v5640 = vsel %vm1489, %v5635, %v5639
      %v5641 = vrot.slane %v5527, 1
      %v5642 = vsel %vm1489, %v5637, %v5641
      %v5643 = vrot.slane %v5531, 1
      %v5644 = vsel %vm1489, %v5639, %v5643
      %v5645 = vrot.slane %v5533, 1
      %v5646 = vsel %vm1489, %v5641, %v5645
      %v5647 = vrot.slane %v5535, 1
      %v5648 = vsel %vm1489, %v5643, %v5647
      %v5649 = vrot.slane %v5537, 1
      %v5650 = vsel %vm1489, %v5645, %v5649
      %v5651 = vrot.slane %v5541, 1
      %v5652 = vsel %vm1489, %v5647, %v5651
      %v5653 = vrot.slane %v5543, 1
      %v5654 = vsel %vm1489, %v5649, %v5653
      %v5655 = vrot.slane %v5545, 1
      %v5656 = vsel %vm1489, %v5651, %v5655
      %v5657 = vrot.slane %v5547, 1
      %v5658 = vsel %vm1489, %v5653, %v5657
      %v5687 = vadd.f32 %v5549, %v5607
      %v5688 = vadd.f32 %v5550, %v5610
      %v5689 = vadd.f32 %v5551, %v5612
      %v5690 = vadd.f32 %v5552, %v5614
      %v5691 = vadd.f32 %v5553, %v5616
      %v5692 = vadd.f32 %v5554, %v5618
      %v5693 = vadd.f32 %v5555, %v5620
      %v5694 = vadd.f32 %v5556, %v5622
      %v5695 = vadd.f32 %v5557, %v5624
      %v5696 = vadd.f32 %v5558, %v5626
      %v5697 = vadd.f32 %v5559, %v5628
      %v5698 = vadd.f32 %v5560, %v5630
      %v5699 = vadd.f32 %v5561, %v5632
      %v5700 = vadd.f32 %v5562, %v5634
      %v5701 = vadd.f32 %v5563, %v5636
      %v5702 = vadd.f32 %v5564, %v5638
      %v5703 = vadd.f32 %v5565, %v5640
      %v5704 = vadd.f32 %v5566, %v5642
      %v5705 = vadd.f32 %v5567, %v5644
      %v5706 = vadd.f32 %v5568, %v5646
      %v5707 = vadd.f32 %v5569, %v5648
      %v5708 = vadd.f32 %v5570, %v5650
      %v5709 = vadd.f32 %v5571, %v5652
      %v5710 = vadd.f32 %v5572, %v5654
      %v5711 = vadd.f32 %v5573, %v5656
      %v5712 = vadd.f32 %v5574, %v5658
      %v5713 = vadd.f32 %v5575, %v5655
      %v5714 = vadd.f32 %v5576, %v5657
      %5715 = vst [vmem:[#allocation3] sm:$0xff] %v5687
      %5716 = vst.msk [vmem:[#allocation3 + $0x8] sm:$0xff] %vm5345, %v5688
      %5717 = vst [vmem:[#allocation3 + $0x10] sm:$0xff] %v5689
      %5718 = vst.msk [vmem:[#allocation3 + $0x18] sm:$0xff] %vm5345, %v5690
      %5719 = vst [vmem:[#allocation3 + $0x20] sm:$0xff] %v5691
      %5720 = vst.msk [vmem:[#allocation3 + $0x28] sm:$0xff] %vm5345, %v5692
      %5721 = vst [vmem:[#allocation3 + $0x30] sm:$0xff] %v5693
      %5722 = vst.msk [vmem:[#allocation3 + $0x38] sm:$0xff] %vm5345, %v5694
      %5723 = vst [vmem:[#allocation3 + $0x40] sm:$0xff] %v5695
      %5724 = vst.msk [vmem:[#allocation3 + $0x48] sm:$0xff] %vm5345, %v5696
      %5725 = vst [vmem:[#allocation3 + $0x50] sm:$0xff] %v5697
      %5726 = vst.msk [vmem:[#allocation3 + $0x58] sm:$0xff] %vm5345, %v5698
      %5727 = vst [vmem:[#allocation3 + $0x60] sm:$0xff] %v5699
      %5728 = vst.msk [vmem:[#allocation3 + $0x68] sm:$0xff] %vm5345, %v5700
      %5729 = vst [vmem:[#allocation3 + $0x70] sm:$0xff] %v5701
      %5730 = vst.msk [vmem:[#allocation3 + $0x78] sm:$0xff] %vm5345, %v5702
      %5731 = vst [vmem:[#allocation3 + $0x80] sm:$0xff] %v5703
      %5732 = vst.msk [vmem:[#allocation3 + $0x88] sm:$0xff] %vm5345, %v5704
      %5733 = vst [vmem:[#allocation3 + $0x90] sm:$0xff] %v5705
      %5734 = vst.msk [vmem:[#allocation3 + $0x98] sm:$0xff] %vm5345, %v5706
      %5735 = vst [vmem:[#allocation3 + $0xa0] sm:$0xff] %v5707
      %5736 = vst.msk [vmem:[#allocation3 + $0xa8] sm:$0xff] %vm5345, %v5708
      %5737 = vst [vmem:[#allocation3 + $0xb0] sm:$0xff] %v5709
      %5738 = vst.msk [vmem:[#allocation3 + $0xb8] sm:$0xff] %vm5345, %v5710
      %5739 = vst [vmem:[#allocation3 + $0xc0] sm:$0xff] %v5711
      %5740 = vst.msk [vmem:[#allocation3 + $0xc8] sm:$0xff] %vm5345, %v5712
      %5741 = vst [vmem:[#allocation3 + $0xd0] sm:$0x7f] %v5713
      %vm5742 = vcmask 260096
      %5743 = vst.msk [vmem:[#allocation3 + $0xd8] sm:$0x7f] %vm5742, %v5714
      %s5744 = scalar_lea.vmem %s7, 176
      %v5745 = vld [vmem:[%s5744] sm:$0xff]
      %v5746 = vld [vmem:[%s5744 + $0x8] sm:$0xff]
      %v5747 = vld [vmem:[%s5744 + $0x10] sm:$0xff]
      %v5748 = vld [vmem:[%s5744 + $0x18] sm:$0xff]
      %v5749 = vld [vmem:[%s5744 + $0x20] sm:$0xff]
      %v5750 = vld [vmem:[%s5744 + $0x28] sm:$0xff]
      %v5751 = vld [vmem:[%s5744 + $0x30] sm:$0xff]
      %v5752 = vld [vmem:[%s5744 + $0x38] sm:$0xff]
      %v5753 = vld [vmem:[%s5744 + $0x40] sm:$0xff]
      %v5754 = vld [vmem:[%s5744 + $0x48] sm:$0xff]
      %v5755 = vld [vmem:[%s5744 + $0x50] sm:$0x33]
      %v5767 = vunpack.c.l.b16 %v5745
      %v5768 = vunpack.c.h.b16 %v5745
      %v5769 = vunpack.c.l.b16 %v5746
      %v5770 = vunpack.c.h.b16 %v5746
      %v5771 = vunpack.c.l.b16 %v5747
      %v5772 = vunpack.c.h.b16 %v5747
      %v5773 = vunpack.c.l.b16 %v5748
      %v5774 = vunpack.c.h.b16 %v5748
      %v5775 = vunpack.c.l.b16 %v5749
      %v5776 = vunpack.c.h.b16 %v5749
      %v5777 = vunpack.c.l.b16 %v5750
      %v5778 = vunpack.c.h.b16 %v5750
      %v5779 = vunpack.c.l.b16 %v5751
      %v5780 = vunpack.c.h.b16 %v5751
      %v5781 = vunpack.c.l.b16 %v5752
      %v5782 = vunpack.c.h.b16 %v5752
      %v5783 = vunpack.c.l.b16 %v5753
      %v5784 = vunpack.c.h.b16 %v5753
      %v5785 = vunpack.c.l.b16 %v5754
      %v5786 = vunpack.c.h.b16 %v5754
      %v5787 = vunpack.c.l.b16 %v5755
      %v5788 = vunpack.c.h.b16 %v5755
      %v5789 = vpack.c.b16 %v5769, %v5767
      %v5790 = vpack.c.b16 %v5770, %v5768
      %v5791 = vpack.c.b16 %v5773, %v5771
      %v5792 = vpack.c.b16 %v5774, %v5772
      %v5793 = vpack.c.b16 %v5777, %v5775
      %v5794 = vpack.c.b16 %v5778, %v5776
      %v5795 = vpack.c.b16 %v5781, %v5779
      %v5796 = vpack.c.b16 %v5782, %v5780
      %v5797 = vpack.c.b16 %v5785, %v5783
      %v5798 = vpack.c.b16 %v5786, %v5784
      %v5799 = vpack.c.b16 %v5787, %v5787
      %v5800 = vpack.c.b16 %v5788, %v5788
      %v5812 = vsel %vm5234, %v5799, 0
      %v5815 = vsel %vm5234, %v5800, 0
      %5817 = vmatprep.subr.bf16.mxu0 %v5790
      %5818 = vmatpush1.bf16.msra.mxu0 %v5789
      %5819 = vmatprep.subr.bf16.mxu0 %v5792
      %5820 = vmatpush1.bf16.msra.mxu0 %v5791
      %5821 = vmatprep.subr.bf16.mxu0 %v5794
      %5822 = vmatpush1.bf16.msra.mxu0 %v5793
      %5823 = vmatprep.subr.bf16.mxu0 %v5796
      %5824 = vmatpush1.bf16.msra.mxu0 %v5795
      %5825 = vmatprep.subr.bf16.mxu0 %v5798
      %5826 = vmatpush1.bf16.msra.mxu0 %v5797
      %5827 = vmatprep.subr.bf16.mxu0 %v5815
      %5828 = vmatpush1.bf16.msra.mxu0 %v5812
      %5829 = vmatprep.subr.bf16.mxu0 0
      %5830 = vmatpush1.bf16.msra.mxu0 0
      %5831 = vmatprep.subr.bf16.mxu0 0
      %5832 = vmatpush1.bf16.msra.mxu0 0
      %5833 = vmatprep.subr.bf16.mxu0 0
      %5834 = vmatpush1.bf16.msra.mxu0 0
      %5835 = vmatprep.subr.bf16.mxu0 0
      %5836 = vmatpush1.bf16.msra.mxu0 0
      %5837 = vmatprep.subr.bf16.mxu0 0
      %5838 = vmatpush1.bf16.msra.mxu0 0
      %5839 = vmatprep.subr.bf16.mxu0 0
      %5840 = vmatpush1.bf16.msra.mxu0 0
      %5841 = vmatprep.subr.bf16.mxu0 0
      %5842 = vmatpush1.bf16.msra.mxu0 0
      %5843 = vmatprep.subr.bf16.mxu0 0
      %5844 = vmatpush1.bf16.msra.mxu0 0
      %5845 = vmatprep.subr.bf16.mxu0 0
      %5846 = vmatpush1.bf16.msra.mxu0 0
      %5847 = vmatprep.subr.bf16.mxu0 0
      %5848 = vmatpush1.bf16.msra.mxu0 0
      %5849 = vmatprep.mubr.bf16.mxu0 0
      %5850 = vmatmul.mubr.bf16.gmra.mrb[0].mxu0 %v5214
      %v5851 = vpop.f32.mrb[0].mxu0
      %v5852 = vadd.f32 0.0, %v5851
      %v5853 = vpop.f32.mrb[0].mxu0
      %v5854 = vadd.f32 0.0, %v5853
      %v5855 = vpop.f32.mrb[0].mxu0
      %v5856 = vadd.f32 0.0, %v5855
      %v5857 = vpop.f32.mrb[0].mxu0
      %v5858 = vadd.f32 0.0, %v5857
      %5859 = vmatprep.mubr.bf16.mxu0 0
      %5860 = vmatmul.mubr.bf16.gmra.mrb[0].mxu0 %v5217
      %v5861 = vpop.f32.mrb[0].mxu0
      %v5862 = vadd.f32 0.0, %v5861
      %v5863 = vpop.f32.mrb[0].mxu0
      %v5864 = vadd.f32 0.0, %v5863
      %v5865 = vpop.f32.mrb[0].mxu0
      %v5866 = vadd.f32 0.0, %v5865
      %v5867 = vpop.f32.mrb[0].mxu0
      %v5868 = vadd.f32 0.0, %v5867
      %5869 = vmatprep.mubr.bf16.mxu0 0
      %5870 = vmatmul.mubr.bf16.gmra.mrb[0].mxu0 %v5220
      %v5871 = vpop.f32.mrb[0].mxu0
      %v5872 = vadd.f32 0.0, %v5871
      %v5873 = vpop.f32.mrb[0].mxu0
      %v5874 = vadd.f32 0.0, %v5873
      %v5875 = vpop.f32.mrb[0].mxu0
      %v5876 = vadd.f32 0.0, %v5875
      %v5877 = vpop.f32.mrb[0].mxu0
      %v5878 = vadd.f32 0.0, %v5877
      %5879 = vmatprep.mubr.bf16.mxu0 0
      %5880 = vmatmul.mubr.bf16.gmra.mrb[0].mxu0 %v5223
      %v5881 = vpop.f32.mrb[0].mxu0
      %v5882 = vadd.f32 0.0, %v5881
      %v5883 = vpop.f32.mrb[0].mxu0
      %v5884 = vadd.f32 0.0, %v5883
      %v5885 = vpop.f32.mrb[0].mxu0
      %v5886 = vadd.f32 0.0, %v5885
      %v5887 = vpop.f32.mrb[0].mxu0
      %v5888 = vadd.f32 0.0, %v5887
      %5889 = vmatprep.mubr.bf16.mxu0 0
      %5890 = vmatmul.mubr.bf16.gmra.mrb[0].mxu0 %v5226
      %v5891 = vpop.f32.mrb[0].mxu0
      %v5892 = vadd.f32 0.0, %v5891
      %v5893 = vpop.f32.mrb[0].mxu0
      %v5894 = vadd.f32 0.0, %v5893
      %v5895 = vpop.f32.mrb[0].mxu0
      %v5896 = vadd.f32 0.0, %v5895
      %v5897 = vpop.f32.mrb[0].mxu0
      %v5898 = vadd.f32 0.0, %v5897
      %5899 = vmatprep.mubr.bf16.mxu0 0
      %5900 = vmatmul.mubr.bf16.gmra.mrb[0].mxu0 %v5229
      %v5901 = vpop.f32.mrb[0].mxu0
      %v5902 = vadd.f32 0.0, %v5901
      %v5903 = vpop.f32.mrb[0].mxu0
      %v5904 = vadd.f32 0.0, %v5903
      %v5905 = vpop.f32.mrb[0].mxu0
      %v5906 = vadd.f32 0.0, %v5905
      %v5907 = vpop.f32.mrb[0].mxu0
      %v5908 = vadd.f32 0.0, %v5907
      %5909 = vmatprep.mubr.bf16.mxu0 0
      %5910 = vmatmul.mubr.bf16.gmra.mrb[0].mxu0 %v5232
      %v5911 = vpop.f32.mrb[0].mxu0
      %v5912 = vadd.f32 0.0, %v5911
      %v5913 = vpop.f32.mrb[0].mxu0
      %v5914 = vadd.f32 0.0, %v5913
      %v5915 = vpop.f32.mrb[0].mxu0
      %v5916 = vadd.f32 0.0, %v5915
      %v5917 = vpop.f32.mrb[0].mxu0
      %v5918 = vadd.f32 0.0, %v5917
      %5919 = vdwg.mxu0
      %v5920 = vld [vmem:[#allocation3] sm:$0xff]
      %v5921 = vld [vmem:[#allocation3 + $0x8] sm:$0xff]
      %v5922 = vld [vmem:[#allocation3 + $0x10] sm:$0xff]
      %v5923 = vld [vmem:[#allocation3 + $0x18] sm:$0xff]
      %v5924 = vld [vmem:[#allocation3 + $0x20] sm:$0xff]
      %v5925 = vld [vmem:[#allocation3 + $0x28] sm:$0xff]
      %v5926 = vld [vmem:[#allocation3 + $0x30] sm:$0xff]
      %v5927 = vld [vmem:[#allocation3 + $0x38] sm:$0xff]
      %v5928 = vld [vmem:[#allocation3 + $0x40] sm:$0xff]
      %v5929 = vld [vmem:[#allocation3 + $0x48] sm:$0xff]
      %v5930 = vld [vmem:[#allocation3 + $0x50] sm:$0xff]
      %v5931 = vld [vmem:[#allocation3 + $0x58] sm:$0xff]
      %v5932 = vld [vmem:[#allocation3 + $0x60] sm:$0xff]
      %v5933 = vld [vmem:[#allocation3 + $0x68] sm:$0xff]
      %v5934 = vld [vmem:[#allocation3 + $0x70] sm:$0xff]
      %v5935 = vld [vmem:[#allocation3 + $0x78] sm:$0xff]
      %v5936 = vld [vmem:[#allocation3 + $0x80] sm:$0xff]
      %v5937 = vld [vmem:[#allocation3 + $0x88] sm:$0xff]
      %v5938 = vld [vmem:[#allocation3 + $0x90] sm:$0xff]
      %v5939 = vld [vmem:[#allocation3 + $0x98] sm:$0xff]
      %v5940 = vld [vmem:[#allocation3 + $0xa0] sm:$0xff]
      %v5941 = vld [vmem:[#allocation3 + $0xa8] sm:$0xff]
      %v5942 = vld [vmem:[#allocation3 + $0xb0] sm:$0xff]
      %v5943 = vld [vmem:[#allocation3 + $0xb8] sm:$0xff]
      %v5944 = vld [vmem:[#allocation3 + $0xc0] sm:$0xff]
      %v5945 = vld [vmem:[#allocation3 + $0xc8] sm:$0xff]
      %v5946 = vld [vmem:[#allocation3 + $0xd0] sm:$0x3f]
      %v5947 = vld [vmem:[#allocation3 + $0xd8] sm:$0x3f]
      %v5976 = vrot.slane %v5852, 2
      %v5977 = vrot.slane %v5856, 2
      %v5978 = vsel %vm2203, %v5976, %v5977
      %v5979 = vrot.slane %v5854, 2
      %v5980 = vrot.slane %v5858, 2
      %v5981 = vsel %vm2203, %v5979, %v5980
      %v5982 = vrot.slane %v5862, 2
      %v5983 = vsel %vm2203, %v5977, %v5982
      %v5984 = vrot.slane %v5864, 2
      %v5985 = vsel %vm2203, %v5980, %v5984
      %v5986 = vrot.slane %v5866, 2
      %v5987 = vsel %vm2203, %v5982, %v5986
      %v5988 = vrot.slane %v5868, 2
      %v5989 = vsel %vm2203, %v5984, %v5988
      %v5990 = vrot.slane %v5872, 2
      %v5991 = vsel %vm2203, %v5986, %v5990
      %v5992 = vrot.slane %v5874, 2
      %v5993 = vsel %vm2203, %v5988, %v5992
      %v5994 = vrot.slane %v5876, 2
      %v5995 = vsel %vm2203, %v5990, %v5994
      %v5996 = vrot.slane %v5878, 2
      %v5997 = vsel %vm2203, %v5992, %v5996
      %v5998 = vrot.slane %v5882, 2
      %v5999 = vsel %vm2203, %v5994, %v5998
      %v6000 = vrot.slane %v5884, 2
      %v6001 = vsel %vm2203, %v5996, %v6000
      %v6002 = vrot.slane %v5886, 2
      %v6003 = vsel %vm2203, %v5998, %v6002
      %v6004 = vrot.slane %v5888, 2
      %v6005 = vsel %vm2203, %v6000, %v6004
      %v6006 = vrot.slane %v5892, 2
      %v6007 = vsel %vm2203, %v6002, %v6006
      %v6008 = vrot.slane %v5894, 2
      %v6009 = vsel %vm2203, %v6004, %v6008
      %v6010 = vrot.slane %v5896, 2
      %v6011 = vsel %vm2203, %v6006, %v6010
      %v6012 = vrot.slane %v5898, 2
      %v6013 = vsel %vm2203, %v6008, %v6012
      %v6014 = vrot.slane %v5902, 2
      %v6015 = vsel %vm2203, %v6010, %v6014
      %v6016 = vrot.slane %v5904, 2
      %v6017 = vsel %vm2203, %v6012, %v6016
      %v6018 = vrot.slane %v5906, 2
      %v6019 = vsel %vm2203, %v6014, %v6018
      %v6020 = vrot.slane %v5908, 2
      %v6021 = vsel %vm2203, %v6016, %v6020
      %v6022 = vrot.slane %v5912, 2
      %v6023 = vsel %vm2203, %v6018, %v6022
      %v6024 = vrot.slane %v5914, 2
      %v6025 = vsel %vm2203, %v6020, %v6024
      %v6026 = vrot.slane %v5916, 2
      %v6027 = vsel %vm2203, %v6022, %v6026
      %v6028 = vrot.slane %v5918, 2
      %v6029 = vsel %vm2203, %v6024, %v6028
      %v6058 = vadd.f32 %v5920, %v5978
      %v6059 = vadd.f32 %v5921, %v5981
      %v6060 = vadd.f32 %v5922, %v5983
      %v6061 = vadd.f32 %v5923, %v5985
      %v6062 = vadd.f32 %v5924, %v5987
      %v6063 = vadd.f32 %v5925, %v5989
      %v6064 = vadd.f32 %v5926, %v5991
      %v6065 = vadd.f32 %v5927, %v5993
      %v6066 = vadd.f32 %v5928, %v5995
      %v6067 = vadd.f32 %v5929, %v5997
      %v6068 = vadd.f32 %v5930, %v5999
      %v6069 = vadd.f32 %v5931, %v6001
      %v6070 = vadd.f32 %v5932, %v6003
      %v6071 = vadd.f32 %v5933, %v6005
      %v6072 = vadd.f32 %v5934, %v6007
      %v6073 = vadd.f32 %v5935, %v6009
      %v6074 = vadd.f32 %v5936, %v6011
      %v6075 = vadd.f32 %v5937, %v6013
      %v6076 = vadd.f32 %v5938, %v6015
      %v6077 = vadd.f32 %v5939, %v6017
      %v6078 = vadd.f32 %v5940, %v6019
      %v6079 = vadd.f32 %v5941, %v6021
      %v6080 = vadd.f32 %v5942, %v6023
      %v6081 = vadd.f32 %v5943, %v6025
      %v6082 = vadd.f32 %v5944, %v6027
      %v6083 = vadd.f32 %v5945, %v6029
      %v6084 = vadd.f32 %v5946, %v6026
      %v6085 = vadd.f32 %v5947, %v6028
      %6086 = vst [vmem:[#allocation3] sm:$0xff] %v6058
      %6087 = vst.msk [vmem:[#allocation3 + $0x8] sm:$0xff] %vm5345, %v6059
      %6088 = vst [vmem:[#allocation3 + $0x10] sm:$0xff] %v6060
      %6089 = vst.msk [vmem:[#allocation3 + $0x18] sm:$0xff] %vm5345, %v6061
      %6090 = vst [vmem:[#allocation3 + $0x20] sm:$0xff] %v6062
      %6091 = vst.msk [vmem:[#allocation3 + $0x28] sm:$0xff] %vm5345, %v6063
      %6092 = vst [vmem:[#allocation3 + $0x30] sm:$0xff] %v6064
      %6093 = vst.msk [vmem:[#allocation3 + $0x38] sm:$0xff] %vm5345, %v6065
      %6094 = vst [vmem:[#allocation3 + $0x40] sm:$0xff] %v6066
      %6095 = vst.msk [vmem:[#allocation3 + $0x48] sm:$0xff] %vm5345, %v6067
      %6096 = vst [vmem:[#allocation3 + $0x50] sm:$0xff] %v6068
      %6097 = vst.msk [vmem:[#allocation3 + $0x58] sm:$0xff] %vm5345, %v6069
      %6098 = vst [vmem:[#allocation3 + $0x60] sm:$0xff] %v6070
      %6099 = vst.msk [vmem:[#allocation3 + $0x68] sm:$0xff] %vm5345, %v6071
      %6100 = vst [vmem:[#allocation3 + $0x70] sm:$0xff] %v6072
      %6101 = vst.msk [vmem:[#allocation3 + $0x78] sm:$0xff] %vm5345, %v6073
      %6102 = vst [vmem:[#allocation3 + $0x80] sm:$0xff] %v6074
      %6103 = vst.msk [vmem:[#allocation3 + $0x88] sm:$0xff] %vm5345, %v6075
      %6104 = vst [vmem:[#allocation3 + $0x90] sm:$0xff] %v6076
      %6105 = vst.msk [vmem:[#allocation3 + $0x98] sm:$0xff] %vm5345, %v6077
      %6106 = vst [vmem:[#allocation3 + $0xa0] sm:$0xff] %v6078
      %6107 = vst.msk [vmem:[#allocation3 + $0xa8] sm:$0xff] %vm5345, %v6079
      %6108 = vst [vmem:[#allocation3 + $0xb0] sm:$0xff] %v6080
      %6109 = vst.msk [vmem:[#allocation3 + $0xb8] sm:$0xff] %vm5345, %v6081
      %6110 = vst [vmem:[#allocation3 + $0xc0] sm:$0xff] %v6082
      %6111 = vst.msk [vmem:[#allocation3 + $0xc8] sm:$0xff] %vm5345, %v6083
      %6112 = vst [vmem:[#allocation3 + $0xd0] sm:$0x3f] %v6084
      %vm6113 = vcmask 259072
      %6114 = vst.msk [vmem:[#allocation3 + $0xd8] sm:$0x3f] %vm6113, %v6085
      %s6115 = scalar_lea.vmem %s7, 264
      %v6116 = vld [vmem:[%s6115] sm:$0xff]
      %v6117 = vld [vmem:[%s6115 + $0x8] sm:$0xff]
      %v6118 = vld [vmem:[%s6115 + $0x10] sm:$0xff]
      %v6119 = vld [vmem:[%s6115 + $0x18] sm:$0xff]
      %v6120 = vld [vmem:[%s6115 + $0x20] sm:$0xff]
      %v6121 = vld [vmem:[%s6115 + $0x28] sm:$0xff]
      %v6122 = vld [vmem:[%s6115 + $0x30] sm:$0xff]
      %v6123 = vld [vmem:[%s6115 + $0x38] sm:$0xff]
      %v6124 = vld [vmem:[%s6115 + $0x40] sm:$0xff]
      %v6125 = vld [vmem:[%s6115 + $0x48] sm:$0xff]
      %v6126 = vld [vmem:[%s6115 + $0x50] sm:$0x33]
      %v6138 = vunpack.c.l.b16 %v6116
      %v6139 = vunpack.c.h.b16 %v6116
      %v6140 = vunpack.c.l.b16 %v6117
      %v6141 = vunpack.c.h.b16 %v6117
      %v6142 = vunpack.c.l.b16 %v6118
      %v6143 = vunpack.c.h.b16 %v6118
      %v6144 = vunpack.c.l.b16 %v6119
      %v6145 = vunpack.c.h.b16 %v6119
      %v6146 = vunpack.c.l.b16 %v6120
      %v6147 = vunpack.c.h.b16 %v6120
      %v6148 = vunpack.c.l.b16 %v6121
      %v6149 = vunpack.c.h.b16 %v6121
      %v6150 = vunpack.c.l.b16 %v6122
      %v6151 = vunpack.c.h.b16 %v6122
      %v6152 = vunpack.c.l.b16 %v6123
      %v6153 = vunpack.c.h.b16 %v6123
      %v6154 = vunpack.c.l.b16 %v6124
      %v6155 = vunpack.c.h.b16 %v6124
      %v6156 = vunpack.c.l.b16 %v6125
      %v6157 = vunpack.c.h.b16 %v6125
      %v6158 = vunpack.c.l.b16 %v6126
      %v6159 = vunpack.c.h.b16 %v6126
      %v6160 = vpack.c.b16 %v6140, %v6138
      %v6161 = vpack.c.b16 %v6141, %v6139
      %v6162 = vpack.c.b16 %v6144, %v6142
      %v6163 = vpack.c.b16 %v6145, %v6143
      %v6164 = vpack.c.b16 %v6148, %v6146
      %v6165 = vpack.c.b16 %v6149, %v6147
      %v6166 = vpack.c.b16 %v6152, %v6150
      %v6167 = vpack.c.b16 %v6153, %v6151
      %v6168 = vpack.c.b16 %v6156, %v6154
      %v6169 = vpack.c.b16 %v6157, %v6155
      %v6170 = vpack.c.b16 %v6158, %v6158
      %v6171 = vpack.c.b16 %v6159, %v6159
      %v6183 = vsel %vm5234, %v6170, 0
      %v6186 = vsel %vm5234, %v6171, 0
      %6188 = vmatprep.subr.bf16.mxu0 %v6161
      %6189 = vmatpush1.bf16.msra.mxu0 %v6160
      %6190 = vmatprep.subr.bf16.mxu0 %v6163
      %6191 = vmatpush1.bf16.msra.mxu0 %v6162
      %6192 = vmatprep.subr.bf16.mxu0 %v6165
      %6193 = vmatpush1.bf16.msra.mxu0 %v6164
      %6194 = vmatprep.subr.bf16.mxu0 %v6167
      %6195 = vmatpush1.bf16.msra.mxu0 %v6166
      %6196 = vmatprep.subr.bf16.mxu0 %v6169
      %6197 = vmatpush1.bf16.msra.mxu0 %v6168
      %6198 = vmatprep.subr.bf16.mxu0 %v6186
      %6199 = vmatpush1.bf16.msra.mxu0 %v6183
      %6200 = vmatprep.subr.bf16.mxu0 0
      %6201 = vmatpush1.bf16.msra.mxu0 0
      %6202 = vmatprep.subr.bf16.mxu0 0
      %6203 = vmatpush1.bf16.msra.mxu0 0
      %6204 = vmatprep.subr.bf16.mxu0 0
      %6205 = vmatpush1.bf16.msra.mxu0 0
      %6206 = vmatprep.subr.bf16.mxu0 0
      %6207 = vmatpush1.bf16.msra.mxu0 0
      %6208 = vmatprep.subr.bf16.mxu0 0
      %6209 = vmatpush1.bf16.msra.mxu0 0
      %6210 = vmatprep.subr.bf16.mxu0 0
      %6211 = vmatpush1.bf16.msra.mxu0 0
      %6212 = vmatprep.subr.bf16.mxu0 0
      %6213 = vmatpush1.bf16.msra.mxu0 0
      %6214 = vmatprep.subr.bf16.mxu0 0
      %6215 = vmatpush1.bf16.msra.mxu0 0
      %6216 = vmatprep.subr.bf16.mxu0 0
      %6217 = vmatpush1.bf16.msra.mxu0 0
      %6218 = vmatprep.subr.bf16.mxu0 0
      %6219 = vmatpush1.bf16.msra.mxu0 0
      %6220 = vmatprep.mubr.bf16.mxu0 0
      %6221 = vmatmul.mubr.bf16.gmra.mrb[0].mxu0 %v5214
      %v6222 = vpop.f32.mrb[0].mxu0
      %v6223 = vadd.f32 0.0, %v6222
      %v6224 = vpop.f32.mrb[0].mxu0
      %v6225 = vadd.f32 0.0, %v6224
      %v6226 = vpop.f32.mrb[0].mxu0
      %v6227 = vadd.f32 0.0, %v6226
      %v6228 = vpop.f32.mrb[0].mxu0
      %v6229 = vadd.f32 0.0, %v6228
      %6230 = vmatprep.mubr.bf16.mxu0 0
      %6231 = vmatmul.mubr.bf16.gmra.mrb[0].mxu0 %v5217
      %v6232 = vpop.f32.mrb[0].mxu0
      %v6233 = vadd.f32 0.0, %v6232
      %v6234 = vpop.f32.mrb[0].mxu0
      %v6235 = vadd.f32 0.0, %v6234
      %v6236 = vpop.f32.mrb[0].mxu0
      %v6237 = vadd.f32 0.0, %v6236
      %v6238 = vpop.f32.mrb[0].mxu0
      %v6239 = vadd.f32 0.0, %v6238
      %6240 = vmatprep.mubr.bf16.mxu0 0
      %6241 = vmatmul.mubr.bf16.gmra.mrb[0].mxu0 %v5220
      %v6242 = vpop.f32.mrb[0].mxu0
      %v6243 = vadd.f32 0.0, %v6242
      %v6244 = vpop.f32.mrb[0].mxu0
      %v6245 = vadd.f32 0.0, %v6244
      %v6246 = vpop.f32.mrb[0].mxu0
      %v6247 = vadd.f32 0.0, %v6246
      %v6248 = vpop.f32.mrb[0].mxu0
      %v6249 = vadd.f32 0.0, %v6248
      %6250 = vmatprep.mubr.bf16.mxu0 0
      %6251 = vmatmul.mubr.bf16.gmra.mrb[0].mxu0 %v5223
      %v6252 = vpop.f32.mrb[0].mxu0
      %v6253 = vadd.f32 0.0, %v6252
      %v6254 = vpop.f32.mrb[0].mxu0
      %v6255 = vadd.f32 0.0, %v6254
      %v6256 = vpop.f32.mrb[0].mxu0
      %v6257 = vadd.f32 0.0, %v6256
      %v6258 = vpop.f32.mrb[0].mxu0
      %v6259 = vadd.f32 0.0, %v6258
      %6260 = vmatprep.mubr.bf16.mxu0 0
      %6261 = vmatmul.mubr.bf16.gmra.mrb[0].mxu0 %v5226
      %v6262 = vpop.f32.mrb[0].mxu0
      %v6263 = vadd.f32 0.0, %v6262
      %v6264 = vpop.f32.mrb[0].mxu0
      %v6265 = vadd.f32 0.0, %v6264
      %v6266 = vpop.f32.mrb[0].mxu0
      %v6267 = vadd.f32 0.0, %v6266
      %v6268 = vpop.f32.mrb[0].mxu0
      %v6269 = vadd.f32 0.0, %v6268
      %6270 = vmatprep.mubr.bf16.mxu0 0
      %6271 = vmatmul.mubr.bf16.gmra.mrb[0].mxu0 %v5229
      %v6272 = vpop.f32.mrb[0].mxu0
      %v6273 = vadd.f32 0.0, %v6272
      %v6274 = vpop.f32.mrb[0].mxu0
      %v6275 = vadd.f32 0.0, %v6274
      %v6276 = vpop.f32.mrb[0].mxu0
      %v6277 = vadd.f32 0.0, %v6276
      %v6278 = vpop.f32.mrb[0].mxu0
      %v6279 = vadd.f32 0.0, %v6278
      %6280 = vmatprep.mubr.bf16.mxu0 0
      %6281 = vmatmul.mubr.bf16.gmra.mrb[0].mxu0 %v5232
      %v6282 = vpop.f32.mrb[0].mxu0
      %v6283 = vadd.f32 0.0, %v6282
      %v6284 = vpop.f32.mrb[0].mxu0
      %v6285 = vadd.f32 0.0, %v6284
      %v6286 = vpop.f32.mrb[0].mxu0
      %v6287 = vadd.f32 0.0, %v6286
      %v6288 = vpop.f32.mrb[0].mxu0
      %v6289 = vadd.f32 0.0, %v6288
      %6290 = vdwg.mxu0
      %v6291 = vld [vmem:[#allocation3] sm:$0xff]
      %v6292 = vld [vmem:[#allocation3 + $0x8] sm:$0xff]
      %v6293 = vld [vmem:[#allocation3 + $0x10] sm:$0xff]
      %v6294 = vld [vmem:[#allocation3 + $0x18] sm:$0xff]
      %v6295 = vld [vmem:[#allocation3 + $0x20] sm:$0xff]
      %v6296 = vld [vmem:[#allocation3 + $0x28] sm:$0xff]
      %v6297 = vld [vmem:[#allocation3 + $0x30] sm:$0xff]
      %v6298 = vld [vmem:[#allocation3 + $0x38] sm:$0xff]
      %v6299 = vld [vmem:[#allocation3 + $0x40] sm:$0xff]
      %v6300 = vld [vmem:[#allocation3 + $0x48] sm:$0xff]
      %v6301 = vld [vmem:[#allocation3 + $0x50] sm:$0xff]
      %v6302 = vld [vmem:[#allocation3 + $0x58] sm:$0xff]
      %v6303 = vld [vmem:[#allocation3 + $0x60] sm:$0xff]
      %v6304 = vld [vmem:[#allocation3 + $0x68] sm:$0xff]
      %v6305 = vld [vmem:[#allocation3 + $0x70] sm:$0xff]
      %v6306 = vld [vmem:[#allocation3 + $0x78] sm:$0xff]
      %v6307 = vld [vmem:[#allocation3 + $0x80] sm:$0xff]
      %v6308 = vld [vmem:[#allocation3 + $0x88] sm:$0xff]
      %v6309 = vld [vmem:[#allocation3 + $0x90] sm:$0xff]
      %v6310 = vld [vmem:[#allocation3 + $0x98] sm:$0xff]
      %v6311 = vld [vmem:[#allocation3 + $0xa0] sm:$0xff]
      %v6312 = vld [vmem:[#allocation3 + $0xa8] sm:$0xff]
      %v6313 = vld [vmem:[#allocation3 + $0xb0] sm:$0xff]
      %v6314 = vld [vmem:[#allocation3 + $0xb8] sm:$0xff]
      %v6315 = vld [vmem:[#allocation3 + $0xc0] sm:$0xff]
      %v6316 = vld [vmem:[#allocation3 + $0xc8] sm:$0xff]
      %v6317 = vld [vmem:[#allocation3 + $0xd0] sm:$0x1f]
      %v6318 = vld [vmem:[#allocation3 + $0xd8] sm:$0x1f]
      %v6347 = vrot.slane %v6223, 3
      %v6348 = vrot.slane %v6227, 3
      %v6349 = vsel %vm2917, %v6347, %v6348
      %v6350 = vrot.slane %v6225, 3
      %v6351 = vrot.slane %v6229, 3
      %v6352 = vsel %vm2917, %v6350, %v6351
      %v6353 = vrot.slane %v6233, 3
      %v6354 = vsel %vm2917, %v6348, %v6353
      %v6355 = vrot.slane %v6235, 3
      %v6356 = vsel %vm2917, %v6351, %v6355
      %v6357 = vrot.slane %v6237, 3
      %v6358 = vsel %vm2917, %v6353, %v6357
      %v6359 = vrot.slane %v6239, 3
      %v6360 = vsel %vm2917, %v6355, %v6359
      %v6361 = vrot.slane %v6243, 3
      %v6362 = vsel %vm2917, %v6357, %v6361
      %v6363 = vrot.slane %v6245, 3
      %v6364 = vsel %vm2917, %v6359, %v6363
      %v6365 = vrot.slane %v6247, 3
      %v6366 = vsel %vm2917, %v6361, %v6365
      %v6367 = vrot.slane %v6249, 3
      %v6368 = vsel %vm2917, %v6363, %v6367
      %v6369 = vrot.slane %v6253, 3
      %v6370 = vsel %vm2917, %v6365, %v6369
      %v6371 = vrot.slane %v6255, 3
      %v6372 = vsel %vm2917, %v6367, %v6371
      %v6373 = vrot.slane %v6257, 3
      %v6374 = vsel %vm2917, %v6369, %v6373
      %v6375 = vrot.slane %v6259, 3
      %v6376 = vsel %vm2917, %v6371, %v6375
      %v6377 = vrot.slane %v6263, 3
      %v6378 = vsel %vm2917, %v6373, %v6377
      %v6379 = vrot.slane %v6265, 3
      %v6380 = vsel %vm2917, %v6375, %v6379
      %v6381 = vrot.slane %v6267, 3
      %v6382 = vsel %vm2917, %v6377, %v6381
      %v6383 = vrot.slane %v6269, 3
      %v6384 = vsel %vm2917, %v6379, %v6383
      %v6385 = vrot.slane %v6273, 3
      %v6386 = vsel %vm2917, %v6381, %v6385
      %v6387 = vrot.slane %v6275, 3
      %v6388 = vsel %vm2917, %v6383, %v6387
      %v6389 = vrot.slane %v6277, 3
      %v6390 = vsel %vm2917, %v6385, %v6389
      %v6391 = vrot.slane %v6279, 3
      %v6392 = vsel %vm2917, %v6387, %v6391
      %v6393 = vrot.slane %v6283, 3
      %v6394 = vsel %vm2917, %v6389, %v6393
      %v6395 = vrot.slane %v6285, 3
      %v6396 = vsel %vm2917, %v6391, %v6395
      %v6397 = vrot.slane %v6287, 3
      %v6398 = vsel %vm2917, %v6393, %v6397
      %v6399 = vrot.slane %v6289, 3
      %v6400 = vsel %vm2917, %v6395, %v6399
      %v6429 = vadd.f32 %v6291, %v6349
      %v6430 = vadd.f32 %v6292, %v6352
      %v6431 = vadd.f32 %v6293, %v6354
      %v6432 = vadd.f32 %v6294, %v6356
      %v6433 = vadd.f32 %v6295, %v6358
      %v6434 = vadd.f32 %v6296, %v6360
      %v6435 = vadd.f32 %v6297, %v6362
      %v6436 = vadd.f32 %v6298, %v6364
      %v6437 = vadd.f32 %v6299, %v6366
      %v6438 = vadd.f32 %v6300, %v6368
      %v6439 = vadd.f32 %v6301, %v6370
      %v6440 = vadd.f32 %v6302, %v6372
      %v6441 = vadd.f32 %v6303, %v6374
      %v6442 = vadd.f32 %v6304, %v6376
      %v6443 = vadd.f32 %v6305, %v6378
      %v6444 = vadd.f32 %v6306, %v6380
      %v6445 = vadd.f32 %v6307, %v6382
      %v6446 = vadd.f32 %v6308, %v6384
      %v6447 = vadd.f32 %v6309, %v6386
      %v6448 = vadd.f32 %v6310, %v6388
      %v6449 = vadd.f32 %v6311, %v6390
      %v6450 = vadd.f32 %v6312, %v6392
      %v6451 = vadd.f32 %v6313, %v6394
      %v6452 = vadd.f32 %v6314, %v6396
      %v6453 = vadd.f32 %v6315, %v6398
      %v6454 = vadd.f32 %v6316, %v6400
      %v6455 = vadd.f32 %v6317, %v6397
      %v6456 = vadd.f32 %v6318, %v6399
      %6457 = vst [vmem:[#allocation3] sm:$0xff] %v6429
      %6458 = vst.msk [vmem:[#allocation3 + $0x8] sm:$0xff] %vm5345, %v6430
      %6459 = vst [vmem:[#allocation3 + $0x10] sm:$0xff] %v6431
      %6460 = vst.msk [vmem:[#allocation3 + $0x18] sm:$0xff] %vm5345, %v6432
      %6461 = vst [vmem:[#allocation3 + $0x20] sm:$0xff] %v6433
      %6462 = vst.msk [vmem:[#allocation3 + $0x28] sm:$0xff] %vm5345, %v6434
      %6463 = vst [vmem:[#allocation3 + $0x30] sm:$0xff] %v6435
      %6464 = vst.msk [vmem:[#allocation3 + $0x38] sm:$0xff] %vm5345, %v6436
      %6465 = vst [vmem:[#allocation3 + $0x40] sm:$0xff] %v6437
      %6466 = vst.msk [vmem:[#allocation3 + $0x48] sm:$0xff] %vm5345, %v6438
      %6467 = vst [vmem:[#allocation3 + $0x50] sm:$0xff] %v6439
      %6468 = vst.msk [vmem:[#allocation3 + $0x58] sm:$0xff] %vm5345, %v6440
      %6469 = vst [vmem:[#allocation3 + $0x60] sm:$0xff] %v6441
      %6470 = vst.msk [vmem:[#allocation3 + $0x68] sm:$0xff] %vm5345, %v6442
      %6471 = vst [vmem:[#allocation3 + $0x70] sm:$0xff] %v6443
      %6472 = vst.msk [vmem:[#allocation3 + $0x78] sm:$0xff] %vm5345, %v6444
      %6473 = vst [vmem:[#allocation3 + $0x80] sm:$0xff] %v6445
      %6474 = vst.msk [vmem:[#allocation3 + $0x88] sm:$0xff] %vm5345, %v6446
      %6475 = vst [vmem:[#allocation3 + $0x90] sm:$0xff] %v6447
      %6476 = vst.msk [vmem:[#allocation3 + $0x98] sm:$0xff] %vm5345, %v6448
      %6477 = vst [vmem:[#allocation3 + $0xa0] sm:$0xff] %v6449
      %6478 = vst.msk [vmem:[#allocation3 + $0xa8] sm:$0xff] %vm5345, %v6450
      %6479 = vst [vmem:[#allocation3 + $0xb0] sm:$0xff] %v6451
      %6480 = vst.msk [vmem:[#allocation3 + $0xb8] sm:$0xff] %vm5345, %v6452
      %6481 = vst [vmem:[#allocation3 + $0xc0] sm:$0xff] %v6453
      %6482 = vst.msk [vmem:[#allocation3 + $0xc8] sm:$0xff] %vm5345, %v6454
      %6483 = vst [vmem:[#allocation3 + $0xd0] sm:$0x1f] %v6455
      %vm6484 = vcmask 258048
      %6485 = vst.msk [vmem:[#allocation3 + $0xd8] sm:$0x1f] %vm6484, %v6456
      %s6486 = scalar_lea.vmem %s7, 352
      %v6487 = vld [vmem:[%s6486] sm:$0xff]
      %v6488 = vld [vmem:[%s6486 + $0x8] sm:$0xff]
      %v6489 = vld [vmem:[%s6486 + $0x10] sm:$0xff]
      %v6490 = vld [vmem:[%s6486 + $0x18] sm:$0xff]
      %v6491 = vld [vmem:[%s6486 + $0x20] sm:$0xff]
      %v6492 = vld [vmem:[%s6486 + $0x28] sm:$0xff]
      %v6493 = vld [vmem:[%s6486 + $0x30] sm:$0xff]
      %v6494 = vld [vmem:[%s6486 + $0x38] sm:$0xff]
      %v6495 = vld [vmem:[%s6486 + $0x40] sm:$0xff]
      %v6496 = vld [vmem:[%s6486 + $0x48] sm:$0xff]
      %v6497 = vld [vmem:[%s6486 + $0x50] sm:$0x33]
      %v6509 = vunpack.c.l.b16 %v6487
      %v6510 = vunpack.c.h.b16 %v6487
      %v6511 = vunpack.c.l.b16 %v6488
      %v6512 = vunpack.c.h.b16 %v6488
      %v6513 = vunpack.c.l.b16 %v6489
      %v6514 = vunpack.c.h.b16 %v6489
      %v6515 = vunpack.c.l.b16 %v6490
      %v6516 = vunpack.c.h.b16 %v6490
      %v6517 = vunpack.c.l.b16 %v6491
      %v6518 = vunpack.c.h.b16 %v6491
      %v6519 = vunpack.c.l.b16 %v6492
      %v6520 = vunpack.c.h.b16 %v6492
      %v6521 = vunpack.c.l.b16 %v6493
      %v6522 = vunpack.c.h.b16 %v6493
      %v6523 = vunpack.c.l.b16 %v6494
      %v6524 = vunpack.c.h.b16 %v6494
      %v6525 = vunpack.c.l.b16 %v6495
      %v6526 = vunpack.c.h.b16 %v6495
      %v6527 = vunpack.c.l.b16 %v6496
      %v6528 = vunpack.c.h.b16 %v6496
      %v6529 = vunpack.c.l.b16 %v6497
      %v6530 = vunpack.c.h.b16 %v6497
      %v6531 = vpack.c.b16 %v6511, %v6509
      %v6532 = vpack.c.b16 %v6512, %v6510
      %v6533 = vpack.c.b16 %v6515, %v6513
      %v6534 = vpack.c.b16 %v6516, %v6514
      %v6535 = vpack.c.b16 %v6519, %v6517
      %v6536 = vpack.c.b16 %v6520, %v6518
      %v6537 = vpack.c.b16 %v6523, %v6521
      %v6538 = vpack.c.b16 %v6524, %v6522
      %v6539 = vpack.c.b16 %v6527, %v6525
      %v6540 = vpack.c.b16 %v6528, %v6526
      %v6541 = vpack.c.b16 %v6529, %v6529
      %v6542 = vpack.c.b16 %v6530, %v6530
      %v6554 = vsel %vm5234, %v6541, 0
      %v6557 = vsel %vm5234, %v6542, 0
      %6559 = vmatprep.subr.bf16.mxu0 %v6532
      %6560 = vmatpush1.bf16.msra.mxu0 %v6531
      %6561 = vmatprep.subr.bf16.mxu0 %v6534
      %6562 = vmatpush1.bf16.msra.mxu0 %v6533
      %6563 = vmatprep.subr.bf16.mxu0 %v6536
      %6564 = vmatpush1.bf16.msra.mxu0 %v6535
      %6565 = vmatprep.subr.bf16.mxu0 %v6538
      %6566 = vmatpush1.bf16.msra.mxu0 %v6537
      %6567 = vmatprep.subr.bf16.mxu0 %v6540
      %6568 = vmatpush1.bf16.msra.mxu0 %v6539
      %6569 = vmatprep.subr.bf16.mxu0 %v6557
      %6570 = vmatpush1.bf16.msra.mxu0 %v6554
      %6571 = vmatprep.subr.bf16.mxu0 0
      %6572 = vmatpush1.bf16.msra.mxu0 0
      %6573 = vmatprep.subr.bf16.mxu0 0
      %6574 = vmatpush1.bf16.msra.mxu0 0
      %6575 = vmatprep.subr.bf16.mxu0 0
      %6576 = vmatpush1.bf16.msra.mxu0 0
      %6577 = vmatprep.subr.bf16.mxu0 0
      %6578 = vmatpush1.bf16.msra.mxu0 0
      %6579 = vmatprep.subr.bf16.mxu0 0
      %6580 = vmatpush1.bf16.msra.mxu0 0
      %6581 = vmatprep.subr.bf16.mxu0 0
      %6582 = vmatpush1.bf16.msra.mxu0 0
      %6583 = vmatprep.subr.bf16.mxu0 0
      %6584 = vmatpush1.bf16.msra.mxu0 0
      %6585 = vmatprep.subr.bf16.mxu0 0
      %6586 = vmatpush1.bf16.msra.mxu0 0
      %6587 = vmatprep.subr.bf16.mxu0 0
      %6588 = vmatpush1.bf16.msra.mxu0 0
      %6589 = vmatprep.subr.bf16.mxu0 0
      %6590 = vmatpush1.bf16.msra.mxu0 0
      %6591 = vmatprep.mubr.bf16.mxu0 0
      %6592 = vmatmul.mubr.bf16.gmra.mrb[0].mxu0 %v5214
      %v6593 = vpop.f32.mrb[0].mxu0
      %v6594 = vadd.f32 0.0, %v6593
      %v6595 = vpop.f32.mrb[0].mxu0
      %v6596 = vadd.f32 0.0, %v6595
      %v6597 = vpop.f32.mrb[0].mxu0
      %v6598 = vadd.f32 0.0, %v6597
      %v6599 = vpop.f32.mrb[0].mxu0
      %v6600 = vadd.f32 0.0, %v6599
      %6601 = vmatprep.mubr.bf16.mxu0 0
      %6602 = vmatmul.mubr.bf16.gmra.mrb[0].mxu0 %v5217
      %v6603 = vpop.f32.mrb[0].mxu0
      %v6604 = vadd.f32 0.0, %v6603
      %v6605 = vpop.f32.mrb[0].mxu0
      %v6606 = vadd.f32 0.0, %v6605
      %v6607 = vpop.f32.mrb[0].mxu0
      %v6608 = vadd.f32 0.0, %v6607
      %v6609 = vpop.f32.mrb[0].mxu0
      %v6610 = vadd.f32 0.0, %v6609
      %6611 = vmatprep.mubr.bf16.mxu0 0
      %6612 = vmatmul.mubr.bf16.gmra.mrb[0].mxu0 %v5220
      %v6613 = vpop.f32.mrb[0].mxu0
      %v6614 = vadd.f32 0.0, %v6613
      %v6615 = vpop.f32.mrb[0].mxu0
      %v6616 = vadd.f32 0.0, %v6615
      %v6617 = vpop.f32.mrb[0].mxu0
      %v6618 = vadd.f32 0.0, %v6617
      %v6619 = vpop.f32.mrb[0].mxu0
      %v6620 = vadd.f32 0.0, %v6619
      %6621 = vmatprep.mubr.bf16.mxu0 0
      %6622 = vmatmul.mubr.bf16.gmra.mrb[0].mxu0 %v5223
      %v6623 = vpop.f32.mrb[0].mxu0
      %v6624 = vadd.f32 0.0, %v6623
      %v6625 = vpop.f32.mrb[0].mxu0
      %v6626 = vadd.f32 0.0, %v6625
      %v6627 = vpop.f32.mrb[0].mxu0
      %v6628 = vadd.f32 0.0, %v6627
      %v6629 = vpop.f32.mrb[0].mxu0
      %v6630 = vadd.f32 0.0, %v6629
      %6631 = vmatprep.mubr.bf16.mxu0 0
      %6632 = vmatmul.mubr.bf16.gmra.mrb[0].mxu0 %v5226
      %v6633 = vpop.f32.mrb[0].mxu0
      %v6634 = vadd.f32 0.0, %v6633
      %v6635 = vpop.f32.mrb[0].mxu0
      %v6636 = vadd.f32 0.0, %v6635
      %v6637 = vpop.f32.mrb[0].mxu0
      %v6638 = vadd.f32 0.0, %v6637
      %v6639 = vpop.f32.mrb[0].mxu0
      %v6640 = vadd.f32 0.0, %v6639
      %6641 = vmatprep.mubr.bf16.mxu0 0
      %6642 = vmatmul.mubr.bf16.gmra.mrb[0].mxu0 %v5229
      %v6643 = vpop.f32.mrb[0].mxu0
      %v6644 = vadd.f32 0.0, %v6643
      %v6645 = vpop.f32.mrb[0].mxu0
      %v6646 = vadd.f32 0.0, %v6645
      %v6647 = vpop.f32.mrb[0].mxu0
      %v6648 = vadd.f32 0.0, %v6647
      %v6649 = vpop.f32.mrb[0].mxu0
      %v6650 = vadd.f32 0.0, %v6649
      %6651 = vmatprep.mubr.bf16.mxu0 0
      %6652 = vmatmul.mubr.bf16.gmra.mrb[0].mxu0 %v5232
      %v6653 = vpop.f32.mrb[0].mxu0
      %v6654 = vadd.f32 0.0, %v6653
      %v6655 = vpop.f32.mrb[0].mxu0
      %v6656 = vadd.f32 0.0, %v6655
      %v6657 = vpop.f32.mrb[0].mxu0
      %v6658 = vadd.f32 0.0, %v6657
      %v6659 = vpop.f32.mrb[0].mxu0
      %v6660 = vadd.f32 0.0, %v6659
      %6661 = vdwg.mxu0
      %v6662 = vld [vmem:[#allocation3] sm:$0xff]
      %v6663 = vld [vmem:[#allocation3 + $0x8] sm:$0xff]
      %v6664 = vld [vmem:[#allocation3 + $0x10] sm:$0xff]
      %v6665 = vld [vmem:[#allocation3 + $0x18] sm:$0xff]
      %v6666 = vld [vmem:[#allocation3 + $0x20] sm:$0xff]
      %v6667 = vld [vmem:[#allocation3 + $0x28] sm:$0xff]
      %v6668 = vld [vmem:[#allocation3 + $0x30] sm:$0xff]
      %v6669 = vld [vmem:[#allocation3 + $0x38] sm:$0xff]
      %v6670 = vld [vmem:[#allocation3 + $0x40] sm:$0xff]
      %v6671 = vld [vmem:[#allocation3 + $0x48] sm:$0xff]
      %v6672 = vld [vmem:[#allocation3 + $0x50] sm:$0xff]
      %v6673 = vld [vmem:[#allocation3 + $0x58] sm:$0xff]
      %v6674 = vld [vmem:[#allocation3 + $0x60] sm:$0xff]
      %v6675 = vld [vmem:[#allocation3 + $0x68] sm:$0xff]
      %v6676 = vld [vmem:[#allocation3 + $0x70] sm:$0xff]
      %v6677 = vld [vmem:[#allocation3 + $0x78] sm:$0xff]
      %v6678 = vld [vmem:[#allocation3 + $0x80] sm:$0xff]
      %v6679 = vld [vmem:[#allocation3 + $0x88] sm:$0xff]
      %v6680 = vld [vmem:[#allocation3 + $0x90] sm:$0xff]
      %v6681 = vld [vmem:[#allocation3 + $0x98] sm:$0xff]
      %v6682 = vld [vmem:[#allocation3 + $0xa0] sm:$0xff]
      %v6683 = vld [vmem:[#allocation3 + $0xa8] sm:$0xff]
      %v6684 = vld [vmem:[#allocation3 + $0xb0] sm:$0xff]
      %v6685 = vld [vmem:[#allocation3 + $0xb8] sm:$0xff]
      %v6686 = vld [vmem:[#allocation3 + $0xc0] sm:$0xff]
      %v6687 = vld [vmem:[#allocation3 + $0xc8] sm:$0xff]
      %v6688 = vld [vmem:[#allocation3 + $0xd0] sm:$0xf]
      %v6689 = vld [vmem:[#allocation3 + $0xd8] sm:$0xf]
      %v6718 = vrot.slane %v6594, 4
      %v6719 = vrot.slane %v6598, 4
      %v6720 = vsel %vm3631, %v6718, %v6719
      %v6721 = vrot.slane %v6596, 4
      %v6722 = vrot.slane %v6600, 4
      %v6723 = vsel %vm3631, %v6721, %v6722
      %v6724 = vrot.slane %v6604, 4
      %v6725 = vsel %vm3631, %v6719, %v6724
      %v6726 = vrot.slane %v6606, 4
      %v6727 = vsel %vm3631, %v6722, %v6726
      %v6728 = vrot.slane %v6608, 4
      %v6729 = vsel %vm3631, %v6724, %v6728
      %v6730 = vrot.slane %v6610, 4
      %v6731 = vsel %vm3631, %v6726, %v6730
      %v6732 = vrot.slane %v6614, 4
      %v6733 = vsel %vm3631, %v6728, %v6732
      %v6734 = vrot.slane %v6616, 4
      %v6735 = vsel %vm3631, %v6730, %v6734
      %v6736 = vrot.slane %v6618, 4
      %v6737 = vsel %vm3631, %v6732, %v6736
      %v6738 = vrot.slane %v6620, 4
      %v6739 = vsel %vm3631, %v6734, %v6738
      %v6740 = vrot.slane %v6624, 4
      %v6741 = vsel %vm3631, %v6736, %v6740
      %v6742 = vrot.slane %v6626, 4
      %v6743 = vsel %vm3631, %v6738, %v6742
      %v6744 = vrot.slane %v6628, 4
      %v6745 = vsel %vm3631, %v6740, %v6744
      %v6746 = vrot.slane %v6630, 4
      %v6747 = vsel %vm3631, %v6742, %v6746
      %v6748 = vrot.slane %v6634, 4
      %v6749 = vsel %vm3631, %v6744, %v6748
      %v6750 = vrot.slane %v6636, 4
      %v6751 = vsel %vm3631, %v6746, %v6750
      %v6752 = vrot.slane %v6638, 4
      %v6753 = vsel %vm3631, %v6748, %v6752
      %v6754 = vrot.slane %v6640, 4
      %v6755 = vsel %vm3631, %v6750, %v6754
      %v6756 = vrot.slane %v6644, 4
      %v6757 = vsel %vm3631, %v6752, %v6756
      %v6758 = vrot.slane %v6646, 4
      %v6759 = vsel %vm3631, %v6754, %v6758
      %v6760 = vrot.slane %v6648, 4
      %v6761 = vsel %vm3631, %v6756, %v6760
      %v6762 = vrot.slane %v6650, 4
      %v6763 = vsel %vm3631, %v6758, %v6762
      %v6764 = vrot.slane %v6654, 4
      %v6765 = vsel %vm3631, %v6760, %v6764
      %v6766 = vrot.slane %v6656, 4
      %v6767 = vsel %vm3631, %v6762, %v6766
      %v6768 = vrot.slane %v6658, 4
      %v6769 = vsel %vm3631, %v6764, %v6768
      %v6770 = vrot.slane %v6660, 4
      %v6771 = vsel %vm3631, %v6766, %v6770
      %v6800 = vadd.f32 %v6662, %v6720
      %v6801 = vadd.f32 %v6663, %v6723
      %v6802 = vadd.f32 %v6664, %v6725
      %v6803 = vadd.f32 %v6665, %v6727
      %v6804 = vadd.f32 %v6666, %v6729
      %v6805 = vadd.f32 %v6667, %v6731
      %v6806 = vadd.f32 %v6668, %v6733
      %v6807 = vadd.f32 %v6669, %v6735
      %v6808 = vadd.f32 %v6670, %v6737
      %v6809 = vadd.f32 %v6671, %v6739
      %v6810 = vadd.f32 %v6672, %v6741
      %v6811 = vadd.f32 %v6673, %v6743
      %v6812 = vadd.f32 %v6674, %v6745
      %v6813 = vadd.f32 %v6675, %v6747
      %v6814 = vadd.f32 %v6676, %v6749
      %v6815 = vadd.f32 %v6677, %v6751
      %v6816 = vadd.f32 %v6678, %v6753
      %v6817 = vadd.f32 %v6679, %v6755
      %v6818 = vadd.f32 %v6680, %v6757
      %v6819 = vadd.f32 %v6681, %v6759
      %v6820 = vadd.f32 %v6682, %v6761
      %v6821 = vadd.f32 %v6683, %v6763
      %v6822 = vadd.f32 %v6684, %v6765
      %v6823 = vadd.f32 %v6685, %v6767
      %v6824 = vadd.f32 %v6686, %v6769
      %v6825 = vadd.f32 %v6687, %v6771
      %v6826 = vadd.f32 %v6688, %v6768
      %v6827 = vadd.f32 %v6689, %v6770
      %6828 = vst [vmem:[#allocation3] sm:$0xff] %v6800
      %6829 = vst.msk [vmem:[#allocation3 + $0x8] sm:$0xff] %vm5345, %v6801
      %6830 = vst [vmem:[#allocation3 + $0x10] sm:$0xff] %v6802
      %6831 = vst.msk [vmem:[#allocation3 + $0x18] sm:$0xff] %vm5345, %v6803
      %6832 = vst [vmem:[#allocation3 + $0x20] sm:$0xff] %v6804
      %6833 = vst.msk [vmem:[#allocation3 + $0x28] sm:$0xff] %vm5345, %v6805
      %6834 = vst [vmem:[#allocation3 + $0x30] sm:$0xff] %v6806
      %6835 = vst.msk [vmem:[#allocation3 + $0x38] sm:$0xff] %vm5345, %v6807
      %6836 = vst [vmem:[#allocation3 + $0x40] sm:$0xff] %v6808
      %6837 = vst.msk [vmem:[#allocation3 + $0x48] sm:$0xff] %vm5345, %v6809
      %6838 = vst [vmem:[#allocation3 + $0x50] sm:$0xff] %v6810
      %6839 = vst.msk [vmem:[#allocation3 + $0x58] sm:$0xff] %vm5345, %v6811
      %6840 = vst [vmem:[#allocation3 + $0x60] sm:$0xff] %v6812
      %6841 = vst.msk [vmem:[#allocation3 + $0x68] sm:$0xff] %vm5345, %v6813
      %6842 = vst [vmem:[#allocation3 + $0x70] sm:$0xff] %v6814
      %6843 = vst.msk [vmem:[#allocation3 + $0x78] sm:$0xff] %vm5345, %v6815
      %6844 = vst [vmem:[#allocation3 + $0x80] sm:$0xff] %v6816
      %6845 = vst.msk [vmem:[#allocation3 + $0x88] sm:$0xff] %vm5345, %v6817
      %6846 = vst [vmem:[#allocation3 + $0x90] sm:$0xff] %v6818
      %6847 = vst.msk [vmem:[#allocation3 + $0x98] sm:$0xff] %vm5345, %v6819
      %6848 = vst [vmem:[#allocation3 + $0xa0] sm:$0xff] %v6820
      %6849 = vst.msk [vmem:[#allocation3 + $0xa8] sm:$0xff] %vm5345, %v6821
      %6850 = vst [vmem:[#allocation3 + $0xb0] sm:$0xff] %v6822
      %6851 = vst.msk [vmem:[#allocation3 + $0xb8] sm:$0xff] %vm5345, %v6823
      %6852 = vst [vmem:[#allocation3 + $0xc0] sm:$0xff] %v6824
      %6853 = vst.msk [vmem:[#allocation3 + $0xc8] sm:$0xff] %vm5345, %v6825
      %6854 = vst [vmem:[#allocation3 + $0xd0] sm:$0xf] %v6826
      %vm6855 = vcmask 257024
      %6856 = vst.msk [vmem:[#allocation3 + $0xd8] sm:$0xf] %vm6855, %v6827
      %v6857 = vld [vmem:[#allocation3] sm:$0xff]
      %v6858 = vld [vmem:[#allocation3 + $0x8] sm:$0xff]
      %v6859 = vld [vmem:[#allocation3 + $0x10] sm:$0xff]
      %v6860 = vld [vmem:[#allocation3 + $0x18] sm:$0xff]
      %v6861 = vld [vmem:[#allocation3 + $0x20] sm:$0xff]
      %v6862 = vld [vmem:[#allocation3 + $0x28] sm:$0xff]
      %v6863 = vld [vmem:[#allocation3 + $0x30] sm:$0xff]
      %v6864 = vld [vmem:[#allocation3 + $0x38] sm:$0xff]
      %v6865 = vld [vmem:[#allocation3 + $0x40] sm:$0xff]
      %v6866 = vld [vmem:[#allocation3 + $0x48] sm:$0xff]
      %v6867 = vld [vmem:[#allocation3 + $0x50] sm:$0xff]
      %v6868 = vld [vmem:[#allocation3 + $0x58] sm:$0xff]
      %v6869 = vld [vmem:[#allocation3 + $0x60] sm:$0xff]
      %v6870 = vld [vmem:[#allocation3 + $0x68] sm:$0xff]
      %v6871 = vld [vmem:[#allocation3 + $0x70] sm:$0xff]
      %v6872 = vld [vmem:[#allocation3 + $0x78] sm:$0xff]
      %v6873 = vld [vmem:[#allocation3 + $0x80] sm:$0xff]
      %v6874 = vld [vmem:[#allocation3 + $0x88] sm:$0xff]
      %v6875 = vld [vmem:[#allocation3 + $0x90] sm:$0xff]
      %v6876 = vld [vmem:[#allocation3 + $0x98] sm:$0xff]
      %v6877 = vld [vmem:[#allocation3 + $0xa0] sm:$0xff]
      %v6878 = vld [vmem:[#allocation3 + $0xa8] sm:$0xff]
      %v6879 = vld [vmem:[#allocation3 + $0xb0] sm:$0xff]
      %v6880 = vld [vmem:[#allocation3 + $0xb8] sm:$0xff]
      %v6881 = vld [vmem:[#allocation3 + $0xc0] sm:$0xff]
      %v6882 = vld [vmem:[#allocation3 + $0xc8] sm:$0xff]
      %v6883 = vld [vmem:[#allocation3 + $0xd0] sm:$0xff]
      %v6884 = vld [vmem:[#allocation3 + $0xd8] sm:$0xff]
      %v6885 = vld [vmem:[%s8] sm:$0x3]
      %v6887 = vlaneseq
      %v6888 = vshrl.u32 %v6887, 7
      %v6889 = vsub.s32 0, %v6888
      %v6890 = vrot.slane %v6885, %v6889
      %v6891 = vlaneseq
      %v6892 = vshrl.u32 %v6891, 7
      %v6893 = vsub.s32 1, %v6892
      %v6894 = vrot.slane %v6885, %v6893
      %v6897 = vadd.f32 %v6857, %v6890
      %v6898 = vadd.f32 %v6858, %v6894
      %v6899 = vadd.f32 %v6859, %v6890
      %v6900 = vadd.f32 %v6860, %v6894
      %v6901 = vadd.f32 %v6861, %v6890
      %v6902 = vadd.f32 %v6862, %v6894
      %v6903 = vadd.f32 %v6863, %v6890
      %v6904 = vadd.f32 %v6864, %v6894
      %v6905 = vadd.f32 %v6865, %v6890
      %v6906 = vadd.f32 %v6866, %v6894
      %v6907 = vadd.f32 %v6867, %v6890
      %v6908 = vadd.f32 %v6868, %v6894
      %v6909 = vadd.f32 %v6869, %v6890
      %v6910 = vadd.f32 %v6870, %v6894
      %v6911 = vadd.f32 %v6871, %v6890
      %v6912 = vadd.f32 %v6872, %v6894
      %v6913 = vadd.f32 %v6873, %v6890
      %v6914 = vadd.f32 %v6874, %v6894
      %v6915 = vadd.f32 %v6875, %v6890
      %v6916 = vadd.f32 %v6876, %v6894
      %v6917 = vadd.f32 %v6877, %v6890
      %v6918 = vadd.f32 %v6878, %v6894
      %v6919 = vadd.f32 %v6879, %v6890
      %v6920 = vadd.f32 %v6880, %v6894
      %v6921 = vadd.f32 %v6881, %v6890
      %v6922 = vadd.f32 %v6882, %v6894
      %v6923 = vadd.f32 %v6883, %v6890
      %v6924 = vadd.f32 %v6884, %v6894
      %v6925 = vmax.f32 %v6897, 0.0
      %v6926 = vmax.f32 %v6898, 0.0
      %v6927 = vmax.f32 %v6899, 0.0
      %v6928 = vmax.f32 %v6900, 0.0
      %v6929 = vmax.f32 %v6901, 0.0
      %v6930 = vmax.f32 %v6902, 0.0
      %v6931 = vmax.f32 %v6903, 0.0
      %v6932 = vmax.f32 %v6904, 0.0
      %v6933 = vmax.f32 %v6905, 0.0
      %v6934 = vmax.f32 %v6906, 0.0
      %v6935 = vmax.f32 %v6907, 0.0
      %v6936 = vmax.f32 %v6908, 0.0
      %v6937 = vmax.f32 %v6909, 0.0
      %v6938 = vmax.f32 %v6910, 0.0
      %v6939 = vmax.f32 %v6911, 0.0
      %v6940 = vmax.f32 %v6912, 0.0
      %v6941 = vmax.f32 %v6913, 0.0
      %v6942 = vmax.f32 %v6914, 0.0
      %v6943 = vmax.f32 %v6915, 0.0
      %v6944 = vmax.f32 %v6916, 0.0
      %v6945 = vmax.f32 %v6917, 0.0
      %v6946 = vmax.f32 %v6918, 0.0
      %v6947 = vmax.f32 %v6919, 0.0
      %v6948 = vmax.f32 %v6920, 0.0
      %v6949 = vmax.f32 %v6921, 0.0
      %v6950 = vmax.f32 %v6922, 0.0
      %v6951 = vmax.f32 %v6923, 0.0
      %v6952 = vmax.f32 %v6924, 0.0
      %v6953 = vpack.c.bf16 %v6927, %v6925
      %v6954 = vpack.c.bf16 %v6928, %v6926
      %v6955 = vpack.c.bf16 %v6931, %v6929
      %v6956 = vpack.c.bf16 %v6932, %v6930
      %v6957 = vpack.c.bf16 %v6935, %v6933
      %v6958 = vpack.c.bf16 %v6936, %v6934
      %v6959 = vpack.c.bf16 %v6939, %v6937
      %v6960 = vpack.c.bf16 %v6940, %v6938
      %v6961 = vpack.c.bf16 %v6943, %v6941
      %v6962 = vpack.c.bf16 %v6944, %v6942
      %v6963 = vpack.c.bf16 %v6947, %v6945
      %v6964 = vpack.c.bf16 %v6948, %v6946
      %v6965 = vpack.c.bf16 %v6951, %v6949
      %v6966 = vpack.c.bf16 %v6952, %v6950
      %v6967 = vld [vmem:[%s9] sm:$0xf]
      %v6968 = vld [vmem:[%s9 + $0x4] sm:$0xf]
      %v6969 = vld [vmem:[%s9 + $0x8] sm:$0xf]
      %v6970 = vld [vmem:[%s9 + $0xc] sm:$0xf]
      %v6971 = vld [vmem:[%s9 + $0x10] sm:$0xf]
      %v6972 = vld [vmem:[%s9 + $0x14] sm:$0xf]
      %v6973 = vld [vmem:[%s9 + $0x18] sm:$0xf]
      %v6974 = vld [vmem:[%s9 + $0x1c] sm:$0xf]
      %v6975 = vld [vmem:[%s9 + $0x20] sm:$0xf]
      %v6976 = vld [vmem:[%s9 + $0x24] sm:$0xf]
      %v6977 = vld [vmem:[%s9 + $0x28] sm:$0xf]
      %v6978 = vld [vmem:[%s9 + $0x2c] sm:$0xf]
      %v6979 = vld [vmem:[%s9 + $0x30] sm:$0xf]
      %v6980 = vld [vmem:[%s9 + $0x34] sm:$0xf]
      %v6981 = vld [vmem:[%s9 + $0x38] sm:$0xf]
      %v6982 = vld [vmem:[%s9 + $0x3c] sm:$0xf]
      %v6983 = vld [vmem:[%s9 + $0x40] sm:$0xf]
      %v6984 = vld [vmem:[%s9 + $0x44] sm:$0xf]
      %v6985 = vld [vmem:[%s9 + $0x48] sm:$0xf]
      %v6986 = vld [vmem:[%s9 + $0x4c] sm:$0xf]
      %v7007 = vunpack.c.l.b16 %v6967
      %v7008 = vunpack.c.l.b16 %v6968
      %v7009 = vunpack.c.l.b16 %v6969
      %v7010 = vunpack.c.l.b16 %v6970
      %v7011 = vunpack.c.l.b16 %v6971
      %v7012 = vunpack.c.l.b16 %v6972
      %v7013 = vunpack.c.l.b16 %v6973
      %v7014 = vunpack.c.l.b16 %v6974
      %v7015 = vunpack.c.l.b16 %v6975
      %v7016 = vunpack.c.l.b16 %v6976
      %v7017 = vunpack.c.l.b16 %v6977
      %v7018 = vunpack.c.l.b16 %v6978
      %v7019 = vunpack.c.l.b16 %v6979
      %v7020 = vunpack.c.l.b16 %v6980
      %v7021 = vunpack.c.l.b16 %v6981
      %v7022 = vunpack.c.l.b16 %v6982
      %v7023 = vunpack.c.l.b16 %v6983
      %v7024 = vunpack.c.l.b16 %v6984
      %v7025 = vunpack.c.l.b16 %v6985
      %v7026 = vunpack.c.l.b16 %v6986
      %v7027 = vpack.c.b16 %v7008, %v7007
      %v7028 = vpack.c.b16 %v7010, %v7009
      %v7029 = vpack.c.b16 %v7012, %v7011
      %v7030 = vpack.c.b16 %v7014, %v7013
      %v7031 = vpack.c.b16 %v7016, %v7015
      %v7032 = vpack.c.b16 %v7018, %v7017
      %v7033 = vpack.c.b16 %v7020, %v7019
      %v7034 = vpack.c.b16 %v7022, %v7021
      %v7035 = vpack.c.b16 %v7024, %v7023
      %v7036 = vpack.c.b16 %v7026, %v7025
      %v7048 = vsel %vm5345, %v6954, 0
      %v7051 = vsel %vm5345, %v6956, 0
      %v7054 = vsel %vm5345, %v6958, 0
      %v7057 = vsel %vm5345, %v6960, 0
      %v7060 = vsel %vm5345, %v6962, 0
      %v7063 = vsel %vm5345, %v6964, 0
      %v7066 = vsel %vm5345, %v6966, 0
      %7068 = vmatprep.subr.bf16.mxu0 0
      %7069 = vmatpush1.bf16.msra.mxu0 %v7027
      %7070 = vmatprep.subr.bf16.mxu0 0
      %7071 = vmatpush1.bf16.msra.mxu0 %v7028
      %7072 = vmatprep.subr.bf16.mxu0 0
      %7073 = vmatpush1.bf16.msra.mxu0 %v7029
      %7074 = vmatprep.subr.bf16.mxu0 0
      %7075 = vmatpush1.bf16.msra.mxu0 %v7030
      %7076 = vmatprep.subr.bf16.mxu0 0
      %7077 = vmatpush1.bf16.msra.mxu0 %v7031
      %7078 = vmatprep.subr.bf16.mxu0 0
      %7079 = vmatpush1.bf16.msra.mxu0 %v7032
      %7080 = vmatprep.subr.bf16.mxu0 0
      %7081 = vmatpush1.bf16.msra.mxu0 %v7033
      %7082 = vmatprep.subr.bf16.mxu0 0
      %7083 = vmatpush1.bf16.msra.mxu0 %v7034
      %7084 = vmatprep.subr.bf16.mxu0 0
      %7085 = vmatpush1.bf16.msra.mxu0 %v7035
      %7086 = vmatprep.subr.bf16.mxu0 0
      %7087 = vmatpush1.bf16.msra.mxu0 %v7036
      %7088 = vmatprep.subr.bf16.mxu0 0
      %7089 = vmatpush1.bf16.msra.mxu0 0
      %7090 = vmatprep.subr.bf16.mxu0 0
      %7091 = vmatpush1.bf16.msra.mxu0 0
      %7092 = vmatprep.subr.bf16.mxu0 0
      %7093 = vmatpush1.bf16.msra.mxu0 0
      %7094 = vmatprep.subr.bf16.mxu0 0
      %7095 = vmatpush1.bf16.msra.mxu0 0
      %7096 = vmatprep.subr.bf16.mxu0 0
      %7097 = vmatpush1.bf16.msra.mxu0 0
      %7098 = vmatprep.subr.bf16.mxu0 0
      %7099 = vmatpush1.bf16.msra.mxu0 0
      %7100 = vmatprep.mubr.bf16.mxu0 %v7048
      %7101 = vmatmul.mubr.bf16.gmra.mrb[0].mxu0 %v6953
      %v7102 = vpop.f32.mrb[0].mxu0
      %v7103 = vadd.f32 0.0, %v7102
      %v7104 = vpop.f32.mrb[0].mxu0
      %v7105 = vpop.f32.mrb[0].mxu0
      %v7106 = vadd.f32 0.0, %v7105
      %v7107 = vpop.f32.mrb[0].mxu0
      %7108 = vmatprep.mubr.bf16.mxu0 %v7051
      %7109 = vmatmul.mubr.bf16.gmra.mrb[0].mxu0 %v6955
      %v7110 = vpop.f32.mrb[0].mxu0
      %v7111 = vadd.f32 0.0, %v7110
      %v7112 = vpop.f32.mrb[0].mxu0
      %v7113 = vpop.f32.mrb[0].mxu0
      %v7114 = vadd.f32 0.0, %v7113
      %v7115 = vpop.f32.mrb[0].mxu0
      %7116 = vmatprep.mubr.bf16.mxu0 %v7054
      %7117 = vmatmul.mubr.bf16.gmra.mrb[0].mxu0 %v6957
      %v7118 = vpop.f32.mrb[0].mxu0
      %v7119 = vadd.f32 0.0, %v7118
      %v7120 = vpop.f32.mrb[0].mxu0
      %v7121 = vpop.f32.mrb[0].mxu0
      %v7122 = vadd.f32 0.0, %v7121
      %v7123 = vpop.f32.mrb[0].mxu0
      %7124 = vmatprep.mubr.bf16.mxu0 %v7057
      %7125 = vmatmul.mubr.bf16.gmra.mrb[0].mxu0 %v6959
      %v7126 = vpop.f32.mrb[0].mxu0
      %v7127 = vadd.f32 0.0, %v7126
      %v7128 = vpop.f32.mrb[0].mxu0
      %v7129 = vpop.f32.mrb[0].mxu0
      %v7130 = vadd.f32 0.0, %v7129
      %v7131 = vpop.f32.mrb[0].mxu0
      %7132 = vmatprep.mubr.bf16.mxu0 %v7060
      %7133 = vmatmul.mubr.bf16.gmra.mrb[0].mxu0 %v6961
      %v7134 = vpop.f32.mrb[0].mxu0
      %v7135 = vadd.f32 0.0, %v7134
      %v7136 = vpop.f32.mrb[0].mxu0
      %v7137 = vpop.f32.mrb[0].mxu0
      %v7138 = vadd.f32 0.0, %v7137
      %v7139 = vpop.f32.mrb[0].mxu0
      %7140 = vmatprep.mubr.bf16.mxu0 %v7063
      %7141 = vmatmul.mubr.bf16.gmra.mrb[0].mxu0 %v6963
      %v7142 = vpop.f32.mrb[0].mxu0
      %v7143 = vadd.f32 0.0, %v7142
      %v7144 = vpop.f32.mrb[0].mxu0
      %v7145 = vpop.f32.mrb[0].mxu0
      %v7146 = vadd.f32 0.0, %v7145
      %v7147 = vpop.f32.mrb[0].mxu0
      %7148 = vmatprep.mubr.bf16.mxu0 %v7066
      %7149 = vmatmul.mubr.bf16.gmra.mrb[0].mxu0 %v6965
      %v7150 = vpop.f32.mrb[0].mxu0
      %v7151 = vadd.f32 0.0, %v7150
      %v7152 = vpop.f32.mrb[0].mxu0
      %v7153 = vpop.f32.mrb[0].mxu0
      %v7154 = vadd.f32 0.0, %v7153
      %v7155 = vpop.f32.mrb[0].mxu0
      %7156 = vdwg.mxu0
      %v7157 = vld [vmem:[%s10] sm:$0xf]
      %v7158 = vld [vmem:[%s10 + $0x4] sm:$0xf]
      %v7159 = vld [vmem:[%s10 + $0x8] sm:$0xf]
      %v7160 = vld [vmem:[%s10 + $0xc] sm:$0xf]
      %v7161 = vld [vmem:[%s10 + $0x10] sm:$0xf]
      %v7162 = vld [vmem:[%s10 + $0x14] sm:$0xf]
      %v7163 = vld [vmem:[%s10 + $0x18] sm:$0xf]
      %v7164 = vld [vmem:[%s10 + $0x1c] sm:$0xf]
      %v7165 = vld [vmem:[%s10 + $0x20] sm:$0xf]
      %v7166 = vld [vmem:[%s10 + $0x24] sm:$0xf]
      %v7167 = vld [vmem:[%s10 + $0x28] sm:$0xf]
      %v7168 = vld [vmem:[%s10 + $0x2c] sm:$0xf]
      %v7169 = vld [vmem:[%s10 + $0x30] sm:$0xf]
      %v7170 = vld [vmem:[%s10 + $0x34] sm:$0xf]
      %v7171 = vld [vmem:[%s10 + $0x38] sm:$0xf]
      %v7172 = vld [vmem:[%s10 + $0x3c] sm:$0xf]
      %v7173 = vld [vmem:[%s10 + $0x40] sm:$0xf]
      %v7174 = vld [vmem:[%s10 + $0x44] sm:$0xf]
      %v7175 = vld [vmem:[%s10 + $0x48] sm:$0xf]
      %v7176 = vld [vmem:[%s10 + $0x4c] sm:$0xf]
      %v7197 = vunpack.c.l.b16 %v7157
      %v7198 = vunpack.c.l.b16 %v7158
      %v7199 = vunpack.c.l.b16 %v7159
      %v7200 = vunpack.c.l.b16 %v7160
      %v7201 = vunpack.c.l.b16 %v7161
      %v7202 = vunpack.c.l.b16 %v7162
      %v7203 = vunpack.c.l.b16 %v7163
      %v7204 = vunpack.c.l.b16 %v7164
      %v7205 = vunpack.c.l.b16 %v7165
      %v7206 = vunpack.c.l.b16 %v7166
      %v7207 = vunpack.c.l.b16 %v7167
      %v7208 = vunpack.c.l.b16 %v7168
      %v7209 = vunpack.c.l.b16 %v7169
      %v7210 = vunpack.c.l.b16 %v7170
      %v7211 = vunpack.c.l.b16 %v7171
      %v7212 = vunpack.c.l.b16 %v7172
      %v7213 = vunpack.c.l.b16 %v7173
      %v7214 = vunpack.c.l.b16 %v7174
      %v7215 = vunpack.c.l.b16 %v7175
      %v7216 = vunpack.c.l.b16 %v7176
      %v7217 = vpack.c.b16 %v7198, %v7197
      %v7218 = vpack.c.b16 %v7200, %v7199
      %v7219 = vpack.c.b16 %v7202, %v7201
      %v7220 = vpack.c.b16 %v7204, %v7203
      %v7221 = vpack.c.b16 %v7206, %v7205
      %v7222 = vpack.c.b16 %v7208, %v7207
      %v7223 = vpack.c.b16 %v7210, %v7209
      %v7224 = vpack.c.b16 %v7212, %v7211
      %v7225 = vpack.c.b16 %v7214, %v7213
      %v7226 = vpack.c.b16 %v7216, %v7215
      %7237 = vmatprep.subr.bf16.mxu0 0
      %7238 = vmatpush1.bf16.msra.mxu0 %v7217
      %7239 = vmatprep.subr.bf16.mxu0 0
      %7240 = vmatpush1.bf16.msra.mxu0 %v7218
      %7241 = vmatprep.subr.bf16.mxu0 0
      %7242 = vmatpush1.bf16.msra.mxu0 %v7219
      %7243 = vmatprep.subr.bf16.mxu0 0
      %7244 = vmatpush1.bf16.msra.mxu0 %v7220
      %7245 = vmatprep.subr.bf16.mxu0 0
      %7246 = vmatpush1.bf16.msra.mxu0 %v7221
      %7247 = vmatprep.subr.bf16.mxu0 0
      %7248 = vmatpush1.bf16.msra.mxu0 %v7222
      %7249 = vmatprep.subr.bf16.mxu0 0
      %7250 = vmatpush1.bf16.msra.mxu0 %v7223
      %7251 = vmatprep.subr.bf16.mxu0 0
      %7252 = vmatpush1.bf16.msra.mxu0 %v7224
      %7253 = vmatprep.subr.bf16.mxu0 0
      %7254 = vmatpush1.bf16.msra.mxu0 %v7225
      %7255 = vmatprep.subr.bf16.mxu0 0
      %7256 = vmatpush1.bf16.msra.mxu0 %v7226
      %7257 = vmatprep.subr.bf16.mxu0 0
      %7258 = vmatpush1.bf16.msra.mxu0 0
      %7259 = vmatprep.subr.bf16.mxu0 0
      %7260 = vmatpush1.bf16.msra.mxu0 0
      %7261 = vmatprep.subr.bf16.mxu0 0
      %7262 = vmatpush1.bf16.msra.mxu0 0
      %7263 = vmatprep.subr.bf16.mxu0 0
      %7264 = vmatpush1.bf16.msra.mxu0 0
      %7265 = vmatprep.subr.bf16.mxu0 0
      %7266 = vmatpush1.bf16.msra.mxu0 0
      %7267 = vmatprep.subr.bf16.mxu0 0
      %7268 = vmatpush1.bf16.msra.mxu0 0
      %7269 = vmatprep.mubr.bf16.mxu0 %v7048
      %7270 = vmatmul.mubr.bf16.gmra.mrb[0].mxu0 %v6953
      %v7271 = vpop.f32.mrb[0].mxu0
      %v7272 = vadd.f32 0.0, %v7271
      %v7273 = vpop.f32.mrb[0].mxu0
      %v7274 = vpop.f32.mrb[0].mxu0
      %v7275 = vadd.f32 0.0, %v7274
      %v7276 = vpop.f32.mrb[0].mxu0
      %7277 = vmatprep.mubr.bf16.mxu0 %v7051
      %7278 = vmatmul.mubr.bf16.gmra.mrb[0].mxu0 %v6955
      %v7279 = vpop.f32.mrb[0].mxu0
      %v7280 = vadd.f32 0.0, %v7279
      %v7281 = vpop.f32.mrb[0].mxu0
      %v7282 = vpop.f32.mrb[0].mxu0
      %v7283 = vadd.f32 0.0, %v7282
      %v7284 = vpop.f32.mrb[0].mxu0
      %7285 = vmatprep.mubr.bf16.mxu0 %v7054
      %7286 = vmatmul.mubr.bf16.gmra.mrb[0].mxu0 %v6957
      %v7287 = vpop.f32.mrb[0].mxu0
      %v7288 = vadd.f32 0.0, %v7287
      %v7289 = vpop.f32.mrb[0].mxu0
      %v7290 = vpop.f32.mrb[0].mxu0
      %v7291 = vadd.f32 0.0, %v7290
      %v7292 = vpop.f32.mrb[0].mxu0
      %7293 = vmatprep.mubr.bf16.mxu0 %v7057
      %7294 = vmatmul.mubr.bf16.gmra.mrb[0].mxu0 %v6959
      %v7295 = vpop.f32.mrb[0].mxu0
      %v7296 = vadd.f32 0.0, %v7295
      %v7297 = vpop.f32.mrb[0].mxu0
      %v7298 = vpop.f32.mrb[0].mxu0
      %v7299 = vadd.f32 0.0, %v7298
      %v7300 = vpop.f32.mrb[0].mxu0
      %7301 = vmatprep.mubr.bf16.mxu0 %v7060
      %7302 = vmatmul.mubr.bf16.gmra.mrb[0].mxu0 %v6961
      %v7303 = vpop.f32.mrb[0].mxu0
      %v7304 = vadd.f32 0.0, %v7303
      %v7305 = vpop.f32.mrb[0].mxu0
      %v7306 = vpop.f32.mrb[0].mxu0
      %v7307 = vadd.f32 0.0, %v7306
      %v7308 = vpop.f32.mrb[0].mxu0
      %7309 = vmatprep.mubr.bf16.mxu0 %v7063
      %7310 = vmatmul.mubr.bf16.gmra.mrb[0].mxu0 %v6963
      %v7311 = vpop.f32.mrb[0].mxu0
      %v7312 = vadd.f32 0.0, %v7311
      %v7313 = vpop.f32.mrb[0].mxu0
      %v7314 = vpop.f32.mrb[0].mxu0
      %v7315 = vadd.f32 0.0, %v7314
      %v7316 = vpop.f32.mrb[0].mxu0
      %7317 = vmatprep.mubr.bf16.mxu0 %v7066
      %7318 = vmatmul.mubr.bf16.gmra.mrb[0].mxu0 %v6965
      %v7319 = vpop.f32.mrb[0].mxu0
      %v7320 = vadd.f32 0.0, %v7319
      %v7321 = vpop.f32.mrb[0].mxu0
      %v7322 = vpop.f32.mrb[0].mxu0
      %v7323 = vadd.f32 0.0, %v7322
      %v7324 = vpop.f32.mrb[0].mxu0
      %7325 = vdwg.mxu0
      %v7326 = vmax.f32 %v7103, %v7272
      %v7327 = vmax.f32 %v7106, %v7275
      %v7328 = vmax.f32 %v7111, %v7280
      %v7329 = vmax.f32 %v7114, %v7283
      %v7330 = vmax.f32 %v7119, %v7288
      %v7331 = vmax.f32 %v7122, %v7291
      %v7332 = vmax.f32 %v7127, %v7296
      %v7333 = vmax.f32 %v7130, %v7299
      %v7334 = vmax.f32 %v7135, %v7304
      %v7335 = vmax.f32 %v7138, %v7307
      %v7336 = vmax.f32 %v7143, %v7312
      %v7337 = vmax.f32 %v7146, %v7315
      %v7338 = vmax.f32 %v7151, %v7320
      %v7339 = vmax.f32 %v7154, %v7323
      %v7340 = vpack.c.bf16 %v7327, %v7326
      %v7341 = vpack.c.bf16 %v7329, %v7328
      %v7342 = vpack.c.bf16 %v7331, %v7330
      %v7343 = vpack.c.bf16 %v7333, %v7332
      %v7344 = vpack.c.bf16 %v7335, %v7334
      %v7345 = vpack.c.bf16 %v7337, %v7336
      %v7346 = vpack.c.bf16 %v7339, %v7338
      %v7347 = vld [vmem:[%s11] sm:$0xf]
      %v7348 = vld [vmem:[%s11 + $0x4] sm:$0xf]
      %v7349 = vld [vmem:[%s11 + $0x8] sm:$0xf]
      %v7350 = vld [vmem:[%s11 + $0xc] sm:$0xf]
      %v7351 = vld [vmem:[%s11 + $0x10] sm:$0xf]
      %v7357 = vunpack.c.l.b16 %v7347
      %v7358 = vunpack.c.l.b16 %v7348
      %v7359 = vunpack.c.l.b16 %v7349
      %v7360 = vunpack.c.l.b16 %v7350
      %v7361 = vunpack.c.l.b16 %v7351
      %v7362 = vpack.c.b16 %v7358, %v7357
      %v7363 = vpack.c.b16 %v7360, %v7359
      %v7364 = vpack.c.b16 %v7361, %v7361
      %vm7365 = vcmask 916480
      %v7367 = vsel %vm7365, %v7362, 0
      %v7370 = vsel %vm7365, %v7363, 0
      %v7373 = vsel %vm7365, %v7364, 0
      %7375 = vmatprep.subr.bf16.mxu0 0
      %7376 = vmatpush1.bf16.msra.mxu0 %v7340
      %7377 = vmatprep.subr.bf16.mxu0 0
      %7378 = vmatpush1.bf16.msra.mxu0 %v7341
      %7379 = vmatprep.subr.bf16.mxu0 0
      %7380 = vmatpush1.bf16.msra.mxu0 %v7342
      %7381 = vmatprep.subr.bf16.mxu0 0
      %7382 = vmatpush1.bf16.msra.mxu0 %v7343
      %7383 = vmatprep.subr.bf16.mxu0 0
      %7384 = vmatpush1.bf16.msra.mxu0 %v7344
      %7385 = vmatprep.subr.bf16.mxu0 0
      %7386 = vmatpush1.bf16.msra.mxu0 %v7345
      %7387 = vmatprep.subr.bf16.mxu0 0
      %7388 = vmatpush1.bf16.msra.mxu0 %v7346
      %7389 = vmatprep.subr.bf16.mxu0 0
      %7390 = vmatpush1.bf16.msra.mxu0 0
      %7391 = vmatprep.subr.bf16.mxu0 0
      %7392 = vmatpush1.bf16.msra.mxu0 0
      %7393 = vmatprep.subr.bf16.mxu0 0
      %7394 = vmatpush1.bf16.msra.mxu0 0
      %7395 = vmatprep.subr.bf16.mxu0 0
      %7396 = vmatpush1.bf16.msra.mxu0 0
      %7397 = vmatprep.subr.bf16.mxu0 0
      %7398 = vmatpush1.bf16.msra.mxu0 0
      %7399 = vmatprep.subr.bf16.mxu0 0
      %7400 = vmatpush1.bf16.msra.mxu0 0
      %7401 = vmatprep.subr.bf16.mxu0 0
      %7402 = vmatpush1.bf16.msra.mxu0 0
      %7403 = vmatprep.subr.bf16.mxu0 0
      %7404 = vmatpush1.bf16.msra.mxu0 0
      %7405 = vmatprep.subr.bf16.mxu0 0
      %7406 = vmatpush1.bf16.msra.mxu0 0
      %7407 = vmatprep.mubr.bf16.mxu0 0
      %7408 = vmatmul.mubr.bf16.gmra.mrb[0].mxu0 %v7367
      %v7409 = vpop.f32.mrb[0].mxu0
      %v7410 = vadd.f32 0.0, %v7409
      %v7411 = vpop.f32.mrb[0].mxu0
      %v7412 = vpop.f32.mrb[0].mxu0
      %v7413 = vadd.f32 0.0, %v7412
      %v7414 = vpop.f32.mrb[0].mxu0
      %7415 = vmatprep.mubr.bf16.mxu0 0
      %7416 = vmatmul.mubr.bf16.gmra.mrb[0].mxu0 %v7370
      %v7417 = vpop.f32.mrb[0].mxu0
      %v7418 = vadd.f32 0.0, %v7417
      %v7419 = vpop.f32.mrb[0].mxu0
      %v7420 = vpop.f32.mrb[0].mxu0
      %v7421 = vadd.f32 0.0, %v7420
      %v7422 = vpop.f32.mrb[0].mxu0
      %7423 = vmatprep.mubr.bf16.mxu0 0
      %7424 = vmatmul.mubr.bf16.gmra.mrb[0].mxu0 %v7373
      %v7425 = vpop.f32.mrb[0].mxu0
      %v7426 = vadd.f32 0.0, %v7425
      %v7427 = vpop.f32.mrb[0].mxu0
      %v7428 = vpop.f32.mrb[0].mxu0
      %v7429 = vpop.f32.mrb[0].mxu0
      %7430 = vdwg.mxu0
      %v7431 = vld [vmem:[%s12] sm:$0xf]
      %v7432 = vld [vmem:[%s12 + $0x4] sm:$0xf]
      %v7433 = vld [vmem:[%s12 + $0x8] sm:$0xf]
      %v7434 = vld [vmem:[%s12 + $0xc] sm:$0xf]
      %v7435 = vld [vmem:[%s12 + $0x10] sm:$0xf]
      %v7441 = vunpack.c.l.b16 %v7431
      %v7442 = vunpack.c.l.b16 %v7432
      %v7443 = vunpack.c.l.b16 %v7433
      %v7444 = vunpack.c.l.b16 %v7434
      %v7445 = vunpack.c.l.b16 %v7435
      %v7446 = vpack.c.b16 %v7442, %v7441
      %v7447 = vpack.c.b16 %v7444, %v7443
      %v7448 = vpack.c.b16 %v7445, %v7445
      %v7450 = vsel %vm7365, %v7446, 0
      %v7453 = vsel %vm7365, %v7447, 0
      %v7456 = vsel %vm7365, %v7448, 0
      %7458 = vmatprep.subr.bf16.mxu0 0
      %7459 = vmatpush1.bf16.msra.mxu0 %v7340
      %7460 = vmatprep.subr.bf16.mxu0 0
      %7461 = vmatpush1.bf16.msra.mxu0 %v7341
      %7462 = vmatprep.subr.bf16.mxu0 0
      %7463 = vmatpush1.bf16.msra.mxu0 %v7342
      %7464 = vmatprep.subr.bf16.mxu0 0
      %7465 = vmatpush1.bf16.msra.mxu0 %v7343
      %7466 = vmatprep.subr.bf16.mxu0 0
      %7467 = vmatpush1.bf16.msra.mxu0 %v7344
      %7468 = vmatprep.subr.bf16.mxu0 0
      %7469 = vmatpush1.bf16.msra.mxu0 %v7345
      %7470 = vmatprep.subr.bf16.mxu0 0
      %7471 = vmatpush1.bf16.msra.mxu0 %v7346
      %7472 = vmatprep.subr.bf16.mxu0 0
      %7473 = vmatpush1.bf16.msra.mxu0 0
      %7474 = vmatprep.subr.bf16.mxu0 0
      %7475 = vmatpush1.bf16.msra.mxu0 0
      %7476 = vmatprep.subr.bf16.mxu0 0
      %7477 = vmatpush1.bf16.msra.mxu0 0
      %7478 = vmatprep.subr.bf16.mxu0 0
      %7479 = vmatpush1.bf16.msra.mxu0 0
      %7480 = vmatprep.subr.bf16.mxu0 0
      %7481 = vmatpush1.bf16.msra.mxu0 0
      %7482 = vmatprep.subr.bf16.mxu0 0
      %7483 = vmatpush1.bf16.msra.mxu0 0
      %7484 = vmatprep.subr.bf16.mxu0 0
      %7485 = vmatpush1.bf16.msra.mxu0 0
      %7486 = vmatprep.subr.bf16.mxu0 0
      %7487 = vmatpush1.bf16.msra.mxu0 0
      %7488 = vmatprep.subr.bf16.mxu0 0
      %7489 = vmatpush1.bf16.msra.mxu0 0
      %7490 = vmatprep.mubr.bf16.mxu0 0
      %7491 = vmatmul.mubr.bf16.gmra.mrb[0].mxu0 %v7450
      %v7492 = vpop.f32.mrb[0].mxu0
      %v7493 = vadd.f32 0.0, %v7492
      %v7494 = vpop.f32.mrb[0].mxu0
      %v7495 = vpop.f32.mrb[0].mxu0
      %v7496 = vadd.f32 0.0, %v7495
      %v7497 = vpop.f32.mrb[0].mxu0
      %7498 = vmatprep.mubr.bf16.mxu0 0
      %7499 = vmatmul.mubr.bf16.gmra.mrb[0].mxu0 %v7453
      %v7500 = vpop.f32.mrb[0].mxu0
      %v7501 = vadd.f32 0.0, %v7500
      %v7502 = vpop.f32.mrb[0].mxu0
      %v7503 = vpop.f32.mrb[0].mxu0
      %v7504 = vadd.f32 0.0, %v7503
      %v7505 = vpop.f32.mrb[0].mxu0
      %7506 = vmatprep.mubr.bf16.mxu0 0
      %7507 = vmatmul.mubr.bf16.gmra.mrb[0].mxu0 %v7456
      %v7508 = vpop.f32.mrb[0].mxu0
      %v7509 = vadd.f32 0.0, %v7508
      %v7510 = vpop.f32.mrb[0].mxu0
      %v7511 = vpop.f32.mrb[0].mxu0
      %v7512 = vpop.f32.mrb[0].mxu0
      %7513 = vdwg.mxu0
      %v7514 = vmax.f32 %v7410, %v7493
      %v7515 = vmax.f32 %v7413, %v7496
      %v7516 = vmax.f32 %v7418, %v7501
      %v7517 = vmax.f32 %v7421, %v7504
      %v7518 = vmax.f32 %v7426, %v7509
      %v7519 = vpack.c.bf16 %v7514, %v7514
      %v7520 = vld [vmem:[%s13] sm:$0xf]
      %v7521 = vld [vmem:[%s13 + $0x4] sm:$0xf]
      %v7522 = vld [vmem:[%s13 + $0x8] sm:$0xf]
      %v7523 = vld [vmem:[%s13 + $0xc] sm:$0xf]
      %v7524 = vld [vmem:[%s13 + $0x10] sm:$0xf]
      %v7525 = vld [vmem:[%s13 + $0x14] sm:$0xf]
      %v7526 = vld [vmem:[%s13 + $0x18] sm:$0xf]
      %v7527 = vld [vmem:[%s13 + $0x1c] sm:$0xf]
      %v7528 = vld [vmem:[%s13 + $0x20] sm:$0xf]
      %v7529 = vld [vmem:[%s13 + $0x24] sm:$0xf]
      %v7530 = vpack.c.bf16 %v7515, %v7515
      %s7531 = scalar_lea.vmem %s13, 40
      %v7532 = vld [vmem:[%s7531] sm:$0xf]
      %v7533 = vld [vmem:[%s7531 + $0x4] sm:$0xf]
      %v7534 = vld [vmem:[%s7531 + $0x8] sm:$0xf]
      %v7535 = vld [vmem:[%s7531 + $0xc] sm:$0xf]
      %v7536 = vld [vmem:[%s7531 + $0x10] sm:$0xf]
      %v7537 = vld [vmem:[%s7531 + $0x14] sm:$0xf]
      %v7538 = vld [vmem:[%s7531 + $0x18] sm:$0xf]
      %v7539 = vld [vmem:[%s7531 + $0x1c] sm:$0xf]
      %v7540 = vld [vmem:[%s7531 + $0x20] sm:$0xf]
      %v7541 = vld [vmem:[%s7531 + $0x24] sm:$0xf]
      %v7552 = vunpack.c.l.b16 %v7532
      %v7553 = vunpack.c.l.b16 %v7533
      %v7554 = vunpack.c.l.b16 %v7534
      %v7555 = vunpack.c.l.b16 %v7535
      %v7556 = vunpack.c.l.b16 %v7536
      %v7557 = vunpack.c.l.b16 %v7537
      %v7558 = vunpack.c.l.b16 %v7538
      %v7559 = vunpack.c.l.b16 %v7539
      %v7560 = vunpack.c.l.b16 %v7540
      %v7561 = vunpack.c.l.b16 %v7541
      %v7562 = vpack.c.b16 %v7553, %v7552
      %v7563 = vpack.c.b16 %v7555, %v7554
      %v7564 = vpack.c.b16 %v7557, %v7556
      %v7565 = vpack.c.b16 %v7559, %v7558
      %v7566 = vpack.c.b16 %v7561, %v7560
      %vm7572 = vcmask 654336
      %v7574 = vsel %vm7572, %v7530, 0
      %7576 = vmatprep.subr.bf16.mxu0 0
      %7577 = vmatpush1.bf16.msra.mxu0 %v7562
      %7578 = vmatprep.subr.bf16.mxu0 0
      %7579 = vmatpush1.bf16.msra.mxu0 %v7563
      %7580 = vmatprep.subr.bf16.mxu0 0
      %7581 = vmatpush1.bf16.msra.mxu0 %v7564
      %7582 = vmatprep.subr.bf16.mxu0 0
      %7583 = vmatpush1.bf16.msra.mxu0 %v7565
      %7584 = vmatprep.subr.bf16.mxu0 0
      %7585 = vmatpush1.bf16.msra.mxu0 %v7566
      %7586 = vmatprep.subr.bf16.mxu0 0
      %7587 = vmatpush1.bf16.msra.mxu0 0
      %7588 = vmatprep.subr.bf16.mxu0 0
      %7589 = vmatpush1.bf16.msra.mxu0 0
      %7590 = vmatprep.subr.bf16.mxu0 0
      %7591 = vmatpush1.bf16.msra.mxu0 0
      %7592 = vmatprep.subr.bf16.mxu0 0
      %7593 = vmatpush1.bf16.msra.mxu0 0
      %7594 = vmatprep.subr.bf16.mxu0 0
      %7595 = vmatpush1.bf16.msra.mxu0 0
      %7596 = vmatprep.subr.bf16.mxu0 0
      %7597 = vmatpush1.bf16.msra.mxu0 0
      %7598 = vmatprep.subr.bf16.mxu0 0
      %7599 = vmatpush1.bf16.msra.mxu0 0
      %7600 = vmatprep.subr.bf16.mxu0 0
      %7601 = vmatpush1.bf16.msra.mxu0 0
      %7602 = vmatprep.subr.bf16.mxu0 0
      %7603 = vmatpush1.bf16.msra.mxu0 0
      %7604 = vmatprep.subr.bf16.mxu0 0
      %7605 = vmatpush1.bf16.msra.mxu0 0
      %7606 = vmatprep.subr.bf16.mxu0 0
      %7607 = vmatpush1.bf16.msra.mxu0 0
      %7608 = vmatprep.mubr.bf16.mxu0 0
      %7609 = vmatmul.mubr.bf16.gmra.mrb[0].mxu0 %v7574
      %v7610 = vpop.f32.mrb[0].mxu0
      %v7611 = vadd.f32 0.0, %v7610
      %v7612 = vpop.f32.mrb[0].mxu0
      %v7613 = vpop.f32.mrb[0].mxu0
      %v7614 = vpop.f32.mrb[0].mxu0
      %7615 = vdwg.mxu0
      %v7626 = vunpack.c.l.b16 %v7520
      %v7627 = vunpack.c.l.b16 %v7521
      %v7628 = vunpack.c.l.b16 %v7522
      %v7629 = vunpack.c.l.b16 %v7523
      %v7630 = vunpack.c.l.b16 %v7524
      %v7631 = vunpack.c.l.b16 %v7525
      %v7632 = vunpack.c.l.b16 %v7526
      %v7633 = vunpack.c.l.b16 %v7527
      %v7634 = vunpack.c.l.b16 %v7528
      %v7635 = vunpack.c.l.b16 %v7529
      %v7636 = vpack.c.b16 %v7627, %v7626
      %v7637 = vpack.c.b16 %v7629, %v7628
      %v7638 = vpack.c.b16 %v7631, %v7630
      %v7639 = vpack.c.b16 %v7633, %v7632
      %v7640 = vpack.c.b16 %v7635, %v7634
      %v7647 = vsel %vm7572, %v7519, 0
      %7649 = vmatprep.subr.bf16.mxu0 0
      %7650 = vmatpush1.bf16.msra.mxu0 %v7636
      %7651 = vmatprep.subr.bf16.mxu0 0
      %7652 = vmatpush1.bf16.msra.mxu0 %v7637
      %7653 = vmatprep.subr.bf16.mxu0 0
      %7654 = vmatpush1.bf16.msra.mxu0 %v7638
      %7655 = vmatprep.subr.bf16.mxu0 0
      %7656 = vmatpush1.bf16.msra.mxu0 %v7639
      %7657 = vmatprep.subr.bf16.mxu0 0
      %7658 = vmatpush1.bf16.msra.mxu0 %v7640
      %7659 = vmatprep.subr.bf16.mxu0 0
      %7660 = vmatpush1.bf16.msra.mxu0 0
      %7661 = vmatprep.subr.bf16.mxu0 0
      %7662 = vmatpush1.bf16.msra.mxu0 0
      %7663 = vmatprep.subr.bf16.mxu0 0
      %7664 = vmatpush1.bf16.msra.mxu0 0
      %7665 = vmatprep.subr.bf16.mxu0 0
      %7666 = vmatpush1.bf16.msra.mxu0 0
      %7667 = vmatprep.subr.bf16.mxu0 0
      %7668 = vmatpush1.bf16.msra.mxu0 0
      %7669 = vmatprep.subr.bf16.mxu0 0
      %7670 = vmatpush1.bf16.msra.mxu0 0
      %7671 = vmatprep.subr.bf16.mxu0 0
      %7672 = vmatpush1.bf16.msra.mxu0 0
      %7673 = vmatprep.subr.bf16.mxu0 0
      %7674 = vmatpush1.bf16.msra.mxu0 0
      %7675 = vmatprep.subr.bf16.mxu0 0
      %7676 = vmatpush1.bf16.msra.mxu0 0
      %7677 = vmatprep.subr.bf16.mxu0 0
      %7678 = vmatpush1.bf16.msra.mxu0 0
      %7679 = vmatprep.subr.bf16.mxu0 0
      %7680 = vmatpush1.bf16.msra.mxu0 0
      %7681 = vmatprep.mubr.bf16.mxu0 0
      %7682 = vmatmul.mubr.bf16.gmra.mrb[0].mxu0 %v7647
      %v7683 = vpop.f32.mrb[0].mxu0
      %v7684 = vadd.f32 %v7611, %v7683
      %v7685 = vpop.f32.mrb[0].mxu0
      %v7686 = vpop.f32.mrb[0].mxu0
      %v7687 = vpop.f32.mrb[0].mxu0
      %7688 = vdwg.mxu0
      %v7689 = vpack.c.bf16 %v7516, %v7516
      %s7690 = scalar_lea.vmem %s13, 80
      %v7691 = vld [vmem:[%s7690] sm:$0xf]
      %v7692 = vld [vmem:[%s7690 + $0x4] sm:$0xf]
      %v7693 = vld [vmem:[%s7690 + $0x8] sm:$0xf]
      %v7694 = vld [vmem:[%s7690 + $0xc] sm:$0xf]
      %v7695 = vld [vmem:[%s7690 + $0x10] sm:$0xf]
      %v7696 = vld [vmem:[%s7690 + $0x14] sm:$0xf]
      %v7697 = vld [vmem:[%s7690 + $0x18] sm:$0xf]
      %v7698 = vld [vmem:[%s7690 + $0x1c] sm:$0xf]
      %v7699 = vld [vmem:[%s7690 + $0x20] sm:$0xf]
      %v7700 = vld [vmem:[%s7690 + $0x24] sm:$0xf]
      %v7711 = vunpack.c.l.b16 %v7691
      %v7712 = vunpack.c.l.b16 %v7692
      %v7713 = vunpack.c.l.b16 %v7693
      %v7714 = vunpack.c.l.b16 %v7694
      %v7715 = vunpack.c.l.b16 %v7695
      %v7716 = vunpack.c.l.b16 %v7696
      %v7717 = vunpack.c.l.b16 %v7697
      %v7718 = vunpack.c.l.b16 %v7698
      %v7719 = vunpack.c.l.b16 %v7699
      %v7720 = vunpack.c.l.b16 %v7700
      %v7721 = vpack.c.b16 %v7712, %v7711
      %v7722 = vpack.c.b16 %v7714, %v7713
      %v7723 = vpack.c.b16 %v7716, %v7715
      %v7724 = vpack.c.b16 %v7718, %v7717
      %v7725 = vpack.c.b16 %v7720, %v7719
      %v7732 = vsel %vm7572, %v7689, 0
      %7734 = vmatprep.subr.bf16.mxu0 0
      %7735 = vmatpush1.bf16.msra.mxu0 %v7721
      %7736 = vmatprep.subr.bf16.mxu0 0
      %7737 = vmatpush1.bf16.msra.mxu0 %v7722
      %7738 = vmatprep.subr.bf16.mxu0 0
      %7739 = vmatpush1.bf16.msra.mxu0 %v7723
      %7740 = vmatprep.subr.bf16.mxu0 0
      %7741 = vmatpush1.bf16.msra.mxu0 %v7724
      %7742 = vmatprep.subr.bf16.mxu0 0
      %7743 = vmatpush1.bf16.msra.mxu0 %v7725
      %7744 = vmatprep.subr.bf16.mxu0 0
      %7745 = vmatpush1.bf16.msra.mxu0 0
      %7746 = vmatprep.subr.bf16.mxu0 0
      %7747 = vmatpush1.bf16.msra.mxu0 0
      %7748 = vmatprep.subr.bf16.mxu0 0
      %7749 = vmatpush1.bf16.msra.mxu0 0
      %7750 = vmatprep.subr.bf16.mxu0 0
      %7751 = vmatpush1.bf16.msra.mxu0 0
      %7752 = vmatprep.subr.bf16.mxu0 0
      %7753 = vmatpush1.bf16.msra.mxu0 0
      %7754 = vmatprep.subr.bf16.mxu0 0
      %7755 = vmatpush1.bf16.msra.mxu0 0
      %7756 = vmatprep.subr.bf16.mxu0 0
      %7757 = vmatpush1.bf16.msra.mxu0 0
      %7758 = vmatprep.subr.bf16.mxu0 0
      %7759 = vmatpush1.bf16.msra.mxu0 0
      %7760 = vmatprep.subr.bf16.mxu0 0
      %7761 = vmatpush1.bf16.msra.mxu0 0
      %7762 = vmatprep.subr.bf16.mxu0 0
      %7763 = vmatpush1.bf16.msra.mxu0 0
      %7764 = vmatprep.subr.bf16.mxu0 0
      %7765 = vmatpush1.bf16.msra.mxu0 0
      %7766 = vmatprep.mubr.bf16.mxu0 0
      %7767 = vmatmul.mubr.bf16.gmra.mrb[0].mxu0 %v7732
      %v7768 = vpop.f32.mrb[0].mxu0
      %v7769 = vadd.f32 0.0, %v7768
      %v7770 = vpop.f32.mrb[0].mxu0
      %v7771 = vpop.f32.mrb[0].mxu0
      %v7772 = vpop.f32.mrb[0].mxu0
      %7773 = vdwg.mxu0
      %v7774 = vadd.f32 %v7684, %v7769
      %v7775 = vpack.c.bf16 %v7517, %v7517
      %s7776 = scalar_lea.vmem %s13, 120
      %v7777 = vld [vmem:[%s7776] sm:$0xf]
      %v7778 = vld [vmem:[%s7776 + $0x4] sm:$0xf]
      %v7779 = vld [vmem:[%s7776 + $0x8] sm:$0xf]
      %v7780 = vld [vmem:[%s7776 + $0xc] sm:$0xf]
      %v7781 = vld [vmem:[%s7776 + $0x10] sm:$0xf]
      %v7782 = vld [vmem:[%s7776 + $0x14] sm:$0xf]
      %v7783 = vld [vmem:[%s7776 + $0x18] sm:$0xf]
      %v7784 = vld [vmem:[%s7776 + $0x1c] sm:$0xf]
      %v7785 = vld [vmem:[%s7776 + $0x20] sm:$0xf]
      %v7786 = vld [vmem:[%s7776 + $0x24] sm:$0xf]
      %v7797 = vunpack.c.l.b16 %v7777
      %v7798 = vunpack.c.l.b16 %v7778
      %v7799 = vunpack.c.l.b16 %v7779
      %v7800 = vunpack.c.l.b16 %v7780
      %v7801 = vunpack.c.l.b16 %v7781
      %v7802 = vunpack.c.l.b16 %v7782
      %v7803 = vunpack.c.l.b16 %v7783
      %v7804 = vunpack.c.l.b16 %v7784
      %v7805 = vunpack.c.l.b16 %v7785
      %v7806 = vunpack.c.l.b16 %v7786
      %v7807 = vpack.c.b16 %v7798, %v7797
      %v7808 = vpack.c.b16 %v7800, %v7799
      %v7809 = vpack.c.b16 %v7802, %v7801
      %v7810 = vpack.c.b16 %v7804, %v7803
      %v7811 = vpack.c.b16 %v7806, %v7805
      %v7818 = vsel %vm7572, %v7775, 0
      %7820 = vmatprep.subr.bf16.mxu0 0
      %7821 = vmatpush1.bf16.msra.mxu0 %v7807
      %7822 = vmatprep.subr.bf16.mxu0 0
      %7823 = vmatpush1.bf16.msra.mxu0 %v7808
      %7824 = vmatprep.subr.bf16.mxu0 0
      %7825 = vmatpush1.bf16.msra.mxu0 %v7809
      %7826 = vmatprep.subr.bf16.mxu0 0
      %7827 = vmatpush1.bf16.msra.mxu0 %v7810
      %7828 = vmatprep.subr.bf16.mxu0 0
      %7829 = vmatpush1.bf16.msra.mxu0 %v7811
      %7830 = vmatprep.subr.bf16.mxu0 0
      %7831 = vmatpush1.bf16.msra.mxu0 0
      %7832 = vmatprep.subr.bf16.mxu0 0
      %7833 = vmatpush1.bf16.msra.mxu0 0
      %7834 = vmatprep.subr.bf16.mxu0 0
      %7835 = vmatpush1.bf16.msra.mxu0 0
      %7836 = vmatprep.subr.bf16.mxu0 0
      %7837 = vmatpush1.bf16.msra.mxu0 0
      %7838 = vmatprep.subr.bf16.mxu0 0
      %7839 = vmatpush1.bf16.msra.mxu0 0
      %7840 = vmatprep.subr.bf16.mxu0 0
      %7841 = vmatpush1.bf16.msra.mxu0 0
      %7842 = vmatprep.subr.bf16.mxu0 0
      %7843 = vmatpush1.bf16.msra.mxu0 0
      %7844 = vmatprep.subr.bf16.mxu0 0
      %7845 = vmatpush1.bf16.msra.mxu0 0
      %7846 = vmatprep.subr.bf16.mxu0 0
      %7847 = vmatpush1.bf16.msra.mxu0 0
      %7848 = vmatprep.subr.bf16.mxu0 0
      %7849 = vmatpush1.bf16.msra.mxu0 0
      %7850 = vmatprep.subr.bf16.mxu0 0
      %7851 = vmatpush1.bf16.msra.mxu0 0
      %7852 = vmatprep.mubr.bf16.mxu0 0
      %7853 = vmatmul.mubr.bf16.gmra.mrb[0].mxu0 %v7818
      %v7854 = vpop.f32.mrb[0].mxu0
      %v7855 = vadd.f32 0.0, %v7854
      %v7856 = vpop.f32.mrb[0].mxu0
      %v7857 = vpop.f32.mrb[0].mxu0
      %v7858 = vpop.f32.mrb[0].mxu0
      %7859 = vdwg.mxu0
      %v7860 = vadd.f32 %v7774, %v7855
      %v7861 = vpack.c.bf16 %v7518, %v7518
      %s7862 = scalar_lea.vmem %s13, 160
      %v7863 = vld [vmem:[%s7862] sm:$0xf]
      %v7864 = vld [vmem:[%s7862 + $0x4] sm:$0xf]
      %v7865 = vld [vmem:[%s7862 + $0x8] sm:$0xf]
      %v7866 = vld [vmem:[%s7862 + $0xc] sm:$0xf]
      %v7867 = vld [vmem:[%s7862 + $0x10] sm:$0xf]
      %v7868 = vld [vmem:[%s7862 + $0x14] sm:$0xf]
      %v7869 = vld [vmem:[%s7862 + $0x18] sm:$0xf]
      %v7870 = vld [vmem:[%s7862 + $0x1c] sm:$0xf]
      %v7871 = vld [vmem:[%s7862 + $0x20] sm:$0xf]
      %v7872 = vld [vmem:[%s7862 + $0x24] sm:$0xf]
      %v7883 = vunpack.c.l.b16 %v7863
      %v7884 = vunpack.c.l.b16 %v7864
      %v7885 = vunpack.c.l.b16 %v7865
      %v7886 = vunpack.c.l.b16 %v7866
      %v7887 = vunpack.c.l.b16 %v7867
      %v7888 = vunpack.c.l.b16 %v7868
      %v7889 = vunpack.c.l.b16 %v7869
      %v7890 = vunpack.c.l.b16 %v7870
      %v7891 = vunpack.c.l.b16 %v7871
      %v7892 = vunpack.c.l.b16 %v7872
      %v7893 = vpack.c.b16 %v7884, %v7883
      %v7894 = vpack.c.b16 %v7886, %v7885
      %v7895 = vpack.c.b16 %v7888, %v7887
      %v7896 = vpack.c.b16 %v7890, %v7889
      %v7897 = vpack.c.b16 %v7892, %v7891
      %v7904 = vsel %vm7572, %v7861, 0
      %7906 = vmatprep.subr.bf16.mxu0 0
      %7907 = vmatpush1.bf16.msra.mxu0 %v7893
      %7908 = vmatprep.subr.bf16.mxu0 0
      %7909 = vmatpush1.bf16.msra.mxu0 %v7894
      %7910 = vmatprep.subr.bf16.mxu0 0
      %7911 = vmatpush1.bf16.msra.mxu0 %v7895
      %7912 = vmatprep.subr.bf16.mxu0 0
      %7913 = vmatpush1.bf16.msra.mxu0 %v7896
      %7914 = vmatprep.subr.bf16.mxu0 0
      %7915 = vmatpush1.bf16.msra.mxu0 %v7897
      %7916 = vmatprep.subr.bf16.mxu0 0
      %7917 = vmatpush1.bf16.msra.mxu0 0
      %7918 = vmatprep.subr.bf16.mxu0 0
      %7919 = vmatpush1.bf16.msra.mxu0 0
      %7920 = vmatprep.subr.bf16.mxu0 0
      %7921 = vmatpush1.bf16.msra.mxu0 0
      %7922 = vmatprep.subr.bf16.mxu0 0
      %7923 = vmatpush1.bf16.msra.mxu0 0
      %7924 = vmatprep.subr.bf16.mxu0 0
      %7925 = vmatpush1.bf16.msra.mxu0 0
      %7926 = vmatprep.subr.bf16.mxu0 0
      %7927 = vmatpush1.bf16.msra.mxu0 0
      %7928 = vmatprep.subr.bf16.mxu0 0
      %7929 = vmatpush1.bf16.msra.mxu0 0
      %7930 = vmatprep.subr.bf16.mxu0 0
      %7931 = vmatpush1.bf16.msra.mxu0 0
      %7932 = vmatprep.subr.bf16.mxu0 0
      %7933 = vmatpush1.bf16.msra.mxu0 0
      %7934 = vmatprep.subr.bf16.mxu0 0
      %7935 = vmatpush1.bf16.msra.mxu0 0
      %7936 = vmatprep.subr.bf16.mxu0 0
      %7937 = vmatpush1.bf16.msra.mxu0 0
      %7938 = vmatprep.mubr.bf16.mxu0 0
      %7939 = vmatmul.mubr.bf16.gmra.mrb[0].mxu0 %v7904
      %v7940 = vpop.f32.mrb[0].mxu0
      %v7941 = vadd.f32 0.0, %v7940
      %v7942 = vpop.f32.mrb[0].mxu0
      %v7943 = vpop.f32.mrb[0].mxu0
      %v7944 = vpop.f32.mrb[0].mxu0
      %7945 = vdwg.mxu0
      %v7946 = vadd.f32 %v7860, %v7941
      %v7947 = vld [vmem:[%s14] sm:$0x1]
      %v7949 = vlaneseq
      %v7950 = vshrl.u32 %v7949, 7
      %v7951 = vsub.s32 0, %v7950
      %v7952 = vrot.slane %v7947, %v7951
      %v7954 = vadd.f32 %v7946, %v7952
      %v7955 = vmax.f32 %v7954, 0.0
      %v7956 = vpack.c.bf16 %v7955, %v7955
      %v7957 = vld [vmem:[%s15] sm:$0xf]
      %v7958 = vld [vmem:[%s15 + $0x4] sm:$0xf]
      %v7959 = vld [vmem:[%s15 + $0x8] sm:$0xf]
      %v7960 = vld [vmem:[%s15 + $0xc] sm:$0xf]
      %v7961 = vld [vmem:[%s15 + $0x10] sm:$0xf]
      %v7962 = vld [vmem:[%s15 + $0x14] sm:$0xf]
      %v7963 = vld [vmem:[%s15 + $0x18] sm:$0xf]
      %v7964 = vld [vmem:[%s15 + $0x1c] sm:$0xf]
      %v7965 = vld [vmem:[%s15 + $0x20] sm:$0xf]
      %v7966 = vld [vmem:[%s15 + $0x24] sm:$0xf]
      %v7967 = vld [vmem:[%s15 + $0x28] sm:$0xf]
      %v7968 = vld [vmem:[%s15 + $0x2c] sm:$0xf]
      %v7969 = vld [vmem:[%s15 + $0x30] sm:$0xf]
      %v7970 = vld [vmem:[%s15 + $0x34] sm:$0xf]
      %v7971 = vld [vmem:[%s15 + $0x38] sm:$0xf]
      %v7972 = vld [vmem:[%s15 + $0x3c] sm:$0xf]
      %v7973 = vld [vmem:[%s16] sm:$0x1]
      %v7975 = vlaneseq
      %v7976 = vshrl.u32 %v7975, 7
      %v7977 = vsub.s32 0, %v7976
      %v7978 = vrot.slane %v7973, %v7977
      %v7996 = vunpack.c.l.b16 %v7957
      %v7997 = vunpack.c.l.b16 %v7958
      %v7998 = vunpack.c.l.b16 %v7959
      %v7999 = vunpack.c.l.b16 %v7960
      %v8000 = vunpack.c.l.b16 %v7961
      %v8001 = vunpack.c.l.b16 %v7962
      %v8002 = vunpack.c.l.b16 %v7963
      %v8003 = vunpack.c.l.b16 %v7964
      %v8004 = vunpack.c.l.b16 %v7965
      %v8005 = vunpack.c.l.b16 %v7966
      %v8006 = vunpack.c.l.b16 %v7967
      %v8007 = vunpack.c.l.b16 %v7968
      %v8008 = vunpack.c.l.b16 %v7969
      %v8009 = vunpack.c.l.b16 %v7970
      %v8010 = vunpack.c.l.b16 %v7971
      %v8011 = vunpack.c.l.b16 %v7972
      %v8012 = vpack.c.b16 %v7997, %v7996
      %v8013 = vpack.c.b16 %v7999, %v7998
      %v8014 = vpack.c.b16 %v8001, %v8000
      %v8015 = vpack.c.b16 %v8003, %v8002
      %v8016 = vpack.c.b16 %v8005, %v8004
      %v8017 = vpack.c.b16 %v8007, %v8006
      %v8018 = vpack.c.b16 %v8009, %v8008
      %v8019 = vpack.c.b16 %v8011, %v8010
      %8028 = vmatprep.subr.bf16.mxu0 0
      %8029 = vmatpush1.bf16.msra.mxu0 %v8012
      %8030 = vmatprep.subr.bf16.mxu0 0
      %8031 = vmatpush1.bf16.msra.mxu0 %v8013
      %8032 = vmatprep.subr.bf16.mxu0 0
      %8033 = vmatpush1.bf16.msra.mxu0 %v8014
      %8034 = vmatprep.subr.bf16.mxu0 0
      %8035 = vmatpush1.bf16.msra.mxu0 %v8015
      %8036 = vmatprep.subr.bf16.mxu0 0
      %8037 = vmatpush1.bf16.msra.mxu0 %v8016
      %8038 = vmatprep.subr.bf16.mxu0 0
      %8039 = vmatpush1.bf16.msra.mxu0 %v8017
      %8040 = vmatprep.subr.bf16.mxu0 0
      %8041 = vmatpush1.bf16.msra.mxu0 %v8018
      %8042 = vmatprep.subr.bf16.mxu0 0
      %8043 = vmatpush1.bf16.msra.mxu0 %v8019
      %8044 = vmatprep.subr.bf16.mxu0 0
      %8045 = vmatpush1.bf16.msra.mxu0 0
      %8046 = vmatprep.subr.bf16.mxu0 0
      %8047 = vmatpush1.bf16.msra.mxu0 0
      %8048 = vmatprep.subr.bf16.mxu0 0
      %8049 = vmatpush1.bf16.msra.mxu0 0
      %8050 = vmatprep.subr.bf16.mxu0 0
      %8051 = vmatpush1.bf16.msra.mxu0 0
      %8052 = vmatprep.subr.bf16.mxu0 0
      %8053 = vmatpush1.bf16.msra.mxu0 0
      %8054 = vmatprep.subr.bf16.mxu0 0
      %8055 = vmatpush1.bf16.msra.mxu0 0
      %8056 = vmatprep.subr.bf16.mxu0 0
      %8057 = vmatpush1.bf16.msra.mxu0 0
      %8058 = vmatprep.subr.bf16.mxu0 0
      %8059 = vmatpush1.bf16.msra.mxu0 0
      %8060 = vmatprep.mubr.bf16.mxu0 0
      %8061 = vmatmul.mubr.bf16.gmra.mrb[0].mxu0 %v7956
      %v8062 = vpop.f32.mrb[0].mxu0
      %v8063 = vadd.f32 %v7978, %v8062
      %v8064 = vpop.f32.mrb[0].mxu0
      %v8065 = vpop.f32.mrb[0].mxu0
      %v8066 = vpop.f32.mrb[0].mxu0
      %8067 = vdwg.mxu0
      %v8068 = vmax.f32 %v8063, 0.0
      %v8069 = vpack.c.bf16 %v8068, %v8068
      %v8070 = vld [vmem:[%s17] sm:$0xf]
      %v8071 = vld [vmem:[%s17 + $0x4] sm:$0xf]
      %v8072 = vld [vmem:[%s17 + $0x8] sm:$0xf]
      %v8073 = vld [vmem:[%s17 + $0xc] sm:$0xf]
      %v8074 = vld [vmem:[%s17 + $0x10] sm:$0xf]
      %v8075 = vld [vmem:[%s17 + $0x14] sm:$0xf]
      %v8076 = vld [vmem:[%s17 + $0x18] sm:$0xf]
      %v8077 = vld [vmem:[%s17 + $0x1c] sm:$0xf]
      %v8078 = vld [vmem:[%s17 + $0x20] sm:$0xf]
      %v8079 = vld [vmem:[%s17 + $0x24] sm:$0xf]
      %v8080 = vld [vmem:[%s17 + $0x28] sm:$0xf]
      %v8081 = vld [vmem:[%s17 + $0x2c] sm:$0xf]
      %v8082 = vld [vmem:[%s17 + $0x30] sm:$0xf]
      %v8083 = vld [vmem:[%s17 + $0x34] sm:$0xf]
      %v8084 = vld [vmem:[%s17 + $0x38] sm:$0xf]
      %v8085 = vld [vmem:[%s17 + $0x3c] sm:$0xf]
      %v8086 = vld [vmem:[%s18] sm:$0x1]
      %v8088 = vlaneseq
      %v8089 = vshrl.u32 %v8088, 7
      %v8090 = vsub.s32 0, %v8089
      %v8091 = vrot.slane %v8086, %v8090
      %v8109 = vunpack.c.l.b16 %v8070
      %v8110 = vunpack.c.l.b16 %v8071
      %v8111 = vunpack.c.l.b16 %v8072
      %v8112 = vunpack.c.l.b16 %v8073
      %v8113 = vunpack.c.l.b16 %v8074
      %v8114 = vunpack.c.l.b16 %v8075
      %v8115 = vunpack.c.l.b16 %v8076
      %v8116 = vunpack.c.l.b16 %v8077
      %v8117 = vunpack.c.l.b16 %v8078
      %v8118 = vunpack.c.l.b16 %v8079
      %v8119 = vunpack.c.l.b16 %v8080
      %v8120 = vunpack.c.l.b16 %v8081
      %v8121 = vunpack.c.l.b16 %v8082
      %v8122 = vunpack.c.l.b16 %v8083
      %v8123 = vunpack.c.l.b16 %v8084
      %v8124 = vunpack.c.l.b16 %v8085
      %v8125 = vpack.c.b16 %v8110, %v8109
      %v8126 = vpack.c.b16 %v8112, %v8111
      %v8127 = vpack.c.b16 %v8114, %v8113
      %v8128 = vpack.c.b16 %v8116, %v8115
      %v8129 = vpack.c.b16 %v8118, %v8117
      %v8130 = vpack.c.b16 %v8120, %v8119
      %v8131 = vpack.c.b16 %v8122, %v8121
      %v8132 = vpack.c.b16 %v8124, %v8123
      %8141 = vmatprep.subr.bf16.mxu0 0
      %8142 = vmatpush1.bf16.msra.mxu0 %v8125
      %8143 = vmatprep.subr.bf16.mxu0 0
      %8144 = vmatpush1.bf16.msra.mxu0 %v8126
      %8145 = vmatprep.subr.bf16.mxu0 0
      %8146 = vmatpush1.bf16.msra.mxu0 %v8127
      %8147 = vmatprep.subr.bf16.mxu0 0
      %8148 = vmatpush1.bf16.msra.mxu0 %v8128
      %8149 = vmatprep.subr.bf16.mxu0 0
      %8150 = vmatpush1.bf16.msra.mxu0 %v8129
      %8151 = vmatprep.subr.bf16.mxu0 0
      %8152 = vmatpush1.bf16.msra.mxu0 %v8130
      %8153 = vmatprep.subr.bf16.mxu0 0
      %8154 = vmatpush1.bf16.msra.mxu0 %v8131
      %8155 = vmatprep.subr.bf16.mxu0 0
      %8156 = vmatpush1.bf16.msra.mxu0 %v8132
      %8157 = vmatprep.subr.bf16.mxu0 0
      %8158 = vmatpush1.bf16.msra.mxu0 0
      %8159 = vmatprep.subr.bf16.mxu0 0
      %8160 = vmatpush1.bf16.msra.mxu0 0
      %8161 = vmatprep.subr.bf16.mxu0 0
      %8162 = vmatpush1.bf16.msra.mxu0 0
      %8163 = vmatprep.subr.bf16.mxu0 0
      %8164 = vmatpush1.bf16.msra.mxu0 0
      %8165 = vmatprep.subr.bf16.mxu0 0
      %8166 = vmatpush1.bf16.msra.mxu0 0
      %8167 = vmatprep.subr.bf16.mxu0 0
      %8168 = vmatpush1.bf16.msra.mxu0 0
      %8169 = vmatprep.subr.bf16.mxu0 0
      %8170 = vmatpush1.bf16.msra.mxu0 0
      %8171 = vmatprep.subr.bf16.mxu0 0
      %8172 = vmatpush1.bf16.msra.mxu0 0
      %8173 = vmatprep.mubr.bf16.mxu0 0
      %8174 = vmatmul.mubr.bf16.gmra.mrb[0].mxu0 %v8069
      %v8175 = vpop.f32.mrb[0].mxu0
      %v8176 = vadd.f32 %v8091, %v8175
      %v8177 = vpop.f32.mrb[0].mxu0
      %v8178 = vpop.f32.mrb[0].mxu0
      %v8179 = vpop.f32.mrb[0].mxu0
      %8180 = vdwg.mxu0
      %8181 = vst [vmem:[%s602] sm:$0xff] %v8176
      %p8182 = scmp.lt.s32.totalorder %s30, 1
      %s8183 = scalar_select %p8182, %s30, 1
      %s8184 = smul.addr %s8183, 8
      %s8185 = scalar_lea.vmem %s19, %s8184
      // Predicated region
      $region97: #{lenet_forward.1} parent=95 // pred_check
        %p8186 = pneg %p452
      $region98: #{lenet_forward.1} parent=95 // pred_check_branch
        %8188 = sbr.rel (%p8186) target = $region100
      $region99: #{lenet_forward.1} parent=95 // pred_region
        _
      $region100: #{lenet_forward.1} parent=95 // pred_fallthru
        _
    $region96: #{lenet_forward.1} parent=5 // pred_fallthru
      _
    %p8189 = scmp.le.s32.totalorder 2, %s25
    // Predicated region
    $region101: #{lenet_forward.1} parent=5 // pred_check
      %p8190 = pneg %p8189
    $region102: #{lenet_forward.1} parent=5 // pred_check_branch
      %8192 = sbr.rel (%p8190) target = $region104
    $region103: #{lenet_forward.1} parent=5 // pred_region
      %s8193 = ssub.s32 %s25, 2
      // Predicated region
      $region105: #{lenet_forward.1} parent=103 // pred_check
        %p8194 = pneg %p458
      $region106: #{lenet_forward.1} parent=103 // pred_check_branch
        %8196 = sbr.rel (%p8194) target = $region108
      $region107: #{lenet_forward.1} parent=103 // pred_region
        %p8197 = scmp.lt.s32.totalorder %s31, 1
        %s8198 = scalar_select %p8197, %s31, 1
        %s8199 = smul.addr %s8198, 8
        %s8200 = scalar_lea.vmem %s19, %s8199
      $region108: #{lenet_forward.1} parent=103 // pred_fallthru
        _
    $region104: #{lenet_forward.1} parent=5 // pred_fallthru
      _
  $region6: #{lenet_forward.1} parent=0 // loop_footer
    %s29 = sadd.s32 1, %s25
  $region7: #{lenet_forward.1} parent=0 // loop_footer_branch
    %24 = sbr.rel target = $region3
  $region8: #{lenet_forward.1} parent=0 // loop_exit
    _

</llo_original>
